<compile_context>
chip_gen: v6e
topology: v6e:2x2x1
jax: 0.10.0
libtpu: 0.0.40
codegen_flags: <defaults>
</compile_context>

<pallas_src>
import jax
import jax.numpy as jnp
import numpy as np
from jax.experimental import pallas as pl
from jax.experimental.pallas import tpu as pltpu

PRIMITIVES = ['none', 'max_pool_3x3', 'avg_pool_3x3', 'skip_connect',
              'sep_conv_3x3', 'sep_conv_5x5', 'dil_conv_3x3', 'dil_conv_5x5']
BN_EPS = 1e-5
PAD = 4   # max halo of any op (dil_conv_5x5: pad=4) -> single shared zero-padded input
PB = 2    # halo of the intermediate sep-conv scratch (k=5, p=2)


# -----------------------------------------------------------------------------
# Pallas kernel: all candidate ops + streaming weighted sum, entirely in VMEM.
# -----------------------------------------------------------------------------
def _make_mixed_op_kernel(N, H, W, C):
    WC = W * C
    inv_m = 1.0 / float(N * H * W)

    def kernel(alpha_ref, xz_ref, mbias_ref, invc_ref, gmat_ref, gmatT_ref,
               s3dw1_ref, s3pw1_ref, s3dw2_ref, s3pw2_ref,
               s5dw1_ref, s5pw1_ref, s5dw2_ref, s5pw2_ref,
               d3dw_ref, d3pw_ref, d5dw_ref, d5pw_ref,
               o_ref, xr_ref, pad_ref):

        def bn(t):
            # Fused single-pass BatchNorm2d(affine=False), training-mode stats.
            # Per-channel fold of the (w, c) lane groups via tiny MXU matmuls.
            s = jnp.sum(t, axis=(0, 1), keepdims=True).reshape(1, WC)
            ss = jnp.sum(t * t, axis=(0, 1), keepdims=True).reshape(1, WC)
            ch_s = jnp.dot(s, gmat_ref[...], preferred_element_type=jnp.float32)
            ch_ss = jnp.dot(ss, gmat_ref[...], preferred_element_type=jnp.float32)
            mean = ch_s * inv_m
            var = ch_ss * inv_m - mean * mean
            scale = jax.lax.rsqrt(var + BN_EPS)          # (1, C)
            shift = -mean * scale                        # (1, C)
            scale_f = jnp.dot(scale, gmatT_ref[...], preferred_element_type=jnp.float32)
            shift_f = jnp.dot(shift, gmatT_ref[...], preferred_element_type=jnp.float32)
            return t * scale_f + shift_f                 # (1, WC) broadcasts over (N, H, WC)

        def dwconv(src_ref, dw_ref, k, d, p, base):
            # depthwise conv as k*k shifted multiply-accumulates on the VPU;
            # W-shifts are lane-axis slices (offset kw*d*C), H-shifts are
            # sublane-axis slices. dw_ref[kh, kw] is a (W*C,) lane-tiled tap.
            acc = jnp.zeros((N, H, WC), jnp.float32)
            for kh in range(k):
                for kw in range(k):
                    oh = base - p + kh * d
                    ow = (base - p + kw * d) * C
                    v = src_ref[:, oh:oh + H, ow:ow + WC]
                    acc = acc + v * dw_ref[kh, kw]
            return acc

        def pwconv(t, pwB_ref):
            # 1x1 conv as a single MXU matmul against the block-diagonal
            # (W*C, W*C) weight (kron(I_W, pw^T)) built in the wrapper.
            t2 = t.reshape(N * H, WC)
            o2 = jnp.dot(t2, pwB_ref[...], preferred_element_type=jnp.float32)
            return o2.reshape(N, H, WC)

        # Zero only the halo bands of the sep-conv scratch, once (the interior
        # is fully overwritten by every sep() call).
        WP2 = (W + 2 * PB) * C
        pad_ref[:, 0:PB, :] = jnp.zeros((N, PB, WP2), jnp.float32)
        pad_ref[:, PB + H:PB + H + PB, :] = jnp.zeros((N, PB, WP2), jnp.float32)
        pad_ref[:, PB:PB + H, 0:PB * C] = jnp.zeros((N, H, PB * C), jnp.float32)
        pad_ref[:, PB:PB + H, (PB + W) * C:WP2] = jnp.zeros((N, H, PB * C), jnp.float32)

        # Shared ReLU(x) (zero-padded) computed once for ops 4..7.
        xr_ref[...] = jnp.maximum(xz_ref[...], 0.0)

        x = xz_ref[:, PAD:PAD + H, PAD * C:PAD * C + WC]

        # op 3: skip_connect (alpha[3] pre-gated to 0 in the wrapper when
        # excluded). op 0 ('none') contributes exactly zero and is dropped.
        res = alpha_ref[3] * x

        # --- op 1: max_pool_3x3 (s=1, p=1, -inf border via additive bias) + BN
        xmv = (xz_ref[:, PAD - 1:PAD - 1 + H + 2,
                      (PAD - 1) * C:(PAD + 1 + W) * C] + mbias_ref[...])
        mp = xmv[:, 0:H, 0:WC]
        for kh in range(3):
            for kw in range(3):
                if kh == 0 and kw == 0:
                    continue
                mp = jnp.maximum(mp, xmv[:, kh:kh + H, kw * C:kw * C + WC])
        res = res + alpha_ref[1] * bn(mp)

        # --- op 2: avg_pool_3x3 (s=1, p=1, count_include_pad=False) + BN ------
        sm = jnp.zeros((N, H, WC), jnp.float32)
        for kh in range(3):
            for kw in range(3):
                sm = sm + xz_ref[:, PAD - 1 + kh:PAD - 1 + kh + H,
                                 (PAD - 1 + kw) * C:(PAD - 1 + kw) * C + WC]
        res = res + alpha_ref[2] * bn(sm * invc_ref[...])

        # --- ops 4/5: SepConv (ReLU-dw-pw-BN-ReLU-dw-pw-BN) -------------------
        def sep(dw1, pw1, dw2, pw2, k, p):
            t = dwconv(xr_ref, dw1, k, 1, p, PAD)
            t = bn(pwconv(t, pw1))
            pad_ref[:, PB:PB + H, PB * C:(PB + W) * C] = jnp.maximum(t, 0.0)
            t = dwconv(pad_ref, dw2, k, 1, p, PB)
            return bn(pwconv(t, pw2))

        res = res + alpha_ref[4] * sep(s3dw1_ref, s3pw1_ref, s3dw2_ref, s3pw2_ref, 3, 1)
        res = res + alpha_ref[5] * sep(s5dw1_ref, s5pw1_ref, s5dw2_ref, s5pw2_ref, 5, 2)

        # --- ops 6/7: DilConv (ReLU-dw(dil=2)-pw-BN) --------------------------
        def dil(dw, pw, k, p):
            t = dwconv(xr_ref, dw, k, 2, p, PAD)
            return bn(pwconv(t, pw))

        res = res + alpha_ref[6] * dil(d3dw_ref, d3pw_ref, 3, 2)
        res = res + alpha_ref[7] * dil(d5dw_ref, d5pw_ref, 5, 4)

        o_ref[...] = res

    return kernel


# -----------------------------------------------------------------------------
# Wrapper: layout conversion (NCHW -> lane-dense (N, H, W*C)), weight packing.
# -----------------------------------------------------------------------------
def mixed_op_pallas(x_nchw, alphas, params, j, fix_edge4_noskip):
    N, C, H, W = x_nchw.shape
    WC = W * C
    x = jnp.transpose(x_nchw, (0, 2, 3, 1)).astype(jnp.float32)          # NHWC
    # single shared zero-padded input, folded to lane-dense (N, H+2P, (W+2P)*C)
    xz = jnp.pad(x, ((0, 0), (PAD, PAD), (PAD, PAD), (0, 0)))
    xz = xz.reshape(N, H + 2 * PAD, (W + 2 * PAD) * C)

    # -inf additive bias for the 1-padded max-pool window (replaces a second
    # full -inf-padded copy of the activation)
    vh = (jnp.arange(H + 2) >= 1) & (jnp.arange(H + 2) <= H)
    vw = (jnp.arange(W + 2) >= 1) & (jnp.arange(W + 2) <= W)
    mbias = jnp.where(vh[:, None] & vw[None, :], 0.0, -jnp.inf).astype(jnp.float32)
    mbias = jnp.repeat(mbias, C, axis=1)                                 # (H+2, (W+2)*C)

    # count_include_pad=False reciprocal divisors for 3x3 / stride 1 / pad 1
    rh = 3.0 - (jnp.arange(H) == 0).astype(jnp.float32) - (jnp.arange(H) == H - 1).astype(jnp.float32)
    rw = 3.0 - (jnp.arange(W) == 0).astype(jnp.float32) - (jnp.arange(W) == W - 1).astype(jnp.float32)
    invc = jnp.repeat(1.0 / (rh[:, None] * rw[None, :]), C, axis=1).astype(jnp.float32)  # (H, W*C)

    # lane-group <-> channel fold matrices for BatchNorm statistics
    gmat = jnp.tile(jnp.eye(C, dtype=jnp.float32), (W, 1))               # (W*C, C)
    gmatT = gmat.T                                                       # (C, W*C)

    # skip_connect gating folded into the alpha vector (no in-kernel branch)
    a = alphas.astype(jnp.float32)
    if fix_edge4_noskip and j == 4:
        a = a.at[3].set(0.0)

    def dw_fmt(w):   # torch (C,1,k,k) -> (k, k, W*C) lane-tiled depthwise taps
        return jnp.tile(jnp.transpose(w[:, 0, :, :], (1, 2, 0)), (1, 1, W)).astype(jnp.float32)

    def pw_fmt(w):   # torch (Cout,Cin,1,1) -> block-diagonal (W*C, W*C) for MXU 1x1 conv
        return jnp.kron(jnp.eye(W, dtype=jnp.float32), w[:, :, 0, 0].T).astype(jnp.float32)

    wlist = [
        dw_fmt(params['s3_dw1']), pw_fmt(params['s3_pw1']),
        dw_fmt(params['s3_dw2']), pw_fmt(params['s3_pw2']),
        dw_fmt(params['s5_dw1']), pw_fmt(params['s5_pw1']),
        dw_fmt(params['s5_dw2']), pw_fmt(params['s5_pw2']),
        dw_fmt(params['d3_dw']), pw_fmt(params['d3_pw']),
        dw_fmt(params['d5_dw']), pw_fmt(params['d5_pw']),
    ]

    smem = pl.BlockSpec(memory_space=pltpu.MemorySpace.SMEM)
    vmem = pl.BlockSpec(memory_space=pltpu.MemorySpace.VMEM)
    out_flat = pl.pallas_call(
        _make_mixed_op_kernel(N, H, W, C),
        out_shape=jax.ShapeDtypeStruct((N, H, WC), jnp.float32),
        in_specs=[smem] + [vmem] * 17,
        out_specs=vmem,
        scratch_shapes=[
            pltpu.VMEM((N, H + 2 * PAD, (W + 2 * PAD) * C), jnp.float32),  # ReLU(xz)
            pltpu.VMEM((N, H + 2 * PB, (W + 2 * PB) * C), jnp.float32),    # sep-conv halo pad
        ],
        compiler_params=pltpu.CompilerParams(vmem_limit_bytes=64 * 1024 * 1024),
    )(a, xz, mbias, invc, gmat, gmatT, *wlist)

    out = out_flat.reshape(N, H, W, C)
    return jnp.transpose(out, (0, 3, 1, 2))                              # back to NCHW


# -----------------------------------------------------------------------------
# Independent pure-JAX reference (XLA convs / reduce_window), NCHW like PyTorch.
# -----------------------------------------------------------------------------
def _bn_ref(t):
    mean = jnp.mean(t, axis=(0, 2, 3), keepdims=True)
    var = jnp.mean((t - mean) ** 2, axis=(0, 2, 3), keepdims=True)
    return (t - mean) / jnp.sqrt(var + BN_EPS)


def _conv_ref(x, w, p, d, groups):
    return jax.lax.conv_general_dilated(
        x, w, window_strides=(1, 1), padding=[(p, p), (p, p)],
        rhs_dilation=(d, d), dimension_numbers=('NCHW', 'OIHW', 'NCHW'),
        feature_group_count=groups, precision=jax.lax.Precision.HIGHEST)


def mixed_op_ref(x, alphas, p, j, fix_edge4_noskip):
    C = x.shape[1]
    pad = [(0, 0), (0, 0), (1, 1), (1, 1)]

    def maxpool(x):
        return jax.lax.reduce_window(x, -jnp.inf, jax.lax.max, (1, 1, 3, 3), (1, 1, 1, 1), pad)

    def avgpool(x):
        s = jax.lax.reduce_window(x, 0.0, jax.lax.add, (1, 1, 3, 3), (1, 1, 1, 1), pad)
        cnt = jax.lax.reduce_window(jnp.ones_like(x), 0.0, jax.lax.add, (1, 1, 3, 3), (1, 1, 1, 1), pad)
        return s / cnt

    def sep(x, dw1, pw1, dw2, pw2, pd):
        t = _conv_ref(jax.nn.relu(x), dw1, pd, 1, C)
        t = _bn_ref(_conv_ref(t, pw1, 0, 1, 1))
        t = _conv_ref(jax.nn.relu(t), dw2, pd, 1, C)
        return _bn_ref(_conv_ref(t, pw2, 0, 1, 1))

    def dil(x, dw, pw, pd):
        t = _conv_ref(jax.nn.relu(x), dw, pd, 2, C)
        return _bn_ref(_conv_ref(t, pw, 0, 1, 1))

    ops = [
        x * 0.0,
        _bn_ref(maxpool(x)),
        _bn_ref(avgpool(x)),
        x,
        sep(x, p['s3_dw1'], p['s3_pw1'], p['s3_dw2'], p['s3_pw2'], 1),
        sep(x, p['s5_dw1'], p['s5_pw1'], p['s5_dw2'], p['s5_pw2'], 2),
        dil(x, p['d3_dw'], p['d3_pw'], 2),
        dil(x, p['d5_dw'], p['d5_pw'], 4),
    ]
    result = jnp.zeros_like(x)
    for count, (w, op) in enumerate(zip(alphas, ops)):
        if not (fix_edge4_noskip and count == 3 and j == 4):
            result = result + w * op
    return result


if __name__ == "__main__":
    N, C, H, W = 2, 4, 16, 16
    key = jax.random.PRNGKey(0)
    ks = jax.random.split(key, 16)

    x = jax.random.normal(ks[0], (N, C, H, W), jnp.float32)
    alphas = jax.nn.softmax(jax.random.normal(ks[1], (len(PRIMITIVES),), jnp.float32))

    def w(k, shape):
        return 0.4 * jax.random.normal(k, shape, jnp.float32)

    params = {
        's3_dw1': w(ks[2], (C, 1, 3, 3)), 's3_pw1': w(ks[3], (C, C, 1, 1)),
        's3_dw2': w(ks[4], (C, 1, 3, 3)), 's3_pw2': w(ks[5], (C, C, 1, 1)),
        's5_dw1': w(ks[6], (C, 1, 5, 5)), 's5_pw1': w(ks[7], (C, C, 1, 1)),
        's5_dw2': w(ks[8], (C, 1, 5, 5)), 's5_pw2': w(ks[9], (C, C, 1, 1)),
        'd3_dw': w(ks[10], (C, 1, 3, 3)), 'd3_pw': w(ks[11], (C, C, 1, 1)),
        'd5_dw': w(ks[12], (C, 1, 5, 5)), 'd5_pw': w(ks[13], (C, C, 1, 1)),
    }

    # j=0: skip_connect included; j=4 with fix_edge4_noskip: skip_connect excluded.
    for (j, fix) in [(0, True), (4, True)]:
        out = mixed_op_pallas(x, alphas, params, j, fix)
        out = jax.block_until_ready(out)
        ref = mixed_op_ref(x, alphas, params, j, fix)
        np.testing.assert_allclose(np.asarray(out), np.asarray(ref), rtol=2e-3, atol=2e-3)

    print("KERNEL_OK")
</pallas_src>

<mosaic_0001>
module attributes {stable_mosaic.version = 11 : i64} {
  func.func @kernel(%arg0: memref<8xf32, #tpu.memory_space<smem>>, %arg1: memref<2x24x96xf32, #tpu.memory_space<vmem>>, %arg2: memref<18x72xf32, #tpu.memory_space<vmem>>, %arg3: memref<16x64xf32, #tpu.memory_space<vmem>>, %arg4: memref<64x4xf32, #tpu.memory_space<vmem>>, %arg5: memref<4x64xf32, #tpu.memory_space<vmem>>, %arg6: memref<3x3x64xf32, #tpu.memory_space<vmem>>, %arg7: memref<64x64xf32, #tpu.memory_space<vmem>>, %arg8: memref<3x3x64xf32, #tpu.memory_space<vmem>>, %arg9: memref<64x64xf32, #tpu.memory_space<vmem>>, %arg10: memref<5x5x64xf32, #tpu.memory_space<vmem>>, %arg11: memref<64x64xf32, #tpu.memory_space<vmem>>, %arg12: memref<5x5x64xf32, #tpu.memory_space<vmem>>, %arg13: memref<64x64xf32, #tpu.memory_space<vmem>>, %arg14: memref<3x3x64xf32, #tpu.memory_space<vmem>>, %arg15: memref<64x64xf32, #tpu.memory_space<vmem>>, %arg16: memref<5x5x64xf32, #tpu.memory_space<vmem>>, %arg17: memref<64x64xf32, #tpu.memory_space<vmem>>, %arg18: memref<2x16x64xf32, #tpu.memory_space<vmem>>, %arg19: memref<2x24x96xf32, #tpu.memory_space<vmem>>, %arg20: memref<2x20x80xf32, #tpu.memory_space<vmem>>) attributes {dimension_semantics = [], scalar_prefetch = 0 : i64, scratch_operands = 2 : i64, tpu.core_type = #tpu.core_type<tc>} {
    %cst = arith.constant 0.000000e+00 : f32
    %0 = vector.broadcast %cst : f32 to vector<2x2x80xf32>
    %c0 = arith.constant 0 : index
    %c0_0 = arith.constant 0 : index
    %c0_1 = arith.constant 0 : index
    %1 = vector.load %arg20[%c0, %c0_0, %c0_1] : memref<2x20x80xf32, #tpu.memory_space<vmem>>, vector<2x2x80xf32>
    tpu.vector_store %arg20[%c0, %c0_0, %c0_1], %0 {strides = array<i32>} : memref<2x20x80xf32, #tpu.memory_space<vmem>>, vector<2x2x80xf32>,
    %cst_2 = arith.constant 0.000000e+00 : f32
    %2 = vector.broadcast %cst_2 : f32 to vector<2x2x80xf32>
    %c0_3 = arith.constant 0 : index
    %c18 = arith.constant 18 : index
    %c0_4 = arith.constant 0 : index
    %3 = vector.load %arg20[%c0_3, %c18, %c0_4] : memref<2x20x80xf32, #tpu.memory_space<vmem>>, vector<2x2x80xf32>
    tpu.vector_store %arg20[%c0_3, %c18, %c0_4], %2 {strides = array<i32>} : memref<2x20x80xf32, #tpu.memory_space<vmem>>, vector<2x2x80xf32>,
    %cst_5 = arith.constant 0.000000e+00 : f32
    %4 = vector.broadcast %cst_5 : f32 to vector<2x16x8xf32>
    %c0_6 = arith.constant 0 : index
    %c2 = arith.constant 2 : index
    %c0_7 = arith.constant 0 : index
    %5 = vector.load %arg20[%c0_6, %c2, %c0_7] : memref<2x20x80xf32, #tpu.memory_space<vmem>>, vector<2x16x8xf32>
    tpu.vector_store %arg20[%c0_6, %c2, %c0_7], %4 {strides = array<i32>} : memref<2x20x80xf32, #tpu.memory_space<vmem>>, vector<2x16x8xf32>,
    %cst_8 = arith.constant 0.000000e+00 : f32
    %6 = vector.broadcast %cst_8 : f32 to vector<2x16x8xf32>
    %c0_9 = arith.constant 0 : index
    %c2_10 = arith.constant 2 : index
    %c72 = arith.constant 72 : index
    %7 = vector.load %arg20[%c0_9, %c2_10, %c72] : memref<2x20x80xf32, #tpu.memory_space<vmem>>, vector<2x16x8xf32>
    tpu.vector_store %arg20[%c0_9, %c2_10, %c72], %6 {strides = array<i32>} : memref<2x20x80xf32, #tpu.memory_space<vmem>>, vector<2x16x8xf32>,
    %c0_11 = arith.constant 0 : index
    %c0_12 = arith.constant 0 : index
    %c0_13 = arith.constant 0 : index
    %8 = vector.load %arg1[%c0_11, %c0_12, %c0_13] : memref<2x24x96xf32, #tpu.memory_space<vmem>>, vector<2x24x96xf32>
    %cst_14 = arith.constant 0.000000e+00 : f32
    %9 = vector.broadcast %cst_14 : f32 to vector<2x24x96xf32>
    %10 = arith.maximumf %8, %9 : vector<2x24x96xf32>
    %c0_15 = arith.constant 0 : index
    %c0_16 = arith.constant 0 : index
    %c0_17 = arith.constant 0 : index
    %11 = vector.load %arg19[%c0_15, %c0_16, %c0_17] : memref<2x24x96xf32, #tpu.memory_space<vmem>>, vector<2x24x96xf32>
    tpu.vector_store %arg19[%c0_15, %c0_16, %c0_17], %10 {strides = array<i32>} : memref<2x24x96xf32, #tpu.memory_space<vmem>>, vector<2x24x96xf32>,
    %c0_18 = arith.constant 0 : index
    %c4 = arith.constant 4 : index
    %c16 = arith.constant 16 : index
    %12 = vector.load %arg1[%c0_18, %c4, %c16] : memref<2x24x96xf32, #tpu.memory_space<vmem>>, vector<2x16x64xf32>
    %c3 = arith.constant 3 : index
    %13 = memref.load %arg0[%c3] : memref<8xf32, #tpu.memory_space<smem>>
    %14 = vector.broadcast %13 : f32 to vector<2x16x64xf32>
    %15 = arith.mulf %14, %12 : vector<2x16x64xf32>
    %c0_19 = arith.constant 0 : index
    %c3_20 = arith.constant 3 : index
    %c12 = arith.constant 12 : index
    %16 = vector.load %arg1[%c0_19, %c3_20, %c12] : memref<2x24x96xf32, #tpu.memory_space<vmem>>, vector<2x18x72xf32>
    %c0_21 = arith.constant 0 : index
    %c0_22 = arith.constant 0 : index
    %17 = vector.load %arg2[%c0_21, %c0_22] : memref<18x72xf32, #tpu.memory_space<vmem>>, vector<18x72xf32>
    %18 = vector.shape_cast %17 : vector<18x72xf32> to vector<1x18x72xf32>
    %19 = vector.broadcast %18 : vector<1x18x72xf32> to vector<2x18x72xf32>
    %20 = arith.addf %16, %19 : vector<2x18x72xf32>
    %21 = vector.extract_strided_slice %20 {offsets = [0, 0, 0], sizes = [2, 16, 64], strides = [1, 1, 1]} : vector<2x18x72xf32> to vector<2x16x64xf32>
    %22 = vector.extract_strided_slice %20 {offsets = [0, 0, 4], sizes = [2, 16, 64], strides = [1, 1, 1]} : vector<2x18x72xf32> to vector<2x16x64xf32>
    %23 = arith.maximumf %21, %22 : vector<2x16x64xf32>
    %24 = vector.extract_strided_slice %20 {offsets = [0, 0, 8], sizes = [2, 16, 64], strides = [1, 1, 1]} : vector<2x18x72xf32> to vector<2x16x64xf32>
    %25 = arith.maximumf %23, %24 : vector<2x16x64xf32>
    %26 = vector.extract_strided_slice %20 {offsets = [0, 1, 0], sizes = [2, 16, 64], strides = [1, 1, 1]} : vector<2x18x72xf32> to vector<2x16x64xf32>
    %27 = arith.maximumf %25, %26 : vector<2x16x64xf32>
    %28 = vector.extract_strided_slice %20 {offsets = [0, 1, 4], sizes = [2, 16, 64], strides = [1, 1, 1]} : vector<2x18x72xf32> to vector<2x16x64xf32>
    %29 = arith.maximumf %27, %28 : vector<2x16x64xf32>
    %30 = vector.extract_strided_slice %20 {offsets = [0, 1, 8], sizes = [2, 16, 64], strides = [1, 1, 1]} : vector<2x18x72xf32> to vector<2x16x64xf32>
    %31 = arith.maximumf %29, %30 : vector<2x16x64xf32>
    %32 = vector.extract_strided_slice %20 {offsets = [0, 2, 0], sizes = [2, 16, 64], strides = [1, 1, 1]} : vector<2x18x72xf32> to vector<2x16x64xf32>
    %33 = arith.maximumf %31, %32 : vector<2x16x64xf32>
    %34 = vector.extract_strided_slice %20 {offsets = [0, 2, 4], sizes = [2, 16, 64], strides = [1, 1, 1]} : vector<2x18x72xf32> to vector<2x16x64xf32>
    %35 = arith.maximumf %33, %34 : vector<2x16x64xf32>
    %36 = vector.extract_strided_slice %20 {offsets = [0, 2, 8], sizes = [2, 16, 64], strides = [1, 1, 1]} : vector<2x18x72xf32> to vector<2x16x64xf32>
    %37 = arith.maximumf %35, %36 : vector<2x16x64xf32>
    %c1 = arith.constant 1 : index
    %38 = memref.load %arg0[%c1] : memref<8xf32, #tpu.memory_space<smem>>
    %cst_23 = arith.constant dense<0.000000e+00> : vector<64xf32>
    %39 = vector.multi_reduction <add>, %37, %cst_23 [0, 1] : vector<2x16x64xf32> to vector<64xf32>
    %40 = vector.shape_cast %39 : vector<64xf32> to vector<1x1x64xf32>
    %41 = vector.shape_cast %40 : vector<1x1x64xf32> to vector<1x64xf32>
    %42 = arith.mulf %37, %37 : vector<2x16x64xf32>
    %cst_24 = arith.constant dense<0.000000e+00> : vector<64xf32>
    %43 = vector.multi_reduction <add>, %42, %cst_24 [0, 1] : vector<2x16x64xf32> to vector<64xf32>
    %44 = vector.shape_cast %43 : vector<64xf32> to vector<1x1x64xf32>
    %45 = vector.shape_cast %44 : vector<1x1x64xf32> to vector<1x64xf32>
    %c0_25 = arith.constant 0 : index
    %c0_26 = arith.constant 0 : index
    %46 = vector.load %arg4[%c0_25, %c0_26] : memref<64x4xf32, #tpu.memory_space<vmem>>, vector<64x4xf32>
    %cst_27 = arith.constant dense<0.000000e+00> : vector<1x4xf32>
    %47 = tpu.matmul %41, %46, %cst_27 {dimension_numbers = #tpu.dot_dimension_numbers<[1], [0], [0], [1], [0, 0, 1, 1], [], []>} : vector<1x64xf32>, vector<64x4xf32>, vector<1x4xf32> -> vector<1x4xf32>
    %c0_28 = arith.constant 0 : index
    %c0_29 = arith.constant 0 : index
    %48 = vector.load %arg4[%c0_28, %c0_29] : memref<64x4xf32, #tpu.memory_space<vmem>>, vector<64x4xf32>
    %cst_30 = arith.constant dense<0.000000e+00> : vector<1x4xf32>
    %49 = tpu.matmul %45, %48, %cst_30 {dimension_numbers = #tpu.dot_dimension_numbers<[1], [0], [0], [1], [0, 0, 1, 1], [], []>} : vector<1x64xf32>, vector<64x4xf32>, vector<1x4xf32> -> vector<1x4xf32>
    %cst_31 = arith.constant 0.001953125 : f32
    %50 = vector.broadcast %cst_31 : f32 to vector<1x4xf32>
    %51 = arith.mulf %47, %50 : vector<1x4xf32>
    %cst_32 = arith.constant 0.001953125 : f32
    %52 = vector.broadcast %cst_32 : f32 to vector<1x4xf32>
    %53 = arith.mulf %49, %52 : vector<1x4xf32>
    %54 = arith.mulf %51, %51 : vector<1x4xf32>
    %55 = arith.subf %53, %54 : vector<1x4xf32>
    %cst_33 = arith.constant 9.99999974E-6 : f32
    %56 = vector.broadcast %cst_33 : f32 to vector<1x4xf32>
    %57 = arith.addf %55, %56 : vector<1x4xf32>
    %58 = math.rsqrt %57 : vector<1x4xf32>
    %cst_34 = arith.constant 0.000000e+00 : f32
    %59 = vector.broadcast %cst_34 : f32 to vector<1x4xf32>
    %60 = arith.subf %59, %51 : vector<1x4xf32>
    %61 = arith.mulf %60, %58 : vector<1x4xf32>
    %c0_35 = arith.constant 0 : index
    %c0_36 = arith.constant 0 : index
    %62 = vector.load %arg5[%c0_35, %c0_36] : memref<4x64xf32, #tpu.memory_space<vmem>>, vector<4x64xf32>
    %cst_37 = arith.constant dense<0.000000e+00> : vector<1x64xf32>
    %63 = tpu.matmul %58, %62, %cst_37 {dimension_numbers = #tpu.dot_dimension_numbers<[1], [0], [0], [1], [0, 0, 1, 1], [], []>} : vector<1x4xf32>, vector<4x64xf32>, vector<1x64xf32> -> vector<1x64xf32>
    %c0_38 = arith.constant 0 : index
    %c0_39 = arith.constant 0 : index
    %64 = vector.load %arg5[%c0_38, %c0_39] : memref<4x64xf32, #tpu.memory_space<vmem>>, vector<4x64xf32>
    %cst_40 = arith.constant dense<0.000000e+00> : vector<1x64xf32>
    %65 = tpu.matmul %61, %64, %cst_40 {dimension_numbers = #tpu.dot_dimension_numbers<[1], [0], [0], [1], [0, 0, 1, 1], [], []>} : vector<1x4xf32>, vector<4x64xf32>, vector<1x64xf32> -> vector<1x64xf32>
    %66 = vector.shape_cast %63 : vector<1x64xf32> to vector<1x1x64xf32>
    %67 = vector.broadcast %66 : vector<1x1x64xf32> to vector<2x16x64xf32>
    %68 = arith.mulf %37, %67 : vector<2x16x64xf32>
    %69 = vector.shape_cast %65 : vector<1x64xf32> to vector<1x1x64xf32>
    %70 = vector.broadcast %69 : vector<1x1x64xf32> to vector<2x16x64xf32>
    %71 = arith.addf %68, %70 : vector<2x16x64xf32>
    %72 = vector.broadcast %38 : f32 to vector<2x16x64xf32>
    %73 = arith.mulf %72, %71 : vector<2x16x64xf32>
    %74 = arith.addf %15, %73 : vector<2x16x64xf32>
    %cst_41 = arith.constant 0.000000e+00 : f32
    %75 = vector.broadcast %cst_41 : f32 to vector<2x16x64xf32>
    %c0_42 = arith.constant 0 : index
    %c3_43 = arith.constant 3 : index
    %c12_44 = arith.constant 12 : index
    %76 = vector.load %arg1[%c0_42, %c3_43, %c12_44] : memref<2x24x96xf32, #tpu.memory_space<vmem>>, vector<2x16x64xf32>
    %77 = arith.addf %75, %76 : vector<2x16x64xf32>
    %c0_45 = arith.constant 0 : index
    %c3_46 = arith.constant 3 : index
    %c16_47 = arith.constant 16 : index
    %78 = vector.load %arg1[%c0_45, %c3_46, %c16_47] : memref<2x24x96xf32, #tpu.memory_space<vmem>>, vector<2x16x64xf32>
    %79 = arith.addf %77, %78 : vector<2x16x64xf32>
    %c0_48 = arith.constant 0 : index
    %c3_49 = arith.constant 3 : index
    %c20 = arith.constant 20 : index
    %80 = vector.load %arg1[%c0_48, %c3_49, %c20] : memref<2x24x96xf32, #tpu.memory_space<vmem>>, vector<2x16x64xf32>
    %81 = arith.addf %79, %80 : vector<2x16x64xf32>
    %c0_50 = arith.constant 0 : index
    %c4_51 = arith.constant 4 : index
    %c12_52 = arith.constant 12 : index
    %82 = vector.load %arg1[%c0_50, %c4_51, %c12_52] : memref<2x24x96xf32, #tpu.memory_space<vmem>>, vector<2x16x64xf32>
    %83 = arith.addf %81, %82 : vector<2x16x64xf32>
    %c0_53 = arith.constant 0 : index
    %c4_54 = arith.constant 4 : index
    %c16_55 = arith.constant 16 : index
    %84 = vector.load %arg1[%c0_53, %c4_54, %c16_55] : memref<2x24x96xf32, #tpu.memory_space<vmem>>, vector<2x16x64xf32>
    %85 = arith.addf %83, %84 : vector<2x16x64xf32>
    %c0_56 = arith.constant 0 : index
    %c4_57 = arith.constant 4 : index
    %c20_58 = arith.constant 20 : index
    %86 = vector.load %arg1[%c0_56, %c4_57, %c20_58] : memref<2x24x96xf32, #tpu.memory_space<vmem>>, vector<2x16x64xf32>
    %87 = arith.addf %85, %86 : vector<2x16x64xf32>
    %c0_59 = arith.constant 0 : index
    %c5 = arith.constant 5 : index
    %c12_60 = arith.constant 12 : index
    %88 = vector.load %arg1[%c0_59, %c5, %c12_60] : memref<2x24x96xf32, #tpu.memory_space<vmem>>, vector<2x16x64xf32>
    %89 = arith.addf %87, %88 : vector<2x16x64xf32>
    %c0_61 = arith.constant 0 : index
    %c5_62 = arith.constant 5 : index
    %c16_63 = arith.constant 16 : index
    %90 = vector.load %arg1[%c0_61, %c5_62, %c16_63] : memref<2x24x96xf32, #tpu.memory_space<vmem>>, vector<2x16x64xf32>
    %91 = arith.addf %89, %90 : vector<2x16x64xf32>
    %c0_64 = arith.constant 0 : index
    %c5_65 = arith.constant 5 : index
    %c20_66 = arith.constant 20 : index
    %92 = vector.load %arg1[%c0_64, %c5_65, %c20_66] : memref<2x24x96xf32, #tpu.memory_space<vmem>>, vector<2x16x64xf32>
    %93 = arith.addf %91, %92 : vector<2x16x64xf32>
    %c2_67 = arith.constant 2 : index
    %94 = memref.load %arg0[%c2_67] : memref<8xf32, #tpu.memory_space<smem>>
    %c0_68 = arith.constant 0 : index
    %c0_69 = arith.constant 0 : index
    %95 = vector.load %arg3[%c0_68, %c0_69] : memref<16x64xf32, #tpu.memory_space<vmem>>, vector<16x64xf32>
    %96 = vector.shape_cast %95 : vector<16x64xf32> to vector<1x16x64xf32>
    %97 = vector.broadcast %96 : vector<1x16x64xf32> to vector<2x16x64xf32>
    %98 = arith.mulf %93, %97 : vector<2x16x64xf32>
    %cst_70 = arith.constant dense<0.000000e+00> : vector<64xf32>
    %99 = vector.multi_reduction <add>, %98, %cst_70 [0, 1] : vector<2x16x64xf32> to vector<64xf32>
    %100 = vector.shape_cast %99 : vector<64xf32> to vector<1x1x64xf32>
    %101 = vector.shape_cast %100 : vector<1x1x64xf32> to vector<1x64xf32>
    %102 = arith.mulf %98, %98 : vector<2x16x64xf32>
    %cst_71 = arith.constant dense<0.000000e+00> : vector<64xf32>
    %103 = vector.multi_reduction <add>, %102, %cst_71 [0, 1] : vector<2x16x64xf32> to vector<64xf32>
    %104 = vector.shape_cast %103 : vector<64xf32> to vector<1x1x64xf32>
    %105 = vector.shape_cast %104 : vector<1x1x64xf32> to vector<1x64xf32>
    %c0_72 = arith.constant 0 : index
    %c0_73 = arith.constant 0 : index
    %106 = vector.load %arg4[%c0_72, %c0_73] : memref<64x4xf32, #tpu.memory_space<vmem>>, vector<64x4xf32>
    %cst_74 = arith.constant dense<0.000000e+00> : vector<1x4xf32>
    %107 = tpu.matmul %101, %106, %cst_74 {dimension_numbers = #tpu.dot_dimension_numbers<[1], [0], [0], [1], [0, 0, 1, 1], [], []>} : vector<1x64xf32>, vector<64x4xf32>, vector<1x4xf32> -> vector<1x4xf32>
    %c0_75 = arith.constant 0 : index
    %c0_76 = arith.constant 0 : index
    %108 = vector.load %arg4[%c0_75, %c0_76] : memref<64x4xf32, #tpu.memory_space<vmem>>, vector<64x4xf32>
    %cst_77 = arith.constant dense<0.000000e+00> : vector<1x4xf32>
    %109 = tpu.matmul %105, %108, %cst_77 {dimension_numbers = #tpu.dot_dimension_numbers<[1], [0], [0], [1], [0, 0, 1, 1], [], []>} : vector<1x64xf32>, vector<64x4xf32>, vector<1x4xf32> -> vector<1x4xf32>
    %cst_78 = arith.constant 0.001953125 : f32
    %110 = vector.broadcast %cst_78 : f32 to vector<1x4xf32>
    %111 = arith.mulf %107, %110 : vector<1x4xf32>
    %cst_79 = arith.constant 0.001953125 : f32
    %112 = vector.broadcast %cst_79 : f32 to vector<1x4xf32>
    %113 = arith.mulf %109, %112 : vector<1x4xf32>
    %114 = arith.mulf %111, %111 : vector<1x4xf32>
    %115 = arith.subf %113, %114 : vector<1x4xf32>
    %cst_80 = arith.constant 9.99999974E-6 : f32
    %116 = vector.broadcast %cst_80 : f32 to vector<1x4xf32>
    %117 = arith.addf %115, %116 : vector<1x4xf32>
    %118 = math.rsqrt %117 : vector<1x4xf32>
    %cst_81 = arith.constant 0.000000e+00 : f32
    %119 = vector.broadcast %cst_81 : f32 to vector<1x4xf32>
    %120 = arith.subf %119, %111 : vector<1x4xf32>
    %121 = arith.mulf %120, %118 : vector<1x4xf32>
    %c0_82 = arith.constant 0 : index
    %c0_83 = arith.constant 0 : index
    %122 = vector.load %arg5[%c0_82, %c0_83] : memref<4x64xf32, #tpu.memory_space<vmem>>, vector<4x64xf32>
    %cst_84 = arith.constant dense<0.000000e+00> : vector<1x64xf32>
    %123 = tpu.matmul %118, %122, %cst_84 {dimension_numbers = #tpu.dot_dimension_numbers<[1], [0], [0], [1], [0, 0, 1, 1], [], []>} : vector<1x4xf32>, vector<4x64xf32>, vector<1x64xf32> -> vector<1x64xf32>
    %c0_85 = arith.constant 0 : index
    %c0_86 = arith.constant 0 : index
    %124 = vector.load %arg5[%c0_85, %c0_86] : memref<4x64xf32, #tpu.memory_space<vmem>>, vector<4x64xf32>
    %cst_87 = arith.constant dense<0.000000e+00> : vector<1x64xf32>
    %125 = tpu.matmul %121, %124, %cst_87 {dimension_numbers = #tpu.dot_dimension_numbers<[1], [0], [0], [1], [0, 0, 1, 1], [], []>} : vector<1x4xf32>, vector<4x64xf32>, vector<1x64xf32> -> vector<1x64xf32>
    %126 = vector.shape_cast %123 : vector<1x64xf32> to vector<1x1x64xf32>
    %127 = vector.broadcast %126 : vector<1x1x64xf32> to vector<2x16x64xf32>
    %128 = arith.mulf %98, %127 : vector<2x16x64xf32>
    %129 = vector.shape_cast %125 : vector<1x64xf32> to vector<1x1x64xf32>
    %130 = vector.broadcast %129 : vector<1x1x64xf32> to vector<2x16x64xf32>
    %131 = arith.addf %128, %130 : vector<2x16x64xf32>
    %132 = vector.broadcast %94 : f32 to vector<2x16x64xf32>
    %133 = arith.mulf %132, %131 : vector<2x16x64xf32>
    %134 = arith.addf %74, %133 : vector<2x16x64xf32>
    %c4_88 = arith.constant 4 : index
    %135 = memref.load %arg0[%c4_88] : memref<8xf32, #tpu.memory_space<smem>>
    %cst_89 = arith.constant 0.000000e+00 : f32
    %136 = vector.broadcast %cst_89 : f32 to vector<2x16x64xf32>
    %c0_90 = arith.constant 0 : index
    %c3_91 = arith.constant 3 : index
    %c12_92 = arith.constant 12 : index
    %137 = vector.load %arg19[%c0_90, %c3_91, %c12_92] : memref<2x24x96xf32, #tpu.memory_space<vmem>>, vector<2x16x64xf32>
    %c0_93 = arith.constant 0 : index
    %c0_94 = arith.constant 0 : index
    %c0_95 = arith.constant 0 : index
    %138 = vector.load %arg6[%c0_93, %c0_94, %c0_95] : memref<3x3x64xf32, #tpu.memory_space<vmem>>, vector<1x1x64xf32>
    %139 = vector.shape_cast %138 : vector<1x1x64xf32> to vector<64xf32>
    %140 = vector.shape_cast %139 : vector<64xf32> to vector<1x1x64xf32>
    %141 = vector.broadcast %140 : vector<1x1x64xf32> to vector<2x16x64xf32>
    %142 = arith.mulf %137, %141 : vector<2x16x64xf32>
    %143 = arith.addf %136, %142 : vector<2x16x64xf32>
    %c0_96 = arith.constant 0 : index
    %c3_97 = arith.constant 3 : index
    %c16_98 = arith.constant 16 : index
    %144 = vector.load %arg19[%c0_96, %c3_97, %c16_98] : memref<2x24x96xf32, #tpu.memory_space<vmem>>, vector<2x16x64xf32>
    %c0_99 = arith.constant 0 : index
    %c1_100 = arith.constant 1 : index
    %c0_101 = arith.constant 0 : index
    %145 = vector.load %arg6[%c0_99, %c1_100, %c0_101] : memref<3x3x64xf32, #tpu.memory_space<vmem>>, vector<1x1x64xf32>
    %146 = vector.shape_cast %145 : vector<1x1x64xf32> to vector<64xf32>
    %147 = vector.shape_cast %146 : vector<64xf32> to vector<1x1x64xf32>
    %148 = vector.broadcast %147 : vector<1x1x64xf32> to vector<2x16x64xf32>
    %149 = arith.mulf %144, %148 : vector<2x16x64xf32>
    %150 = arith.addf %143, %149 : vector<2x16x64xf32>
    %c0_102 = arith.constant 0 : index
    %c3_103 = arith.constant 3 : index
    %c20_104 = arith.constant 20 : index
    %151 = vector.load %arg19[%c0_102, %c3_103, %c20_104] : memref<2x24x96xf32, #tpu.memory_space<vmem>>, vector<2x16x64xf32>
    %c0_105 = arith.constant 0 : index
    %c2_106 = arith.constant 2 : index
    %c0_107 = arith.constant 0 : index
    %152 = vector.load %arg6[%c0_105, %c2_106, %c0_107] : memref<3x3x64xf32, #tpu.memory_space<vmem>>, vector<1x1x64xf32>
    %153 = vector.shape_cast %152 : vector<1x1x64xf32> to vector<64xf32>
    %154 = vector.shape_cast %153 : vector<64xf32> to vector<1x1x64xf32>
    %155 = vector.broadcast %154 : vector<1x1x64xf32> to vector<2x16x64xf32>
    %156 = arith.mulf %151, %155 : vector<2x16x64xf32>
    %157 = arith.addf %150, %156 : vector<2x16x64xf32>
    %c0_108 = arith.constant 0 : index
    %c4_109 = arith.constant 4 : index
    %c12_110 = arith.constant 12 : index
    %158 = vector.load %arg19[%c0_108, %c4_109, %c12_110] : memref<2x24x96xf32, #tpu.memory_space<vmem>>, vector<2x16x64xf32>
    %c1_111 = arith.constant 1 : index
    %c0_112 = arith.constant 0 : index
    %c0_113 = arith.constant 0 : index
    %159 = vector.load %arg6[%c1_111, %c0_112, %c0_113] : memref<3x3x64xf32, #tpu.memory_space<vmem>>, vector<1x1x64xf32>
    %160 = vector.shape_cast %159 : vector<1x1x64xf32> to vector<64xf32>
    %161 = vector.shape_cast %160 : vector<64xf32> to vector<1x1x64xf32>
    %162 = vector.broadcast %161 : vector<1x1x64xf32> to vector<2x16x64xf32>
    %163 = arith.mulf %158, %162 : vector<2x16x64xf32>
    %164 = arith.addf %157, %163 : vector<2x16x64xf32>
    %c0_114 = arith.constant 0 : index
    %c4_115 = arith.constant 4 : index
    %c16_116 = arith.constant 16 : index
    %165 = vector.load %arg19[%c0_114, %c4_115, %c16_116] : memref<2x24x96xf32, #tpu.memory_space<vmem>>, vector<2x16x64xf32>
    %c1_117 = arith.constant 1 : index
    %c1_118 = arith.constant 1 : index
    %c0_119 = arith.constant 0 : index
    %166 = vector.load %arg6[%c1_117, %c1_118, %c0_119] : memref<3x3x64xf32, #tpu.memory_space<vmem>>, vector<1x1x64xf32>
    %167 = vector.shape_cast %166 : vector<1x1x64xf32> to vector<64xf32>
    %168 = vector.shape_cast %167 : vector<64xf32> to vector<1x1x64xf32>
    %169 = vector.broadcast %168 : vector<1x1x64xf32> to vector<2x16x64xf32>
    %170 = arith.mulf %165, %169 : vector<2x16x64xf32>
    %171 = arith.addf %164, %170 : vector<2x16x64xf32>
    %c0_120 = arith.constant 0 : index
    %c4_121 = arith.constant 4 : index
    %c20_122 = arith.constant 20 : index
    %172 = vector.load %arg19[%c0_120, %c4_121, %c20_122] : memref<2x24x96xf32, #tpu.memory_space<vmem>>, vector<2x16x64xf32>
    %c1_123 = arith.constant 1 : index
    %c2_124 = arith.constant 2 : index
    %c0_125 = arith.constant 0 : index
    %173 = vector.load %arg6[%c1_123, %c2_124, %c0_125] : memref<3x3x64xf32, #tpu.memory_space<vmem>>, vector<1x1x64xf32>
    %174 = vector.shape_cast %173 : vector<1x1x64xf32> to vector<64xf32>
    %175 = vector.shape_cast %174 : vector<64xf32> to vector<1x1x64xf32>
    %176 = vector.broadcast %175 : vector<1x1x64xf32> to vector<2x16x64xf32>
    %177 = arith.mulf %172, %176 : vector<2x16x64xf32>
    %178 = arith.addf %171, %177 : vector<2x16x64xf32>
    %c0_126 = arith.constant 0 : index
    %c5_127 = arith.constant 5 : index
    %c12_128 = arith.constant 12 : index
    %179 = vector.load %arg19[%c0_126, %c5_127, %c12_128] : memref<2x24x96xf32, #tpu.memory_space<vmem>>, vector<2x16x64xf32>
    %c2_129 = arith.constant 2 : index
    %c0_130 = arith.constant 0 : index
    %c0_131 = arith.constant 0 : index
    %180 = vector.load %arg6[%c2_129, %c0_130, %c0_131] : memref<3x3x64xf32, #tpu.memory_space<vmem>>, vector<1x1x64xf32>
    %181 = vector.shape_cast %180 : vector<1x1x64xf32> to vector<64xf32>
    %182 = vector.shape_cast %181 : vector<64xf32> to vector<1x1x64xf32>
    %183 = vector.broadcast %182 : vector<1x1x64xf32> to vector<2x16x64xf32>
    %184 = arith.mulf %179, %183 : vector<2x16x64xf32>
    %185 = arith.addf %178, %184 : vector<2x16x64xf32>
    %c0_132 = arith.constant 0 : index
    %c5_133 = arith.constant 5 : index
    %c16_134 = arith.constant 16 : index
    %186 = vector.load %arg19[%c0_132, %c5_133, %c16_134] : memref<2x24x96xf32, #tpu.memory_space<vmem>>, vector<2x16x64xf32>
    %c2_135 = arith.constant 2 : index
    %c1_136 = arith.constant 1 : index
    %c0_137 = arith.constant 0 : index
    %187 = vector.load %arg6[%c2_135, %c1_136, %c0_137] : memref<3x3x64xf32, #tpu.memory_space<vmem>>, vector<1x1x64xf32>
    %188 = vector.shape_cast %187 : vector<1x1x64xf32> to vector<64xf32>
    %189 = vector.shape_cast %188 : vector<64xf32> to vector<1x1x64xf32>
    %190 = vector.broadcast %189 : vector<1x1x64xf32> to vector<2x16x64xf32>
    %191 = arith.mulf %186, %190 : vector<2x16x64xf32>
    %192 = arith.addf %185, %191 : vector<2x16x64xf32>
    %c0_138 = arith.constant 0 : index
    %c5_139 = arith.constant 5 : index
    %c20_140 = arith.constant 20 : index
    %193 = vector.load %arg19[%c0_138, %c5_139, %c20_140] : memref<2x24x96xf32, #tpu.memory_space<vmem>>, vector<2x16x64xf32>
    %c2_141 = arith.constant 2 : index
    %c2_142 = arith.constant 2 : index
    %c0_143 = arith.constant 0 : index
    %194 = vector.load %arg6[%c2_141, %c2_142, %c0_143] : memref<3x3x64xf32, #tpu.memory_space<vmem>>, vector<1x1x64xf32>
    %195 = vector.shape_cast %194 : vector<1x1x64xf32> to vector<64xf32>
    %196 = vector.shape_cast %195 : vector<64xf32> to vector<1x1x64xf32>
    %197 = vector.broadcast %196 : vector<1x1x64xf32> to vector<2x16x64xf32>
    %198 = arith.mulf %193, %197 : vector<2x16x64xf32>
    %199 = arith.addf %192, %198 : vector<2x16x64xf32>
    %200 = vector.shape_cast %199 : vector<2x16x64xf32> to vector<32x64xf32>
    %c0_144 = arith.constant 0 : index
    %c0_145 = arith.constant 0 : index
    %201 = vector.load %arg7[%c0_144, %c0_145] : memref<64x64xf32, #tpu.memory_space<vmem>>, vector<64x64xf32>
    %cst_146 = arith.constant dense<0.000000e+00> : vector<32x64xf32>
    %202 = tpu.matmul %200, %201, %cst_146 {dimension_numbers = #tpu.dot_dimension_numbers<[1], [0], [0], [1], [0, 0, 1, 1], [], []>} : vector<32x64xf32>, vector<64x64xf32>, vector<32x64xf32> -> vector<32x64xf32>
    %203 = vector.shape_cast %202 : vector<32x64xf32> to vector<2x16x64xf32>
    %cst_147 = arith.constant dense<0.000000e+00> : vector<64xf32>
    %204 = vector.multi_reduction <add>, %203, %cst_147 [0, 1] : vector<2x16x64xf32> to vector<64xf32>
    %205 = vector.shape_cast %204 : vector<64xf32> to vector<1x1x64xf32>
    %206 = vector.shape_cast %205 : vector<1x1x64xf32> to vector<1x64xf32>
    %207 = arith.mulf %203, %203 : vector<2x16x64xf32>
    %cst_148 = arith.constant dense<0.000000e+00> : vector<64xf32>
    %208 = vector.multi_reduction <add>, %207, %cst_148 [0, 1] : vector<2x16x64xf32> to vector<64xf32>
    %209 = vector.shape_cast %208 : vector<64xf32> to vector<1x1x64xf32>
    %210 = vector.shape_cast %209 : vector<1x1x64xf32> to vector<1x64xf32>
    %c0_149 = arith.constant 0 : index
    %c0_150 = arith.constant 0 : index
    %211 = vector.load %arg4[%c0_149, %c0_150] : memref<64x4xf32, #tpu.memory_space<vmem>>, vector<64x4xf32>
    %cst_151 = arith.constant dense<0.000000e+00> : vector<1x4xf32>
    %212 = tpu.matmul %206, %211, %cst_151 {dimension_numbers = #tpu.dot_dimension_numbers<[1], [0], [0], [1], [0, 0, 1, 1], [], []>} : vector<1x64xf32>, vector<64x4xf32>, vector<1x4xf32> -> vector<1x4xf32>
    %c0_152 = arith.constant 0 : index
    %c0_153 = arith.constant 0 : index
    %213 = vector.load %arg4[%c0_152, %c0_153] : memref<64x4xf32, #tpu.memory_space<vmem>>, vector<64x4xf32>
    %cst_154 = arith.constant dense<0.000000e+00> : vector<1x4xf32>
    %214 = tpu.matmul %210, %213, %cst_154 {dimension_numbers = #tpu.dot_dimension_numbers<[1], [0], [0], [1], [0, 0, 1, 1], [], []>} : vector<1x64xf32>, vector<64x4xf32>, vector<1x4xf32> -> vector<1x4xf32>
    %cst_155 = arith.constant 0.001953125 : f32
    %215 = vector.broadcast %cst_155 : f32 to vector<1x4xf32>
    %216 = arith.mulf %212, %215 : vector<1x4xf32>
    %cst_156 = arith.constant 0.001953125 : f32
    %217 = vector.broadcast %cst_156 : f32 to vector<1x4xf32>
    %218 = arith.mulf %214, %217 : vector<1x4xf32>
    %219 = arith.mulf %216, %216 : vector<1x4xf32>
    %220 = arith.subf %218, %219 : vector<1x4xf32>
    %cst_157 = arith.constant 9.99999974E-6 : f32
    %221 = vector.broadcast %cst_157 : f32 to vector<1x4xf32>
    %222 = arith.addf %220, %221 : vector<1x4xf32>
    %223 = math.rsqrt %222 : vector<1x4xf32>
    %cst_158 = arith.constant 0.000000e+00 : f32
    %224 = vector.broadcast %cst_158 : f32 to vector<1x4xf32>
    %225 = arith.subf %224, %216 : vector<1x4xf32>
    %226 = arith.mulf %225, %223 : vector<1x4xf32>
    %c0_159 = arith.constant 0 : index
    %c0_160 = arith.constant 0 : index
    %227 = vector.load %arg5[%c0_159, %c0_160] : memref<4x64xf32, #tpu.memory_space<vmem>>, vector<4x64xf32>
    %cst_161 = arith.constant dense<0.000000e+00> : vector<1x64xf32>
    %228 = tpu.matmul %223, %227, %cst_161 {dimension_numbers = #tpu.dot_dimension_numbers<[1], [0], [0], [1], [0, 0, 1, 1], [], []>} : vector<1x4xf32>, vector<4x64xf32>, vector<1x64xf32> -> vector<1x64xf32>
    %c0_162 = arith.constant 0 : index
    %c0_163 = arith.constant 0 : index
    %229 = vector.load %arg5[%c0_162, %c0_163] : memref<4x64xf32, #tpu.memory_space<vmem>>, vector<4x64xf32>
    %cst_164 = arith.constant dense<0.000000e+00> : vector<1x64xf32>
    %230 = tpu.matmul %226, %229, %cst_164 {dimension_numbers = #tpu.dot_dimension_numbers<[1], [0], [0], [1], [0, 0, 1, 1], [], []>} : vector<1x4xf32>, vector<4x64xf32>, vector<1x64xf32> -> vector<1x64xf32>
    %231 = vector.shape_cast %228 : vector<1x64xf32> to vector<1x1x64xf32>
    %232 = vector.broadcast %231 : vector<1x1x64xf32> to vector<2x16x64xf32>
    %233 = arith.mulf %203, %232 : vector<2x16x64xf32>
    %234 = vector.shape_cast %230 : vector<1x64xf32> to vector<1x1x64xf32>
    %235 = vector.broadcast %234 : vector<1x1x64xf32> to vector<2x16x64xf32>
    %236 = arith.addf %233, %235 : vector<2x16x64xf32>
    %cst_165 = arith.constant 0.000000e+00 : f32
    %237 = vector.broadcast %cst_165 : f32 to vector<2x16x64xf32>
    %238 = arith.maximumf %236, %237 : vector<2x16x64xf32>
    %c0_166 = arith.constant 0 : index
    %c2_167 = arith.constant 2 : index
    %c8 = arith.constant 8 : index
    %239 = vector.load %arg20[%c0_166, %c2_167, %c8] : memref<2x20x80xf32, #tpu.memory_space<vmem>>, vector<2x16x64xf32>
    tpu.vector_store %arg20[%c0_166, %c2_167, %c8], %238 {strides = array<i32>} : memref<2x20x80xf32, #tpu.memory_space<vmem>>, vector<2x16x64xf32>,
    %cst_168 = arith.constant 0.000000e+00 : f32
    %240 = vector.broadcast %cst_168 : f32 to vector<2x16x64xf32>
    %c0_169 = arith.constant 0 : index
    %c1_170 = arith.constant 1 : index
    %c4_171 = arith.constant 4 : index
    %241 = vector.load %arg20[%c0_169, %c1_170, %c4_171] : memref<2x20x80xf32, #tpu.memory_space<vmem>>, vector<2x16x64xf32>
    %c0_172 = arith.constant 0 : index
    %c0_173 = arith.constant 0 : index
    %c0_174 = arith.constant 0 : index
    %242 = vector.load %arg8[%c0_172, %c0_173, %c0_174] : memref<3x3x64xf32, #tpu.memory_space<vmem>>, vector<1x1x64xf32>
    %243 = vector.shape_cast %242 : vector<1x1x64xf32> to vector<64xf32>
    %244 = vector.shape_cast %243 : vector<64xf32> to vector<1x1x64xf32>
    %245 = vector.broadcast %244 : vector<1x1x64xf32> to vector<2x16x64xf32>
    %246 = arith.mulf %241, %245 : vector<2x16x64xf32>
    %247 = arith.addf %240, %246 : vector<2x16x64xf32>
    %c0_175 = arith.constant 0 : index
    %c1_176 = arith.constant 1 : index
    %c8_177 = arith.constant 8 : index
    %248 = vector.load %arg20[%c0_175, %c1_176, %c8_177] : memref<2x20x80xf32, #tpu.memory_space<vmem>>, vector<2x16x64xf32>
    %c0_178 = arith.constant 0 : index
    %c1_179 = arith.constant 1 : index
    %c0_180 = arith.constant 0 : index
    %249 = vector.load %arg8[%c0_178, %c1_179, %c0_180] : memref<3x3x64xf32, #tpu.memory_space<vmem>>, vector<1x1x64xf32>
    %250 = vector.shape_cast %249 : vector<1x1x64xf32> to vector<64xf32>
    %251 = vector.shape_cast %250 : vector<64xf32> to vector<1x1x64xf32>
    %252 = vector.broadcast %251 : vector<1x1x64xf32> to vector<2x16x64xf32>
    %253 = arith.mulf %248, %252 : vector<2x16x64xf32>
    %254 = arith.addf %247, %253 : vector<2x16x64xf32>
    %c0_181 = arith.constant 0 : index
    %c1_182 = arith.constant 1 : index
    %c12_183 = arith.constant 12 : index
    %255 = vector.load %arg20[%c0_181, %c1_182, %c12_183] : memref<2x20x80xf32, #tpu.memory_space<vmem>>, vector<2x16x64xf32>
    %c0_184 = arith.constant 0 : index
    %c2_185 = arith.constant 2 : index
    %c0_186 = arith.constant 0 : index
    %256 = vector.load %arg8[%c0_184, %c2_185, %c0_186] : memref<3x3x64xf32, #tpu.memory_space<vmem>>, vector<1x1x64xf32>
    %257 = vector.shape_cast %256 : vector<1x1x64xf32> to vector<64xf32>
    %258 = vector.shape_cast %257 : vector<64xf32> to vector<1x1x64xf32>
    %259 = vector.broadcast %258 : vector<1x1x64xf32> to vector<2x16x64xf32>
    %260 = arith.mulf %255, %259 : vector<2x16x64xf32>
    %261 = arith.addf %254, %260 : vector<2x16x64xf32>
    %c0_187 = arith.constant 0 : index
    %c2_188 = arith.constant 2 : index
    %c4_189 = arith.constant 4 : index
    %262 = vector.load %arg20[%c0_187, %c2_188, %c4_189] : memref<2x20x80xf32, #tpu.memory_space<vmem>>, vector<2x16x64xf32>
    %c1_190 = arith.constant 1 : index
    %c0_191 = arith.constant 0 : index
    %c0_192 = arith.constant 0 : index
    %263 = vector.load %arg8[%c1_190, %c0_191, %c0_192] : memref<3x3x64xf32, #tpu.memory_space<vmem>>, vector<1x1x64xf32>
    %264 = vector.shape_cast %263 : vector<1x1x64xf32> to vector<64xf32>
    %265 = vector.shape_cast %264 : vector<64xf32> to vector<1x1x64xf32>
    %266 = vector.broadcast %265 : vector<1x1x64xf32> to vector<2x16x64xf32>
    %267 = arith.mulf %262, %266 : vector<2x16x64xf32>
    %268 = arith.addf %261, %267 : vector<2x16x64xf32>
    %c0_193 = arith.constant 0 : index
    %c2_194 = arith.constant 2 : index
    %c8_195 = arith.constant 8 : index
    %269 = vector.load %arg20[%c0_193, %c2_194, %c8_195] : memref<2x20x80xf32, #tpu.memory_space<vmem>>, vector<2x16x64xf32>
    %c1_196 = arith.constant 1 : index
    %c1_197 = arith.constant 1 : index
    %c0_198 = arith.constant 0 : index
    %270 = vector.load %arg8[%c1_196, %c1_197, %c0_198] : memref<3x3x64xf32, #tpu.memory_space<vmem>>, vector<1x1x64xf32>
    %271 = vector.shape_cast %270 : vector<1x1x64xf32> to vector<64xf32>
    %272 = vector.shape_cast %271 : vector<64xf32> to vector<1x1x64xf32>
    %273 = vector.broadcast %272 : vector<1x1x64xf32> to vector<2x16x64xf32>
    %274 = arith.mulf %269, %273 : vector<2x16x64xf32>
    %275 = arith.addf %268, %274 : vector<2x16x64xf32>
    %c0_199 = arith.constant 0 : index
    %c2_200 = arith.constant 2 : index
    %c12_201 = arith.constant 12 : index
    %276 = vector.load %arg20[%c0_199, %c2_200, %c12_201] : memref<2x20x80xf32, #tpu.memory_space<vmem>>, vector<2x16x64xf32>
    %c1_202 = arith.constant 1 : index
    %c2_203 = arith.constant 2 : index
    %c0_204 = arith.constant 0 : index
    %277 = vector.load %arg8[%c1_202, %c2_203, %c0_204] : memref<3x3x64xf32, #tpu.memory_space<vmem>>, vector<1x1x64xf32>
    %278 = vector.shape_cast %277 : vector<1x1x64xf32> to vector<64xf32>
    %279 = vector.shape_cast %278 : vector<64xf32> to vector<1x1x64xf32>
    %280 = vector.broadcast %279 : vector<1x1x64xf32> to vector<2x16x64xf32>
    %281 = arith.mulf %276, %280 : vector<2x16x64xf32>
    %282 = arith.addf %275, %281 : vector<2x16x64xf32>
    %c0_205 = arith.constant 0 : index
    %c3_206 = arith.constant 3 : index
    %c4_207 = arith.constant 4 : index
    %283 = vector.load %arg20[%c0_205, %c3_206, %c4_207] : memref<2x20x80xf32, #tpu.memory_space<vmem>>, vector<2x16x64xf32>
    %c2_208 = arith.constant 2 : index
    %c0_209 = arith.constant 0 : index
    %c0_210 = arith.constant 0 : index
    %284 = vector.load %arg8[%c2_208, %c0_209, %c0_210] : memref<3x3x64xf32, #tpu.memory_space<vmem>>, vector<1x1x64xf32>
    %285 = vector.shape_cast %284 : vector<1x1x64xf32> to vector<64xf32>
    %286 = vector.shape_cast %285 : vector<64xf32> to vector<1x1x64xf32>
    %287 = vector.broadcast %286 : vector<1x1x64xf32> to vector<2x16x64xf32>
    %288 = arith.mulf %283, %287 : vector<2x16x64xf32>
    %289 = arith.addf %282, %288 : vector<2x16x64xf32>
    %c0_211 = arith.constant 0 : index
    %c3_212 = arith.constant 3 : index
    %c8_213 = arith.constant 8 : index
    %290 = vector.load %arg20[%c0_211, %c3_212, %c8_213] : memref<2x20x80xf32, #tpu.memory_space<vmem>>, vector<2x16x64xf32>
    %c2_214 = arith.constant 2 : index
    %c1_215 = arith.constant 1 : index
    %c0_216 = arith.constant 0 : index
    %291 = vector.load %arg8[%c2_214, %c1_215, %c0_216] : memref<3x3x64xf32, #tpu.memory_space<vmem>>, vector<1x1x64xf32>
    %292 = vector.shape_cast %291 : vector<1x1x64xf32> to vector<64xf32>
    %293 = vector.shape_cast %292 : vector<64xf32> to vector<1x1x64xf32>
    %294 = vector.broadcast %293 : vector<1x1x64xf32> to vector<2x16x64xf32>
    %295 = arith.mulf %290, %294 : vector<2x16x64xf32>
    %296 = arith.addf %289, %295 : vector<2x16x64xf32>
    %c0_217 = arith.constant 0 : index
    %c3_218 = arith.constant 3 : index
    %c12_219 = arith.constant 12 : index
    %297 = vector.load %arg20[%c0_217, %c3_218, %c12_219] : memref<2x20x80xf32, #tpu.memory_space<vmem>>, vector<2x16x64xf32>
    %c2_220 = arith.constant 2 : index
    %c2_221 = arith.constant 2 : index
    %c0_222 = arith.constant 0 : index
    %298 = vector.load %arg8[%c2_220, %c2_221, %c0_222] : memref<3x3x64xf32, #tpu.memory_space<vmem>>, vector<1x1x64xf32>
    %299 = vector.shape_cast %298 : vector<1x1x64xf32> to vector<64xf32>
    %300 = vector.shape_cast %299 : vector<64xf32> to vector<1x1x64xf32>
    %301 = vector.broadcast %300 : vector<1x1x64xf32> to vector<2x16x64xf32>
    %302 = arith.mulf %297, %301 : vector<2x16x64xf32>
    %303 = arith.addf %296, %302 : vector<2x16x64xf32>
    %304 = vector.shape_cast %303 : vector<2x16x64xf32> to vector<32x64xf32>
    %c0_223 = arith.constant 0 : index
    %c0_224 = arith.constant 0 : index
    %305 = vector.load %arg9[%c0_223, %c0_224] : memref<64x64xf32, #tpu.memory_space<vmem>>, vector<64x64xf32>
    %cst_225 = arith.constant dense<0.000000e+00> : vector<32x64xf32>
    %306 = tpu.matmul %304, %305, %cst_225 {dimension_numbers = #tpu.dot_dimension_numbers<[1], [0], [0], [1], [0, 0, 1, 1], [], []>} : vector<32x64xf32>, vector<64x64xf32>, vector<32x64xf32> -> vector<32x64xf32>
    %307 = vector.shape_cast %306 : vector<32x64xf32> to vector<2x16x64xf32>
    %cst_226 = arith.constant dense<0.000000e+00> : vector<64xf32>
    %308 = vector.multi_reduction <add>, %307, %cst_226 [0, 1] : vector<2x16x64xf32> to vector<64xf32>
    %309 = vector.shape_cast %308 : vector<64xf32> to vector<1x1x64xf32>
    %310 = vector.shape_cast %309 : vector<1x1x64xf32> to vector<1x64xf32>
    %311 = arith.mulf %307, %307 : vector<2x16x64xf32>
    %cst_227 = arith.constant dense<0.000000e+00> : vector<64xf32>
    %312 = vector.multi_reduction <add>, %311, %cst_227 [0, 1] : vector<2x16x64xf32> to vector<64xf32>
    %313 = vector.shape_cast %312 : vector<64xf32> to vector<1x1x64xf32>
    %314 = vector.shape_cast %313 : vector<1x1x64xf32> to vector<1x64xf32>
    %c0_228 = arith.constant 0 : index
    %c0_229 = arith.constant 0 : index
    %315 = vector.load %arg4[%c0_228, %c0_229] : memref<64x4xf32, #tpu.memory_space<vmem>>, vector<64x4xf32>
    %cst_230 = arith.constant dense<0.000000e+00> : vector<1x4xf32>
    %316 = tpu.matmul %310, %315, %cst_230 {dimension_numbers = #tpu.dot_dimension_numbers<[1], [0], [0], [1], [0, 0, 1, 1], [], []>} : vector<1x64xf32>, vector<64x4xf32>, vector<1x4xf32> -> vector<1x4xf32>
    %c0_231 = arith.constant 0 : index
    %c0_232 = arith.constant 0 : index
    %317 = vector.load %arg4[%c0_231, %c0_232] : memref<64x4xf32, #tpu.memory_space<vmem>>, vector<64x4xf32>
    %cst_233 = arith.constant dense<0.000000e+00> : vector<1x4xf32>
    %318 = tpu.matmul %314, %317, %cst_233 {dimension_numbers = #tpu.dot_dimension_numbers<[1], [0], [0], [1], [0, 0, 1, 1], [], []>} : vector<1x64xf32>, vector<64x4xf32>, vector<1x4xf32> -> vector<1x4xf32>
    %cst_234 = arith.constant 0.001953125 : f32
    %319 = vector.broadcast %cst_234 : f32 to vector<1x4xf32>
    %320 = arith.mulf %316, %319 : vector<1x4xf32>
    %cst_235 = arith.constant 0.001953125 : f32
    %321 = vector.broadcast %cst_235 : f32 to vector<1x4xf32>
    %322 = arith.mulf %318, %321 : vector<1x4xf32>
    %323 = arith.mulf %320, %320 : vector<1x4xf32>
    %324 = arith.subf %322, %323 : vector<1x4xf32>
    %cst_236 = arith.constant 9.99999974E-6 : f32
    %325 = vector.broadcast %cst_236 : f32 to vector<1x4xf32>
    %326 = arith.addf %324, %325 : vector<1x4xf32>
    %327 = math.rsqrt %326 : vector<1x4xf32>
    %cst_237 = arith.constant 0.000000e+00 : f32
    %328 = vector.broadcast %cst_237 : f32 to vector<1x4xf32>
    %329 = arith.subf %328, %320 : vector<1x4xf32>
    %330 = arith.mulf %329, %327 : vector<1x4xf32>
    %c0_238 = arith.constant 0 : index
    %c0_239 = arith.constant 0 : index
    %331 = vector.load %arg5[%c0_238, %c0_239] : memref<4x64xf32, #tpu.memory_space<vmem>>, vector<4x64xf32>
    %cst_240 = arith.constant dense<0.000000e+00> : vector<1x64xf32>
    %332 = tpu.matmul %327, %331, %cst_240 {dimension_numbers = #tpu.dot_dimension_numbers<[1], [0], [0], [1], [0, 0, 1, 1], [], []>} : vector<1x4xf32>, vector<4x64xf32>, vector<1x64xf32> -> vector<1x64xf32>
    %c0_241 = arith.constant 0 : index
    %c0_242 = arith.constant 0 : index
    %333 = vector.load %arg5[%c0_241, %c0_242] : memref<4x64xf32, #tpu.memory_space<vmem>>, vector<4x64xf32>
    %cst_243 = arith.constant dense<0.000000e+00> : vector<1x64xf32>
    %334 = tpu.matmul %330, %333, %cst_243 {dimension_numbers = #tpu.dot_dimension_numbers<[1], [0], [0], [1], [0, 0, 1, 1], [], []>} : vector<1x4xf32>, vector<4x64xf32>, vector<1x64xf32> -> vector<1x64xf32>
    %335 = vector.shape_cast %332 : vector<1x64xf32> to vector<1x1x64xf32>
    %336 = vector.broadcast %335 : vector<1x1x64xf32> to vector<2x16x64xf32>
    %337 = arith.mulf %307, %336 : vector<2x16x64xf32>
    %338 = vector.shape_cast %334 : vector<1x64xf32> to vector<1x1x64xf32>
    %339 = vector.broadcast %338 : vector<1x1x64xf32> to vector<2x16x64xf32>
    %340 = arith.addf %337, %339 : vector<2x16x64xf32>
    %341 = vector.broadcast %135 : f32 to vector<2x16x64xf32>
    %342 = arith.mulf %341, %340 : vector<2x16x64xf32>
    %343 = arith.addf %134, %342 : vector<2x16x64xf32>
    %c5_244 = arith.constant 5 : index
    %344 = memref.load %arg0[%c5_244] : memref<8xf32, #tpu.memory_space<smem>>
    %cst_245 = arith.constant 0.000000e+00 : f32
    %345 = vector.broadcast %cst_245 : f32 to vector<2x16x64xf32>
    %c0_246 = arith.constant 0 : index
    %c2_247 = arith.constant 2 : index
    %c8_248 = arith.constant 8 : index
    %346 = vector.load %arg19[%c0_246, %c2_247, %c8_248] : memref<2x24x96xf32, #tpu.memory_space<vmem>>, vector<2x16x64xf32>
    %c0_249 = arith.constant 0 : index
    %c0_250 = arith.constant 0 : index
    %c0_251 = arith.constant 0 : index
    %347 = vector.load %arg10[%c0_249, %c0_250, %c0_251] : memref<5x5x64xf32, #tpu.memory_space<vmem>>, vector<1x1x64xf32>
    %348 = vector.shape_cast %347 : vector<1x1x64xf32> to vector<64xf32>
    %349 = vector.shape_cast %348 : vector<64xf32> to vector<1x1x64xf32>
    %350 = vector.broadcast %349 : vector<1x1x64xf32> to vector<2x16x64xf32>
    %351 = arith.mulf %346, %350 : vector<2x16x64xf32>
    %352 = arith.addf %345, %351 : vector<2x16x64xf32>
    %c0_252 = arith.constant 0 : index
    %c2_253 = arith.constant 2 : index
    %c12_254 = arith.constant 12 : index
    %353 = vector.load %arg19[%c0_252, %c2_253, %c12_254] : memref<2x24x96xf32, #tpu.memory_space<vmem>>, vector<2x16x64xf32>
    %c0_255 = arith.constant 0 : index
    %c1_256 = arith.constant 1 : index
    %c0_257 = arith.constant 0 : index
    %354 = vector.load %arg10[%c0_255, %c1_256, %c0_257] : memref<5x5x64xf32, #tpu.memory_space<vmem>>, vector<1x1x64xf32>
    %355 = vector.shape_cast %354 : vector<1x1x64xf32> to vector<64xf32>
    %356 = vector.shape_cast %355 : vector<64xf32> to vector<1x1x64xf32>
    %357 = vector.broadcast %356 : vector<1x1x64xf32> to vector<2x16x64xf32>
    %358 = arith.mulf %353, %357 : vector<2x16x64xf32>
    %359 = arith.addf %352, %358 : vector<2x16x64xf32>
    %c0_258 = arith.constant 0 : index
    %c2_259 = arith.constant 2 : index
    %c16_260 = arith.constant 16 : index
    %360 = vector.load %arg19[%c0_258, %c2_259, %c16_260] : memref<2x24x96xf32, #tpu.memory_space<vmem>>, vector<2x16x64xf32>
    %c0_261 = arith.constant 0 : index
    %c2_262 = arith.constant 2 : index
    %c0_263 = arith.constant 0 : index
    %361 = vector.load %arg10[%c0_261, %c2_262, %c0_263] : memref<5x5x64xf32, #tpu.memory_space<vmem>>, vector<1x1x64xf32>
    %362 = vector.shape_cast %361 : vector<1x1x64xf32> to vector<64xf32>
    %363 = vector.shape_cast %362 : vector<64xf32> to vector<1x1x64xf32>
    %364 = vector.broadcast %363 : vector<1x1x64xf32> to vector<2x16x64xf32>
    %365 = arith.mulf %360, %364 : vector<2x16x64xf32>
    %366 = arith.addf %359, %365 : vector<2x16x64xf32>
    %c0_264 = arith.constant 0 : index
    %c2_265 = arith.constant 2 : index
    %c20_266 = arith.constant 20 : index
    %367 = vector.load %arg19[%c0_264, %c2_265, %c20_266] : memref<2x24x96xf32, #tpu.memory_space<vmem>>, vector<2x16x64xf32>
    %c0_267 = arith.constant 0 : index
    %c3_268 = arith.constant 3 : index
    %c0_269 = arith.constant 0 : index
    %368 = vector.load %arg10[%c0_267, %c3_268, %c0_269] : memref<5x5x64xf32, #tpu.memory_space<vmem>>, vector<1x1x64xf32>
    %369 = vector.shape_cast %368 : vector<1x1x64xf32> to vector<64xf32>
    %370 = vector.shape_cast %369 : vector<64xf32> to vector<1x1x64xf32>
    %371 = vector.broadcast %370 : vector<1x1x64xf32> to vector<2x16x64xf32>
    %372 = arith.mulf %367, %371 : vector<2x16x64xf32>
    %373 = arith.addf %366, %372 : vector<2x16x64xf32>
    %c0_270 = arith.constant 0 : index
    %c2_271 = arith.constant 2 : index
    %c24 = arith.constant 24 : index
    %374 = vector.load %arg19[%c0_270, %c2_271, %c24] : memref<2x24x96xf32, #tpu.memory_space<vmem>>, vector<2x16x64xf32>
    %c0_272 = arith.constant 0 : index
    %c4_273 = arith.constant 4 : index
    %c0_274 = arith.constant 0 : index
    %375 = vector.load %arg10[%c0_272, %c4_273, %c0_274] : memref<5x5x64xf32, #tpu.memory_space<vmem>>, vector<1x1x64xf32>
    %376 = vector.shape_cast %375 : vector<1x1x64xf32> to vector<64xf32>
    %377 = vector.shape_cast %376 : vector<64xf32> to vector<1x1x64xf32>
    %378 = vector.broadcast %377 : vector<1x1x64xf32> to vector<2x16x64xf32>
    %379 = arith.mulf %374, %378 : vector<2x16x64xf32>
    %380 = arith.addf %373, %379 : vector<2x16x64xf32>
    %c0_275 = arith.constant 0 : index
    %c3_276 = arith.constant 3 : index
    %c8_277 = arith.constant 8 : index
    %381 = vector.load %arg19[%c0_275, %c3_276, %c8_277] : memref<2x24x96xf32, #tpu.memory_space<vmem>>, vector<2x16x64xf32>
    %c1_278 = arith.constant 1 : index
    %c0_279 = arith.constant 0 : index
    %c0_280 = arith.constant 0 : index
    %382 = vector.load %arg10[%c1_278, %c0_279, %c0_280] : memref<5x5x64xf32, #tpu.memory_space<vmem>>, vector<1x1x64xf32>
    %383 = vector.shape_cast %382 : vector<1x1x64xf32> to vector<64xf32>
    %384 = vector.shape_cast %383 : vector<64xf32> to vector<1x1x64xf32>
    %385 = vector.broadcast %384 : vector<1x1x64xf32> to vector<2x16x64xf32>
    %386 = arith.mulf %381, %385 : vector<2x16x64xf32>
    %387 = arith.addf %380, %386 : vector<2x16x64xf32>
    %c0_281 = arith.constant 0 : index
    %c3_282 = arith.constant 3 : index
    %c12_283 = arith.constant 12 : index
    %388 = vector.load %arg19[%c0_281, %c3_282, %c12_283] : memref<2x24x96xf32, #tpu.memory_space<vmem>>, vector<2x16x64xf32>
    %c1_284 = arith.constant 1 : index
    %c1_285 = arith.constant 1 : index
    %c0_286 = arith.constant 0 : index
    %389 = vector.load %arg10[%c1_284, %c1_285, %c0_286] : memref<5x5x64xf32, #tpu.memory_space<vmem>>, vector<1x1x64xf32>
    %390 = vector.shape_cast %389 : vector<1x1x64xf32> to vector<64xf32>
    %391 = vector.shape_cast %390 : vector<64xf32> to vector<1x1x64xf32>
    %392 = vector.broadcast %391 : vector<1x1x64xf32> to vector<2x16x64xf32>
    %393 = arith.mulf %388, %392 : vector<2x16x64xf32>
    %394 = arith.addf %387, %393 : vector<2x16x64xf32>
    %c0_287 = arith.constant 0 : index
    %c3_288 = arith.constant 3 : index
    %c16_289 = arith.constant 16 : index
    %395 = vector.load %arg19[%c0_287, %c3_288, %c16_289] : memref<2x24x96xf32, #tpu.memory_space<vmem>>, vector<2x16x64xf32>
    %c1_290 = arith.constant 1 : index
    %c2_291 = arith.constant 2 : index
    %c0_292 = arith.constant 0 : index
    %396 = vector.load %arg10[%c1_290, %c2_291, %c0_292] : memref<5x5x64xf32, #tpu.memory_space<vmem>>, vector<1x1x64xf32>
    %397 = vector.shape_cast %396 : vector<1x1x64xf32> to vector<64xf32>
    %398 = vector.shape_cast %397 : vector<64xf32> to vector<1x1x64xf32>
    %399 = vector.broadcast %398 : vector<1x1x64xf32> to vector<2x16x64xf32>
    %400 = arith.mulf %395, %399 : vector<2x16x64xf32>
    %401 = arith.addf %394, %400 : vector<2x16x64xf32>
    %c0_293 = arith.constant 0 : index
    %c3_294 = arith.constant 3 : index
    %c20_295 = arith.constant 20 : index
    %402 = vector.load %arg19[%c0_293, %c3_294, %c20_295] : memref<2x24x96xf32, #tpu.memory_space<vmem>>, vector<2x16x64xf32>
    %c1_296 = arith.constant 1 : index
    %c3_297 = arith.constant 3 : index
    %c0_298 = arith.constant 0 : index
    %403 = vector.load %arg10[%c1_296, %c3_297, %c0_298] : memref<5x5x64xf32, #tpu.memory_space<vmem>>, vector<1x1x64xf32>
    %404 = vector.shape_cast %403 : vector<1x1x64xf32> to vector<64xf32>
    %405 = vector.shape_cast %404 : vector<64xf32> to vector<1x1x64xf32>
    %406 = vector.broadcast %405 : vector<1x1x64xf32> to vector<2x16x64xf32>
    %407 = arith.mulf %402, %406 : vector<2x16x64xf32>
    %408 = arith.addf %401, %407 : vector<2x16x64xf32>
    %c0_299 = arith.constant 0 : index
    %c3_300 = arith.constant 3 : index
    %c24_301 = arith.constant 24 : index
    %409 = vector.load %arg19[%c0_299, %c3_300, %c24_301] : memref<2x24x96xf32, #tpu.memory_space<vmem>>, vector<2x16x64xf32>
    %c1_302 = arith.constant 1 : index
    %c4_303 = arith.constant 4 : index
    %c0_304 = arith.constant 0 : index
    %410 = vector.load %arg10[%c1_302, %c4_303, %c0_304] : memref<5x5x64xf32, #tpu.memory_space<vmem>>, vector<1x1x64xf32>
    %411 = vector.shape_cast %410 : vector<1x1x64xf32> to vector<64xf32>
    %412 = vector.shape_cast %411 : vector<64xf32> to vector<1x1x64xf32>
    %413 = vector.broadcast %412 : vector<1x1x64xf32> to vector<2x16x64xf32>
    %414 = arith.mulf %409, %413 : vector<2x16x64xf32>
    %415 = arith.addf %408, %414 : vector<2x16x64xf32>
    %c0_305 = arith.constant 0 : index
    %c4_306 = arith.constant 4 : index
    %c8_307 = arith.constant 8 : index
    %416 = vector.load %arg19[%c0_305, %c4_306, %c8_307] : memref<2x24x96xf32, #tpu.memory_space<vmem>>, vector<2x16x64xf32>
    %c2_308 = arith.constant 2 : index
    %c0_309 = arith.constant 0 : index
    %c0_310 = arith.constant 0 : index
    %417 = vector.load %arg10[%c2_308, %c0_309, %c0_310] : memref<5x5x64xf32, #tpu.memory_space<vmem>>, vector<1x1x64xf32>
    %418 = vector.shape_cast %417 : vector<1x1x64xf32> to vector<64xf32>
    %419 = vector.shape_cast %418 : vector<64xf32> to vector<1x1x64xf32>
    %420 = vector.broadcast %419 : vector<1x1x64xf32> to vector<2x16x64xf32>
    %421 = arith.mulf %416, %420 : vector<2x16x64xf32>
    %422 = arith.addf %415, %421 : vector<2x16x64xf32>
    %c0_311 = arith.constant 0 : index
    %c4_312 = arith.constant 4 : index
    %c12_313 = arith.constant 12 : index
    %423 = vector.load %arg19[%c0_311, %c4_312, %c12_313] : memref<2x24x96xf32, #tpu.memory_space<vmem>>, vector<2x16x64xf32>
    %c2_314 = arith.constant 2 : index
    %c1_315 = arith.constant 1 : index
    %c0_316 = arith.constant 0 : index
    %424 = vector.load %arg10[%c2_314, %c1_315, %c0_316] : memref<5x5x64xf32, #tpu.memory_space<vmem>>, vector<1x1x64xf32>
    %425 = vector.shape_cast %424 : vector<1x1x64xf32> to vector<64xf32>
    %426 = vector.shape_cast %425 : vector<64xf32> to vector<1x1x64xf32>
    %427 = vector.broadcast %426 : vector<1x1x64xf32> to vector<2x16x64xf32>
    %428 = arith.mulf %423, %427 : vector<2x16x64xf32>
    %429 = arith.addf %422, %428 : vector<2x16x64xf32>
    %c0_317 = arith.constant 0 : index
    %c4_318 = arith.constant 4 : index
    %c16_319 = arith.constant 16 : index
    %430 = vector.load %arg19[%c0_317, %c4_318, %c16_319] : memref<2x24x96xf32, #tpu.memory_space<vmem>>, vector<2x16x64xf32>
    %c2_320 = arith.constant 2 : index
    %c2_321 = arith.constant 2 : index
    %c0_322 = arith.constant 0 : index
    %431 = vector.load %arg10[%c2_320, %c2_321, %c0_322] : memref<5x5x64xf32, #tpu.memory_space<vmem>>, vector<1x1x64xf32>
    %432 = vector.shape_cast %431 : vector<1x1x64xf32> to vector<64xf32>
    %433 = vector.shape_cast %432 : vector<64xf32> to vector<1x1x64xf32>
    %434 = vector.broadcast %433 : vector<1x1x64xf32> to vector<2x16x64xf32>
    %435 = arith.mulf %430, %434 : vector<2x16x64xf32>
    %436 = arith.addf %429, %435 : vector<2x16x64xf32>
    %c0_323 = arith.constant 0 : index
    %c4_324 = arith.constant 4 : index
    %c20_325 = arith.constant 20 : index
    %437 = vector.load %arg19[%c0_323, %c4_324, %c20_325] : memref<2x24x96xf32, #tpu.memory_space<vmem>>, vector<2x16x64xf32>
    %c2_326 = arith.constant 2 : index
    %c3_327 = arith.constant 3 : index
    %c0_328 = arith.constant 0 : index
    %438 = vector.load %arg10[%c2_326, %c3_327, %c0_328] : memref<5x5x64xf32, #tpu.memory_space<vmem>>, vector<1x1x64xf32>
    %439 = vector.shape_cast %438 : vector<1x1x64xf32> to vector<64xf32>
    %440 = vector.shape_cast %439 : vector<64xf32> to vector<1x1x64xf32>
    %441 = vector.broadcast %440 : vector<1x1x64xf32> to vector<2x16x64xf32>
    %442 = arith.mulf %437, %441 : vector<2x16x64xf32>
    %443 = arith.addf %436, %442 : vector<2x16x64xf32>
    %c0_329 = arith.constant 0 : index
    %c4_330 = arith.constant 4 : index
    %c24_331 = arith.constant 24 : index
    %444 = vector.load %arg19[%c0_329, %c4_330, %c24_331] : memref<2x24x96xf32, #tpu.memory_space<vmem>>, vector<2x16x64xf32>
    %c2_332 = arith.constant 2 : index
    %c4_333 = arith.constant 4 : index
    %c0_334 = arith.constant 0 : index
    %445 = vector.load %arg10[%c2_332, %c4_333, %c0_334] : memref<5x5x64xf32, #tpu.memory_space<vmem>>, vector<1x1x64xf32>
    %446 = vector.shape_cast %445 : vector<1x1x64xf32> to vector<64xf32>
    %447 = vector.shape_cast %446 : vector<64xf32> to vector<1x1x64xf32>
    %448 = vector.broadcast %447 : vector<1x1x64xf32> to vector<2x16x64xf32>
    %449 = arith.mulf %444, %448 : vector<2x16x64xf32>
    %450 = arith.addf %443, %449 : vector<2x16x64xf32>
    %c0_335 = arith.constant 0 : index
    %c5_336 = arith.constant 5 : index
    %c8_337 = arith.constant 8 : index
    %451 = vector.load %arg19[%c0_335, %c5_336, %c8_337] : memref<2x24x96xf32, #tpu.memory_space<vmem>>, vector<2x16x64xf32>
    %c3_338 = arith.constant 3 : index
    %c0_339 = arith.constant 0 : index
    %c0_340 = arith.constant 0 : index
    %452 = vector.load %arg10[%c3_338, %c0_339, %c0_340] : memref<5x5x64xf32, #tpu.memory_space<vmem>>, vector<1x1x64xf32>
    %453 = vector.shape_cast %452 : vector<1x1x64xf32> to vector<64xf32>
    %454 = vector.shape_cast %453 : vector<64xf32> to vector<1x1x64xf32>
    %455 = vector.broadcast %454 : vector<1x1x64xf32> to vector<2x16x64xf32>
    %456 = arith.mulf %451, %455 : vector<2x16x64xf32>
    %457 = arith.addf %450, %456 : vector<2x16x64xf32>
    %c0_341 = arith.constant 0 : index
    %c5_342 = arith.constant 5 : index
    %c12_343 = arith.constant 12 : index
    %458 = vector.load %arg19[%c0_341, %c5_342, %c12_343] : memref<2x24x96xf32, #tpu.memory_space<vmem>>, vector<2x16x64xf32>
    %c3_344 = arith.constant 3 : index
    %c1_345 = arith.constant 1 : index
    %c0_346 = arith.constant 0 : index
    %459 = vector.load %arg10[%c3_344, %c1_345, %c0_346] : memref<5x5x64xf32, #tpu.memory_space<vmem>>, vector<1x1x64xf32>
    %460 = vector.shape_cast %459 : vector<1x1x64xf32> to vector<64xf32>
    %461 = vector.shape_cast %460 : vector<64xf32> to vector<1x1x64xf32>
    %462 = vector.broadcast %461 : vector<1x1x64xf32> to vector<2x16x64xf32>
    %463 = arith.mulf %458, %462 : vector<2x16x64xf32>
    %464 = arith.addf %457, %463 : vector<2x16x64xf32>
    %c0_347 = arith.constant 0 : index
    %c5_348 = arith.constant 5 : index
    %c16_349 = arith.constant 16 : index
    %465 = vector.load %arg19[%c0_347, %c5_348, %c16_349] : memref<2x24x96xf32, #tpu.memory_space<vmem>>, vector<2x16x64xf32>
    %c3_350 = arith.constant 3 : index
    %c2_351 = arith.constant 2 : index
    %c0_352 = arith.constant 0 : index
    %466 = vector.load %arg10[%c3_350, %c2_351, %c0_352] : memref<5x5x64xf32, #tpu.memory_space<vmem>>, vector<1x1x64xf32>
    %467 = vector.shape_cast %466 : vector<1x1x64xf32> to vector<64xf32>
    %468 = vector.shape_cast %467 : vector<64xf32> to vector<1x1x64xf32>
    %469 = vector.broadcast %468 : vector<1x1x64xf32> to vector<2x16x64xf32>
    %470 = arith.mulf %465, %469 : vector<2x16x64xf32>
    %471 = arith.addf %464, %470 : vector<2x16x64xf32>
    %c0_353 = arith.constant 0 : index
    %c5_354 = arith.constant 5 : index
    %c20_355 = arith.constant 20 : index
    %472 = vector.load %arg19[%c0_353, %c5_354, %c20_355] : memref<2x24x96xf32, #tpu.memory_space<vmem>>, vector<2x16x64xf32>
    %c3_356 = arith.constant 3 : index
    %c3_357 = arith.constant 3 : index
    %c0_358 = arith.constant 0 : index
    %473 = vector.load %arg10[%c3_356, %c3_357, %c0_358] : memref<5x5x64xf32, #tpu.memory_space<vmem>>, vector<1x1x64xf32>
    %474 = vector.shape_cast %473 : vector<1x1x64xf32> to vector<64xf32>
    %475 = vector.shape_cast %474 : vector<64xf32> to vector<1x1x64xf32>
    %476 = vector.broadcast %475 : vector<1x1x64xf32> to vector<2x16x64xf32>
    %477 = arith.mulf %472, %476 : vector<2x16x64xf32>
    %478 = arith.addf %471, %477 : vector<2x16x64xf32>
    %c0_359 = arith.constant 0 : index
    %c5_360 = arith.constant 5 : index
    %c24_361 = arith.constant 24 : index
    %479 = vector.load %arg19[%c0_359, %c5_360, %c24_361] : memref<2x24x96xf32, #tpu.memory_space<vmem>>, vector<2x16x64xf32>
    %c3_362 = arith.constant 3 : index
    %c4_363 = arith.constant 4 : index
    %c0_364 = arith.constant 0 : index
    %480 = vector.load %arg10[%c3_362, %c4_363, %c0_364] : memref<5x5x64xf32, #tpu.memory_space<vmem>>, vector<1x1x64xf32>
    %481 = vector.shape_cast %480 : vector<1x1x64xf32> to vector<64xf32>
    %482 = vector.shape_cast %481 : vector<64xf32> to vector<1x1x64xf32>
    %483 = vector.broadcast %482 : vector<1x1x64xf32> to vector<2x16x64xf32>
    %484 = arith.mulf %479, %483 : vector<2x16x64xf32>
    %485 = arith.addf %478, %484 : vector<2x16x64xf32>
    %c0_365 = arith.constant 0 : index
    %c6 = arith.constant 6 : index
    %c8_366 = arith.constant 8 : index
    %486 = vector.load %arg19[%c0_365, %c6, %c8_366] : memref<2x24x96xf32, #tpu.memory_space<vmem>>, vector<2x16x64xf32>
    %c4_367 = arith.constant 4 : index
    %c0_368 = arith.constant 0 : index
    %c0_369 = arith.constant 0 : index
    %487 = vector.load %arg10[%c4_367, %c0_368, %c0_369] : memref<5x5x64xf32, #tpu.memory_space<vmem>>, vector<1x1x64xf32>
    %488 = vector.shape_cast %487 : vector<1x1x64xf32> to vector<64xf32>
    %489 = vector.shape_cast %488 : vector<64xf32> to vector<1x1x64xf32>
    %490 = vector.broadcast %489 : vector<1x1x64xf32> to vector<2x16x64xf32>
    %491 = arith.mulf %486, %490 : vector<2x16x64xf32>
    %492 = arith.addf %485, %491 : vector<2x16x64xf32>
    %c0_370 = arith.constant 0 : index
    %c6_371 = arith.constant 6 : index
    %c12_372 = arith.constant 12 : index
    %493 = vector.load %arg19[%c0_370, %c6_371, %c12_372] : memref<2x24x96xf32, #tpu.memory_space<vmem>>, vector<2x16x64xf32>
    %c4_373 = arith.constant 4 : index
    %c1_374 = arith.constant 1 : index
    %c0_375 = arith.constant 0 : index
    %494 = vector.load %arg10[%c4_373, %c1_374, %c0_375] : memref<5x5x64xf32, #tpu.memory_space<vmem>>, vector<1x1x64xf32>
    %495 = vector.shape_cast %494 : vector<1x1x64xf32> to vector<64xf32>
    %496 = vector.shape_cast %495 : vector<64xf32> to vector<1x1x64xf32>
    %497 = vector.broadcast %496 : vector<1x1x64xf32> to vector<2x16x64xf32>
    %498 = arith.mulf %493, %497 : vector<2x16x64xf32>
    %499 = arith.addf %492, %498 : vector<2x16x64xf32>
    %c0_376 = arith.constant 0 : index
    %c6_377 = arith.constant 6 : index
    %c16_378 = arith.constant 16 : index
    %500 = vector.load %arg19[%c0_376, %c6_377, %c16_378] : memref<2x24x96xf32, #tpu.memory_space<vmem>>, vector<2x16x64xf32>
    %c4_379 = arith.constant 4 : index
    %c2_380 = arith.constant 2 : index
    %c0_381 = arith.constant 0 : index
    %501 = vector.load %arg10[%c4_379, %c2_380, %c0_381] : memref<5x5x64xf32, #tpu.memory_space<vmem>>, vector<1x1x64xf32>
    %502 = vector.shape_cast %501 : vector<1x1x64xf32> to vector<64xf32>
    %503 = vector.shape_cast %502 : vector<64xf32> to vector<1x1x64xf32>
    %504 = vector.broadcast %503 : vector<1x1x64xf32> to vector<2x16x64xf32>
    %505 = arith.mulf %500, %504 : vector<2x16x64xf32>
    %506 = arith.addf %499, %505 : vector<2x16x64xf32>
    %c0_382 = arith.constant 0 : index
    %c6_383 = arith.constant 6 : index
    %c20_384 = arith.constant 20 : index
    %507 = vector.load %arg19[%c0_382, %c6_383, %c20_384] : memref<2x24x96xf32, #tpu.memory_space<vmem>>, vector<2x16x64xf32>
    %c4_385 = arith.constant 4 : index
    %c3_386 = arith.constant 3 : index
    %c0_387 = arith.constant 0 : index
    %508 = vector.load %arg10[%c4_385, %c3_386, %c0_387] : memref<5x5x64xf32, #tpu.memory_space<vmem>>, vector<1x1x64xf32>
    %509 = vector.shape_cast %508 : vector<1x1x64xf32> to vector<64xf32>
    %510 = vector.shape_cast %509 : vector<64xf32> to vector<1x1x64xf32>
    %511 = vector.broadcast %510 : vector<1x1x64xf32> to vector<2x16x64xf32>
    %512 = arith.mulf %507, %511 : vector<2x16x64xf32>
    %513 = arith.addf %506, %512 : vector<2x16x64xf32>
    %c0_388 = arith.constant 0 : index
    %c6_389 = arith.constant 6 : index
    %c24_390 = arith.constant 24 : index
    %514 = vector.load %arg19[%c0_388, %c6_389, %c24_390] : memref<2x24x96xf32, #tpu.memory_space<vmem>>, vector<2x16x64xf32>
    %c4_391 = arith.constant 4 : index
    %c4_392 = arith.constant 4 : index
    %c0_393 = arith.constant 0 : index
    %515 = vector.load %arg10[%c4_391, %c4_392, %c0_393] : memref<5x5x64xf32, #tpu.memory_space<vmem>>, vector<1x1x64xf32>
    %516 = vector.shape_cast %515 : vector<1x1x64xf32> to vector<64xf32>
    %517 = vector.shape_cast %516 : vector<64xf32> to vector<1x1x64xf32>
    %518 = vector.broadcast %517 : vector<1x1x64xf32> to vector<2x16x64xf32>
    %519 = arith.mulf %514, %518 : vector<2x16x64xf32>
    %520 = arith.addf %513, %519 : vector<2x16x64xf32>
    %521 = vector.shape_cast %520 : vector<2x16x64xf32> to vector<32x64xf32>
    %c0_394 = arith.constant 0 : index
    %c0_395 = arith.constant 0 : index
    %522 = vector.load %arg11[%c0_394, %c0_395] : memref<64x64xf32, #tpu.memory_space<vmem>>, vector<64x64xf32>
    %cst_396 = arith.constant dense<0.000000e+00> : vector<32x64xf32>
    %523 = tpu.matmul %521, %522, %cst_396 {dimension_numbers = #tpu.dot_dimension_numbers<[1], [0], [0], [1], [0, 0, 1, 1], [], []>} : vector<32x64xf32>, vector<64x64xf32>, vector<32x64xf32> -> vector<32x64xf32>
    %524 = vector.shape_cast %523 : vector<32x64xf32> to vector<2x16x64xf32>
    %cst_397 = arith.constant dense<0.000000e+00> : vector<64xf32>
    %525 = vector.multi_reduction <add>, %524, %cst_397 [0, 1] : vector<2x16x64xf32> to vector<64xf32>
    %526 = vector.shape_cast %525 : vector<64xf32> to vector<1x1x64xf32>
    %527 = vector.shape_cast %526 : vector<1x1x64xf32> to vector<1x64xf32>
    %528 = arith.mulf %524, %524 : vector<2x16x64xf32>
    %cst_398 = arith.constant dense<0.000000e+00> : vector<64xf32>
    %529 = vector.multi_reduction <add>, %528, %cst_398 [0, 1] : vector<2x16x64xf32> to vector<64xf32>
    %530 = vector.shape_cast %529 : vector<64xf32> to vector<1x1x64xf32>
    %531 = vector.shape_cast %530 : vector<1x1x64xf32> to vector<1x64xf32>
    %c0_399 = arith.constant 0 : index
    %c0_400 = arith.constant 0 : index
    %532 = vector.load %arg4[%c0_399, %c0_400] : memref<64x4xf32, #tpu.memory_space<vmem>>, vector<64x4xf32>
    %cst_401 = arith.constant dense<0.000000e+00> : vector<1x4xf32>
    %533 = tpu.matmul %527, %532, %cst_401 {dimension_numbers = #tpu.dot_dimension_numbers<[1], [0], [0], [1], [0, 0, 1, 1], [], []>} : vector<1x64xf32>, vector<64x4xf32>, vector<1x4xf32> -> vector<1x4xf32>
    %c0_402 = arith.constant 0 : index
    %c0_403 = arith.constant 0 : index
    %534 = vector.load %arg4[%c0_402, %c0_403] : memref<64x4xf32, #tpu.memory_space<vmem>>, vector<64x4xf32>
    %cst_404 = arith.constant dense<0.000000e+00> : vector<1x4xf32>
    %535 = tpu.matmul %531, %534, %cst_404 {dimension_numbers = #tpu.dot_dimension_numbers<[1], [0], [0], [1], [0, 0, 1, 1], [], []>} : vector<1x64xf32>, vector<64x4xf32>, vector<1x4xf32> -> vector<1x4xf32>
    %cst_405 = arith.constant 0.001953125 : f32
    %536 = vector.broadcast %cst_405 : f32 to vector<1x4xf32>
    %537 = arith.mulf %533, %536 : vector<1x4xf32>
    %cst_406 = arith.constant 0.001953125 : f32
    %538 = vector.broadcast %cst_406 : f32 to vector<1x4xf32>
    %539 = arith.mulf %535, %538 : vector<1x4xf32>
    %540 = arith.mulf %537, %537 : vector<1x4xf32>
    %541 = arith.subf %539, %540 : vector<1x4xf32>
    %cst_407 = arith.constant 9.99999974E-6 : f32
    %542 = vector.broadcast %cst_407 : f32 to vector<1x4xf32>
    %543 = arith.addf %541, %542 : vector<1x4xf32>
    %544 = math.rsqrt %543 : vector<1x4xf32>
    %cst_408 = arith.constant 0.000000e+00 : f32
    %545 = vector.broadcast %cst_408 : f32 to vector<1x4xf32>
    %546 = arith.subf %545, %537 : vector<1x4xf32>
    %547 = arith.mulf %546, %544 : vector<1x4xf32>
    %c0_409 = arith.constant 0 : index
    %c0_410 = arith.constant 0 : index
    %548 = vector.load %arg5[%c0_409, %c0_410] : memref<4x64xf32, #tpu.memory_space<vmem>>, vector<4x64xf32>
    %cst_411 = arith.constant dense<0.000000e+00> : vector<1x64xf32>
    %549 = tpu.matmul %544, %548, %cst_411 {dimension_numbers = #tpu.dot_dimension_numbers<[1], [0], [0], [1], [0, 0, 1, 1], [], []>} : vector<1x4xf32>, vector<4x64xf32>, vector<1x64xf32> -> vector<1x64xf32>
    %c0_412 = arith.constant 0 : index
    %c0_413 = arith.constant 0 : index
    %550 = vector.load %arg5[%c0_412, %c0_413] : memref<4x64xf32, #tpu.memory_space<vmem>>, vector<4x64xf32>
    %cst_414 = arith.constant dense<0.000000e+00> : vector<1x64xf32>
    %551 = tpu.matmul %547, %550, %cst_414 {dimension_numbers = #tpu.dot_dimension_numbers<[1], [0], [0], [1], [0, 0, 1, 1], [], []>} : vector<1x4xf32>, vector<4x64xf32>, vector<1x64xf32> -> vector<1x64xf32>
    %552 = vector.shape_cast %549 : vector<1x64xf32> to vector<1x1x64xf32>
    %553 = vector.broadcast %552 : vector<1x1x64xf32> to vector<2x16x64xf32>
    %554 = arith.mulf %524, %553 : vector<2x16x64xf32>
    %555 = vector.shape_cast %551 : vector<1x64xf32> to vector<1x1x64xf32>
    %556 = vector.broadcast %555 : vector<1x1x64xf32> to vector<2x16x64xf32>
    %557 = arith.addf %554, %556 : vector<2x16x64xf32>
    %cst_415 = arith.constant 0.000000e+00 : f32
    %558 = vector.broadcast %cst_415 : f32 to vector<2x16x64xf32>
    %559 = arith.maximumf %557, %558 : vector<2x16x64xf32>
    %c0_416 = arith.constant 0 : index
    %c2_417 = arith.constant 2 : index
    %c8_418 = arith.constant 8 : index
    %560 = vector.load %arg20[%c0_416, %c2_417, %c8_418] : memref<2x20x80xf32, #tpu.memory_space<vmem>>, vector<2x16x64xf32>
    tpu.vector_store %arg20[%c0_416, %c2_417, %c8_418], %559 {strides = array<i32>} : memref<2x20x80xf32, #tpu.memory_space<vmem>>, vector<2x16x64xf32>,
    %cst_419 = arith.constant 0.000000e+00 : f32
    %561 = vector.broadcast %cst_419 : f32 to vector<2x16x64xf32>
    %c0_420 = arith.constant 0 : index
    %c0_421 = arith.constant 0 : index
    %c0_422 = arith.constant 0 : index
    %562 = vector.load %arg20[%c0_420, %c0_421, %c0_422] : memref<2x20x80xf32, #tpu.memory_space<vmem>>, vector<2x16x64xf32>
    %c0_423 = arith.constant 0 : index
    %c0_424 = arith.constant 0 : index
    %c0_425 = arith.constant 0 : index
    %563 = vector.load %arg12[%c0_423, %c0_424, %c0_425] : memref<5x5x64xf32, #tpu.memory_space<vmem>>, vector<1x1x64xf32>
    %564 = vector.shape_cast %563 : vector<1x1x64xf32> to vector<64xf32>
    %565 = vector.shape_cast %564 : vector<64xf32> to vector<1x1x64xf32>
    %566 = vector.broadcast %565 : vector<1x1x64xf32> to vector<2x16x64xf32>
    %567 = arith.mulf %562, %566 : vector<2x16x64xf32>
    %568 = arith.addf %561, %567 : vector<2x16x64xf32>
    %c0_426 = arith.constant 0 : index
    %c0_427 = arith.constant 0 : index
    %c4_428 = arith.constant 4 : index
    %569 = vector.load %arg20[%c0_426, %c0_427, %c4_428] : memref<2x20x80xf32, #tpu.memory_space<vmem>>, vector<2x16x64xf32>
    %c0_429 = arith.constant 0 : index
    %c1_430 = arith.constant 1 : index
    %c0_431 = arith.constant 0 : index
    %570 = vector.load %arg12[%c0_429, %c1_430, %c0_431] : memref<5x5x64xf32, #tpu.memory_space<vmem>>, vector<1x1x64xf32>
    %571 = vector.shape_cast %570 : vector<1x1x64xf32> to vector<64xf32>
    %572 = vector.shape_cast %571 : vector<64xf32> to vector<1x1x64xf32>
    %573 = vector.broadcast %572 : vector<1x1x64xf32> to vector<2x16x64xf32>
    %574 = arith.mulf %569, %573 : vector<2x16x64xf32>
    %575 = arith.addf %568, %574 : vector<2x16x64xf32>
    %c0_432 = arith.constant 0 : index
    %c0_433 = arith.constant 0 : index
    %c8_434 = arith.constant 8 : index
    %576 = vector.load %arg20[%c0_432, %c0_433, %c8_434] : memref<2x20x80xf32, #tpu.memory_space<vmem>>, vector<2x16x64xf32>
    %c0_435 = arith.constant 0 : index
    %c2_436 = arith.constant 2 : index
    %c0_437 = arith.constant 0 : index
    %577 = vector.load %arg12[%c0_435, %c2_436, %c0_437] : memref<5x5x64xf32, #tpu.memory_space<vmem>>, vector<1x1x64xf32>
    %578 = vector.shape_cast %577 : vector<1x1x64xf32> to vector<64xf32>
    %579 = vector.shape_cast %578 : vector<64xf32> to vector<1x1x64xf32>
    %580 = vector.broadcast %579 : vector<1x1x64xf32> to vector<2x16x64xf32>
    %581 = arith.mulf %576, %580 : vector<2x16x64xf32>
    %582 = arith.addf %575, %581 : vector<2x16x64xf32>
    %c0_438 = arith.constant 0 : index
    %c0_439 = arith.constant 0 : index
    %c12_440 = arith.constant 12 : index
    %583 = vector.load %arg20[%c0_438, %c0_439, %c12_440] : memref<2x20x80xf32, #tpu.memory_space<vmem>>, vector<2x16x64xf32>
    %c0_441 = arith.constant 0 : index
    %c3_442 = arith.constant 3 : index
    %c0_443 = arith.constant 0 : index
    %584 = vector.load %arg12[%c0_441, %c3_442, %c0_443] : memref<5x5x64xf32, #tpu.memory_space<vmem>>, vector<1x1x64xf32>
    %585 = vector.shape_cast %584 : vector<1x1x64xf32> to vector<64xf32>
    %586 = vector.shape_cast %585 : vector<64xf32> to vector<1x1x64xf32>
    %587 = vector.broadcast %586 : vector<1x1x64xf32> to vector<2x16x64xf32>
    %588 = arith.mulf %583, %587 : vector<2x16x64xf32>
    %589 = arith.addf %582, %588 : vector<2x16x64xf32>
    %c0_444 = arith.constant 0 : index
    %c0_445 = arith.constant 0 : index
    %c16_446 = arith.constant 16 : index
    %590 = vector.load %arg20[%c0_444, %c0_445, %c16_446] : memref<2x20x80xf32, #tpu.memory_space<vmem>>, vector<2x16x64xf32>
    %c0_447 = arith.constant 0 : index
    %c4_448 = arith.constant 4 : index
    %c0_449 = arith.constant 0 : index
    %591 = vector.load %arg12[%c0_447, %c4_448, %c0_449] : memref<5x5x64xf32, #tpu.memory_space<vmem>>, vector<1x1x64xf32>
    %592 = vector.shape_cast %591 : vector<1x1x64xf32> to vector<64xf32>
    %593 = vector.shape_cast %592 : vector<64xf32> to vector<1x1x64xf32>
    %594 = vector.broadcast %593 : vector<1x1x64xf32> to vector<2x16x64xf32>
    %595 = arith.mulf %590, %594 : vector<2x16x64xf32>
    %596 = arith.addf %589, %595 : vector<2x16x64xf32>
    %c0_450 = arith.constant 0 : index
    %c1_451 = arith.constant 1 : index
    %c0_452 = arith.constant 0 : index
    %597 = vector.load %arg20[%c0_450, %c1_451, %c0_452] : memref<2x20x80xf32, #tpu.memory_space<vmem>>, vector<2x16x64xf32>
    %c1_453 = arith.constant 1 : index
    %c0_454 = arith.constant 0 : index
    %c0_455 = arith.constant 0 : index
    %598 = vector.load %arg12[%c1_453, %c0_454, %c0_455] : memref<5x5x64xf32, #tpu.memory_space<vmem>>, vector<1x1x64xf32>
    %599 = vector.shape_cast %598 : vector<1x1x64xf32> to vector<64xf32>
    %600 = vector.shape_cast %599 : vector<64xf32> to vector<1x1x64xf32>
    %601 = vector.broadcast %600 : vector<1x1x64xf32> to vector<2x16x64xf32>
    %602 = arith.mulf %597, %601 : vector<2x16x64xf32>
    %603 = arith.addf %596, %602 : vector<2x16x64xf32>
    %c0_456 = arith.constant 0 : index
    %c1_457 = arith.constant 1 : index
    %c4_458 = arith.constant 4 : index
    %604 = vector.load %arg20[%c0_456, %c1_457, %c4_458] : memref<2x20x80xf32, #tpu.memory_space<vmem>>, vector<2x16x64xf32>
    %c1_459 = arith.constant 1 : index
    %c1_460 = arith.constant 1 : index
    %c0_461 = arith.constant 0 : index
    %605 = vector.load %arg12[%c1_459, %c1_460, %c0_461] : memref<5x5x64xf32, #tpu.memory_space<vmem>>, vector<1x1x64xf32>
    %606 = vector.shape_cast %605 : vector<1x1x64xf32> to vector<64xf32>
    %607 = vector.shape_cast %606 : vector<64xf32> to vector<1x1x64xf32>
    %608 = vector.broadcast %607 : vector<1x1x64xf32> to vector<2x16x64xf32>
    %609 = arith.mulf %604, %608 : vector<2x16x64xf32>
    %610 = arith.addf %603, %609 : vector<2x16x64xf32>
    %c0_462 = arith.constant 0 : index
    %c1_463 = arith.constant 1 : index
    %c8_464 = arith.constant 8 : index
    %611 = vector.load %arg20[%c0_462, %c1_463, %c8_464] : memref<2x20x80xf32, #tpu.memory_space<vmem>>, vector<2x16x64xf32>
    %c1_465 = arith.constant 1 : index
    %c2_466 = arith.constant 2 : index
    %c0_467 = arith.constant 0 : index
    %612 = vector.load %arg12[%c1_465, %c2_466, %c0_467] : memref<5x5x64xf32, #tpu.memory_space<vmem>>, vector<1x1x64xf32>
    %613 = vector.shape_cast %612 : vector<1x1x64xf32> to vector<64xf32>
    %614 = vector.shape_cast %613 : vector<64xf32> to vector<1x1x64xf32>
    %615 = vector.broadcast %614 : vector<1x1x64xf32> to vector<2x16x64xf32>
    %616 = arith.mulf %611, %615 : vector<2x16x64xf32>
    %617 = arith.addf %610, %616 : vector<2x16x64xf32>
    %c0_468 = arith.constant 0 : index
    %c1_469 = arith.constant 1 : index
    %c12_470 = arith.constant 12 : index
    %618 = vector.load %arg20[%c0_468, %c1_469, %c12_470] : memref<2x20x80xf32, #tpu.memory_space<vmem>>, vector<2x16x64xf32>
    %c1_471 = arith.constant 1 : index
    %c3_472 = arith.constant 3 : index
    %c0_473 = arith.constant 0 : index
    %619 = vector.load %arg12[%c1_471, %c3_472, %c0_473] : memref<5x5x64xf32, #tpu.memory_space<vmem>>, vector<1x1x64xf32>
    %620 = vector.shape_cast %619 : vector<1x1x64xf32> to vector<64xf32>
    %621 = vector.shape_cast %620 : vector<64xf32> to vector<1x1x64xf32>
    %622 = vector.broadcast %621 : vector<1x1x64xf32> to vector<2x16x64xf32>
    %623 = arith.mulf %618, %622 : vector<2x16x64xf32>
    %624 = arith.addf %617, %623 : vector<2x16x64xf32>
    %c0_474 = arith.constant 0 : index
    %c1_475 = arith.constant 1 : index
    %c16_476 = arith.constant 16 : index
    %625 = vector.load %arg20[%c0_474, %c1_475, %c16_476] : memref<2x20x80xf32, #tpu.memory_space<vmem>>, vector<2x16x64xf32>
    %c1_477 = arith.constant 1 : index
    %c4_478 = arith.constant 4 : index
    %c0_479 = arith.constant 0 : index
    %626 = vector.load %arg12[%c1_477, %c4_478, %c0_479] : memref<5x5x64xf32, #tpu.memory_space<vmem>>, vector<1x1x64xf32>
    %627 = vector.shape_cast %626 : vector<1x1x64xf32> to vector<64xf32>
    %628 = vector.shape_cast %627 : vector<64xf32> to vector<1x1x64xf32>
    %629 = vector.broadcast %628 : vector<1x1x64xf32> to vector<2x16x64xf32>
    %630 = arith.mulf %625, %629 : vector<2x16x64xf32>
    %631 = arith.addf %624, %630 : vector<2x16x64xf32>
    %c0_480 = arith.constant 0 : index
    %c2_481 = arith.constant 2 : index
    %c0_482 = arith.constant 0 : index
    %632 = vector.load %arg20[%c0_480, %c2_481, %c0_482] : memref<2x20x80xf32, #tpu.memory_space<vmem>>, vector<2x16x64xf32>
    %c2_483 = arith.constant 2 : index
    %c0_484 = arith.constant 0 : index
    %c0_485 = arith.constant 0 : index
    %633 = vector.load %arg12[%c2_483, %c0_484, %c0_485] : memref<5x5x64xf32, #tpu.memory_space<vmem>>, vector<1x1x64xf32>
    %634 = vector.shape_cast %633 : vector<1x1x64xf32> to vector<64xf32>
    %635 = vector.shape_cast %634 : vector<64xf32> to vector<1x1x64xf32>
    %636 = vector.broadcast %635 : vector<1x1x64xf32> to vector<2x16x64xf32>
    %637 = arith.mulf %632, %636 : vector<2x16x64xf32>
    %638 = arith.addf %631, %637 : vector<2x16x64xf32>
    %c0_486 = arith.constant 0 : index
    %c2_487 = arith.constant 2 : index
    %c4_488 = arith.constant 4 : index
    %639 = vector.load %arg20[%c0_486, %c2_487, %c4_488] : memref<2x20x80xf32, #tpu.memory_space<vmem>>, vector<2x16x64xf32>
    %c2_489 = arith.constant 2 : index
    %c1_490 = arith.constant 1 : index
    %c0_491 = arith.constant 0 : index
    %640 = vector.load %arg12[%c2_489, %c1_490, %c0_491] : memref<5x5x64xf32, #tpu.memory_space<vmem>>, vector<1x1x64xf32>
    %641 = vector.shape_cast %640 : vector<1x1x64xf32> to vector<64xf32>
    %642 = vector.shape_cast %641 : vector<64xf32> to vector<1x1x64xf32>
    %643 = vector.broadcast %642 : vector<1x1x64xf32> to vector<2x16x64xf32>
    %644 = arith.mulf %639, %643 : vector<2x16x64xf32>
    %645 = arith.addf %638, %644 : vector<2x16x64xf32>
    %c0_492 = arith.constant 0 : index
    %c2_493 = arith.constant 2 : index
    %c8_494 = arith.constant 8 : index
    %646 = vector.load %arg20[%c0_492, %c2_493, %c8_494] : memref<2x20x80xf32, #tpu.memory_space<vmem>>, vector<2x16x64xf32>
    %c2_495 = arith.constant 2 : index
    %c2_496 = arith.constant 2 : index
    %c0_497 = arith.constant 0 : index
    %647 = vector.load %arg12[%c2_495, %c2_496, %c0_497] : memref<5x5x64xf32, #tpu.memory_space<vmem>>, vector<1x1x64xf32>
    %648 = vector.shape_cast %647 : vector<1x1x64xf32> to vector<64xf32>
    %649 = vector.shape_cast %648 : vector<64xf32> to vector<1x1x64xf32>
    %650 = vector.broadcast %649 : vector<1x1x64xf32> to vector<2x16x64xf32>
    %651 = arith.mulf %646, %650 : vector<2x16x64xf32>
    %652 = arith.addf %645, %651 : vector<2x16x64xf32>
    %c0_498 = arith.constant 0 : index
    %c2_499 = arith.constant 2 : index
    %c12_500 = arith.constant 12 : index
    %653 = vector.load %arg20[%c0_498, %c2_499, %c12_500] : memref<2x20x80xf32, #tpu.memory_space<vmem>>, vector<2x16x64xf32>
    %c2_501 = arith.constant 2 : index
    %c3_502 = arith.constant 3 : index
    %c0_503 = arith.constant 0 : index
    %654 = vector.load %arg12[%c2_501, %c3_502, %c0_503] : memref<5x5x64xf32, #tpu.memory_space<vmem>>, vector<1x1x64xf32>
    %655 = vector.shape_cast %654 : vector<1x1x64xf32> to vector<64xf32>
    %656 = vector.shape_cast %655 : vector<64xf32> to vector<1x1x64xf32>
    %657 = vector.broadcast %656 : vector<1x1x64xf32> to vector<2x16x64xf32>
    %658 = arith.mulf %653, %657 : vector<2x16x64xf32>
    %659 = arith.addf %652, %658 : vector<2x16x64xf32>
    %c0_504 = arith.constant 0 : index
    %c2_505 = arith.constant 2 : index
    %c16_506 = arith.constant 16 : index
    %660 = vector.load %arg20[%c0_504, %c2_505, %c16_506] : memref<2x20x80xf32, #tpu.memory_space<vmem>>, vector<2x16x64xf32>
    %c2_507 = arith.constant 2 : index
    %c4_508 = arith.constant 4 : index
    %c0_509 = arith.constant 0 : index
    %661 = vector.load %arg12[%c2_507, %c4_508, %c0_509] : memref<5x5x64xf32, #tpu.memory_space<vmem>>, vector<1x1x64xf32>
    %662 = vector.shape_cast %661 : vector<1x1x64xf32> to vector<64xf32>
    %663 = vector.shape_cast %662 : vector<64xf32> to vector<1x1x64xf32>
    %664 = vector.broadcast %663 : vector<1x1x64xf32> to vector<2x16x64xf32>
    %665 = arith.mulf %660, %664 : vector<2x16x64xf32>
    %666 = arith.addf %659, %665 : vector<2x16x64xf32>
    %c0_510 = arith.constant 0 : index
    %c3_511 = arith.constant 3 : index
    %c0_512 = arith.constant 0 : index
    %667 = vector.load %arg20[%c0_510, %c3_511, %c0_512] : memref<2x20x80xf32, #tpu.memory_space<vmem>>, vector<2x16x64xf32>
    %c3_513 = arith.constant 3 : index
    %c0_514 = arith.constant 0 : index
    %c0_515 = arith.constant 0 : index
    %668 = vector.load %arg12[%c3_513, %c0_514, %c0_515] : memref<5x5x64xf32, #tpu.memory_space<vmem>>, vector<1x1x64xf32>
    %669 = vector.shape_cast %668 : vector<1x1x64xf32> to vector<64xf32>
    %670 = vector.shape_cast %669 : vector<64xf32> to vector<1x1x64xf32>
    %671 = vector.broadcast %670 : vector<1x1x64xf32> to vector<2x16x64xf32>
    %672 = arith.mulf %667, %671 : vector<2x16x64xf32>
    %673 = arith.addf %666, %672 : vector<2x16x64xf32>
    %c0_516 = arith.constant 0 : index
    %c3_517 = arith.constant 3 : index
    %c4_518 = arith.constant 4 : index
    %674 = vector.load %arg20[%c0_516, %c3_517, %c4_518] : memref<2x20x80xf32, #tpu.memory_space<vmem>>, vector<2x16x64xf32>
    %c3_519 = arith.constant 3 : index
    %c1_520 = arith.constant 1 : index
    %c0_521 = arith.constant 0 : index
    %675 = vector.load %arg12[%c3_519, %c1_520, %c0_521] : memref<5x5x64xf32, #tpu.memory_space<vmem>>, vector<1x1x64xf32>
    %676 = vector.shape_cast %675 : vector<1x1x64xf32> to vector<64xf32>
    %677 = vector.shape_cast %676 : vector<64xf32> to vector<1x1x64xf32>
    %678 = vector.broadcast %677 : vector<1x1x64xf32> to vector<2x16x64xf32>
    %679 = arith.mulf %674, %678 : vector<2x16x64xf32>
    %680 = arith.addf %673, %679 : vector<2x16x64xf32>
    %c0_522 = arith.constant 0 : index
    %c3_523 = arith.constant 3 : index
    %c8_524 = arith.constant 8 : index
    %681 = vector.load %arg20[%c0_522, %c3_523, %c8_524] : memref<2x20x80xf32, #tpu.memory_space<vmem>>, vector<2x16x64xf32>
    %c3_525 = arith.constant 3 : index
    %c2_526 = arith.constant 2 : index
    %c0_527 = arith.constant 0 : index
    %682 = vector.load %arg12[%c3_525, %c2_526, %c0_527] : memref<5x5x64xf32, #tpu.memory_space<vmem>>, vector<1x1x64xf32>
    %683 = vector.shape_cast %682 : vector<1x1x64xf32> to vector<64xf32>
    %684 = vector.shape_cast %683 : vector<64xf32> to vector<1x1x64xf32>
    %685 = vector.broadcast %684 : vector<1x1x64xf32> to vector<2x16x64xf32>
    %686 = arith.mulf %681, %685 : vector<2x16x64xf32>
    %687 = arith.addf %680, %686 : vector<2x16x64xf32>
    %c0_528 = arith.constant 0 : index
    %c3_529 = arith.constant 3 : index
    %c12_530 = arith.constant 12 : index
    %688 = vector.load %arg20[%c0_528, %c3_529, %c12_530] : memref<2x20x80xf32, #tpu.memory_space<vmem>>, vector<2x16x64xf32>
    %c3_531 = arith.constant 3 : index
    %c3_532 = arith.constant 3 : index
    %c0_533 = arith.constant 0 : index
    %689 = vector.load %arg12[%c3_531, %c3_532, %c0_533] : memref<5x5x64xf32, #tpu.memory_space<vmem>>, vector<1x1x64xf32>
    %690 = vector.shape_cast %689 : vector<1x1x64xf32> to vector<64xf32>
    %691 = vector.shape_cast %690 : vector<64xf32> to vector<1x1x64xf32>
    %692 = vector.broadcast %691 : vector<1x1x64xf32> to vector<2x16x64xf32>
    %693 = arith.mulf %688, %692 : vector<2x16x64xf32>
    %694 = arith.addf %687, %693 : vector<2x16x64xf32>
    %c0_534 = arith.constant 0 : index
    %c3_535 = arith.constant 3 : index
    %c16_536 = arith.constant 16 : index
    %695 = vector.load %arg20[%c0_534, %c3_535, %c16_536] : memref<2x20x80xf32, #tpu.memory_space<vmem>>, vector<2x16x64xf32>
    %c3_537 = arith.constant 3 : index
    %c4_538 = arith.constant 4 : index
    %c0_539 = arith.constant 0 : index
    %696 = vector.load %arg12[%c3_537, %c4_538, %c0_539] : memref<5x5x64xf32, #tpu.memory_space<vmem>>, vector<1x1x64xf32>
    %697 = vector.shape_cast %696 : vector<1x1x64xf32> to vector<64xf32>
    %698 = vector.shape_cast %697 : vector<64xf32> to vector<1x1x64xf32>
    %699 = vector.broadcast %698 : vector<1x1x64xf32> to vector<2x16x64xf32>
    %700 = arith.mulf %695, %699 : vector<2x16x64xf32>
    %701 = arith.addf %694, %700 : vector<2x16x64xf32>
    %c0_540 = arith.constant 0 : index
    %c4_541 = arith.constant 4 : index
    %c0_542 = arith.constant 0 : index
    %702 = vector.load %arg20[%c0_540, %c4_541, %c0_542] : memref<2x20x80xf32, #tpu.memory_space<vmem>>, vector<2x16x64xf32>
    %c4_543 = arith.constant 4 : index
    %c0_544 = arith.constant 0 : index
    %c0_545 = arith.constant 0 : index
    %703 = vector.load %arg12[%c4_543, %c0_544, %c0_545] : memref<5x5x64xf32, #tpu.memory_space<vmem>>, vector<1x1x64xf32>
    %704 = vector.shape_cast %703 : vector<1x1x64xf32> to vector<64xf32>
    %705 = vector.shape_cast %704 : vector<64xf32> to vector<1x1x64xf32>
    %706 = vector.broadcast %705 : vector<1x1x64xf32> to vector<2x16x64xf32>
    %707 = arith.mulf %702, %706 : vector<2x16x64xf32>
    %708 = arith.addf %701, %707 : vector<2x16x64xf32>
    %c0_546 = arith.constant 0 : index
    %c4_547 = arith.constant 4 : index
    %c4_548 = arith.constant 4 : index
    %709 = vector.load %arg20[%c0_546, %c4_547, %c4_548] : memref<2x20x80xf32, #tpu.memory_space<vmem>>, vector<2x16x64xf32>
    %c4_549 = arith.constant 4 : index
    %c1_550 = arith.constant 1 : index
    %c0_551 = arith.constant 0 : index
    %710 = vector.load %arg12[%c4_549, %c1_550, %c0_551] : memref<5x5x64xf32, #tpu.memory_space<vmem>>, vector<1x1x64xf32>
    %711 = vector.shape_cast %710 : vector<1x1x64xf32> to vector<64xf32>
    %712 = vector.shape_cast %711 : vector<64xf32> to vector<1x1x64xf32>
    %713 = vector.broadcast %712 : vector<1x1x64xf32> to vector<2x16x64xf32>
    %714 = arith.mulf %709, %713 : vector<2x16x64xf32>
    %715 = arith.addf %708, %714 : vector<2x16x64xf32>
    %c0_552 = arith.constant 0 : index
    %c4_553 = arith.constant 4 : index
    %c8_554 = arith.constant 8 : index
    %716 = vector.load %arg20[%c0_552, %c4_553, %c8_554] : memref<2x20x80xf32, #tpu.memory_space<vmem>>, vector<2x16x64xf32>
    %c4_555 = arith.constant 4 : index
    %c2_556 = arith.constant 2 : index
    %c0_557 = arith.constant 0 : index
    %717 = vector.load %arg12[%c4_555, %c2_556, %c0_557] : memref<5x5x64xf32, #tpu.memory_space<vmem>>, vector<1x1x64xf32>
    %718 = vector.shape_cast %717 : vector<1x1x64xf32> to vector<64xf32>
    %719 = vector.shape_cast %718 : vector<64xf32> to vector<1x1x64xf32>
    %720 = vector.broadcast %719 : vector<1x1x64xf32> to vector<2x16x64xf32>
    %721 = arith.mulf %716, %720 : vector<2x16x64xf32>
    %722 = arith.addf %715, %721 : vector<2x16x64xf32>
    %c0_558 = arith.constant 0 : index
    %c4_559 = arith.constant 4 : index
    %c12_560 = arith.constant 12 : index
    %723 = vector.load %arg20[%c0_558, %c4_559, %c12_560] : memref<2x20x80xf32, #tpu.memory_space<vmem>>, vector<2x16x64xf32>
    %c4_561 = arith.constant 4 : index
    %c3_562 = arith.constant 3 : index
    %c0_563 = arith.constant 0 : index
    %724 = vector.load %arg12[%c4_561, %c3_562, %c0_563] : memref<5x5x64xf32, #tpu.memory_space<vmem>>, vector<1x1x64xf32>
    %725 = vector.shape_cast %724 : vector<1x1x64xf32> to vector<64xf32>
    %726 = vector.shape_cast %725 : vector<64xf32> to vector<1x1x64xf32>
    %727 = vector.broadcast %726 : vector<1x1x64xf32> to vector<2x16x64xf32>
    %728 = arith.mulf %723, %727 : vector<2x16x64xf32>
    %729 = arith.addf %722, %728 : vector<2x16x64xf32>
    %c0_564 = arith.constant 0 : index
    %c4_565 = arith.constant 4 : index
    %c16_566 = arith.constant 16 : index
    %730 = vector.load %arg20[%c0_564, %c4_565, %c16_566] : memref<2x20x80xf32, #tpu.memory_space<vmem>>, vector<2x16x64xf32>
    %c4_567 = arith.constant 4 : index
    %c4_568 = arith.constant 4 : index
    %c0_569 = arith.constant 0 : index
    %731 = vector.load %arg12[%c4_567, %c4_568, %c0_569] : memref<5x5x64xf32, #tpu.memory_space<vmem>>, vector<1x1x64xf32>
    %732 = vector.shape_cast %731 : vector<1x1x64xf32> to vector<64xf32>
    %733 = vector.shape_cast %732 : vector<64xf32> to vector<1x1x64xf32>
    %734 = vector.broadcast %733 : vector<1x1x64xf32> to vector<2x16x64xf32>
    %735 = arith.mulf %730, %734 : vector<2x16x64xf32>
    %736 = arith.addf %729, %735 : vector<2x16x64xf32>
    %737 = vector.shape_cast %736 : vector<2x16x64xf32> to vector<32x64xf32>
    %c0_570 = arith.constant 0 : index
    %c0_571 = arith.constant 0 : index
    %738 = vector.load %arg13[%c0_570, %c0_571] : memref<64x64xf32, #tpu.memory_space<vmem>>, vector<64x64xf32>
    %cst_572 = arith.constant dense<0.000000e+00> : vector<32x64xf32>
    %739 = tpu.matmul %737, %738, %cst_572 {dimension_numbers = #tpu.dot_dimension_numbers<[1], [0], [0], [1], [0, 0, 1, 1], [], []>} : vector<32x64xf32>, vector<64x64xf32>, vector<32x64xf32> -> vector<32x64xf32>
    %740 = vector.shape_cast %739 : vector<32x64xf32> to vector<2x16x64xf32>
    %cst_573 = arith.constant dense<0.000000e+00> : vector<64xf32>
    %741 = vector.multi_reduction <add>, %740, %cst_573 [0, 1] : vector<2x16x64xf32> to vector<64xf32>
    %742 = vector.shape_cast %741 : vector<64xf32> to vector<1x1x64xf32>
    %743 = vector.shape_cast %742 : vector<1x1x64xf32> to vector<1x64xf32>
    %744 = arith.mulf %740, %740 : vector<2x16x64xf32>
    %cst_574 = arith.constant dense<0.000000e+00> : vector<64xf32>
    %745 = vector.multi_reduction <add>, %744, %cst_574 [0, 1] : vector<2x16x64xf32> to vector<64xf32>
    %746 = vector.shape_cast %745 : vector<64xf32> to vector<1x1x64xf32>
    %747 = vector.shape_cast %746 : vector<1x1x64xf32> to vector<1x64xf32>
    %c0_575 = arith.constant 0 : index
    %c0_576 = arith.constant 0 : index
    %748 = vector.load %arg4[%c0_575, %c0_576] : memref<64x4xf32, #tpu.memory_space<vmem>>, vector<64x4xf32>
    %cst_577 = arith.constant dense<0.000000e+00> : vector<1x4xf32>
    %749 = tpu.matmul %743, %748, %cst_577 {dimension_numbers = #tpu.dot_dimension_numbers<[1], [0], [0], [1], [0, 0, 1, 1], [], []>} : vector<1x64xf32>, vector<64x4xf32>, vector<1x4xf32> -> vector<1x4xf32>
    %c0_578 = arith.constant 0 : index
    %c0_579 = arith.constant 0 : index
    %750 = vector.load %arg4[%c0_578, %c0_579] : memref<64x4xf32, #tpu.memory_space<vmem>>, vector<64x4xf32>
    %cst_580 = arith.constant dense<0.000000e+00> : vector<1x4xf32>
    %751 = tpu.matmul %747, %750, %cst_580 {dimension_numbers = #tpu.dot_dimension_numbers<[1], [0], [0], [1], [0, 0, 1, 1], [], []>} : vector<1x64xf32>, vector<64x4xf32>, vector<1x4xf32> -> vector<1x4xf32>
    %cst_581 = arith.constant 0.001953125 : f32
    %752 = vector.broadcast %cst_581 : f32 to vector<1x4xf32>
    %753 = arith.mulf %749, %752 : vector<1x4xf32>
    %cst_582 = arith.constant 0.001953125 : f32
    %754 = vector.broadcast %cst_582 : f32 to vector<1x4xf32>
    %755 = arith.mulf %751, %754 : vector<1x4xf32>
    %756 = arith.mulf %753, %753 : vector<1x4xf32>
    %757 = arith.subf %755, %756 : vector<1x4xf32>
    %cst_583 = arith.constant 9.99999974E-6 : f32
    %758 = vector.broadcast %cst_583 : f32 to vector<1x4xf32>
    %759 = arith.addf %757, %758 : vector<1x4xf32>
    %760 = math.rsqrt %759 : vector<1x4xf32>
    %cst_584 = arith.constant 0.000000e+00 : f32
    %761 = vector.broadcast %cst_584 : f32 to vector<1x4xf32>
    %762 = arith.subf %761, %753 : vector<1x4xf32>
    %763 = arith.mulf %762, %760 : vector<1x4xf32>
    %c0_585 = arith.constant 0 : index
    %c0_586 = arith.constant 0 : index
    %764 = vector.load %arg5[%c0_585, %c0_586] : memref<4x64xf32, #tpu.memory_space<vmem>>, vector<4x64xf32>
    %cst_587 = arith.constant dense<0.000000e+00> : vector<1x64xf32>
    %765 = tpu.matmul %760, %764, %cst_587 {dimension_numbers = #tpu.dot_dimension_numbers<[1], [0], [0], [1], [0, 0, 1, 1], [], []>} : vector<1x4xf32>, vector<4x64xf32>, vector<1x64xf32> -> vector<1x64xf32>
    %c0_588 = arith.constant 0 : index
    %c0_589 = arith.constant 0 : index
    %766 = vector.load %arg5[%c0_588, %c0_589] : memref<4x64xf32, #tpu.memory_space<vmem>>, vector<4x64xf32>
    %cst_590 = arith.constant dense<0.000000e+00> : vector<1x64xf32>
    %767 = tpu.matmul %763, %766, %cst_590 {dimension_numbers = #tpu.dot_dimension_numbers<[1], [0], [0], [1], [0, 0, 1, 1], [], []>} : vector<1x4xf32>, vector<4x64xf32>, vector<1x64xf32> -> vector<1x64xf32>
    %768 = vector.shape_cast %765 : vector<1x64xf32> to vector<1x1x64xf32>
    %769 = vector.broadcast %768 : vector<1x1x64xf32> to vector<2x16x64xf32>
    %770 = arith.mulf %740, %769 : vector<2x16x64xf32>
    %771 = vector.shape_cast %767 : vector<1x64xf32> to vector<1x1x64xf32>
    %772 = vector.broadcast %771 : vector<1x1x64xf32> to vector<2x16x64xf32>
    %773 = arith.addf %770, %772 : vector<2x16x64xf32>
    %774 = vector.broadcast %344 : f32 to vector<2x16x64xf32>
    %775 = arith.mulf %774, %773 : vector<2x16x64xf32>
    %776 = arith.addf %343, %775 : vector<2x16x64xf32>
    %c6_591 = arith.constant 6 : index
    %777 = memref.load %arg0[%c6_591] : memref<8xf32, #tpu.memory_space<smem>>
    %cst_592 = arith.constant 0.000000e+00 : f32
    %778 = vector.broadcast %cst_592 : f32 to vector<2x16x64xf32>
    %c0_593 = arith.constant 0 : index
    %c2_594 = arith.constant 2 : index
    %c8_595 = arith.constant 8 : index
    %779 = vector.load %arg19[%c0_593, %c2_594, %c8_595] : memref<2x24x96xf32, #tpu.memory_space<vmem>>, vector<2x16x64xf32>
    %c0_596 = arith.constant 0 : index
    %c0_597 = arith.constant 0 : index
    %c0_598 = arith.constant 0 : index
    %780 = vector.load %arg14[%c0_596, %c0_597, %c0_598] : memref<3x3x64xf32, #tpu.memory_space<vmem>>, vector<1x1x64xf32>
    %781 = vector.shape_cast %780 : vector<1x1x64xf32> to vector<64xf32>
    %782 = vector.shape_cast %781 : vector<64xf32> to vector<1x1x64xf32>
    %783 = vector.broadcast %782 : vector<1x1x64xf32> to vector<2x16x64xf32>
    %784 = arith.mulf %779, %783 : vector<2x16x64xf32>
    %785 = arith.addf %778, %784 : vector<2x16x64xf32>
    %c0_599 = arith.constant 0 : index
    %c2_600 = arith.constant 2 : index
    %c16_601 = arith.constant 16 : index
    %786 = vector.load %arg19[%c0_599, %c2_600, %c16_601] : memref<2x24x96xf32, #tpu.memory_space<vmem>>, vector<2x16x64xf32>
    %c0_602 = arith.constant 0 : index
    %c1_603 = arith.constant 1 : index
    %c0_604 = arith.constant 0 : index
    %787 = vector.load %arg14[%c0_602, %c1_603, %c0_604] : memref<3x3x64xf32, #tpu.memory_space<vmem>>, vector<1x1x64xf32>
    %788 = vector.shape_cast %787 : vector<1x1x64xf32> to vector<64xf32>
    %789 = vector.shape_cast %788 : vector<64xf32> to vector<1x1x64xf32>
    %790 = vector.broadcast %789 : vector<1x1x64xf32> to vector<2x16x64xf32>
    %791 = arith.mulf %786, %790 : vector<2x16x64xf32>
    %792 = arith.addf %785, %791 : vector<2x16x64xf32>
    %c0_605 = arith.constant 0 : index
    %c2_606 = arith.constant 2 : index
    %c24_607 = arith.constant 24 : index
    %793 = vector.load %arg19[%c0_605, %c2_606, %c24_607] : memref<2x24x96xf32, #tpu.memory_space<vmem>>, vector<2x16x64xf32>
    %c0_608 = arith.constant 0 : index
    %c2_609 = arith.constant 2 : index
    %c0_610 = arith.constant 0 : index
    %794 = vector.load %arg14[%c0_608, %c2_609, %c0_610] : memref<3x3x64xf32, #tpu.memory_space<vmem>>, vector<1x1x64xf32>
    %795 = vector.shape_cast %794 : vector<1x1x64xf32> to vector<64xf32>
    %796 = vector.shape_cast %795 : vector<64xf32> to vector<1x1x64xf32>
    %797 = vector.broadcast %796 : vector<1x1x64xf32> to vector<2x16x64xf32>
    %798 = arith.mulf %793, %797 : vector<2x16x64xf32>
    %799 = arith.addf %792, %798 : vector<2x16x64xf32>
    %c0_611 = arith.constant 0 : index
    %c4_612 = arith.constant 4 : index
    %c8_613 = arith.constant 8 : index
    %800 = vector.load %arg19[%c0_611, %c4_612, %c8_613] : memref<2x24x96xf32, #tpu.memory_space<vmem>>, vector<2x16x64xf32>
    %c1_614 = arith.constant 1 : index
    %c0_615 = arith.constant 0 : index
    %c0_616 = arith.constant 0 : index
    %801 = vector.load %arg14[%c1_614, %c0_615, %c0_616] : memref<3x3x64xf32, #tpu.memory_space<vmem>>, vector<1x1x64xf32>
    %802 = vector.shape_cast %801 : vector<1x1x64xf32> to vector<64xf32>
    %803 = vector.shape_cast %802 : vector<64xf32> to vector<1x1x64xf32>
    %804 = vector.broadcast %803 : vector<1x1x64xf32> to vector<2x16x64xf32>
    %805 = arith.mulf %800, %804 : vector<2x16x64xf32>
    %806 = arith.addf %799, %805 : vector<2x16x64xf32>
    %c0_617 = arith.constant 0 : index
    %c4_618 = arith.constant 4 : index
    %c16_619 = arith.constant 16 : index
    %807 = vector.load %arg19[%c0_617, %c4_618, %c16_619] : memref<2x24x96xf32, #tpu.memory_space<vmem>>, vector<2x16x64xf32>
    %c1_620 = arith.constant 1 : index
    %c1_621 = arith.constant 1 : index
    %c0_622 = arith.constant 0 : index
    %808 = vector.load %arg14[%c1_620, %c1_621, %c0_622] : memref<3x3x64xf32, #tpu.memory_space<vmem>>, vector<1x1x64xf32>
    %809 = vector.shape_cast %808 : vector<1x1x64xf32> to vector<64xf32>
    %810 = vector.shape_cast %809 : vector<64xf32> to vector<1x1x64xf32>
    %811 = vector.broadcast %810 : vector<1x1x64xf32> to vector<2x16x64xf32>
    %812 = arith.mulf %807, %811 : vector<2x16x64xf32>
    %813 = arith.addf %806, %812 : vector<2x16x64xf32>
    %c0_623 = arith.constant 0 : index
    %c4_624 = arith.constant 4 : index
    %c24_625 = arith.constant 24 : index
    %814 = vector.load %arg19[%c0_623, %c4_624, %c24_625] : memref<2x24x96xf32, #tpu.memory_space<vmem>>, vector<2x16x64xf32>
    %c1_626 = arith.constant 1 : index
    %c2_627 = arith.constant 2 : index
    %c0_628 = arith.constant 0 : index
    %815 = vector.load %arg14[%c1_626, %c2_627, %c0_628] : memref<3x3x64xf32, #tpu.memory_space<vmem>>, vector<1x1x64xf32>
    %816 = vector.shape_cast %815 : vector<1x1x64xf32> to vector<64xf32>
    %817 = vector.shape_cast %816 : vector<64xf32> to vector<1x1x64xf32>
    %818 = vector.broadcast %817 : vector<1x1x64xf32> to vector<2x16x64xf32>
    %819 = arith.mulf %814, %818 : vector<2x16x64xf32>
    %820 = arith.addf %813, %819 : vector<2x16x64xf32>
    %c0_629 = arith.constant 0 : index
    %c6_630 = arith.constant 6 : index
    %c8_631 = arith.constant 8 : index
    %821 = vector.load %arg19[%c0_629, %c6_630, %c8_631] : memref<2x24x96xf32, #tpu.memory_space<vmem>>, vector<2x16x64xf32>
    %c2_632 = arith.constant 2 : index
    %c0_633 = arith.constant 0 : index
    %c0_634 = arith.constant 0 : index
    %822 = vector.load %arg14[%c2_632, %c0_633, %c0_634] : memref<3x3x64xf32, #tpu.memory_space<vmem>>, vector<1x1x64xf32>
    %823 = vector.shape_cast %822 : vector<1x1x64xf32> to vector<64xf32>
    %824 = vector.shape_cast %823 : vector<64xf32> to vector<1x1x64xf32>
    %825 = vector.broadcast %824 : vector<1x1x64xf32> to vector<2x16x64xf32>
    %826 = arith.mulf %821, %825 : vector<2x16x64xf32>
    %827 = arith.addf %820, %826 : vector<2x16x64xf32>
    %c0_635 = arith.constant 0 : index
    %c6_636 = arith.constant 6 : index
    %c16_637 = arith.constant 16 : index
    %828 = vector.load %arg19[%c0_635, %c6_636, %c16_637] : memref<2x24x96xf32, #tpu.memory_space<vmem>>, vector<2x16x64xf32>
    %c2_638 = arith.constant 2 : index
    %c1_639 = arith.constant 1 : index
    %c0_640 = arith.constant 0 : index
    %829 = vector.load %arg14[%c2_638, %c1_639, %c0_640] : memref<3x3x64xf32, #tpu.memory_space<vmem>>, vector<1x1x64xf32>
    %830 = vector.shape_cast %829 : vector<1x1x64xf32> to vector<64xf32>
    %831 = vector.shape_cast %830 : vector<64xf32> to vector<1x1x64xf32>
    %832 = vector.broadcast %831 : vector<1x1x64xf32> to vector<2x16x64xf32>
    %833 = arith.mulf %828, %832 : vector<2x16x64xf32>
    %834 = arith.addf %827, %833 : vector<2x16x64xf32>
    %c0_641 = arith.constant 0 : index
    %c6_642 = arith.constant 6 : index
    %c24_643 = arith.constant 24 : index
    %835 = vector.load %arg19[%c0_641, %c6_642, %c24_643] : memref<2x24x96xf32, #tpu.memory_space<vmem>>, vector<2x16x64xf32>
    %c2_644 = arith.constant 2 : index
    %c2_645 = arith.constant 2 : index
    %c0_646 = arith.constant 0 : index
    %836 = vector.load %arg14[%c2_644, %c2_645, %c0_646] : memref<3x3x64xf32, #tpu.memory_space<vmem>>, vector<1x1x64xf32>
    %837 = vector.shape_cast %836 : vector<1x1x64xf32> to vector<64xf32>
    %838 = vector.shape_cast %837 : vector<64xf32> to vector<1x1x64xf32>
    %839 = vector.broadcast %838 : vector<1x1x64xf32> to vector<2x16x64xf32>
    %840 = arith.mulf %835, %839 : vector<2x16x64xf32>
    %841 = arith.addf %834, %840 : vector<2x16x64xf32>
    %842 = vector.shape_cast %841 : vector<2x16x64xf32> to vector<32x64xf32>
    %c0_647 = arith.constant 0 : index
    %c0_648 = arith.constant 0 : index
    %843 = vector.load %arg15[%c0_647, %c0_648] : memref<64x64xf32, #tpu.memory_space<vmem>>, vector<64x64xf32>
    %cst_649 = arith.constant dense<0.000000e+00> : vector<32x64xf32>
    %844 = tpu.matmul %842, %843, %cst_649 {dimension_numbers = #tpu.dot_dimension_numbers<[1], [0], [0], [1], [0, 0, 1, 1], [], []>} : vector<32x64xf32>, vector<64x64xf32>, vector<32x64xf32> -> vector<32x64xf32>
    %845 = vector.shape_cast %844 : vector<32x64xf32> to vector<2x16x64xf32>
    %cst_650 = arith.constant dense<0.000000e+00> : vector<64xf32>
    %846 = vector.multi_reduction <add>, %845, %cst_650 [0, 1] : vector<2x16x64xf32> to vector<64xf32>
    %847 = vector.shape_cast %846 : vector<64xf32> to vector<1x1x64xf32>
    %848 = vector.shape_cast %847 : vector<1x1x64xf32> to vector<1x64xf32>
    %849 = arith.mulf %845, %845 : vector<2x16x64xf32>
    %cst_651 = arith.constant dense<0.000000e+00> : vector<64xf32>
    %850 = vector.multi_reduction <add>, %849, %cst_651 [0, 1] : vector<2x16x64xf32> to vector<64xf32>
    %851 = vector.shape_cast %850 : vector<64xf32> to vector<1x1x64xf32>
    %852 = vector.shape_cast %851 : vector<1x1x64xf32> to vector<1x64xf32>
    %c0_652 = arith.constant 0 : index
    %c0_653 = arith.constant 0 : index
    %853 = vector.load %arg4[%c0_652, %c0_653] : memref<64x4xf32, #tpu.memory_space<vmem>>, vector<64x4xf32>
    %cst_654 = arith.constant dense<0.000000e+00> : vector<1x4xf32>
    %854 = tpu.matmul %848, %853, %cst_654 {dimension_numbers = #tpu.dot_dimension_numbers<[1], [0], [0], [1], [0, 0, 1, 1], [], []>} : vector<1x64xf32>, vector<64x4xf32>, vector<1x4xf32> -> vector<1x4xf32>
    %c0_655 = arith.constant 0 : index
    %c0_656 = arith.constant 0 : index
    %855 = vector.load %arg4[%c0_655, %c0_656] : memref<64x4xf32, #tpu.memory_space<vmem>>, vector<64x4xf32>
    %cst_657 = arith.constant dense<0.000000e+00> : vector<1x4xf32>
    %856 = tpu.matmul %852, %855, %cst_657 {dimension_numbers = #tpu.dot_dimension_numbers<[1], [0], [0], [1], [0, 0, 1, 1], [], []>} : vector<1x64xf32>, vector<64x4xf32>, vector<1x4xf32> -> vector<1x4xf32>
    %cst_658 = arith.constant 0.001953125 : f32
    %857 = vector.broadcast %cst_658 : f32 to vector<1x4xf32>
    %858 = arith.mulf %854, %857 : vector<1x4xf32>
    %cst_659 = arith.constant 0.001953125 : f32
    %859 = vector.broadcast %cst_659 : f32 to vector<1x4xf32>
    %860 = arith.mulf %856, %859 : vector<1x4xf32>
    %861 = arith.mulf %858, %858 : vector<1x4xf32>
    %862 = arith.subf %860, %861 : vector<1x4xf32>
    %cst_660 = arith.constant 9.99999974E-6 : f32
    %863 = vector.broadcast %cst_660 : f32 to vector<1x4xf32>
    %864 = arith.addf %862, %863 : vector<1x4xf32>
    %865 = math.rsqrt %864 : vector<1x4xf32>
    %cst_661 = arith.constant 0.000000e+00 : f32
    %866 = vector.broadcast %cst_661 : f32 to vector<1x4xf32>
    %867 = arith.subf %866, %858 : vector<1x4xf32>
    %868 = arith.mulf %867, %865 : vector<1x4xf32>
    %c0_662 = arith.constant 0 : index
    %c0_663 = arith.constant 0 : index
    %869 = vector.load %arg5[%c0_662, %c0_663] : memref<4x64xf32, #tpu.memory_space<vmem>>, vector<4x64xf32>
    %cst_664 = arith.constant dense<0.000000e+00> : vector<1x64xf32>
    %870 = tpu.matmul %865, %869, %cst_664 {dimension_numbers = #tpu.dot_dimension_numbers<[1], [0], [0], [1], [0, 0, 1, 1], [], []>} : vector<1x4xf32>, vector<4x64xf32>, vector<1x64xf32> -> vector<1x64xf32>
    %c0_665 = arith.constant 0 : index
    %c0_666 = arith.constant 0 : index
    %871 = vector.load %arg5[%c0_665, %c0_666] : memref<4x64xf32, #tpu.memory_space<vmem>>, vector<4x64xf32>
    %cst_667 = arith.constant dense<0.000000e+00> : vector<1x64xf32>
    %872 = tpu.matmul %868, %871, %cst_667 {dimension_numbers = #tpu.dot_dimension_numbers<[1], [0], [0], [1], [0, 0, 1, 1], [], []>} : vector<1x4xf32>, vector<4x64xf32>, vector<1x64xf32> -> vector<1x64xf32>
    %873 = vector.shape_cast %870 : vector<1x64xf32> to vector<1x1x64xf32>
    %874 = vector.broadcast %873 : vector<1x1x64xf32> to vector<2x16x64xf32>
    %875 = arith.mulf %845, %874 : vector<2x16x64xf32>
    %876 = vector.shape_cast %872 : vector<1x64xf32> to vector<1x1x64xf32>
    %877 = vector.broadcast %876 : vector<1x1x64xf32> to vector<2x16x64xf32>
    %878 = arith.addf %875, %877 : vector<2x16x64xf32>
    %879 = vector.broadcast %777 : f32 to vector<2x16x64xf32>
    %880 = arith.mulf %879, %878 : vector<2x16x64xf32>
    %881 = arith.addf %776, %880 : vector<2x16x64xf32>
    %c7 = arith.constant 7 : index
    %882 = memref.load %arg0[%c7] : memref<8xf32, #tpu.memory_space<smem>>
    %cst_668 = arith.constant 0.000000e+00 : f32
    %883 = vector.broadcast %cst_668 : f32 to vector<2x16x64xf32>
    %c0_669 = arith.constant 0 : index
    %c0_670 = arith.constant 0 : index
    %c0_671 = arith.constant 0 : index
    %884 = vector.load %arg19[%c0_669, %c0_670, %c0_671] : memref<2x24x96xf32, #tpu.memory_space<vmem>>, vector<2x16x64xf32>
    %c0_672 = arith.constant 0 : index
    %c0_673 = arith.constant 0 : index
    %c0_674 = arith.constant 0 : index
    %885 = vector.load %arg16[%c0_672, %c0_673, %c0_674] : memref<5x5x64xf32, #tpu.memory_space<vmem>>, vector<1x1x64xf32>
    %886 = vector.shape_cast %885 : vector<1x1x64xf32> to vector<64xf32>
    %887 = vector.shape_cast %886 : vector<64xf32> to vector<1x1x64xf32>
    %888 = vector.broadcast %887 : vector<1x1x64xf32> to vector<2x16x64xf32>
    %889 = arith.mulf %884, %888 : vector<2x16x64xf32>
    %890 = arith.addf %883, %889 : vector<2x16x64xf32>
    %c0_675 = arith.constant 0 : index
    %c0_676 = arith.constant 0 : index
    %c8_677 = arith.constant 8 : index
    %891 = vector.load %arg19[%c0_675, %c0_676, %c8_677] : memref<2x24x96xf32, #tpu.memory_space<vmem>>, vector<2x16x64xf32>
    %c0_678 = arith.constant 0 : index
    %c1_679 = arith.constant 1 : index
    %c0_680 = arith.constant 0 : index
    %892 = vector.load %arg16[%c0_678, %c1_679, %c0_680] : memref<5x5x64xf32, #tpu.memory_space<vmem>>, vector<1x1x64xf32>
    %893 = vector.shape_cast %892 : vector<1x1x64xf32> to vector<64xf32>
    %894 = vector.shape_cast %893 : vector<64xf32> to vector<1x1x64xf32>
    %895 = vector.broadcast %894 : vector<1x1x64xf32> to vector<2x16x64xf32>
    %896 = arith.mulf %891, %895 : vector<2x16x64xf32>
    %897 = arith.addf %890, %896 : vector<2x16x64xf32>
    %c0_681 = arith.constant 0 : index
    %c0_682 = arith.constant 0 : index
    %c16_683 = arith.constant 16 : index
    %898 = vector.load %arg19[%c0_681, %c0_682, %c16_683] : memref<2x24x96xf32, #tpu.memory_space<vmem>>, vector<2x16x64xf32>
    %c0_684 = arith.constant 0 : index
    %c2_685 = arith.constant 2 : index
    %c0_686 = arith.constant 0 : index
    %899 = vector.load %arg16[%c0_684, %c2_685, %c0_686] : memref<5x5x64xf32, #tpu.memory_space<vmem>>, vector<1x1x64xf32>
    %900 = vector.shape_cast %899 : vector<1x1x64xf32> to vector<64xf32>
    %901 = vector.shape_cast %900 : vector<64xf32> to vector<1x1x64xf32>
    %902 = vector.broadcast %901 : vector<1x1x64xf32> to vector<2x16x64xf32>
    %903 = arith.mulf %898, %902 : vector<2x16x64xf32>
    %904 = arith.addf %897, %903 : vector<2x16x64xf32>
    %c0_687 = arith.constant 0 : index
    %c0_688 = arith.constant 0 : index
    %c24_689 = arith.constant 24 : index
    %905 = vector.load %arg19[%c0_687, %c0_688, %c24_689] : memref<2x24x96xf32, #tpu.memory_space<vmem>>, vector<2x16x64xf32>
    %c0_690 = arith.constant 0 : index
    %c3_691 = arith.constant 3 : index
    %c0_692 = arith.constant 0 : index
    %906 = vector.load %arg16[%c0_690, %c3_691, %c0_692] : memref<5x5x64xf32, #tpu.memory_space<vmem>>, vector<1x1x64xf32>
    %907 = vector.shape_cast %906 : vector<1x1x64xf32> to vector<64xf32>
    %908 = vector.shape_cast %907 : vector<64xf32> to vector<1x1x64xf32>
    %909 = vector.broadcast %908 : vector<1x1x64xf32> to vector<2x16x64xf32>
    %910 = arith.mulf %905, %909 : vector<2x16x64xf32>
    %911 = arith.addf %904, %910 : vector<2x16x64xf32>
    %c0_693 = arith.constant 0 : index
    %c0_694 = arith.constant 0 : index
    %c32 = arith.constant 32 : index
    %912 = vector.load %arg19[%c0_693, %c0_694, %c32] : memref<2x24x96xf32, #tpu.memory_space<vmem>>, vector<2x16x64xf32>
    %c0_695 = arith.constant 0 : index
    %c4_696 = arith.constant 4 : index
    %c0_697 = arith.constant 0 : index
    %913 = vector.load %arg16[%c0_695, %c4_696, %c0_697] : memref<5x5x64xf32, #tpu.memory_space<vmem>>, vector<1x1x64xf32>
    %914 = vector.shape_cast %913 : vector<1x1x64xf32> to vector<64xf32>
    %915 = vector.shape_cast %914 : vector<64xf32> to vector<1x1x64xf32>
    %916 = vector.broadcast %915 : vector<1x1x64xf32> to vector<2x16x64xf32>
    %917 = arith.mulf %912, %916 : vector<2x16x64xf32>
    %918 = arith.addf %911, %917 : vector<2x16x64xf32>
    %c0_698 = arith.constant 0 : index
    %c2_699 = arith.constant 2 : index
    %c0_700 = arith.constant 0 : index
    %919 = vector.load %arg19[%c0_698, %c2_699, %c0_700] : memref<2x24x96xf32, #tpu.memory_space<vmem>>, vector<2x16x64xf32>
    %c1_701 = arith.constant 1 : index
    %c0_702 = arith.constant 0 : index
    %c0_703 = arith.constant 0 : index
    %920 = vector.load %arg16[%c1_701, %c0_702, %c0_703] : memref<5x5x64xf32, #tpu.memory_space<vmem>>, vector<1x1x64xf32>
    %921 = vector.shape_cast %920 : vector<1x1x64xf32> to vector<64xf32>
    %922 = vector.shape_cast %921 : vector<64xf32> to vector<1x1x64xf32>
    %923 = vector.broadcast %922 : vector<1x1x64xf32> to vector<2x16x64xf32>
    %924 = arith.mulf %919, %923 : vector<2x16x64xf32>
    %925 = arith.addf %918, %924 : vector<2x16x64xf32>
    %c0_704 = arith.constant 0 : index
    %c2_705 = arith.constant 2 : index
    %c8_706 = arith.constant 8 : index
    %926 = vector.load %arg19[%c0_704, %c2_705, %c8_706] : memref<2x24x96xf32, #tpu.memory_space<vmem>>, vector<2x16x64xf32>
    %c1_707 = arith.constant 1 : index
    %c1_708 = arith.constant 1 : index
    %c0_709 = arith.constant 0 : index
    %927 = vector.load %arg16[%c1_707, %c1_708, %c0_709] : memref<5x5x64xf32, #tpu.memory_space<vmem>>, vector<1x1x64xf32>
    %928 = vector.shape_cast %927 : vector<1x1x64xf32> to vector<64xf32>
    %929 = vector.shape_cast %928 : vector<64xf32> to vector<1x1x64xf32>
    %930 = vector.broadcast %929 : vector<1x1x64xf32> to vector<2x16x64xf32>
    %931 = arith.mulf %926, %930 : vector<2x16x64xf32>
    %932 = arith.addf %925, %931 : vector<2x16x64xf32>
    %c0_710 = arith.constant 0 : index
    %c2_711 = arith.constant 2 : index
    %c16_712 = arith.constant 16 : index
    %933 = vector.load %arg19[%c0_710, %c2_711, %c16_712] : memref<2x24x96xf32, #tpu.memory_space<vmem>>, vector<2x16x64xf32>
    %c1_713 = arith.constant 1 : index
    %c2_714 = arith.constant 2 : index
    %c0_715 = arith.constant 0 : index
    %934 = vector.load %arg16[%c1_713, %c2_714, %c0_715] : memref<5x5x64xf32, #tpu.memory_space<vmem>>, vector<1x1x64xf32>
    %935 = vector.shape_cast %934 : vector<1x1x64xf32> to vector<64xf32>
    %936 = vector.shape_cast %935 : vector<64xf32> to vector<1x1x64xf32>
    %937 = vector.broadcast %936 : vector<1x1x64xf32> to vector<2x16x64xf32>
    %938 = arith.mulf %933, %937 : vector<2x16x64xf32>
    %939 = arith.addf %932, %938 : vector<2x16x64xf32>
    %c0_716 = arith.constant 0 : index
    %c2_717 = arith.constant 2 : index
    %c24_718 = arith.constant 24 : index
    %940 = vector.load %arg19[%c0_716, %c2_717, %c24_718] : memref<2x24x96xf32, #tpu.memory_space<vmem>>, vector<2x16x64xf32>
    %c1_719 = arith.constant 1 : index
    %c3_720 = arith.constant 3 : index
    %c0_721 = arith.constant 0 : index
    %941 = vector.load %arg16[%c1_719, %c3_720, %c0_721] : memref<5x5x64xf32, #tpu.memory_space<vmem>>, vector<1x1x64xf32>
    %942 = vector.shape_cast %941 : vector<1x1x64xf32> to vector<64xf32>
    %943 = vector.shape_cast %942 : vector<64xf32> to vector<1x1x64xf32>
    %944 = vector.broadcast %943 : vector<1x1x64xf32> to vector<2x16x64xf32>
    %945 = arith.mulf %940, %944 : vector<2x16x64xf32>
    %946 = arith.addf %939, %945 : vector<2x16x64xf32>
    %c0_722 = arith.constant 0 : index
    %c2_723 = arith.constant 2 : index
    %c32_724 = arith.constant 32 : index
    %947 = vector.load %arg19[%c0_722, %c2_723, %c32_724] : memref<2x24x96xf32, #tpu.memory_space<vmem>>, vector<2x16x64xf32>
    %c1_725 = arith.constant 1 : index
    %c4_726 = arith.constant 4 : index
    %c0_727 = arith.constant 0 : index
    %948 = vector.load %arg16[%c1_725, %c4_726, %c0_727] : memref<5x5x64xf32, #tpu.memory_space<vmem>>, vector<1x1x64xf32>
    %949 = vector.shape_cast %948 : vector<1x1x64xf32> to vector<64xf32>
    %950 = vector.shape_cast %949 : vector<64xf32> to vector<1x1x64xf32>
    %951 = vector.broadcast %950 : vector<1x1x64xf32> to vector<2x16x64xf32>
    %952 = arith.mulf %947, %951 : vector<2x16x64xf32>
    %953 = arith.addf %946, %952 : vector<2x16x64xf32>
    %c0_728 = arith.constant 0 : index
    %c4_729 = arith.constant 4 : index
    %c0_730 = arith.constant 0 : index
    %954 = vector.load %arg19[%c0_728, %c4_729, %c0_730] : memref<2x24x96xf32, #tpu.memory_space<vmem>>, vector<2x16x64xf32>
    %c2_731 = arith.constant 2 : index
    %c0_732 = arith.constant 0 : index
    %c0_733 = arith.constant 0 : index
    %955 = vector.load %arg16[%c2_731, %c0_732, %c0_733] : memref<5x5x64xf32, #tpu.memory_space<vmem>>, vector<1x1x64xf32>
    %956 = vector.shape_cast %955 : vector<1x1x64xf32> to vector<64xf32>
    %957 = vector.shape_cast %956 : vector<64xf32> to vector<1x1x64xf32>
    %958 = vector.broadcast %957 : vector<1x1x64xf32> to vector<2x16x64xf32>
    %959 = arith.mulf %954, %958 : vector<2x16x64xf32>
    %960 = arith.addf %953, %959 : vector<2x16x64xf32>
    %c0_734 = arith.constant 0 : index
    %c4_735 = arith.constant 4 : index
    %c8_736 = arith.constant 8 : index
    %961 = vector.load %arg19[%c0_734, %c4_735, %c8_736] : memref<2x24x96xf32, #tpu.memory_space<vmem>>, vector<2x16x64xf32>
    %c2_737 = arith.constant 2 : index
    %c1_738 = arith.constant 1 : index
    %c0_739 = arith.constant 0 : index
    %962 = vector.load %arg16[%c2_737, %c1_738, %c0_739] : memref<5x5x64xf32, #tpu.memory_space<vmem>>, vector<1x1x64xf32>
    %963 = vector.shape_cast %962 : vector<1x1x64xf32> to vector<64xf32>
    %964 = vector.shape_cast %963 : vector<64xf32> to vector<1x1x64xf32>
    %965 = vector.broadcast %964 : vector<1x1x64xf32> to vector<2x16x64xf32>
    %966 = arith.mulf %961, %965 : vector<2x16x64xf32>
    %967 = arith.addf %960, %966 : vector<2x16x64xf32>
    %c0_740 = arith.constant 0 : index
    %c4_741 = arith.constant 4 : index
    %c16_742 = arith.constant 16 : index
    %968 = vector.load %arg19[%c0_740, %c4_741, %c16_742] : memref<2x24x96xf32, #tpu.memory_space<vmem>>, vector<2x16x64xf32>
    %c2_743 = arith.constant 2 : index
    %c2_744 = arith.constant 2 : index
    %c0_745 = arith.constant 0 : index
    %969 = vector.load %arg16[%c2_743, %c2_744, %c0_745] : memref<5x5x64xf32, #tpu.memory_space<vmem>>, vector<1x1x64xf32>
    %970 = vector.shape_cast %969 : vector<1x1x64xf32> to vector<64xf32>
    %971 = vector.shape_cast %970 : vector<64xf32> to vector<1x1x64xf32>
    %972 = vector.broadcast %971 : vector<1x1x64xf32> to vector<2x16x64xf32>
    %973 = arith.mulf %968, %972 : vector<2x16x64xf32>
    %974 = arith.addf %967, %973 : vector<2x16x64xf32>
    %c0_746 = arith.constant 0 : index
    %c4_747 = arith.constant 4 : index
    %c24_748 = arith.constant 24 : index
    %975 = vector.load %arg19[%c0_746, %c4_747, %c24_748] : memref<2x24x96xf32, #tpu.memory_space<vmem>>, vector<2x16x64xf32>
    %c2_749 = arith.constant 2 : index
    %c3_750 = arith.constant 3 : index
    %c0_751 = arith.constant 0 : index
    %976 = vector.load %arg16[%c2_749, %c3_750, %c0_751] : memref<5x5x64xf32, #tpu.memory_space<vmem>>, vector<1x1x64xf32>
    %977 = vector.shape_cast %976 : vector<1x1x64xf32> to vector<64xf32>
    %978 = vector.shape_cast %977 : vector<64xf32> to vector<1x1x64xf32>
    %979 = vector.broadcast %978 : vector<1x1x64xf32> to vector<2x16x64xf32>
    %980 = arith.mulf %975, %979 : vector<2x16x64xf32>
    %981 = arith.addf %974, %980 : vector<2x16x64xf32>
    %c0_752 = arith.constant 0 : index
    %c4_753 = arith.constant 4 : index
    %c32_754 = arith.constant 32 : index
    %982 = vector.load %arg19[%c0_752, %c4_753, %c32_754] : memref<2x24x96xf32, #tpu.memory_space<vmem>>, vector<2x16x64xf32>
    %c2_755 = arith.constant 2 : index
    %c4_756 = arith.constant 4 : index
    %c0_757 = arith.constant 0 : index
    %983 = vector.load %arg16[%c2_755, %c4_756, %c0_757] : memref<5x5x64xf32, #tpu.memory_space<vmem>>, vector<1x1x64xf32>
    %984 = vector.shape_cast %983 : vector<1x1x64xf32> to vector<64xf32>
    %985 = vector.shape_cast %984 : vector<64xf32> to vector<1x1x64xf32>
    %986 = vector.broadcast %985 : vector<1x1x64xf32> to vector<2x16x64xf32>
    %987 = arith.mulf %982, %986 : vector<2x16x64xf32>
    %988 = arith.addf %981, %987 : vector<2x16x64xf32>
    %c0_758 = arith.constant 0 : index
    %c6_759 = arith.constant 6 : index
    %c0_760 = arith.constant 0 : index
    %989 = vector.load %arg19[%c0_758, %c6_759, %c0_760] : memref<2x24x96xf32, #tpu.memory_space<vmem>>, vector<2x16x64xf32>
    %c3_761 = arith.constant 3 : index
    %c0_762 = arith.constant 0 : index
    %c0_763 = arith.constant 0 : index
    %990 = vector.load %arg16[%c3_761, %c0_762, %c0_763] : memref<5x5x64xf32, #tpu.memory_space<vmem>>, vector<1x1x64xf32>
    %991 = vector.shape_cast %990 : vector<1x1x64xf32> to vector<64xf32>
    %992 = vector.shape_cast %991 : vector<64xf32> to vector<1x1x64xf32>
    %993 = vector.broadcast %992 : vector<1x1x64xf32> to vector<2x16x64xf32>
    %994 = arith.mulf %989, %993 : vector<2x16x64xf32>
    %995 = arith.addf %988, %994 : vector<2x16x64xf32>
    %c0_764 = arith.constant 0 : index
    %c6_765 = arith.constant 6 : index
    %c8_766 = arith.constant 8 : index
    %996 = vector.load %arg19[%c0_764, %c6_765, %c8_766] : memref<2x24x96xf32, #tpu.memory_space<vmem>>, vector<2x16x64xf32>
    %c3_767 = arith.constant 3 : index
    %c1_768 = arith.constant 1 : index
    %c0_769 = arith.constant 0 : index
    %997 = vector.load %arg16[%c3_767, %c1_768, %c0_769] : memref<5x5x64xf32, #tpu.memory_space<vmem>>, vector<1x1x64xf32>
    %998 = vector.shape_cast %997 : vector<1x1x64xf32> to vector<64xf32>
    %999 = vector.shape_cast %998 : vector<64xf32> to vector<1x1x64xf32>
    %1000 = vector.broadcast %999 : vector<1x1x64xf32> to vector<2x16x64xf32>
    %1001 = arith.mulf %996, %1000 : vector<2x16x64xf32>
    %1002 = arith.addf %995, %1001 : vector<2x16x64xf32>
    %c0_770 = arith.constant 0 : index
    %c6_771 = arith.constant 6 : index
    %c16_772 = arith.constant 16 : index
    %1003 = vector.load %arg19[%c0_770, %c6_771, %c16_772] : memref<2x24x96xf32, #tpu.memory_space<vmem>>, vector<2x16x64xf32>
    %c3_773 = arith.constant 3 : index
    %c2_774 = arith.constant 2 : index
    %c0_775 = arith.constant 0 : index
    %1004 = vector.load %arg16[%c3_773, %c2_774, %c0_775] : memref<5x5x64xf32, #tpu.memory_space<vmem>>, vector<1x1x64xf32>
    %1005 = vector.shape_cast %1004 : vector<1x1x64xf32> to vector<64xf32>
    %1006 = vector.shape_cast %1005 : vector<64xf32> to vector<1x1x64xf32>
    %1007 = vector.broadcast %1006 : vector<1x1x64xf32> to vector<2x16x64xf32>
    %1008 = arith.mulf %1003, %1007 : vector<2x16x64xf32>
    %1009 = arith.addf %1002, %1008 : vector<2x16x64xf32>
    %c0_776 = arith.constant 0 : index
    %c6_777 = arith.constant 6 : index
    %c24_778 = arith.constant 24 : index
    %1010 = vector.load %arg19[%c0_776, %c6_777, %c24_778] : memref<2x24x96xf32, #tpu.memory_space<vmem>>, vector<2x16x64xf32>
    %c3_779 = arith.constant 3 : index
    %c3_780 = arith.constant 3 : index
    %c0_781 = arith.constant 0 : index
    %1011 = vector.load %arg16[%c3_779, %c3_780, %c0_781] : memref<5x5x64xf32, #tpu.memory_space<vmem>>, vector<1x1x64xf32>
    %1012 = vector.shape_cast %1011 : vector<1x1x64xf32> to vector<64xf32>
    %1013 = vector.shape_cast %1012 : vector<64xf32> to vector<1x1x64xf32>
    %1014 = vector.broadcast %1013 : vector<1x1x64xf32> to vector<2x16x64xf32>
    %1015 = arith.mulf %1010, %1014 : vector<2x16x64xf32>
    %1016 = arith.addf %1009, %1015 : vector<2x16x64xf32>
    %c0_782 = arith.constant 0 : index
    %c6_783 = arith.constant 6 : index
    %c32_784 = arith.constant 32 : index
    %1017 = vector.load %arg19[%c0_782, %c6_783, %c32_784] : memref<2x24x96xf32, #tpu.memory_space<vmem>>, vector<2x16x64xf32>
    %c3_785 = arith.constant 3 : index
    %c4_786 = arith.constant 4 : index
    %c0_787 = arith.constant 0 : index
    %1018 = vector.load %arg16[%c3_785, %c4_786, %c0_787] : memref<5x5x64xf32, #tpu.memory_space<vmem>>, vector<1x1x64xf32>
    %1019 = vector.shape_cast %1018 : vector<1x1x64xf32> to vector<64xf32>
    %1020 = vector.shape_cast %1019 : vector<64xf32> to vector<1x1x64xf32>
    %1021 = vector.broadcast %1020 : vector<1x1x64xf32> to vector<2x16x64xf32>
    %1022 = arith.mulf %1017, %1021 : vector<2x16x64xf32>
    %1023 = arith.addf %1016, %1022 : vector<2x16x64xf32>
    %c0_788 = arith.constant 0 : index
    %c8_789 = arith.constant 8 : index
    %c0_790 = arith.constant 0 : index
    %1024 = vector.load %arg19[%c0_788, %c8_789, %c0_790] : memref<2x24x96xf32, #tpu.memory_space<vmem>>, vector<2x16x64xf32>
    %c4_791 = arith.constant 4 : index
    %c0_792 = arith.constant 0 : index
    %c0_793 = arith.constant 0 : index
    %1025 = vector.load %arg16[%c4_791, %c0_792, %c0_793] : memref<5x5x64xf32, #tpu.memory_space<vmem>>, vector<1x1x64xf32>
    %1026 = vector.shape_cast %1025 : vector<1x1x64xf32> to vector<64xf32>
    %1027 = vector.shape_cast %1026 : vector<64xf32> to vector<1x1x64xf32>
    %1028 = vector.broadcast %1027 : vector<1x1x64xf32> to vector<2x16x64xf32>
    %1029 = arith.mulf %1024, %1028 : vector<2x16x64xf32>
    %1030 = arith.addf %1023, %1029 : vector<2x16x64xf32>
    %c0_794 = arith.constant 0 : index
    %c8_795 = arith.constant 8 : index
    %c8_796 = arith.constant 8 : index
    %1031 = vector.load %arg19[%c0_794, %c8_795, %c8_796] : memref<2x24x96xf32, #tpu.memory_space<vmem>>, vector<2x16x64xf32>
    %c4_797 = arith.constant 4 : index
    %c1_798 = arith.constant 1 : index
    %c0_799 = arith.constant 0 : index
    %1032 = vector.load %arg16[%c4_797, %c1_798, %c0_799] : memref<5x5x64xf32, #tpu.memory_space<vmem>>, vector<1x1x64xf32>
    %1033 = vector.shape_cast %1032 : vector<1x1x64xf32> to vector<64xf32>
    %1034 = vector.shape_cast %1033 : vector<64xf32> to vector<1x1x64xf32>
    %1035 = vector.broadcast %1034 : vector<1x1x64xf32> to vector<2x16x64xf32>
    %1036 = arith.mulf %1031, %1035 : vector<2x16x64xf32>
    %1037 = arith.addf %1030, %1036 : vector<2x16x64xf32>
    %c0_800 = arith.constant 0 : index
    %c8_801 = arith.constant 8 : index
    %c16_802 = arith.constant 16 : index
    %1038 = vector.load %arg19[%c0_800, %c8_801, %c16_802] : memref<2x24x96xf32, #tpu.memory_space<vmem>>, vector<2x16x64xf32>
    %c4_803 = arith.constant 4 : index
    %c2_804 = arith.constant 2 : index
    %c0_805 = arith.constant 0 : index
    %1039 = vector.load %arg16[%c4_803, %c2_804, %c0_805] : memref<5x5x64xf32, #tpu.memory_space<vmem>>, vector<1x1x64xf32>
    %1040 = vector.shape_cast %1039 : vector<1x1x64xf32> to vector<64xf32>
    %1041 = vector.shape_cast %1040 : vector<64xf32> to vector<1x1x64xf32>
    %1042 = vector.broadcast %1041 : vector<1x1x64xf32> to vector<2x16x64xf32>
    %1043 = arith.mulf %1038, %1042 : vector<2x16x64xf32>
    %1044 = arith.addf %1037, %1043 : vector<2x16x64xf32>
    %c0_806 = arith.constant 0 : index
    %c8_807 = arith.constant 8 : index
    %c24_808 = arith.constant 24 : index
    %1045 = vector.load %arg19[%c0_806, %c8_807, %c24_808] : memref<2x24x96xf32, #tpu.memory_space<vmem>>, vector<2x16x64xf32>
    %c4_809 = arith.constant 4 : index
    %c3_810 = arith.constant 3 : index
    %c0_811 = arith.constant 0 : index
    %1046 = vector.load %arg16[%c4_809, %c3_810, %c0_811] : memref<5x5x64xf32, #tpu.memory_space<vmem>>, vector<1x1x64xf32>
    %1047 = vector.shape_cast %1046 : vector<1x1x64xf32> to vector<64xf32>
    %1048 = vector.shape_cast %1047 : vector<64xf32> to vector<1x1x64xf32>
    %1049 = vector.broadcast %1048 : vector<1x1x64xf32> to vector<2x16x64xf32>
    %1050 = arith.mulf %1045, %1049 : vector<2x16x64xf32>
    %1051 = arith.addf %1044, %1050 : vector<2x16x64xf32>
    %c0_812 = arith.constant 0 : index
    %c8_813 = arith.constant 8 : index
    %c32_814 = arith.constant 32 : index
    %1052 = vector.load %arg19[%c0_812, %c8_813, %c32_814] : memref<2x24x96xf32, #tpu.memory_space<vmem>>, vector<2x16x64xf32>
    %c4_815 = arith.constant 4 : index
    %c4_816 = arith.constant 4 : index
    %c0_817 = arith.constant 0 : index
    %1053 = vector.load %arg16[%c4_815, %c4_816, %c0_817] : memref<5x5x64xf32, #tpu.memory_space<vmem>>, vector<1x1x64xf32>
    %1054 = vector.shape_cast %1053 : vector<1x1x64xf32> to vector<64xf32>
    %1055 = vector.shape_cast %1054 : vector<64xf32> to vector<1x1x64xf32>
    %1056 = vector.broadcast %1055 : vector<1x1x64xf32> to vector<2x16x64xf32>
    %1057 = arith.mulf %1052, %1056 : vector<2x16x64xf32>
    %1058 = arith.addf %1051, %1057 : vector<2x16x64xf32>
    %1059 = vector.shape_cast %1058 : vector<2x16x64xf32> to vector<32x64xf32>
    %c0_818 = arith.constant 0 : index
    %c0_819 = arith.constant 0 : index
    %1060 = vector.load %arg17[%c0_818, %c0_819] : memref<64x64xf32, #tpu.memory_space<vmem>>, vector<64x64xf32>
    %cst_820 = arith.constant dense<0.000000e+00> : vector<32x64xf32>
    %1061 = tpu.matmul %1059, %1060, %cst_820 {dimension_numbers = #tpu.dot_dimension_numbers<[1], [0], [0], [1], [0, 0, 1, 1], [], []>} : vector<32x64xf32>, vector<64x64xf32>, vector<32x64xf32> -> vector<32x64xf32>
    %1062 = vector.shape_cast %1061 : vector<32x64xf32> to vector<2x16x64xf32>
    %cst_821 = arith.constant dense<0.000000e+00> : vector<64xf32>
    %1063 = vector.multi_reduction <add>, %1062, %cst_821 [0, 1] : vector<2x16x64xf32> to vector<64xf32>
    %1064 = vector.shape_cast %1063 : vector<64xf32> to vector<1x1x64xf32>
    %1065 = vector.shape_cast %1064 : vector<1x1x64xf32> to vector<1x64xf32>
    %1066 = arith.mulf %1062, %1062 : vector<2x16x64xf32>
    %cst_822 = arith.constant dense<0.000000e+00> : vector<64xf32>
    %1067 = vector.multi_reduction <add>, %1066, %cst_822 [0, 1] : vector<2x16x64xf32> to vector<64xf32>
    %1068 = vector.shape_cast %1067 : vector<64xf32> to vector<1x1x64xf32>
    %1069 = vector.shape_cast %1068 : vector<1x1x64xf32> to vector<1x64xf32>
    %c0_823 = arith.constant 0 : index
    %c0_824 = arith.constant 0 : index
    %1070 = vector.load %arg4[%c0_823, %c0_824] : memref<64x4xf32, #tpu.memory_space<vmem>>, vector<64x4xf32>
    %cst_825 = arith.constant dense<0.000000e+00> : vector<1x4xf32>
    %1071 = tpu.matmul %1065, %1070, %cst_825 {dimension_numbers = #tpu.dot_dimension_numbers<[1], [0], [0], [1], [0, 0, 1, 1], [], []>} : vector<1x64xf32>, vector<64x4xf32>, vector<1x4xf32> -> vector<1x4xf32>
    %c0_826 = arith.constant 0 : index
    %c0_827 = arith.constant 0 : index
    %1072 = vector.load %arg4[%c0_826, %c0_827] : memref<64x4xf32, #tpu.memory_space<vmem>>, vector<64x4xf32>
    %cst_828 = arith.constant dense<0.000000e+00> : vector<1x4xf32>
    %1073 = tpu.matmul %1069, %1072, %cst_828 {dimension_numbers = #tpu.dot_dimension_numbers<[1], [0], [0], [1], [0, 0, 1, 1], [], []>} : vector<1x64xf32>, vector<64x4xf32>, vector<1x4xf32> -> vector<1x4xf32>
    %cst_829 = arith.constant 0.001953125 : f32
    %1074 = vector.broadcast %cst_829 : f32 to vector<1x4xf32>
    %1075 = arith.mulf %1071, %1074 : vector<1x4xf32>
    %cst_830 = arith.constant 0.001953125 : f32
    %1076 = vector.broadcast %cst_830 : f32 to vector<1x4xf32>
    %1077 = arith.mulf %1073, %1076 : vector<1x4xf32>
    %1078 = arith.mulf %1075, %1075 : vector<1x4xf32>
    %1079 = arith.subf %1077, %1078 : vector<1x4xf32>
    %cst_831 = arith.constant 9.99999974E-6 : f32
    %1080 = vector.broadcast %cst_831 : f32 to vector<1x4xf32>
    %1081 = arith.addf %1079, %1080 : vector<1x4xf32>
    %1082 = math.rsqrt %1081 : vector<1x4xf32>
    %cst_832 = arith.constant 0.000000e+00 : f32
    %1083 = vector.broadcast %cst_832 : f32 to vector<1x4xf32>
    %1084 = arith.subf %1083, %1075 : vector<1x4xf32>
    %1085 = arith.mulf %1084, %1082 : vector<1x4xf32>
    %c0_833 = arith.constant 0 : index
    %c0_834 = arith.constant 0 : index
    %1086 = vector.load %arg5[%c0_833, %c0_834] : memref<4x64xf32, #tpu.memory_space<vmem>>, vector<4x64xf32>
    %cst_835 = arith.constant dense<0.000000e+00> : vector<1x64xf32>
    %1087 = tpu.matmul %1082, %1086, %cst_835 {dimension_numbers = #tpu.dot_dimension_numbers<[1], [0], [0], [1], [0, 0, 1, 1], [], []>} : vector<1x4xf32>, vector<4x64xf32>, vector<1x64xf32> -> vector<1x64xf32>
    %c0_836 = arith.constant 0 : index
    %c0_837 = arith.constant 0 : index
    %1088 = vector.load %arg5[%c0_836, %c0_837] : memref<4x64xf32, #tpu.memory_space<vmem>>, vector<4x64xf32>
    %cst_838 = arith.constant dense<0.000000e+00> : vector<1x64xf32>
    %1089 = tpu.matmul %1085, %1088, %cst_838 {dimension_numbers = #tpu.dot_dimension_numbers<[1], [0], [0], [1], [0, 0, 1, 1], [], []>} : vector<1x4xf32>, vector<4x64xf32>, vector<1x64xf32> -> vector<1x64xf32>
    %1090 = vector.shape_cast %1087 : vector<1x64xf32> to vector<1x1x64xf32>
    %1091 = vector.broadcast %1090 : vector<1x1x64xf32> to vector<2x16x64xf32>
    %1092 = arith.mulf %1062, %1091 : vector<2x16x64xf32>
    %1093 = vector.shape_cast %1089 : vector<1x64xf32> to vector<1x1x64xf32>
    %1094 = vector.broadcast %1093 : vector<1x1x64xf32> to vector<2x16x64xf32>
    %1095 = arith.addf %1092, %1094 : vector<2x16x64xf32>
    %1096 = vector.broadcast %882 : f32 to vector<2x16x64xf32>
    %1097 = arith.mulf %1096, %1095 : vector<2x16x64xf32>
    %1098 = arith.addf %881, %1097 : vector<2x16x64xf32>
    %c0_839 = arith.constant 0 : index
    %c0_840 = arith.constant 0 : index
    %c0_841 = arith.constant 0 : index
    %1099 = vector.load %arg18[%c0_839, %c0_840, %c0_841] : memref<2x16x64xf32, #tpu.memory_space<vmem>>, vector<2x16x64xf32>
    tpu.vector_store %arg18[%c0_839, %c0_840, %c0_841], %1098 {strides = array<i32>} : memref<2x16x64xf32, #tpu.memory_space<vmem>>, vector<2x16x64xf32>,
    return
  }
}

</mosaic_0001>

<llo_original>
// kernel: tpu_custom_call.1
$region0: #{tpu_custom_call.1}
  #allocation0 [shape = 'u32[]', space=smem, size = 0x4, offset = 0x4, fixed_abs, tag = 'smem constant byte address 0x4 - core index']
  #allocation1 [shape = 'u32[144,128]{1,0:T(1,128)}', space=vmem, size = 0x12000, scoped, tag = 'internal scratch']
  #allocation2 [shape = 'f32[2,24,96]{2,1,0:T(8,128)}', space=vmem, size = 0x6000, scoped, tag = 'scratch operand']
  #allocation3 [shape = 'f32[2,20,80]{2,1,0:T(8,128)}', space=vmem, size = 0x6000, scoped, tag = 'scratch operand']
  %s0 = inlined_call_operand.hbm [shape: f32[8], index: 0, kind: input, shape index: {}]
  %s1 = inlined_call_operand.hbm [shape: f32[2,24,96], index: 1, kind: input, shape index: {}]
  %s2 = inlined_call_operand.hbm [shape: f32[18,72], index: 2, kind: input, shape index: {}]
  %s3 = inlined_call_operand.vmem [shape: f32[16,64], index: 3, kind: input, shape index: {}]
  %s4 = inlined_call_operand.vmem [shape: f32[64,4], index: 4, kind: input, shape index: {}]
  %s5 = inlined_call_operand.hbm [shape: f32[4,64], index: 5, kind: input, shape index: {}]
  %s6 = inlined_call_operand.hbm [shape: f32[3,3,64], index: 6, kind: input, shape index: {}]
  %s7 = inlined_call_operand.vmem [shape: f32[64,64], index: 7, kind: input, shape index: {}]
  %s8 = inlined_call_operand.hbm [shape: f32[3,3,64], index: 8, kind: input, shape index: {}]
  %s9 = inlined_call_operand.hbm [shape: f32[64,64], index: 9, kind: input, shape index: {}]
  %s10 = inlined_call_operand.hbm [shape: f32[5,5,64], index: 10, kind: input, shape index: {}]
  %s11 = inlined_call_operand.hbm [shape: f32[64,64], index: 11, kind: input, shape index: {}]
  %s12 = inlined_call_operand.hbm [shape: f32[5,5,64], index: 12, kind: input, shape index: {}]
  %s13 = inlined_call_operand.hbm [shape: f32[64,64], index: 13, kind: input, shape index: {}]
  %s14 = inlined_call_operand.vmem [shape: f32[3,3,64], index: 14, kind: input, shape index: {}]
  %s15 = inlined_call_operand.hbm [shape: f32[64,64], index: 15, kind: input, shape index: {}]
  %s16 = inlined_call_operand.hbm [shape: f32[5,5,64], index: 16, kind: input, shape index: {}]
  %s17 = inlined_call_operand.hbm [shape: f32[64,64], index: 17, kind: input, shape index: {}]
  %s18 = inlined_call_operand.hbm [shape: f32[2,16,64], index: 18, kind: output, shape index: {}]
  %s19 = sld [smem:[#allocation0]]
  $region138: #{tpu_custom_call.1} parent=0
    _
  %s21 = ssub.s32 1, %s19
  %s22 = scalar_select 0, %s21, %s19
  $region1: #{tpu_custom_call.1} parent=0
    #allocation4 [shape = 'u8[512]{0}', space=smem, size = 0x200, scoped, tag = 'input window, operand 0, single buffered']
    #allocation5 [shape = 's32[1]{0}', space=sflag, size = 0x4, scoped, tag = 'scoped memory for tpu_custom_call.1']
    #allocation6 [shape = 's32[1]{0}', space=sflag, size = 0x4, scoped, tag = 'scoped memory for tpu_custom_call.1']
    #allocation7 [shape = 's32[1]{0}', space=sflag, size = 0x4, scoped, tag = 'scoped memory for tpu_custom_call.1']
    #allocation8 [shape = 'u8[24576]{0}', space=vmem, size = 0x6000, scoped, tag = 'input window, operand 1, single buffered']
    #allocation9 [shape = 'u8[12288]{0}', space=vmem, size = 0x3000, scoped, tag = 'input window, operand 2, single buffered']
    #allocation10 [shape = 's32[1]{0}', space=sflag, size = 0x4, scoped, tag = 'scoped memory for tpu_custom_call.1']
    #allocation11 [shape = 'u8[2048]{0}', space=vmem, size = 0x800, scoped, tag = 'input window, operand 5, single buffered']
    #allocation12 [shape = 'u8[6144]{0}', space=vmem, size = 0x1800, scoped, tag = 'input window, operand 6, single buffered']
    #allocation13 [shape = 's32[1]{0}', space=sflag, size = 0x4, scoped, tag = 'scoped memory for tpu_custom_call.1']
    #allocation14 [shape = 'u8[6144]{0}', space=vmem, size = 0x1800, scoped, tag = 'input window, operand 8, single buffered']
    #allocation15 [shape = 'u8[32768]{0}', space=vmem, size = 0x8000, scoped, tag = 'input window, operand 9, single buffered']
    #allocation16 [shape = 's32[1]{0}', space=sflag, size = 0x4, scoped, tag = 'scoped memory for tpu_custom_call.1']
    #allocation17 [shape = 'u8[20480]{0}', space=vmem, size = 0x5000, scoped, tag = 'input window, operand 10, single buffered']
    #allocation18 [shape = 'u8[32768]{0}', space=vmem, size = 0x8000, scoped, tag = 'input window, operand 11, single buffered']
    #allocation19 [shape = 's32[1]{0}', space=sflag, size = 0x4, scoped, tag = 'scoped memory for tpu_custom_call.1']
    #allocation20 [shape = 'u8[20480]{0}', space=vmem, size = 0x5000, scoped, tag = 'input window, operand 12, single buffered']
    #allocation21 [shape = 'u8[32768]{0}', space=vmem, size = 0x8000, scoped, tag = 'input window, operand 13, single buffered']
    #allocation22 [shape = 's32[1]{0}', space=sflag, size = 0x4, scoped, tag = 'scoped memory for tpu_custom_call.1']
    #allocation23 [shape = 'u8[32768]{0}', space=vmem, size = 0x8000, scoped, tag = 'input window, operand 15, single buffered']
    #allocation24 [shape = 'u8[20480]{0}', space=vmem, size = 0x5000, scoped, tag = 'input window, operand 16, single buffered']
    #allocation25 [shape = 's32[1]{0}', space=sflag, size = 0x4, scoped, tag = 'scoped memory for tpu_custom_call.1']
    #allocation26 [shape = 'u8[32768]{0}', space=vmem, size = 0x8000, scoped, tag = 'input window, operand 17, single buffered']
    #allocation27 [shape = 'u8[16384]{0}', space=vmem, size = 0x4000, scoped, tag = 'output window, operand 0, single buffered']
    %23 = vsyncpa [#allocation7], 0
    %24 = vsyncpa [#allocation5], 0
    %25 = vsyncpa [#allocation10], 0
    %26 = vsyncpa [#allocation13], 0
    %27 = vsyncpa [#allocation16], 0
    %28 = vsyncpa [#allocation19], 0
    %29 = vsyncpa [#allocation22], 0
    %30 = vsyncpa [#allocation25], 0
    %31 = vsyncpa [#allocation6], 0
    // Predicated region
    $region2: #{tpu_custom_call.1} parent=1 // pred_check
      _
    $region3: #{tpu_custom_call.1} parent=1 // pred_check_branch
      %33 = sbr.rel (0) target = $region5
    $region4: #{tpu_custom_call.1} parent=1 // pred_region
      %s35 = ssub.s32 16, 16
      %36 = vsyncadd [#allocation7], %s35
      %39 = dma.hbm_to_smem %s0, 16, [#allocation4], [#allocation7]
    $region5: #{tpu_custom_call.1} parent=1 // pred_fallthru
      _
    // Predicated region
    $region6: #{tpu_custom_call.1} parent=1 // pred_check
      _
    $region7: #{tpu_custom_call.1} parent=1 // pred_check_branch
      %41 = sbr.rel (0) target = $region9
    $region8: #{tpu_custom_call.1} parent=1 // pred_region
      %s43 = ssub.s32 768, 768
      %44 = vsyncadd [#allocation5], %s43
      %s45 = sshll.u32 [#allocation8], 4
      %s46 = int_to_ptr.vmem [resolvable:$true] %s45
      %51 = dma.hbm_to_vmem [thread:$0]  %s1, 768, %s46, [#allocation5], 128, 128, 8
    $region9: #{tpu_custom_call.1} parent=1 // pred_fallthru
      _
    // Predicated region
    $region10: #{tpu_custom_call.1} parent=1 // pred_check
      _
    $region11: #{tpu_custom_call.1} parent=1 // pred_check_branch
      %53 = sbr.rel (0) target = $region13
    $region12: #{tpu_custom_call.1} parent=1 // pred_region
      %s55 = ssub.s32 384, 384
      %56 = vsyncadd [#allocation10], %s55
      %s57 = sshll.u32 [#allocation9], 4
      %s58 = int_to_ptr.vmem [resolvable:$true] %s57
      %63 = dma.hbm_to_vmem [thread:$0]  %s2, 384, %s58, [#allocation10], 128, 128, 8
    $region13: #{tpu_custom_call.1} parent=1 // pred_fallthru
      _
    // Predicated region
    $region14: #{tpu_custom_call.1} parent=1 // pred_check
      _
    $region15: #{tpu_custom_call.1} parent=1 // pred_check_branch
      %65 = sbr.rel (0) target = $region17
    $region16: #{tpu_custom_call.1} parent=1 // pred_region
      _
    $region17: #{tpu_custom_call.1} parent=1 // pred_fallthru
      _
    // Predicated region
    $region18: #{tpu_custom_call.1} parent=1 // pred_check
      _
    $region19: #{tpu_custom_call.1} parent=1 // pred_check_branch
      %67 = sbr.rel (0) target = $region21
    $region20: #{tpu_custom_call.1} parent=1 // pred_region
      _
    $region21: #{tpu_custom_call.1} parent=1 // pred_fallthru
      _
    // Predicated region
    $region22: #{tpu_custom_call.1} parent=1 // pred_check
      _
    $region23: #{tpu_custom_call.1} parent=1 // pred_check_branch
      %69 = sbr.rel (0) target = $region25
    $region24: #{tpu_custom_call.1} parent=1 // pred_region
      %s71 = ssub.s32 64, 64
      %72 = vsyncadd [#allocation10], %s71
      %s74 = sshll.u32 [#allocation11], 4
      %s75 = int_to_ptr.vmem [resolvable:$true] %s74
      %77 = dma.hbm_to_vmem [thread:$0]  %s5, 64, %s75, [#allocation10]
    $region25: #{tpu_custom_call.1} parent=1 // pred_fallthru
      _
    // Predicated region
    $region26: #{tpu_custom_call.1} parent=1 // pred_check
      _
    $region27: #{tpu_custom_call.1} parent=1 // pred_check_branch
      %79 = sbr.rel (0) target = $region29
    $region28: #{tpu_custom_call.1} parent=1 // pred_region
      %s81 = ssub.s32 192, 192
      %82 = vsyncadd [#allocation13], %s81
      %s83 = sshll.u32 [#allocation12], 4
      %s84 = int_to_ptr.vmem [resolvable:$true] %s83
      %89 = dma.hbm_to_vmem [thread:$0]  %s6, 192, %s84, [#allocation13], 64, 64, 4
    $region29: #{tpu_custom_call.1} parent=1 // pred_fallthru
      _
    // Predicated region
    $region30: #{tpu_custom_call.1} parent=1 // pred_check
      _
    $region31: #{tpu_custom_call.1} parent=1 // pred_check_branch
      %91 = sbr.rel (0) target = $region33
    $region32: #{tpu_custom_call.1} parent=1 // pred_region
      _
    $region33: #{tpu_custom_call.1} parent=1 // pred_fallthru
      _
    // Predicated region
    $region34: #{tpu_custom_call.1} parent=1 // pred_check
      _
    $region35: #{tpu_custom_call.1} parent=1 // pred_check_branch
      %93 = sbr.rel (0) target = $region37
    $region36: #{tpu_custom_call.1} parent=1 // pred_region
      %s95 = ssub.s32 192, 192
      %96 = vsyncadd [#allocation13], %s95
      %s97 = sshll.u32 [#allocation14], 4
      %s98 = int_to_ptr.vmem [resolvable:$true] %s97
      %103 = dma.hbm_to_vmem [thread:$0]  %s8, 192, %s98, [#allocation13], 64, 64, 4
    $region37: #{tpu_custom_call.1} parent=1 // pred_fallthru
      _
    // Predicated region
    $region38: #{tpu_custom_call.1} parent=1 // pred_check
      _
    $region39: #{tpu_custom_call.1} parent=1 // pred_check_branch
      %105 = sbr.rel (0) target = $region41
    $region40: #{tpu_custom_call.1} parent=1 // pred_region
      %s107 = ssub.s32 1024, 1024
      %108 = vsyncadd [#allocation16], %s107
      %s109 = sshll.u32 [#allocation15], 4
      %s110 = int_to_ptr.vmem [resolvable:$true] %s109
      %115 = dma.hbm_to_vmem [thread:$0]  %s9, 1024, %s110, [#allocation16], 128, 128, 8
    $region41: #{tpu_custom_call.1} parent=1 // pred_fallthru
      _
    // Predicated region
    $region42: #{tpu_custom_call.1} parent=1 // pred_check
      _
    $region43: #{tpu_custom_call.1} parent=1 // pred_check_branch
      %117 = sbr.rel (0) target = $region45
    $region44: #{tpu_custom_call.1} parent=1 // pred_region
      %s119 = ssub.s32 640, 640
      %120 = vsyncadd [#allocation16], %s119
      %s121 = sshll.u32 [#allocation17], 4
      %s122 = int_to_ptr.vmem [resolvable:$true] %s121
      %127 = dma.hbm_to_vmem [thread:$0]  %s10, 640, %s122, [#allocation16], 128, 128, 8
    $region45: #{tpu_custom_call.1} parent=1 // pred_fallthru
      _
    // Predicated region
    $region46: #{tpu_custom_call.1} parent=1 // pred_check
      _
    $region47: #{tpu_custom_call.1} parent=1 // pred_check_branch
      %129 = sbr.rel (0) target = $region49
    $region48: #{tpu_custom_call.1} parent=1 // pred_region
      %s131 = ssub.s32 1024, 1024
      %132 = vsyncadd [#allocation19], %s131
      %s133 = sshll.u32 [#allocation18], 4
      %s134 = int_to_ptr.vmem [resolvable:$true] %s133
      %139 = dma.hbm_to_vmem [thread:$0]  %s11, 1024, %s134, [#allocation19], 128, 128, 8
    $region49: #{tpu_custom_call.1} parent=1 // pred_fallthru
      _
    // Predicated region
    $region50: #{tpu_custom_call.1} parent=1 // pred_check
      _
    $region51: #{tpu_custom_call.1} parent=1 // pred_check_branch
      %141 = sbr.rel (0) target = $region53
    $region52: #{tpu_custom_call.1} parent=1 // pred_region
      %s143 = ssub.s32 640, 640
      %144 = vsyncadd [#allocation19], %s143
      %s145 = sshll.u32 [#allocation20], 4
      %s146 = int_to_ptr.vmem [resolvable:$true] %s145
      %151 = dma.hbm_to_vmem [thread:$0]  %s12, 640, %s146, [#allocation19], 128, 128, 8
    $region53: #{tpu_custom_call.1} parent=1 // pred_fallthru
      _
    // Predicated region
    $region54: #{tpu_custom_call.1} parent=1 // pred_check
      _
    $region55: #{tpu_custom_call.1} parent=1 // pred_check_branch
      %153 = sbr.rel (0) target = $region57
    $region56: #{tpu_custom_call.1} parent=1 // pred_region
      %s155 = ssub.s32 1024, 1024
      %156 = vsyncadd [#allocation22], %s155
      %s157 = sshll.u32 [#allocation21], 4
      %s158 = int_to_ptr.vmem [resolvable:$true] %s157
      %163 = dma.hbm_to_vmem [thread:$0]  %s13, 1024, %s158, [#allocation22], 128, 128, 8
    $region57: #{tpu_custom_call.1} parent=1 // pred_fallthru
      _
    // Predicated region
    $region58: #{tpu_custom_call.1} parent=1 // pred_check
      _
    $region59: #{tpu_custom_call.1} parent=1 // pred_check_branch
      %165 = sbr.rel (0) target = $region61
    $region60: #{tpu_custom_call.1} parent=1 // pred_region
      _
    $region61: #{tpu_custom_call.1} parent=1 // pred_fallthru
      _
    // Predicated region
    $region62: #{tpu_custom_call.1} parent=1 // pred_check
      _
    $region63: #{tpu_custom_call.1} parent=1 // pred_check_branch
      %167 = sbr.rel (0) target = $region65
    $region64: #{tpu_custom_call.1} parent=1 // pred_region
      %s169 = ssub.s32 1024, 1024
      %170 = vsyncadd [#allocation22], %s169
      %s171 = sshll.u32 [#allocation23], 4
      %s172 = int_to_ptr.vmem [resolvable:$true] %s171
      %177 = dma.hbm_to_vmem [thread:$0]  %s15, 1024, %s172, [#allocation22], 128, 128, 8
    $region65: #{tpu_custom_call.1} parent=1 // pred_fallthru
      _
    // Predicated region
    $region66: #{tpu_custom_call.1} parent=1 // pred_check
      _
    $region67: #{tpu_custom_call.1} parent=1 // pred_check_branch
      %179 = sbr.rel (0) target = $region69
    $region68: #{tpu_custom_call.1} parent=1 // pred_region
      %s181 = ssub.s32 640, 640
      %182 = vsyncadd [#allocation25], %s181
      %s183 = sshll.u32 [#allocation24], 4
      %s184 = int_to_ptr.vmem [resolvable:$true] %s183
      %189 = dma.hbm_to_vmem [thread:$0]  %s16, 640, %s184, [#allocation25], 128, 128, 8
    $region69: #{tpu_custom_call.1} parent=1 // pred_fallthru
      _
    // Predicated region
    $region70: #{tpu_custom_call.1} parent=1 // pred_check
      _
    $region71: #{tpu_custom_call.1} parent=1 // pred_check_branch
      %191 = sbr.rel (0) target = $region73
    $region72: #{tpu_custom_call.1} parent=1 // pred_region
      %s193 = ssub.s32 1024, 1024
      %194 = vsyncadd [#allocation25], %s193
      %s195 = sshll.u32 [#allocation26], 4
      %s196 = int_to_ptr.vmem [resolvable:$true] %s195
      %201 = dma.hbm_to_vmem [thread:$0]  %s17, 1024, %s196, [#allocation25], 128, 128, 8
    $region73: #{tpu_custom_call.1} parent=1 // pred_fallthru
      _
    // Predicated region
    $region74: #{tpu_custom_call.1} parent=1 // pred_check
      _
    $region75: #{tpu_custom_call.1} parent=1 // pred_check_branch
      %203 = sbr.rel (0) target = $region77
    $region76: #{tpu_custom_call.1} parent=1 // pred_region
      %204 = dma.done [#allocation7], 16
    $region77: #{tpu_custom_call.1} parent=1 // pred_fallthru
      _
    // Predicated region
    $region78: #{tpu_custom_call.1} parent=1 // pred_check
      _
    $region79: #{tpu_custom_call.1} parent=1 // pred_check_branch
      %206 = sbr.rel (0) target = $region81
    $region80: #{tpu_custom_call.1} parent=1 // pred_region
      %207 = dma.done [#allocation5], 768
    $region81: #{tpu_custom_call.1} parent=1 // pred_fallthru
      _
    // Predicated region
    $region82: #{tpu_custom_call.1} parent=1 // pred_check
      _
    $region83: #{tpu_custom_call.1} parent=1 // pred_check_branch
      %209 = sbr.rel (0) target = $region85
    $region84: #{tpu_custom_call.1} parent=1 // pred_region
      %210 = dma.done [#allocation10], 384
    $region85: #{tpu_custom_call.1} parent=1 // pred_fallthru
      _
    // Predicated region
    $region86: #{tpu_custom_call.1} parent=1 // pred_check
      _
    $region87: #{tpu_custom_call.1} parent=1 // pred_check_branch
      %212 = sbr.rel (0) target = $region89
    $region88: #{tpu_custom_call.1} parent=1 // pred_region
      %213 = dma.done [#allocation10], 64
    $region89: #{tpu_custom_call.1} parent=1 // pred_fallthru
      _
    // Predicated region
    $region90: #{tpu_custom_call.1} parent=1 // pred_check
      _
    $region91: #{tpu_custom_call.1} parent=1 // pred_check_branch
      %215 = sbr.rel (0) target = $region93
    $region92: #{tpu_custom_call.1} parent=1 // pred_region
      %216 = dma.done [#allocation13], 192
    $region93: #{tpu_custom_call.1} parent=1 // pred_fallthru
      _
    // Predicated region
    $region94: #{tpu_custom_call.1} parent=1 // pred_check
      _
    $region95: #{tpu_custom_call.1} parent=1 // pred_check_branch
      %218 = sbr.rel (0) target = $region97
    $region96: #{tpu_custom_call.1} parent=1 // pred_region
      %219 = dma.done [#allocation13], 192
    $region97: #{tpu_custom_call.1} parent=1 // pred_fallthru
      _
    // Predicated region
    $region98: #{tpu_custom_call.1} parent=1 // pred_check
      _
    $region99: #{tpu_custom_call.1} parent=1 // pred_check_branch
      %221 = sbr.rel (0) target = $region101
    $region100: #{tpu_custom_call.1} parent=1 // pred_region
      %222 = dma.done [#allocation16], 1024
    $region101: #{tpu_custom_call.1} parent=1 // pred_fallthru
      _
    // Predicated region
    $region102: #{tpu_custom_call.1} parent=1 // pred_check
      _
    $region103: #{tpu_custom_call.1} parent=1 // pred_check_branch
      %224 = sbr.rel (0) target = $region105
    $region104: #{tpu_custom_call.1} parent=1 // pred_region
      %225 = dma.done [#allocation16], 640
    $region105: #{tpu_custom_call.1} parent=1 // pred_fallthru
      _
    // Predicated region
    $region106: #{tpu_custom_call.1} parent=1 // pred_check
      _
    $region107: #{tpu_custom_call.1} parent=1 // pred_check_branch
      %227 = sbr.rel (0) target = $region109
    $region108: #{tpu_custom_call.1} parent=1 // pred_region
      %228 = dma.done [#allocation19], 1024
    $region109: #{tpu_custom_call.1} parent=1 // pred_fallthru
      _
    // Predicated region
    $region110: #{tpu_custom_call.1} parent=1 // pred_check
      _
    $region111: #{tpu_custom_call.1} parent=1 // pred_check_branch
      %230 = sbr.rel (0) target = $region113
    $region112: #{tpu_custom_call.1} parent=1 // pred_region
      %231 = dma.done [#allocation19], 640
    $region113: #{tpu_custom_call.1} parent=1 // pred_fallthru
      _
    // Predicated region
    $region114: #{tpu_custom_call.1} parent=1 // pred_check
      _
    $region115: #{tpu_custom_call.1} parent=1 // pred_check_branch
      %233 = sbr.rel (0) target = $region117
    $region116: #{tpu_custom_call.1} parent=1 // pred_region
      %234 = dma.done [#allocation22], 1024
    $region117: #{tpu_custom_call.1} parent=1 // pred_fallthru
      _
    // Predicated region
    $region118: #{tpu_custom_call.1} parent=1 // pred_check
      _
    $region119: #{tpu_custom_call.1} parent=1 // pred_check_branch
      %236 = sbr.rel (0) target = $region121
    $region120: #{tpu_custom_call.1} parent=1 // pred_region
      %237 = dma.done [#allocation22], 1024
    $region121: #{tpu_custom_call.1} parent=1 // pred_fallthru
      _
    // Predicated region
    $region122: #{tpu_custom_call.1} parent=1 // pred_check
      _
    $region123: #{tpu_custom_call.1} parent=1 // pred_check_branch
      %239 = sbr.rel (0) target = $region125
    $region124: #{tpu_custom_call.1} parent=1 // pred_region
      %240 = dma.done [#allocation25], 640
    $region125: #{tpu_custom_call.1} parent=1 // pred_fallthru
      _
    // Predicated region
    $region126: #{tpu_custom_call.1} parent=1 // pred_check
      _
    $region127: #{tpu_custom_call.1} parent=1 // pred_check_branch
      %242 = sbr.rel (0) target = $region129
    $region128: #{tpu_custom_call.1} parent=1 // pred_region
      %243 = dma.done [#allocation25], 1024
    $region129: #{tpu_custom_call.1} parent=1 // pred_fallthru
      _
    %244 = sfence
    %vm245 = vcmask 648192
    %246 = vst.msk [vmem:[#allocation3] sm:$0x3] %vm245, 0.0
    %247 = vst.msk [vmem:[#allocation3 + $0x18] sm:$0x3] %vm245, 0.0
    %248 = vst.msk [vmem:[#allocation3 + $0x12] sm:$0x3] %vm245, 0.0
    %249 = vst.msk [vmem:[#allocation3 + $0x2a] sm:$0x3] %vm245, 0.0
    %vm250 = vcmask 64512
    %251 = vst.msk [vmem:[#allocation3 + $0x2] sm:$0xff] %vm250, 0.0
    %252 = vst.msk [vmem:[#allocation3 + $0xa] sm:$0xff] %vm250, 0.0
    %253 = vst.msk [vmem:[#allocation3 + $0x1a] sm:$0xff] %vm250, 0.0
    %254 = vst.msk [vmem:[#allocation3 + $0x22] sm:$0xff] %vm250, 0.0
    %vm255 = vcmask 654912
    %256 = vst.msk [vmem:[#allocation3 + $0x2] sm:$0xff] %vm255, 0.0
    %257 = vst.msk [vmem:[#allocation3 + $0xa] sm:$0xff] %vm255, 0.0
    %258 = vst.msk [vmem:[#allocation3 + $0x1a] sm:$0xff] %vm255, 0.0
    %259 = vst.msk [vmem:[#allocation3 + $0x22] sm:$0xff] %vm255, 0.0
    %v260 = vld [vmem:[#allocation8] sm:$0xff]
    %v261 = vld [vmem:[#allocation8 + $0x8] sm:$0xff]
    %v262 = vld [vmem:[#allocation8 + $0x10] sm:$0xff]
    %v263 = vld [vmem:[#allocation8 + $0x18] sm:$0xff]
    %v264 = vld [vmem:[#allocation8 + $0x20] sm:$0xff]
    %v265 = vld [vmem:[#allocation8 + $0x28] sm:$0xff]
    %v266 = vmax.f32 %v260, 0.0
    %v267 = vmax.f32 %v261, 0.0
    %v268 = vmax.f32 %v262, 0.0
    %v269 = vmax.f32 %v263, 0.0
    %v270 = vmax.f32 %v264, 0.0
    %v271 = vmax.f32 %v265, 0.0
    %vm272 = vcmask 785408
    %273 = vst.msk [vmem:[#allocation2] sm:$0xff] %vm272, %v266
    %274 = vst.msk [vmem:[#allocation2 + $0x8] sm:$0xff] %vm272, %v267
    %275 = vst.msk [vmem:[#allocation2 + $0x10] sm:$0xff] %vm272, %v268
    %276 = vst.msk [vmem:[#allocation2 + $0x18] sm:$0xff] %vm272, %v269
    %277 = vst.msk [vmem:[#allocation2 + $0x20] sm:$0xff] %vm272, %v270
    %278 = vst.msk [vmem:[#allocation2 + $0x28] sm:$0xff] %vm272, %v271
    %v279 = vld [vmem:[#allocation8 + $0x4] sm:$0xff]
    %v280 = vld [vmem:[#allocation8 + $0xc] sm:$0xff]
    %v281 = vld [vmem:[#allocation8 + $0x1c] sm:$0xff]
    %v282 = vld [vmem:[#allocation8 + $0x24] sm:$0xff]
    %s283 = sld [smem:[#allocation4 + $0x3]]
    %v284 = vstv %s283
    %v285 = vmul.f32 %v284, %v279
    %v286 = vmul.f32 %v284, %v280
    %v287 = vmul.f32 %v284, %v281
    %v288 = vmul.f32 %v284, %v282
    %v289 = vld [vmem:[#allocation8 + $0x3] sm:$0xff]
    %v290 = vld [vmem:[#allocation8 + $0xb] sm:$0xff]
    %v291 = vld [vmem:[#allocation8 + $0x13] sm:$0x3]
    %v292 = vld [vmem:[#allocation8 + $0x1b] sm:$0xff]
    %v293 = vld [vmem:[#allocation8 + $0x23] sm:$0xff]
    %v294 = vld [vmem:[#allocation8 + $0x2b] sm:$0x3]
    %v295 = vld [vmem:[#allocation9] sm:$0xff]
    %v296 = vld [vmem:[#allocation9 + $0x8] sm:$0xff]
    %v297 = vld [vmem:[#allocation9 + $0x10] sm:$0x3]
    %301 = vrot.lane.b32.xlu0 %v295, 12
    %v302 = vpop.permute.xlu0 %301
    %303 = vrot.lane.b32.xlu0 %v296, 12
    %v304 = vpop.permute.xlu0 %303
    %305 = vrot.lane.b32.xlu0 %v297, 12
    %v306 = vpop.permute.xlu0 %305
    %v310 = vadd.f32 %v289, %v302
    %v311 = vadd.f32 %v290, %v304
    %v312 = vadd.f32 %v291, %v306
    %v313 = vadd.f32 %v292, %v302
    %v314 = vadd.f32 %v293, %v304
    %v315 = vadd.f32 %v294, %v306
    %320 = vrot.lane.b32.xlu0 %v310, 124
    %v321 = vpop.permute.xlu0 %320
    %322 = vrot.lane.b32.xlu0 %v311, 124
    %v323 = vpop.permute.xlu0 %322
    %324 = vrot.lane.b32.xlu0 %v313, 124
    %v325 = vpop.permute.xlu0 %324
    %326 = vrot.lane.b32.xlu0 %v314, 124
    %v327 = vpop.permute.xlu0 %326
    %v332 = vmax.f32 %v310, %v321
    %v333 = vmax.f32 %v311, %v323
    %v334 = vmax.f32 %v313, %v325
    %v335 = vmax.f32 %v314, %v327
    %336 = vrot.lane.b32.xlu0 %v310, 120
    %v337 = vpop.permute.xlu0 %336
    %338 = vrot.lane.b32.xlu0 %v311, 120
    %v339 = vpop.permute.xlu0 %338
    %340 = vrot.lane.b32.xlu0 %v313, 120
    %v341 = vpop.permute.xlu0 %340
    %342 = vrot.lane.b32.xlu0 %v314, 120
    %v343 = vpop.permute.xlu0 %342
    %v348 = vmax.f32 %v332, %v337
    %v349 = vmax.f32 %v333, %v339
    %v350 = vmax.f32 %v334, %v341
    %v351 = vmax.f32 %v335, %v343
    %vm354 = vcmask 1046528
    %v355 = vrot.slane %v310, 1
    %v356 = vrot.slane %v311, 1
    %v357 = vsel %vm354, %v355, %v356
    %v358 = vrot.slane %v312, 1
    %v359 = vsel %vm354, %v356, %v358
    %v360 = vrot.slane %v313, 1
    %v361 = vrot.slane %v314, 1
    %v362 = vsel %vm354, %v360, %v361
    %v363 = vrot.slane %v315, 1
    %v364 = vsel %vm354, %v361, %v363
    %v369 = vmax.f32 %v348, %v357
    %v370 = vmax.f32 %v349, %v359
    %v371 = vmax.f32 %v350, %v362
    %v372 = vmax.f32 %v351, %v364
    %373 = vrot.lane.b32.xlu0 %v357, 124
    %v374 = vpop.permute.xlu0 %373
    %375 = vrot.lane.b32.xlu0 %v359, 124
    %v376 = vpop.permute.xlu0 %375
    %377 = vrot.lane.b32.xlu0 %v362, 124
    %v378 = vpop.permute.xlu0 %377
    %379 = vrot.lane.b32.xlu0 %v364, 124
    %v380 = vpop.permute.xlu0 %379
    %v385 = vmax.f32 %v369, %v374
    %v386 = vmax.f32 %v370, %v376
    %v387 = vmax.f32 %v371, %v378
    %v388 = vmax.f32 %v372, %v380
    %389 = vrot.lane.b32.xlu0 %v357, 120
    %v390 = vpop.permute.xlu0 %389
    %391 = vrot.lane.b32.xlu0 %v359, 120
    %v392 = vpop.permute.xlu0 %391
    %393 = vrot.lane.b32.xlu0 %v362, 120
    %v394 = vpop.permute.xlu0 %393
    %395 = vrot.lane.b32.xlu0 %v364, 120
    %v396 = vpop.permute.xlu0 %395
    %v401 = vmax.f32 %v385, %v390
    %v402 = vmax.f32 %v386, %v392
    %v403 = vmax.f32 %v387, %v394
    %v404 = vmax.f32 %v388, %v396
    %vm405 = vcmask 1045504
    %v406 = vrot.slane %v310, 2
    %v407 = vrot.slane %v311, 2
    %v408 = vsel %vm405, %v406, %v407
    %v409 = vrot.slane %v312, 2
    %v410 = vsel %vm405, %v407, %v409
    %v411 = vrot.slane %v313, 2
    %v412 = vrot.slane %v314, 2
    %v413 = vsel %vm405, %v411, %v412
    %v414 = vrot.slane %v315, 2
    %v415 = vsel %vm405, %v412, %v414
    %v420 = vmax.f32 %v401, %v408
    %v421 = vmax.f32 %v402, %v410
    %v422 = vmax.f32 %v403, %v413
    %v423 = vmax.f32 %v404, %v415
    %424 = vrot.lane.b32.xlu0 %v408, 124
    %v425 = vpop.permute.xlu0 %424
    %426 = vrot.lane.b32.xlu0 %v410, 124
    %v427 = vpop.permute.xlu0 %426
    %428 = vrot.lane.b32.xlu0 %v413, 124
    %v429 = vpop.permute.xlu0 %428
    %430 = vrot.lane.b32.xlu0 %v415, 124
    %v431 = vpop.permute.xlu0 %430
    %v436 = vmax.f32 %v420, %v425
    %v437 = vmax.f32 %v421, %v427
    %v438 = vmax.f32 %v422, %v429
    %v439 = vmax.f32 %v423, %v431
    %440 = vrot.lane.b32.xlu0 %v408, 120
    %v441 = vpop.permute.xlu0 %440
    %442 = vrot.lane.b32.xlu0 %v410, 120
    %v443 = vpop.permute.xlu0 %442
    %444 = vrot.lane.b32.xlu0 %v413, 120
    %v445 = vpop.permute.xlu0 %444
    %446 = vrot.lane.b32.xlu0 %v415, 120
    %v447 = vpop.permute.xlu0 %446
    %v452 = vmax.f32 %v436, %v441
    %v453 = vmax.f32 %v437, %v443
    %v454 = vmax.f32 %v438, %v445
    %v455 = vmax.f32 %v439, %v447
    %s456 = sld [smem:[#allocation4 + $0x1]]
    %vm457 = vcmask 621664
    %v458 = vsel %vm457, %v452, 0.0
    %v459 = vsel %vm457, %v453, 0.0
    %v460 = vadd.f32 %v458, %v459
    %v461 = vsel %vm457, %v454, 0.0
    %v462 = vadd.f32 %v460, %v461
    %v463 = vsel %vm457, %v455, 0.0
    %v464 = vadd.f32 %v462, %v463
    %v465 = vrot.slane %v464, 4
    %v466 = vadd.f32 %v464, %v465
    %v467 = vrot.slane %v466, 2
    %v468 = vadd.f32 %v466, %v467
    %v469 = vrot.slane %v468, 1
    %v470 = vadd.f32 %v468, %v469
    %v471 = vmul.f32 %v452, %v452
    %v472 = vmul.f32 %v453, %v453
    %v473 = vmul.f32 %v454, %v454
    %v474 = vmul.f32 %v455, %v455
    %v475 = vsel %vm457, %v471, 0.0
    %v476 = vsel %vm457, %v472, 0.0
    %v477 = vadd.f32 %v475, %v476
    %v478 = vsel %vm457, %v473, 0.0
    %v479 = vadd.f32 %v477, %v478
    %v480 = vsel %vm457, %v474, 0.0
    %v481 = vadd.f32 %v479, %v480
    %v482 = vrot.slane %v481, 4
    %v483 = vadd.f32 %v481, %v482
    %v484 = vrot.slane %v483, 2
    %v485 = vadd.f32 %v483, %v484
    %v486 = vrot.slane %v485, 1
    %v487 = vadd.f32 %v485, %v486
    %v488 = vld [vmem:[%s4] sm:$0xff]
    %v489 = vld [vmem:[%s4 + $0x8] sm:$0xff]
    %v490 = vld [vmem:[%s4 + $0x10] sm:$0xff]
    %v491 = vld [vmem:[%s4 + $0x18] sm:$0xff]
    %v492 = vld [vmem:[%s4 + $0x20] sm:$0xff]
    %v493 = vld [vmem:[%s4 + $0x28] sm:$0xff]
    %v494 = vld [vmem:[%s4 + $0x30] sm:$0xff]
    %v495 = vld [vmem:[%s4 + $0x38] sm:$0xff]
    %497 = vrot.lane.b32.xlu0 %v470, 116
    %v498 = vpop.permute.xlu0 %497
    %vm499 = vcmask 523264
    %v500 = vsel %vm499, %v498, 0
    %502 = vmatprep.subr.mxu0 0.0
    %503 = vmatpush1.msra.mxu0 0.0
    %504 = vmatprep.subr.mxu0 0.0
    %505 = vmatpush1.msra.mxu0 0.0
    %506 = vmatprep.subr.mxu0 0.0
    %507 = vmatpush1.msra.mxu0 0.0
    %508 = vmatprep.subr.mxu0 0.0
    %509 = vmatpush1.msra.mxu0 0.0
    %510 = vmatprep.subr.mxu0 0.0
    %511 = vmatpush1.msra.mxu0 0.0
    %512 = vmatprep.subr.mxu0 0.0
    %513 = vmatpush1.msra.mxu0 0.0
    %514 = vmatprep.subr.mxu0 0.0
    %515 = vmatpush1.msra.mxu0 0.0
    %516 = vmatprep.subr.mxu0 0.0
    %517 = vmatpush1.msra.mxu0 0.0
    %518 = vmatprep.subr.mxu0 0.0
    %519 = vmatpush1.msra.mxu0 %v495
    %520 = vmatprep.subr.mxu0 0.0
    %521 = vmatpush1.msra.mxu0 %v494
    %522 = vmatprep.subr.mxu0 0.0
    %523 = vmatpush1.msra.mxu0 %v493
    %524 = vmatprep.subr.mxu0 0.0
    %525 = vmatpush1.msra.mxu0 %v492
    %526 = vmatprep.subr.mxu0 0.0
    %527 = vmatpush1.msra.mxu0 %v491
    %528 = vmatprep.subr.mxu0 0.0
    %529 = vmatpush1.msra.mxu0 %v490
    %530 = vmatprep.subr.mxu0 0.0
    %531 = vmatpush1.msra.mxu0 %v489
    %532 = vmatprep.subr.mxu0 0.0
    %533 = vmatpush1.msra.mxu0 %v488
    %534 = vmatprep.subr.mxu0 0.0
    %535 = vmatpush2.msra.mxu0 0.0
    %536 = vmatprep.subr.mxu0 0.0
    %537 = vmatpush2.msra.mxu0 0.0
    %538 = vmatprep.subr.mxu0 0.0
    %539 = vmatpush2.msra.mxu0 0.0
    %540 = vmatprep.subr.mxu0 0.0
    %541 = vmatpush2.msra.mxu0 0.0
    %542 = vmatprep.subr.mxu0 0.0
    %543 = vmatpush2.msra.mxu0 0.0
    %544 = vmatprep.subr.mxu0 0.0
    %545 = vmatpush2.msra.mxu0 0.0
    %546 = vmatprep.subr.mxu0 0.0
    %547 = vmatpush2.msra.mxu0 0.0
    %548 = vmatprep.subr.mxu0 0.0
    %549 = vmatpush2.msra.mxu0 0.0
    %550 = vmatprep.subr.mxu0 0.0
    %551 = vmatpush2.msra.mxu0 0.0
    %552 = vmatprep.subr.mxu0 0.0
    %553 = vmatpush2.msra.mxu0 0.0
    %554 = vmatprep.subr.mxu0 0.0
    %555 = vmatpush2.msra.mxu0 0.0
    %556 = vmatprep.subr.mxu0 0.0
    %557 = vmatpush2.msra.mxu0 0.0
    %558 = vmatprep.subr.mxu0 0.0
    %559 = vmatpush2.msra.mxu0 0.0
    %560 = vmatprep.subr.mxu0 0.0
    %561 = vmatpush2.msra.mxu0 0.0
    %562 = vmatprep.subr.mxu0 0.0
    %563 = vmatpush2.msra.mxu0 0.0
    %564 = vmatprep.subr.mxu0 0.0
    %565 = vmatpush2.msra.mxu0 0.0
    %566 = vmatprep.mubr.f32.mxu0 0.0
    %567 = vmatmul.mubr.f32.gmra.mxu0 %v500
    %v568 = vpop.f32.mrf.mxu0
    %v569 = vadd.f32 0.0, %v568
    %v570 = vpop.f32.mrf.mxu0
    %571 = vdwg.mxu0
    %573 = vrot.lane.b32.xlu0 %v487, 116
    %v574 = vpop.permute.xlu0 %573
    %v575 = vsel %vm499, %v574, 0
    %577 = vmatprep.subr.mxu0 0.0
    %578 = vmatpush1.msra.mxu0 0.0
    %579 = vmatprep.subr.mxu0 0.0
    %580 = vmatpush1.msra.mxu0 0.0
    %581 = vmatprep.subr.mxu0 0.0
    %582 = vmatpush1.msra.mxu0 0.0
    %583 = vmatprep.subr.mxu0 0.0
    %584 = vmatpush1.msra.mxu0 0.0
    %585 = vmatprep.subr.mxu0 0.0
    %586 = vmatpush1.msra.mxu0 0.0
    %587 = vmatprep.subr.mxu0 0.0
    %588 = vmatpush1.msra.mxu0 0.0
    %589 = vmatprep.subr.mxu0 0.0
    %590 = vmatpush1.msra.mxu0 0.0
    %591 = vmatprep.subr.mxu0 0.0
    %592 = vmatpush1.msra.mxu0 0.0
    %593 = vmatprep.subr.mxu0 0.0
    %594 = vmatpush1.msra.mxu0 %v495
    %595 = vmatprep.subr.mxu0 0.0
    %596 = vmatpush1.msra.mxu0 %v494
    %597 = vmatprep.subr.mxu0 0.0
    %598 = vmatpush1.msra.mxu0 %v493
    %599 = vmatprep.subr.mxu0 0.0
    %600 = vmatpush1.msra.mxu0 %v492
    %601 = vmatprep.subr.mxu0 0.0
    %602 = vmatpush1.msra.mxu0 %v491
    %603 = vmatprep.subr.mxu0 0.0
    %604 = vmatpush1.msra.mxu0 %v490
    %605 = vmatprep.subr.mxu0 0.0
    %606 = vmatpush1.msra.mxu0 %v489
    %607 = vmatprep.subr.mxu0 0.0
    %608 = vmatpush1.msra.mxu0 %v488
    %609 = vmatprep.subr.mxu0 0.0
    %610 = vmatpush2.msra.mxu0 0.0
    %611 = vmatprep.subr.mxu0 0.0
    %612 = vmatpush2.msra.mxu0 0.0
    %613 = vmatprep.subr.mxu0 0.0
    %614 = vmatpush2.msra.mxu0 0.0
    %615 = vmatprep.subr.mxu0 0.0
    %616 = vmatpush2.msra.mxu0 0.0
    %617 = vmatprep.subr.mxu0 0.0
    %618 = vmatpush2.msra.mxu0 0.0
    %619 = vmatprep.subr.mxu0 0.0
    %620 = vmatpush2.msra.mxu0 0.0
    %621 = vmatprep.subr.mxu0 0.0
    %622 = vmatpush2.msra.mxu0 0.0
    %623 = vmatprep.subr.mxu0 0.0
    %624 = vmatpush2.msra.mxu0 0.0
    %625 = vmatprep.subr.mxu0 0.0
    %626 = vmatpush2.msra.mxu0 0.0
    %627 = vmatprep.subr.mxu0 0.0
    %628 = vmatpush2.msra.mxu0 0.0
    %629 = vmatprep.subr.mxu0 0.0
    %630 = vmatpush2.msra.mxu0 0.0
    %631 = vmatprep.subr.mxu0 0.0
    %632 = vmatpush2.msra.mxu0 0.0
    %633 = vmatprep.subr.mxu0 0.0
    %634 = vmatpush2.msra.mxu0 0.0
    %635 = vmatprep.subr.mxu0 0.0
    %636 = vmatpush2.msra.mxu0 0.0
    %637 = vmatprep.subr.mxu0 0.0
    %638 = vmatpush2.msra.mxu0 0.0
    %639 = vmatprep.subr.mxu0 0.0
    %640 = vmatpush2.msra.mxu0 0.0
    %641 = vmatprep.mubr.f32.mxu0 0.0
    %642 = vmatmul.mubr.f32.gmra.mxu0 %v575
    %v643 = vpop.f32.mrf.mxu0
    %v644 = vadd.f32 0.0, %v643
    %v645 = vpop.f32.mrf.mxu0
    %646 = vdwg.mxu0
    %v647 = vmul.f32 %v569, 0.001953125
    %v648 = vmul.f32 %v644, 0.001953125
    %v649 = vmul.f32 %v647, %v647
    %v650 = vsub.f32 %v648, %v649
    %v651 = vadd.f32 %v650, 1e-05
    %v652 = vrsqrt.pop %v651
    %v653 = vsub.f32 0.0, %v647
    %v654 = vmul.f32 %v653, %v652
    %v655 = vld [vmem:[#allocation11] sm:$0xf]
    %vm656 = vcmask 31744
    %v658 = vsel %vm656, %v652, 0
    %vm660 = vcmask 1043456
    %v662 = vsel %vm660, %v655, 0
    %664 = vmatprep.subr.mxu0 0.0
    %665 = vmatpush1.msra.mxu0 0.0
    %666 = vmatprep.subr.mxu0 0.0
    %667 = vmatpush1.msra.mxu0 0.0
    %668 = vmatprep.subr.mxu0 0.0
    %669 = vmatpush1.msra.mxu0 0.0
    %670 = vmatprep.subr.mxu0 0.0
    %671 = vmatpush1.msra.mxu0 0.0
    %672 = vmatprep.subr.mxu0 0.0
    %673 = vmatpush1.msra.mxu0 0.0
    %674 = vmatprep.subr.mxu0 0.0
    %675 = vmatpush1.msra.mxu0 0.0
    %676 = vmatprep.subr.mxu0 0.0
    %677 = vmatpush1.msra.mxu0 0.0
    %678 = vmatprep.subr.mxu0 0.0
    %679 = vmatpush1.msra.mxu0 0.0
    %680 = vmatprep.subr.mxu0 0.0
    %681 = vmatpush1.msra.mxu0 0.0
    %682 = vmatprep.subr.mxu0 0.0
    %683 = vmatpush1.msra.mxu0 0.0
    %684 = vmatprep.subr.mxu0 0.0
    %685 = vmatpush1.msra.mxu0 0.0
    %686 = vmatprep.subr.mxu0 0.0
    %687 = vmatpush1.msra.mxu0 0.0
    %688 = vmatprep.subr.mxu0 0.0
    %689 = vmatpush1.msra.mxu0 0.0
    %690 = vmatprep.subr.mxu0 0.0
    %691 = vmatpush1.msra.mxu0 0.0
    %692 = vmatprep.subr.mxu0 0.0
    %693 = vmatpush1.msra.mxu0 0.0
    %694 = vmatprep.subr.mxu0 0.0
    %695 = vmatpush1.msra.mxu0 %v662
    %696 = vmatprep.subr.mxu0 0.0
    %697 = vmatpush2.msra.mxu0 0.0
    %698 = vmatprep.subr.mxu0 0.0
    %699 = vmatpush2.msra.mxu0 0.0
    %700 = vmatprep.subr.mxu0 0.0
    %701 = vmatpush2.msra.mxu0 0.0
    %702 = vmatprep.subr.mxu0 0.0
    %703 = vmatpush2.msra.mxu0 0.0
    %704 = vmatprep.subr.mxu0 0.0
    %705 = vmatpush2.msra.mxu0 0.0
    %706 = vmatprep.subr.mxu0 0.0
    %707 = vmatpush2.msra.mxu0 0.0
    %708 = vmatprep.subr.mxu0 0.0
    %709 = vmatpush2.msra.mxu0 0.0
    %710 = vmatprep.subr.mxu0 0.0
    %711 = vmatpush2.msra.mxu0 0.0
    %712 = vmatprep.subr.mxu0 0.0
    %713 = vmatpush2.msra.mxu0 0.0
    %714 = vmatprep.subr.mxu0 0.0
    %715 = vmatpush2.msra.mxu0 0.0
    %716 = vmatprep.subr.mxu0 0.0
    %717 = vmatpush2.msra.mxu0 0.0
    %718 = vmatprep.subr.mxu0 0.0
    %719 = vmatpush2.msra.mxu0 0.0
    %720 = vmatprep.subr.mxu0 0.0
    %721 = vmatpush2.msra.mxu0 0.0
    %722 = vmatprep.subr.mxu0 0.0
    %723 = vmatpush2.msra.mxu0 0.0
    %724 = vmatprep.subr.mxu0 0.0
    %725 = vmatpush2.msra.mxu0 0.0
    %726 = vmatprep.subr.mxu0 0.0
    %727 = vmatpush2.msra.mxu0 0.0
    %728 = vmatprep.mubr.f32.mxu0 0.0
    %729 = vmatmul.mubr.f32.gmra.mxu0 %v658
    %v730 = vpop.f32.mrf.mxu0
    %v731 = vadd.f32 0.0, %v730
    %v732 = vpop.f32.mrf.mxu0
    %733 = vdwg.mxu0
    %v735 = vsel %vm656, %v654, 0
    %737 = vmatprep.subr.mxu0 0.0
    %738 = vmatpush1.msra.mxu0 0.0
    %739 = vmatprep.subr.mxu0 0.0
    %740 = vmatpush1.msra.mxu0 0.0
    %741 = vmatprep.subr.mxu0 0.0
    %742 = vmatpush1.msra.mxu0 0.0
    %743 = vmatprep.subr.mxu0 0.0
    %744 = vmatpush1.msra.mxu0 0.0
    %745 = vmatprep.subr.mxu0 0.0
    %746 = vmatpush1.msra.mxu0 0.0
    %747 = vmatprep.subr.mxu0 0.0
    %748 = vmatpush1.msra.mxu0 0.0
    %749 = vmatprep.subr.mxu0 0.0
    %750 = vmatpush1.msra.mxu0 0.0
    %751 = vmatprep.subr.mxu0 0.0
    %752 = vmatpush1.msra.mxu0 0.0
    %753 = vmatprep.subr.mxu0 0.0
    %754 = vmatpush1.msra.mxu0 0.0
    %755 = vmatprep.subr.mxu0 0.0
    %756 = vmatpush1.msra.mxu0 0.0
    %757 = vmatprep.subr.mxu0 0.0
    %758 = vmatpush1.msra.mxu0 0.0
    %759 = vmatprep.subr.mxu0 0.0
    %760 = vmatpush1.msra.mxu0 0.0
    %761 = vmatprep.subr.mxu0 0.0
    %762 = vmatpush1.msra.mxu0 0.0
    %763 = vmatprep.subr.mxu0 0.0
    %764 = vmatpush1.msra.mxu0 0.0
    %765 = vmatprep.subr.mxu0 0.0
    %766 = vmatpush1.msra.mxu0 0.0
    %767 = vmatprep.subr.mxu0 0.0
    %768 = vmatpush1.msra.mxu0 %v662
    %769 = vmatprep.subr.mxu0 0.0
    %770 = vmatpush2.msra.mxu0 0.0
    %771 = vmatprep.subr.mxu0 0.0
    %772 = vmatpush2.msra.mxu0 0.0
    %773 = vmatprep.subr.mxu0 0.0
    %774 = vmatpush2.msra.mxu0 0.0
    %775 = vmatprep.subr.mxu0 0.0
    %776 = vmatpush2.msra.mxu0 0.0
    %777 = vmatprep.subr.mxu0 0.0
    %778 = vmatpush2.msra.mxu0 0.0
    %779 = vmatprep.subr.mxu0 0.0
    %780 = vmatpush2.msra.mxu0 0.0
    %781 = vmatprep.subr.mxu0 0.0
    %782 = vmatpush2.msra.mxu0 0.0
    %783 = vmatprep.subr.mxu0 0.0
    %784 = vmatpush2.msra.mxu0 0.0
    %785 = vmatprep.subr.mxu0 0.0
    %786 = vmatpush2.msra.mxu0 0.0
    %787 = vmatprep.subr.mxu0 0.0
    %788 = vmatpush2.msra.mxu0 0.0
    %789 = vmatprep.subr.mxu0 0.0
    %790 = vmatpush2.msra.mxu0 0.0
    %791 = vmatprep.subr.mxu0 0.0
    %792 = vmatpush2.msra.mxu0 0.0
    %793 = vmatprep.subr.mxu0 0.0
    %794 = vmatpush2.msra.mxu0 0.0
    %795 = vmatprep.subr.mxu0 0.0
    %796 = vmatpush2.msra.mxu0 0.0
    %797 = vmatprep.subr.mxu0 0.0
    %798 = vmatpush2.msra.mxu0 0.0
    %799 = vmatprep.subr.mxu0 0.0
    %800 = vmatpush2.msra.mxu0 0.0
    %801 = vmatprep.mubr.f32.mxu0 0.0
    %802 = vmatmul.mubr.f32.gmra.mxu0 %v735
    %v803 = vpop.f32.mrf.mxu0
    %v804 = vadd.f32 0.0, %v803
    %v805 = vpop.f32.mrf.mxu0
    %806 = vdwg.mxu0
    %v807 = vlaneseq
    %v808 = vshrl.u32 %v807, 7
    %v809 = vsub.s32 0, %v808
    %v810 = vrot.slane %v731, %v809
    %812 = vrot.lane.b32.xlu0 %v810, 12
    %v813 = vpop.permute.xlu0 %812
    %v815 = vmul.f32 %v452, %v813
    %v816 = vmul.f32 %v453, %v813
    %v817 = vmul.f32 %v454, %v813
    %v818 = vmul.f32 %v455, %v813
    %v819 = vlaneseq
    %v820 = vshrl.u32 %v819, 7
    %v821 = vsub.s32 0, %v820
    %v822 = vrot.slane %v804, %v821
    %824 = vrot.lane.b32.xlu0 %v822, 12
    %v825 = vpop.permute.xlu0 %824
    %v827 = vadd.f32 %v815, %v825
    %v828 = vadd.f32 %v816, %v825
    %v829 = vadd.f32 %v817, %v825
    %v830 = vadd.f32 %v818, %v825
    %v831 = vstv %s456
    %v832 = vmul.f32 %v831, %v827
    %v833 = vmul.f32 %v831, %v828
    %v834 = vmul.f32 %v831, %v829
    %v835 = vmul.f32 %v831, %v830
    %840 = vrot.lane.b32.xlu0 %v832, 4
    %v841 = vpop.permute.xlu0 %840
    %842 = vrot.lane.b32.xlu0 %v833, 4
    %v843 = vpop.permute.xlu0 %842
    %844 = vrot.lane.b32.xlu0 %v834, 4
    %v845 = vpop.permute.xlu0 %844
    %846 = vrot.lane.b32.xlu0 %v835, 4
    %v847 = vpop.permute.xlu0 %846
    %v852 = vadd.f32 %v285, %v841
    %v853 = vadd.f32 %v286, %v843
    %v854 = vadd.f32 %v287, %v845
    %v855 = vadd.f32 %v288, %v847
    %v856 = vld [vmem:[#allocation8 + $0x3] sm:$0xff]
    %v857 = vld [vmem:[#allocation8 + $0xb] sm:$0xff]
    %v858 = vld [vmem:[#allocation8 + $0x1b] sm:$0xff]
    %v859 = vld [vmem:[#allocation8 + $0x23] sm:$0xff]
    %v860 = vadd.f32 %v856, 0.0
    %v861 = vadd.f32 %v857, 0.0
    %v862 = vadd.f32 %v858, 0.0
    %v863 = vadd.f32 %v859, 0.0
    %868 = vrot.lane.b32.xlu0 %v856, 124
    %v869 = vpop.permute.xlu0 %868
    %870 = vrot.lane.b32.xlu0 %v857, 124
    %v871 = vpop.permute.xlu0 %870
    %872 = vrot.lane.b32.xlu0 %v858, 124
    %v873 = vpop.permute.xlu0 %872
    %874 = vrot.lane.b32.xlu0 %v859, 124
    %v875 = vpop.permute.xlu0 %874
    %v880 = vadd.f32 %v860, %v869
    %v881 = vadd.f32 %v861, %v871
    %v882 = vadd.f32 %v862, %v873
    %v883 = vadd.f32 %v863, %v875
    %884 = vrot.lane.b32.xlu0 %v856, 120
    %v885 = vpop.permute.xlu0 %884
    %886 = vrot.lane.b32.xlu0 %v857, 120
    %v887 = vpop.permute.xlu0 %886
    %888 = vrot.lane.b32.xlu0 %v858, 120
    %v889 = vpop.permute.xlu0 %888
    %890 = vrot.lane.b32.xlu0 %v859, 120
    %v891 = vpop.permute.xlu0 %890
    %v896 = vadd.f32 %v880, %v885
    %v897 = vadd.f32 %v881, %v887
    %v898 = vadd.f32 %v882, %v889
    %v899 = vadd.f32 %v883, %v891
    %v900 = vadd.f32 %v896, %v279
    %v901 = vadd.f32 %v897, %v280
    %v902 = vadd.f32 %v898, %v281
    %v903 = vadd.f32 %v899, %v282
    %908 = vrot.lane.b32.xlu0 %v279, 124
    %v909 = vpop.permute.xlu0 %908
    %910 = vrot.lane.b32.xlu0 %v280, 124
    %v911 = vpop.permute.xlu0 %910
    %912 = vrot.lane.b32.xlu0 %v281, 124
    %v913 = vpop.permute.xlu0 %912
    %914 = vrot.lane.b32.xlu0 %v282, 124
    %v915 = vpop.permute.xlu0 %914
    %v920 = vadd.f32 %v900, %v909
    %v921 = vadd.f32 %v901, %v911
    %v922 = vadd.f32 %v902, %v913
    %v923 = vadd.f32 %v903, %v915
    %924 = vrot.lane.b32.xlu0 %v279, 120
    %v925 = vpop.permute.xlu0 %924
    %926 = vrot.lane.b32.xlu0 %v280, 120
    %v927 = vpop.permute.xlu0 %926
    %928 = vrot.lane.b32.xlu0 %v281, 120
    %v929 = vpop.permute.xlu0 %928
    %930 = vrot.lane.b32.xlu0 %v282, 120
    %v931 = vpop.permute.xlu0 %930
    %v936 = vadd.f32 %v920, %v925
    %v937 = vadd.f32 %v921, %v927
    %v938 = vadd.f32 %v922, %v929
    %v939 = vadd.f32 %v923, %v931
    %v940 = vld [vmem:[#allocation8 + $0x5] sm:$0xff]
    %v941 = vld [vmem:[#allocation8 + $0xd] sm:$0xff]
    %v942 = vld [vmem:[#allocation8 + $0x1d] sm:$0xff]
    %v943 = vld [vmem:[#allocation8 + $0x25] sm:$0xff]
    %v944 = vadd.f32 %v936, %v940
    %v945 = vadd.f32 %v937, %v941
    %v946 = vadd.f32 %v938, %v942
    %v947 = vadd.f32 %v939, %v943
    %952 = vrot.lane.b32.xlu0 %v940, 124
    %v953 = vpop.permute.xlu0 %952
    %954 = vrot.lane.b32.xlu0 %v941, 124
    %v955 = vpop.permute.xlu0 %954
    %956 = vrot.lane.b32.xlu0 %v942, 124
    %v957 = vpop.permute.xlu0 %956
    %958 = vrot.lane.b32.xlu0 %v943, 124
    %v959 = vpop.permute.xlu0 %958
    %v964 = vadd.f32 %v944, %v953
    %v965 = vadd.f32 %v945, %v955
    %v966 = vadd.f32 %v946, %v957
    %v967 = vadd.f32 %v947, %v959
    %968 = vrot.lane.b32.xlu0 %v940, 120
    %v969 = vpop.permute.xlu0 %968
    %970 = vrot.lane.b32.xlu0 %v941, 120
    %v971 = vpop.permute.xlu0 %970
    %972 = vrot.lane.b32.xlu0 %v942, 120
    %v973 = vpop.permute.xlu0 %972
    %974 = vrot.lane.b32.xlu0 %v943, 120
    %v975 = vpop.permute.xlu0 %974
    %v980 = vadd.f32 %v964, %v969
    %v981 = vadd.f32 %v965, %v971
    %v982 = vadd.f32 %v966, %v973
    %v983 = vadd.f32 %v967, %v975
    %s984 = sld [smem:[#allocation4 + $0x2]]
    %v985 = vld [vmem:[%s3] sm:$0xff]
    %v986 = vld [vmem:[%s3 + $0x8] sm:$0xff]
    %989 = vrot.lane.b32.xlu0 %v985, 12
    %v990 = vpop.permute.xlu0 %989
    %991 = vrot.lane.b32.xlu0 %v986, 12
    %v992 = vpop.permute.xlu0 %991
    %v995 = vmul.f32 %v980, %v990
    %v996 = vmul.f32 %v981, %v992
    %v997 = vmul.f32 %v982, %v990
    %v998 = vmul.f32 %v983, %v992
    %v999 = vsel %vm457, %v995, 0.0
    %v1000 = vsel %vm457, %v996, 0.0
    %v1001 = vadd.f32 %v999, %v1000
    %v1002 = vsel %vm457, %v997, 0.0
    %v1003 = vadd.f32 %v1001, %v1002
    %v1004 = vsel %vm457, %v998, 0.0
    %v1005 = vadd.f32 %v1003, %v1004
    %v1006 = vrot.slane %v1005, 4
    %v1007 = vadd.f32 %v1005, %v1006
    %v1008 = vrot.slane %v1007, 2
    %v1009 = vadd.f32 %v1007, %v1008
    %v1010 = vrot.slane %v1009, 1
    %v1011 = vadd.f32 %v1009, %v1010
    %v1012 = vmul.f32 %v995, %v995
    %v1013 = vmul.f32 %v996, %v996
    %v1014 = vmul.f32 %v997, %v997
    %v1015 = vmul.f32 %v998, %v998
    %v1016 = vsel %vm457, %v1012, 0.0
    %v1017 = vsel %vm457, %v1013, 0.0
    %v1018 = vadd.f32 %v1016, %v1017
    %v1019 = vsel %vm457, %v1014, 0.0
    %v1020 = vadd.f32 %v1018, %v1019
    %v1021 = vsel %vm457, %v1015, 0.0
    %v1022 = vadd.f32 %v1020, %v1021
    %v1023 = vrot.slane %v1022, 4
    %v1024 = vadd.f32 %v1022, %v1023
    %v1025 = vrot.slane %v1024, 2
    %v1026 = vadd.f32 %v1024, %v1025
    %v1027 = vrot.slane %v1026, 1
    %v1028 = vadd.f32 %v1026, %v1027
    %1030 = vrot.lane.b32.xlu0 %v1011, 116
    %v1031 = vpop.permute.xlu0 %1030
    %v1032 = vsel %vm499, %v1031, 0
    %1034 = vmatprep.subr.mxu0 0.0
    %1035 = vmatpush1.msra.mxu0 0.0
    %1036 = vmatprep.subr.mxu0 0.0
    %1037 = vmatpush1.msra.mxu0 0.0
    %1038 = vmatprep.subr.mxu0 0.0
    %1039 = vmatpush1.msra.mxu0 0.0
    %1040 = vmatprep.subr.mxu0 0.0
    %1041 = vmatpush1.msra.mxu0 0.0
    %1042 = vmatprep.subr.mxu0 0.0
    %1043 = vmatpush1.msra.mxu0 0.0
    %1044 = vmatprep.subr.mxu0 0.0
    %1045 = vmatpush1.msra.mxu0 0.0
    %1046 = vmatprep.subr.mxu0 0.0
    %1047 = vmatpush1.msra.mxu0 0.0
    %1048 = vmatprep.subr.mxu0 0.0
    %1049 = vmatpush1.msra.mxu0 0.0
    %1050 = vmatprep.subr.mxu0 0.0
    %1051 = vmatpush1.msra.mxu0 %v495
    %1052 = vmatprep.subr.mxu0 0.0
    %1053 = vmatpush1.msra.mxu0 %v494
    %1054 = vmatprep.subr.mxu0 0.0
    %1055 = vmatpush1.msra.mxu0 %v493
    %1056 = vmatprep.subr.mxu0 0.0
    %1057 = vmatpush1.msra.mxu0 %v492
    %1058 = vmatprep.subr.mxu0 0.0
    %1059 = vmatpush1.msra.mxu0 %v491
    %1060 = vmatprep.subr.mxu0 0.0
    %1061 = vmatpush1.msra.mxu0 %v490
    %1062 = vmatprep.subr.mxu0 0.0
    %1063 = vmatpush1.msra.mxu0 %v489
    %1064 = vmatprep.subr.mxu0 0.0
    %1065 = vmatpush1.msra.mxu0 %v488
    %1066 = vmatprep.subr.mxu0 0.0
    %1067 = vmatpush2.msra.mxu0 0.0
    %1068 = vmatprep.subr.mxu0 0.0
    %1069 = vmatpush2.msra.mxu0 0.0
    %1070 = vmatprep.subr.mxu0 0.0
    %1071 = vmatpush2.msra.mxu0 0.0
    %1072 = vmatprep.subr.mxu0 0.0
    %1073 = vmatpush2.msra.mxu0 0.0
    %1074 = vmatprep.subr.mxu0 0.0
    %1075 = vmatpush2.msra.mxu0 0.0
    %1076 = vmatprep.subr.mxu0 0.0
    %1077 = vmatpush2.msra.mxu0 0.0
    %1078 = vmatprep.subr.mxu0 0.0
    %1079 = vmatpush2.msra.mxu0 0.0
    %1080 = vmatprep.subr.mxu0 0.0
    %1081 = vmatpush2.msra.mxu0 0.0
    %1082 = vmatprep.subr.mxu0 0.0
    %1083 = vmatpush2.msra.mxu0 0.0
    %1084 = vmatprep.subr.mxu0 0.0
    %1085 = vmatpush2.msra.mxu0 0.0
    %1086 = vmatprep.subr.mxu0 0.0
    %1087 = vmatpush2.msra.mxu0 0.0
    %1088 = vmatprep.subr.mxu0 0.0
    %1089 = vmatpush2.msra.mxu0 0.0
    %1090 = vmatprep.subr.mxu0 0.0
    %1091 = vmatpush2.msra.mxu0 0.0
    %1092 = vmatprep.subr.mxu0 0.0
    %1093 = vmatpush2.msra.mxu0 0.0
    %1094 = vmatprep.subr.mxu0 0.0
    %1095 = vmatpush2.msra.mxu0 0.0
    %1096 = vmatprep.subr.mxu0 0.0
    %1097 = vmatpush2.msra.mxu0 0.0
    %1098 = vmatprep.mubr.f32.mxu0 0.0
    %1099 = vmatmul.mubr.f32.gmra.mxu0 %v1032
    %v1100 = vpop.f32.mrf.mxu0
    %v1101 = vadd.f32 0.0, %v1100
    %v1102 = vpop.f32.mrf.mxu0
    %1103 = vdwg.mxu0
    %1105 = vrot.lane.b32.xlu0 %v1028, 116
    %v1106 = vpop.permute.xlu0 %1105
    %v1107 = vsel %vm499, %v1106, 0
    %1109 = vmatprep.subr.mxu0 0.0
    %1110 = vmatpush1.msra.mxu0 0.0
    %1111 = vmatprep.subr.mxu0 0.0
    %1112 = vmatpush1.msra.mxu0 0.0
    %1113 = vmatprep.subr.mxu0 0.0
    %1114 = vmatpush1.msra.mxu0 0.0
    %1115 = vmatprep.subr.mxu0 0.0
    %1116 = vmatpush1.msra.mxu0 0.0
    %1117 = vmatprep.subr.mxu0 0.0
    %1118 = vmatpush1.msra.mxu0 0.0
    %1119 = vmatprep.subr.mxu0 0.0
    %1120 = vmatpush1.msra.mxu0 0.0
    %1121 = vmatprep.subr.mxu0 0.0
    %1122 = vmatpush1.msra.mxu0 0.0
    %1123 = vmatprep.subr.mxu0 0.0
    %1124 = vmatpush1.msra.mxu0 0.0
    %1125 = vmatprep.subr.mxu0 0.0
    %1126 = vmatpush1.msra.mxu0 %v495
    %1127 = vmatprep.subr.mxu0 0.0
    %1128 = vmatpush1.msra.mxu0 %v494
    %1129 = vmatprep.subr.mxu0 0.0
    %1130 = vmatpush1.msra.mxu0 %v493
    %1131 = vmatprep.subr.mxu0 0.0
    %1132 = vmatpush1.msra.mxu0 %v492
    %1133 = vmatprep.subr.mxu0 0.0
    %1134 = vmatpush1.msra.mxu0 %v491
    %1135 = vmatprep.subr.mxu0 0.0
    %1136 = vmatpush1.msra.mxu0 %v490
    %1137 = vmatprep.subr.mxu0 0.0
    %1138 = vmatpush1.msra.mxu0 %v489
    %1139 = vmatprep.subr.mxu0 0.0
    %1140 = vmatpush1.msra.mxu0 %v488
    %1141 = vmatprep.subr.mxu0 0.0
    %1142 = vmatpush2.msra.mxu0 0.0
    %1143 = vmatprep.subr.mxu0 0.0
    %1144 = vmatpush2.msra.mxu0 0.0
    %1145 = vmatprep.subr.mxu0 0.0
    %1146 = vmatpush2.msra.mxu0 0.0
    %1147 = vmatprep.subr.mxu0 0.0
    %1148 = vmatpush2.msra.mxu0 0.0
    %1149 = vmatprep.subr.mxu0 0.0
    %1150 = vmatpush2.msra.mxu0 0.0
    %1151 = vmatprep.subr.mxu0 0.0
    %1152 = vmatpush2.msra.mxu0 0.0
    %1153 = vmatprep.subr.mxu0 0.0
    %1154 = vmatpush2.msra.mxu0 0.0
    %1155 = vmatprep.subr.mxu0 0.0
    %1156 = vmatpush2.msra.mxu0 0.0
    %1157 = vmatprep.subr.mxu0 0.0
    %1158 = vmatpush2.msra.mxu0 0.0
    %1159 = vmatprep.subr.mxu0 0.0
    %1160 = vmatpush2.msra.mxu0 0.0
    %1161 = vmatprep.subr.mxu0 0.0
    %1162 = vmatpush2.msra.mxu0 0.0
    %1163 = vmatprep.subr.mxu0 0.0
    %1164 = vmatpush2.msra.mxu0 0.0
    %1165 = vmatprep.subr.mxu0 0.0
    %1166 = vmatpush2.msra.mxu0 0.0
    %1167 = vmatprep.subr.mxu0 0.0
    %1168 = vmatpush2.msra.mxu0 0.0
    %1169 = vmatprep.subr.mxu0 0.0
    %1170 = vmatpush2.msra.mxu0 0.0
    %1171 = vmatprep.subr.mxu0 0.0
    %1172 = vmatpush2.msra.mxu0 0.0
    %1173 = vmatprep.mubr.f32.mxu0 0.0
    %1174 = vmatmul.mubr.f32.gmra.mxu0 %v1107
    %v1175 = vpop.f32.mrf.mxu0
    %v1176 = vadd.f32 0.0, %v1175
    %v1177 = vpop.f32.mrf.mxu0
    %1178 = vdwg.mxu0
    %v1179 = vmul.f32 %v1101, 0.001953125
    %v1180 = vmul.f32 %v1176, 0.001953125
    %v1181 = vmul.f32 %v1179, %v1179
    %v1182 = vsub.f32 %v1180, %v1181
    %v1183 = vadd.f32 %v1182, 1e-05
    %v1184 = vrsqrt.pop %v1183
    %v1185 = vsub.f32 0.0, %v1179
    %v1186 = vmul.f32 %v1185, %v1184
    %v1188 = vsel %vm656, %v1184, 0
    %1190 = vmatprep.subr.mxu0 0.0
    %1191 = vmatpush1.msra.mxu0 0.0
    %1192 = vmatprep.subr.mxu0 0.0
    %1193 = vmatpush1.msra.mxu0 0.0
    %1194 = vmatprep.subr.mxu0 0.0
    %1195 = vmatpush1.msra.mxu0 0.0
    %1196 = vmatprep.subr.mxu0 0.0
    %1197 = vmatpush1.msra.mxu0 0.0
    %1198 = vmatprep.subr.mxu0 0.0
    %1199 = vmatpush1.msra.mxu0 0.0
    %1200 = vmatprep.subr.mxu0 0.0
    %1201 = vmatpush1.msra.mxu0 0.0
    %1202 = vmatprep.subr.mxu0 0.0
    %1203 = vmatpush1.msra.mxu0 0.0
    %1204 = vmatprep.subr.mxu0 0.0
    %1205 = vmatpush1.msra.mxu0 0.0
    %1206 = vmatprep.subr.mxu0 0.0
    %1207 = vmatpush1.msra.mxu0 0.0
    %1208 = vmatprep.subr.mxu0 0.0
    %1209 = vmatpush1.msra.mxu0 0.0
    %1210 = vmatprep.subr.mxu0 0.0
    %1211 = vmatpush1.msra.mxu0 0.0
    %1212 = vmatprep.subr.mxu0 0.0
    %1213 = vmatpush1.msra.mxu0 0.0
    %1214 = vmatprep.subr.mxu0 0.0
    %1215 = vmatpush1.msra.mxu0 0.0
    %1216 = vmatprep.subr.mxu0 0.0
    %1217 = vmatpush1.msra.mxu0 0.0
    %1218 = vmatprep.subr.mxu0 0.0
    %1219 = vmatpush1.msra.mxu0 0.0
    %1220 = vmatprep.subr.mxu0 0.0
    %1221 = vmatpush1.msra.mxu0 %v662
    %1222 = vmatprep.subr.mxu0 0.0
    %1223 = vmatpush2.msra.mxu0 0.0
    %1224 = vmatprep.subr.mxu0 0.0
    %1225 = vmatpush2.msra.mxu0 0.0
    %1226 = vmatprep.subr.mxu0 0.0
    %1227 = vmatpush2.msra.mxu0 0.0
    %1228 = vmatprep.subr.mxu0 0.0
    %1229 = vmatpush2.msra.mxu0 0.0
    %1230 = vmatprep.subr.mxu0 0.0
    %1231 = vmatpush2.msra.mxu0 0.0
    %1232 = vmatprep.subr.mxu0 0.0
    %1233 = vmatpush2.msra.mxu0 0.0
    %1234 = vmatprep.subr.mxu0 0.0
    %1235 = vmatpush2.msra.mxu0 0.0
    %1236 = vmatprep.subr.mxu0 0.0
    %1237 = vmatpush2.msra.mxu0 0.0
    %1238 = vmatprep.subr.mxu0 0.0
    %1239 = vmatpush2.msra.mxu0 0.0
    %1240 = vmatprep.subr.mxu0 0.0
    %1241 = vmatpush2.msra.mxu0 0.0
    %1242 = vmatprep.subr.mxu0 0.0
    %1243 = vmatpush2.msra.mxu0 0.0
    %1244 = vmatprep.subr.mxu0 0.0
    %1245 = vmatpush2.msra.mxu0 0.0
    %1246 = vmatprep.subr.mxu0 0.0
    %1247 = vmatpush2.msra.mxu0 0.0
    %1248 = vmatprep.subr.mxu0 0.0
    %1249 = vmatpush2.msra.mxu0 0.0
    %1250 = vmatprep.subr.mxu0 0.0
    %1251 = vmatpush2.msra.mxu0 0.0
    %1252 = vmatprep.subr.mxu0 0.0
    %1253 = vmatpush2.msra.mxu0 0.0
    %1254 = vmatprep.mubr.f32.mxu0 0.0
    %1255 = vmatmul.mubr.f32.gmra.mxu0 %v1188
    %v1256 = vpop.f32.mrf.mxu0
    %v1257 = vadd.f32 0.0, %v1256
    %v1258 = vpop.f32.mrf.mxu0
    %1259 = vdwg.mxu0
    %v1261 = vsel %vm656, %v1186, 0
    %1263 = vmatprep.subr.mxu0 0.0
    %1264 = vmatpush1.msra.mxu0 0.0
    %1265 = vmatprep.subr.mxu0 0.0
    %1266 = vmatpush1.msra.mxu0 0.0
    %1267 = vmatprep.subr.mxu0 0.0
    %1268 = vmatpush1.msra.mxu0 0.0
    %1269 = vmatprep.subr.mxu0 0.0
    %1270 = vmatpush1.msra.mxu0 0.0
    %1271 = vmatprep.subr.mxu0 0.0
    %1272 = vmatpush1.msra.mxu0 0.0
    %1273 = vmatprep.subr.mxu0 0.0
    %1274 = vmatpush1.msra.mxu0 0.0
    %1275 = vmatprep.subr.mxu0 0.0
    %1276 = vmatpush1.msra.mxu0 0.0
    %1277 = vmatprep.subr.mxu0 0.0
    %1278 = vmatpush1.msra.mxu0 0.0
    %1279 = vmatprep.subr.mxu0 0.0
    %1280 = vmatpush1.msra.mxu0 0.0
    %1281 = vmatprep.subr.mxu0 0.0
    %1282 = vmatpush1.msra.mxu0 0.0
    %1283 = vmatprep.subr.mxu0 0.0
    %1284 = vmatpush1.msra.mxu0 0.0
    %1285 = vmatprep.subr.mxu0 0.0
    %1286 = vmatpush1.msra.mxu0 0.0
    %1287 = vmatprep.subr.mxu0 0.0
    %1288 = vmatpush1.msra.mxu0 0.0
    %1289 = vmatprep.subr.mxu0 0.0
    %1290 = vmatpush1.msra.mxu0 0.0
    %1291 = vmatprep.subr.mxu0 0.0
    %1292 = vmatpush1.msra.mxu0 0.0
    %1293 = vmatprep.subr.mxu0 0.0
    %1294 = vmatpush1.msra.mxu0 %v662
    %1295 = vmatprep.subr.mxu0 0.0
    %1296 = vmatpush2.msra.mxu0 0.0
    %1297 = vmatprep.subr.mxu0 0.0
    %1298 = vmatpush2.msra.mxu0 0.0
    %1299 = vmatprep.subr.mxu0 0.0
    %1300 = vmatpush2.msra.mxu0 0.0
    %1301 = vmatprep.subr.mxu0 0.0
    %1302 = vmatpush2.msra.mxu0 0.0
    %1303 = vmatprep.subr.mxu0 0.0
    %1304 = vmatpush2.msra.mxu0 0.0
    %1305 = vmatprep.subr.mxu0 0.0
    %1306 = vmatpush2.msra.mxu0 0.0
    %1307 = vmatprep.subr.mxu0 0.0
    %1308 = vmatpush2.msra.mxu0 0.0
    %1309 = vmatprep.subr.mxu0 0.0
    %1310 = vmatpush2.msra.mxu0 0.0
    %1311 = vmatprep.subr.mxu0 0.0
    %1312 = vmatpush2.msra.mxu0 0.0
    %1313 = vmatprep.subr.mxu0 0.0
    %1314 = vmatpush2.msra.mxu0 0.0
    %1315 = vmatprep.subr.mxu0 0.0
    %1316 = vmatpush2.msra.mxu0 0.0
    %1317 = vmatprep.subr.mxu0 0.0
    %1318 = vmatpush2.msra.mxu0 0.0
    %1319 = vmatprep.subr.mxu0 0.0
    %1320 = vmatpush2.msra.mxu0 0.0
    %1321 = vmatprep.subr.mxu0 0.0
    %1322 = vmatpush2.msra.mxu0 0.0
    %1323 = vmatprep.subr.mxu0 0.0
    %1324 = vmatpush2.msra.mxu0 0.0
    %1325 = vmatprep.subr.mxu0 0.0
    %1326 = vmatpush2.msra.mxu0 0.0
    %1327 = vmatprep.mubr.f32.mxu0 0.0
    %1328 = vmatmul.mubr.f32.gmra.mxu0 %v1261
    %v1329 = vpop.f32.mrf.mxu0
    %v1330 = vadd.f32 0.0, %v1329
    %v1331 = vpop.f32.mrf.mxu0
    %1332 = vdwg.mxu0
    %v1333 = vlaneseq
    %v1334 = vshrl.u32 %v1333, 7
    %v1335 = vsub.s32 0, %v1334
    %v1336 = vrot.slane %v1257, %v1335
    %1338 = vrot.lane.b32.xlu0 %v1336, 12
    %v1339 = vpop.permute.xlu0 %1338
    %v1341 = vmul.f32 %v995, %v1339
    %v1342 = vmul.f32 %v996, %v1339
    %v1343 = vmul.f32 %v997, %v1339
    %v1344 = vmul.f32 %v998, %v1339
    %v1345 = vlaneseq
    %v1346 = vshrl.u32 %v1345, 7
    %v1347 = vsub.s32 0, %v1346
    %v1348 = vrot.slane %v1330, %v1347
    %1350 = vrot.lane.b32.xlu0 %v1348, 12
    %v1351 = vpop.permute.xlu0 %1350
    %v1353 = vadd.f32 %v1341, %v1351
    %v1354 = vadd.f32 %v1342, %v1351
    %v1355 = vadd.f32 %v1343, %v1351
    %v1356 = vadd.f32 %v1344, %v1351
    %v1357 = vstv %s984
    %v1358 = vmul.f32 %v1357, %v1353
    %v1359 = vmul.f32 %v1357, %v1354
    %v1360 = vmul.f32 %v1357, %v1355
    %v1361 = vmul.f32 %v1357, %v1356
    %1366 = vrot.lane.b32.xlu0 %v1358, 4
    %v1367 = vpop.permute.xlu0 %1366
    %1368 = vrot.lane.b32.xlu0 %v1359, 4
    %v1369 = vpop.permute.xlu0 %1368
    %1370 = vrot.lane.b32.xlu0 %v1360, 4
    %v1371 = vpop.permute.xlu0 %1370
    %1372 = vrot.lane.b32.xlu0 %v1361, 4
    %v1373 = vpop.permute.xlu0 %1372
    %v1378 = vadd.f32 %v852, %v1367
    %v1379 = vadd.f32 %v853, %v1369
    %v1380 = vadd.f32 %v854, %v1371
    %v1381 = vadd.f32 %v855, %v1373
    %s1382 = sld [smem:[#allocation4 + $0x4]]
    %v1383 = vld [vmem:[#allocation2 + $0x3] sm:$0xff]
    %v1384 = vld [vmem:[#allocation2 + $0xb] sm:$0xff]
    %v1385 = vld [vmem:[#allocation2 + $0x1b] sm:$0xff]
    %v1386 = vld [vmem:[#allocation2 + $0x23] sm:$0xff]
    %v1387 = vld [vmem:[#allocation12] sm:$0x1]
    %v1388 = vlaneseq
    %v1389 = vshrl.u32 %v1388, 7
    %v1390 = vsub.s32 0, %v1389
    %v1391 = vrot.slane %v1387, %v1390
    %1393 = vrot.lane.b32.xlu0 %v1391, 12
    %v1394 = vpop.permute.xlu0 %1393
    %v1396 = vmul.f32 %v1383, %v1394
    %v1397 = vmul.f32 %v1384, %v1394
    %v1398 = vmul.f32 %v1385, %v1394
    %v1399 = vmul.f32 %v1386, %v1394
    %v1400 = vadd.f32 %v1396, 0.0
    %v1401 = vadd.f32 %v1397, 0.0
    %v1402 = vadd.f32 %v1398, 0.0
    %v1403 = vadd.f32 %v1399, 0.0
    %v1404 = vld [vmem:[#allocation12 + $0x1] sm:$0x1]
    %v1405 = vlaneseq
    %v1406 = vshrl.u32 %v1405, 7
    %v1407 = vsub.s32 0, %v1406
    %v1408 = vrot.slane %v1404, %v1407
    %1410 = vrot.lane.b32.xlu0 %v1408, 16
    %v1411 = vpop.permute.xlu0 %1410
    %v1413 = vmul.f32 %v1383, %v1411
    %v1414 = vmul.f32 %v1384, %v1411
    %v1415 = vmul.f32 %v1385, %v1411
    %v1416 = vmul.f32 %v1386, %v1411
    %1421 = vrot.lane.b32.xlu0 %v1413, 124
    %v1422 = vpop.permute.xlu0 %1421
    %1423 = vrot.lane.b32.xlu0 %v1414, 124
    %v1424 = vpop.permute.xlu0 %1423
    %1425 = vrot.lane.b32.xlu0 %v1415, 124
    %v1426 = vpop.permute.xlu0 %1425
    %1427 = vrot.lane.b32.xlu0 %v1416, 124
    %v1428 = vpop.permute.xlu0 %1427
    %v1433 = vadd.f32 %v1400, %v1422
    %v1434 = vadd.f32 %v1401, %v1424
    %v1435 = vadd.f32 %v1402, %v1426
    %v1436 = vadd.f32 %v1403, %v1428
    %v1437 = vld [vmem:[#allocation12 + $0x2] sm:$0x1]
    %v1438 = vlaneseq
    %v1439 = vshrl.u32 %v1438, 7
    %v1440 = vsub.s32 0, %v1439
    %v1441 = vrot.slane %v1437, %v1440
    %1443 = vrot.lane.b32.xlu0 %v1441, 20
    %v1444 = vpop.permute.xlu0 %1443
    %v1446 = vmul.f32 %v1383, %v1444
    %v1447 = vmul.f32 %v1384, %v1444
    %v1448 = vmul.f32 %v1385, %v1444
    %v1449 = vmul.f32 %v1386, %v1444
    %1454 = vrot.lane.b32.xlu0 %v1446, 120
    %v1455 = vpop.permute.xlu0 %1454
    %1456 = vrot.lane.b32.xlu0 %v1447, 120
    %v1457 = vpop.permute.xlu0 %1456
    %1458 = vrot.lane.b32.xlu0 %v1448, 120
    %v1459 = vpop.permute.xlu0 %1458
    %1460 = vrot.lane.b32.xlu0 %v1449, 120
    %v1461 = vpop.permute.xlu0 %1460
    %v1466 = vadd.f32 %v1433, %v1455
    %v1467 = vadd.f32 %v1434, %v1457
    %v1468 = vadd.f32 %v1435, %v1459
    %v1469 = vadd.f32 %v1436, %v1461
    %v1470 = vld [vmem:[#allocation2 + $0x4] sm:$0xff]
    %v1471 = vld [vmem:[#allocation2 + $0xc] sm:$0xff]
    %v1472 = vld [vmem:[#allocation2 + $0x1c] sm:$0xff]
    %v1473 = vld [vmem:[#allocation2 + $0x24] sm:$0xff]
    %s1474 = scalar_lea.vmem [#allocation12], 4
    %v1475 = vld [vmem:[%s1474] sm:$0x1]
    %v1476 = vlaneseq
    %v1477 = vshrl.u32 %v1476, 7
    %v1478 = vsub.s32 0, %v1477
    %v1479 = vrot.slane %v1475, %v1478
    %1481 = vrot.lane.b32.xlu0 %v1479, 12
    %v1482 = vpop.permute.xlu0 %1481
    %v1484 = vmul.f32 %v1470, %v1482
    %v1485 = vmul.f32 %v1471, %v1482
    %v1486 = vmul.f32 %v1472, %v1482
    %v1487 = vmul.f32 %v1473, %v1482
    %v1488 = vadd.f32 %v1466, %v1484
    %v1489 = vadd.f32 %v1467, %v1485
    %v1490 = vadd.f32 %v1468, %v1486
    %v1491 = vadd.f32 %v1469, %v1487
    %v1492 = vld [vmem:[%s1474 + $0x1] sm:$0x1]
    %v1493 = vlaneseq
    %v1494 = vshrl.u32 %v1493, 7
    %v1495 = vsub.s32 0, %v1494
    %v1496 = vrot.slane %v1492, %v1495
    %1498 = vrot.lane.b32.xlu0 %v1496, 16
    %v1499 = vpop.permute.xlu0 %1498
    %v1501 = vmul.f32 %v1470, %v1499
    %v1502 = vmul.f32 %v1471, %v1499
    %v1503 = vmul.f32 %v1472, %v1499
    %v1504 = vmul.f32 %v1473, %v1499
    %1509 = vrot.lane.b32.xlu0 %v1501, 124
    %v1510 = vpop.permute.xlu0 %1509
    %1511 = vrot.lane.b32.xlu0 %v1502, 124
    %v1512 = vpop.permute.xlu0 %1511
    %1513 = vrot.lane.b32.xlu0 %v1503, 124
    %v1514 = vpop.permute.xlu0 %1513
    %1515 = vrot.lane.b32.xlu0 %v1504, 124
    %v1516 = vpop.permute.xlu0 %1515
    %v1521 = vadd.f32 %v1488, %v1510
    %v1522 = vadd.f32 %v1489, %v1512
    %v1523 = vadd.f32 %v1490, %v1514
    %v1524 = vadd.f32 %v1491, %v1516
    %v1525 = vld [vmem:[%s1474 + $0x2] sm:$0x1]
    %v1526 = vlaneseq
    %v1527 = vshrl.u32 %v1526, 7
    %v1528 = vsub.s32 0, %v1527
    %v1529 = vrot.slane %v1525, %v1528
    %1531 = vrot.lane.b32.xlu0 %v1529, 20
    %v1532 = vpop.permute.xlu0 %1531
    %v1534 = vmul.f32 %v1470, %v1532
    %v1535 = vmul.f32 %v1471, %v1532
    %v1536 = vmul.f32 %v1472, %v1532
    %v1537 = vmul.f32 %v1473, %v1532
    %1542 = vrot.lane.b32.xlu0 %v1534, 120
    %v1543 = vpop.permute.xlu0 %1542
    %1544 = vrot.lane.b32.xlu0 %v1535, 120
    %v1545 = vpop.permute.xlu0 %1544
    %1546 = vrot.lane.b32.xlu0 %v1536, 120
    %v1547 = vpop.permute.xlu0 %1546
    %1548 = vrot.lane.b32.xlu0 %v1537, 120
    %v1549 = vpop.permute.xlu0 %1548
    %v1554 = vadd.f32 %v1521, %v1543
    %v1555 = vadd.f32 %v1522, %v1545
    %v1556 = vadd.f32 %v1523, %v1547
    %v1557 = vadd.f32 %v1524, %v1549
    %v1558 = vld [vmem:[#allocation2 + $0x5] sm:$0xff]
    %v1559 = vld [vmem:[#allocation2 + $0xd] sm:$0xff]
    %v1560 = vld [vmem:[#allocation2 + $0x1d] sm:$0xff]
    %v1561 = vld [vmem:[#allocation2 + $0x25] sm:$0xff]
    %s1562 = scalar_lea.vmem [#allocation12], 8
    %v1563 = vld [vmem:[%s1562] sm:$0x1]
    %v1564 = vlaneseq
    %v1565 = vshrl.u32 %v1564, 7
    %v1566 = vsub.s32 0, %v1565
    %v1567 = vrot.slane %v1563, %v1566
    %1569 = vrot.lane.b32.xlu0 %v1567, 12
    %v1570 = vpop.permute.xlu0 %1569
    %v1572 = vmul.f32 %v1558, %v1570
    %v1573 = vmul.f32 %v1559, %v1570
    %v1574 = vmul.f32 %v1560, %v1570
    %v1575 = vmul.f32 %v1561, %v1570
    %v1576 = vadd.f32 %v1554, %v1572
    %v1577 = vadd.f32 %v1555, %v1573
    %v1578 = vadd.f32 %v1556, %v1574
    %v1579 = vadd.f32 %v1557, %v1575
    %v1580 = vld [vmem:[%s1562 + $0x1] sm:$0x1]
    %v1581 = vlaneseq
    %v1582 = vshrl.u32 %v1581, 7
    %v1583 = vsub.s32 0, %v1582
    %v1584 = vrot.slane %v1580, %v1583
    %1586 = vrot.lane.b32.xlu0 %v1584, 16
    %v1587 = vpop.permute.xlu0 %1586
    %v1589 = vmul.f32 %v1558, %v1587
    %v1590 = vmul.f32 %v1559, %v1587
    %v1591 = vmul.f32 %v1560, %v1587
    %v1592 = vmul.f32 %v1561, %v1587
    %1597 = vrot.lane.b32.xlu0 %v1589, 124
    %v1598 = vpop.permute.xlu0 %1597
    %1599 = vrot.lane.b32.xlu0 %v1590, 124
    %v1600 = vpop.permute.xlu0 %1599
    %1601 = vrot.lane.b32.xlu0 %v1591, 124
    %v1602 = vpop.permute.xlu0 %1601
    %1603 = vrot.lane.b32.xlu0 %v1592, 124
    %v1604 = vpop.permute.xlu0 %1603
    %v1609 = vadd.f32 %v1576, %v1598
    %v1610 = vadd.f32 %v1577, %v1600
    %v1611 = vadd.f32 %v1578, %v1602
    %v1612 = vadd.f32 %v1579, %v1604
    %v1613 = vld [vmem:[%s1562 + $0x2] sm:$0x1]
    %v1614 = vlaneseq
    %v1615 = vshrl.u32 %v1614, 7
    %v1616 = vsub.s32 0, %v1615
    %v1617 = vrot.slane %v1613, %v1616
    %1619 = vrot.lane.b32.xlu0 %v1617, 20
    %v1620 = vpop.permute.xlu0 %1619
    %v1622 = vmul.f32 %v1558, %v1620
    %v1623 = vmul.f32 %v1559, %v1620
    %v1624 = vmul.f32 %v1560, %v1620
    %v1625 = vmul.f32 %v1561, %v1620
    %1630 = vrot.lane.b32.xlu0 %v1622, 120
    %v1631 = vpop.permute.xlu0 %1630
    %1632 = vrot.lane.b32.xlu0 %v1623, 120
    %v1633 = vpop.permute.xlu0 %1632
    %1634 = vrot.lane.b32.xlu0 %v1624, 120
    %v1635 = vpop.permute.xlu0 %1634
    %1636 = vrot.lane.b32.xlu0 %v1625, 120
    %v1637 = vpop.permute.xlu0 %1636
    %v1642 = vadd.f32 %v1609, %v1631
    %v1643 = vadd.f32 %v1610, %v1633
    %v1644 = vadd.f32 %v1611, %v1635
    %v1645 = vadd.f32 %v1612, %v1637
    %v1646 = vld [vmem:[%s7] sm:$0xff]
    %v1647 = vld [vmem:[%s7 + $0x8] sm:$0xff]
    %v1648 = vld [vmem:[%s7 + $0x10] sm:$0xff]
    %v1649 = vld [vmem:[%s7 + $0x18] sm:$0xff]
    %v1650 = vld [vmem:[%s7 + $0x20] sm:$0xff]
    %v1651 = vld [vmem:[%s7 + $0x28] sm:$0xff]
    %v1652 = vld [vmem:[%s7 + $0x30] sm:$0xff]
    %v1653 = vld [vmem:[%s7 + $0x38] sm:$0xff]
    %1658 = vrot.lane.b32.xlu0 %v1642, 116
    %v1659 = vpop.permute.xlu0 %1658
    %1660 = vrot.lane.b32.xlu0 %v1643, 116
    %v1661 = vpop.permute.xlu0 %1660
    %1662 = vrot.lane.b32.xlu0 %v1644, 116
    %v1663 = vpop.permute.xlu0 %1662
    %1664 = vrot.lane.b32.xlu0 %v1645, 116
    %v1665 = vpop.permute.xlu0 %1664
    %v1666 = vsel %vm499, %v1659, 0
    %v1668 = vsel %vm499, %v1661, 0
    %v1670 = vsel %vm499, %v1663, 0
    %v1672 = vsel %vm499, %v1665, 0
    %1674 = vmatprep.subr.mxu0 0.0
    %1675 = vmatpush1.msra.mxu0 0.0
    %1676 = vmatprep.subr.mxu0 0.0
    %1677 = vmatpush1.msra.mxu0 0.0
    %1678 = vmatprep.subr.mxu0 0.0
    %1679 = vmatpush1.msra.mxu0 0.0
    %1680 = vmatprep.subr.mxu0 0.0
    %1681 = vmatpush1.msra.mxu0 0.0
    %1682 = vmatprep.subr.mxu0 0.0
    %1683 = vmatpush1.msra.mxu0 0.0
    %1684 = vmatprep.subr.mxu0 0.0
    %1685 = vmatpush1.msra.mxu0 0.0
    %1686 = vmatprep.subr.mxu0 0.0
    %1687 = vmatpush1.msra.mxu0 0.0
    %1688 = vmatprep.subr.mxu0 0.0
    %1689 = vmatpush1.msra.mxu0 0.0
    %1690 = vmatprep.subr.mxu0 0.0
    %1691 = vmatpush1.msra.mxu0 %v1653
    %1692 = vmatprep.subr.mxu0 0.0
    %1693 = vmatpush1.msra.mxu0 %v1652
    %1694 = vmatprep.subr.mxu0 0.0
    %1695 = vmatpush1.msra.mxu0 %v1651
    %1696 = vmatprep.subr.mxu0 0.0
    %1697 = vmatpush1.msra.mxu0 %v1650
    %1698 = vmatprep.subr.mxu0 0.0
    %1699 = vmatpush1.msra.mxu0 %v1649
    %1700 = vmatprep.subr.mxu0 0.0
    %1701 = vmatpush1.msra.mxu0 %v1648
    %1702 = vmatprep.subr.mxu0 0.0
    %1703 = vmatpush1.msra.mxu0 %v1647
    %1704 = vmatprep.subr.mxu0 0.0
    %1705 = vmatpush1.msra.mxu0 %v1646
    %1706 = vmatprep.subr.mxu0 0.0
    %1707 = vmatpush2.msra.mxu0 0.0
    %1708 = vmatprep.subr.mxu0 0.0
    %1709 = vmatpush2.msra.mxu0 0.0
    %1710 = vmatprep.subr.mxu0 0.0
    %1711 = vmatpush2.msra.mxu0 0.0
    %1712 = vmatprep.subr.mxu0 0.0
    %1713 = vmatpush2.msra.mxu0 0.0
    %1714 = vmatprep.subr.mxu0 0.0
    %1715 = vmatpush2.msra.mxu0 0.0
    %1716 = vmatprep.subr.mxu0 0.0
    %1717 = vmatpush2.msra.mxu0 0.0
    %1718 = vmatprep.subr.mxu0 0.0
    %1719 = vmatpush2.msra.mxu0 0.0
    %1720 = vmatprep.subr.mxu0 0.0
    %1721 = vmatpush2.msra.mxu0 0.0
    %1722 = vmatprep.subr.mxu0 0.0
    %1723 = vmatpush2.msra.mxu0 0.0
    %1724 = vmatprep.subr.mxu0 0.0
    %1725 = vmatpush2.msra.mxu0 0.0
    %1726 = vmatprep.subr.mxu0 0.0
    %1727 = vmatpush2.msra.mxu0 0.0
    %1728 = vmatprep.subr.mxu0 0.0
    %1729 = vmatpush2.msra.mxu0 0.0
    %1730 = vmatprep.subr.mxu0 0.0
    %1731 = vmatpush2.msra.mxu0 0.0
    %1732 = vmatprep.subr.mxu0 0.0
    %1733 = vmatpush2.msra.mxu0 0.0
    %1734 = vmatprep.subr.mxu0 0.0
    %1735 = vmatpush2.msra.mxu0 0.0
    %1736 = vmatprep.subr.mxu0 0.0
    %1737 = vmatpush2.msra.mxu0 0.0
    %1738 = vmatprep.mubr.f32.mxu0 0.0
    %1739 = vmatmul.mubr.f32.gmra.mxu0 %v1666
    %v1740 = vpop.f32.mrf.mxu0
    %v1741 = vadd.f32 0.0, %v1740
    %v1742 = vpop.f32.mrf.mxu0
    %1743 = vmatprep.mubr.f32.mxu0 0.0
    %1744 = vmatmul.mubr.f32.gmra.mxu0 %v1668
    %v1745 = vpop.f32.mrf.mxu0
    %v1746 = vadd.f32 0.0, %v1745
    %v1747 = vpop.f32.mrf.mxu0
    %1748 = vmatprep.mubr.f32.mxu0 0.0
    %1749 = vmatmul.mubr.f32.gmra.mxu0 %v1670
    %v1750 = vpop.f32.mrf.mxu0
    %v1751 = vadd.f32 0.0, %v1750
    %v1752 = vpop.f32.mrf.mxu0
    %1753 = vmatprep.mubr.f32.mxu0 0.0
    %1754 = vmatmul.mubr.f32.gmra.mxu0 %v1672
    %v1755 = vpop.f32.mrf.mxu0
    %v1756 = vadd.f32 0.0, %v1755
    %v1757 = vpop.f32.mrf.mxu0
    %1758 = vdwg.mxu0
    %v1759 = vsel %vm499, %v1741, 0.0
    %v1760 = vsel %vm499, %v1746, 0.0
    %v1761 = vadd.f32 %v1759, %v1760
    %v1762 = vsel %vm499, %v1751, 0.0
    %v1763 = vadd.f32 %v1761, %v1762
    %v1764 = vsel %vm499, %v1756, 0.0
    %v1765 = vadd.f32 %v1763, %v1764
    %v1766 = vrot.slane %v1765, 4
    %v1767 = vadd.f32 %v1765, %v1766
    %v1768 = vrot.slane %v1767, 2
    %v1769 = vadd.f32 %v1767, %v1768
    %v1770 = vrot.slane %v1769, 1
    %v1771 = vadd.f32 %v1769, %v1770
    %v1772 = vmul.f32 %v1741, %v1741
    %v1773 = vmul.f32 %v1746, %v1746
    %v1774 = vmul.f32 %v1751, %v1751
    %v1775 = vmul.f32 %v1756, %v1756
    %v1776 = vsel %vm499, %v1772, 0.0
    %v1777 = vsel %vm499, %v1773, 0.0
    %v1778 = vadd.f32 %v1776, %v1777
    %v1779 = vsel %vm499, %v1774, 0.0
    %v1780 = vadd.f32 %v1778, %v1779
    %v1781 = vsel %vm499, %v1775, 0.0
    %v1782 = vadd.f32 %v1780, %v1781
    %v1783 = vrot.slane %v1782, 4
    %v1784 = vadd.f32 %v1782, %v1783
    %v1785 = vrot.slane %v1784, 2
    %v1786 = vadd.f32 %v1784, %v1785
    %v1787 = vrot.slane %v1786, 1
    %v1788 = vadd.f32 %v1786, %v1787
    %v1790 = vsel %vm499, %v1771, 0
    %1792 = vmatprep.subr.mxu0 0.0
    %1793 = vmatpush1.msra.mxu0 0.0
    %1794 = vmatprep.subr.mxu0 0.0
    %1795 = vmatpush1.msra.mxu0 0.0
    %1796 = vmatprep.subr.mxu0 0.0
    %1797 = vmatpush1.msra.mxu0 0.0
    %1798 = vmatprep.subr.mxu0 0.0
    %1799 = vmatpush1.msra.mxu0 0.0
    %1800 = vmatprep.subr.mxu0 0.0
    %1801 = vmatpush1.msra.mxu0 0.0
    %1802 = vmatprep.subr.mxu0 0.0
    %1803 = vmatpush1.msra.mxu0 0.0
    %1804 = vmatprep.subr.mxu0 0.0
    %1805 = vmatpush1.msra.mxu0 0.0
    %1806 = vmatprep.subr.mxu0 0.0
    %1807 = vmatpush1.msra.mxu0 0.0
    %1808 = vmatprep.subr.mxu0 0.0
    %1809 = vmatpush1.msra.mxu0 %v495
    %1810 = vmatprep.subr.mxu0 0.0
    %1811 = vmatpush1.msra.mxu0 %v494
    %1812 = vmatprep.subr.mxu0 0.0
    %1813 = vmatpush1.msra.mxu0 %v493
    %1814 = vmatprep.subr.mxu0 0.0
    %1815 = vmatpush1.msra.mxu0 %v492
    %1816 = vmatprep.subr.mxu0 0.0
    %1817 = vmatpush1.msra.mxu0 %v491
    %1818 = vmatprep.subr.mxu0 0.0
    %1819 = vmatpush1.msra.mxu0 %v490
    %1820 = vmatprep.subr.mxu0 0.0
    %1821 = vmatpush1.msra.mxu0 %v489
    %1822 = vmatprep.subr.mxu0 0.0
    %1823 = vmatpush1.msra.mxu0 %v488
    %1824 = vmatprep.subr.mxu0 0.0
    %1825 = vmatpush2.msra.mxu0 0.0
    %1826 = vmatprep.subr.mxu0 0.0
    %1827 = vmatpush2.msra.mxu0 0.0
    %1828 = vmatprep.subr.mxu0 0.0
    %1829 = vmatpush2.msra.mxu0 0.0
    %1830 = vmatprep.subr.mxu0 0.0
    %1831 = vmatpush2.msra.mxu0 0.0
    %1832 = vmatprep.subr.mxu0 0.0
    %1833 = vmatpush2.msra.mxu0 0.0
    %1834 = vmatprep.subr.mxu0 0.0
    %1835 = vmatpush2.msra.mxu0 0.0
    %1836 = vmatprep.subr.mxu0 0.0
    %1837 = vmatpush2.msra.mxu0 0.0
    %1838 = vmatprep.subr.mxu0 0.0
    %1839 = vmatpush2.msra.mxu0 0.0
    %1840 = vmatprep.subr.mxu0 0.0
    %1841 = vmatpush2.msra.mxu0 0.0
    %1842 = vmatprep.subr.mxu0 0.0
    %1843 = vmatpush2.msra.mxu0 0.0
    %1844 = vmatprep.subr.mxu0 0.0
    %1845 = vmatpush2.msra.mxu0 0.0
    %1846 = vmatprep.subr.mxu0 0.0
    %1847 = vmatpush2.msra.mxu0 0.0
    %1848 = vmatprep.subr.mxu0 0.0
    %1849 = vmatpush2.msra.mxu0 0.0
    %1850 = vmatprep.subr.mxu0 0.0
    %1851 = vmatpush2.msra.mxu0 0.0
    %1852 = vmatprep.subr.mxu0 0.0
    %1853 = vmatpush2.msra.mxu0 0.0
    %1854 = vmatprep.subr.mxu0 0.0
    %1855 = vmatpush2.msra.mxu0 0.0
    %1856 = vmatprep.mubr.f32.mxu0 0.0
    %1857 = vmatmul.mubr.f32.gmra.mxu0 %v1790
    %v1858 = vpop.f32.mrf.mxu0
    %v1859 = vadd.f32 0.0, %v1858
    %v1860 = vpop.f32.mrf.mxu0
    %1861 = vdwg.mxu0
    %v1863 = vsel %vm499, %v1788, 0
    %1865 = vmatprep.subr.mxu0 0.0
    %1866 = vmatpush1.msra.mxu0 0.0
    %1867 = vmatprep.subr.mxu0 0.0
    %1868 = vmatpush1.msra.mxu0 0.0
    %1869 = vmatprep.subr.mxu0 0.0
    %1870 = vmatpush1.msra.mxu0 0.0
    %1871 = vmatprep.subr.mxu0 0.0
    %1872 = vmatpush1.msra.mxu0 0.0
    %1873 = vmatprep.subr.mxu0 0.0
    %1874 = vmatpush1.msra.mxu0 0.0
    %1875 = vmatprep.subr.mxu0 0.0
    %1876 = vmatpush1.msra.mxu0 0.0
    %1877 = vmatprep.subr.mxu0 0.0
    %1878 = vmatpush1.msra.mxu0 0.0
    %1879 = vmatprep.subr.mxu0 0.0
    %1880 = vmatpush1.msra.mxu0 0.0
    %1881 = vmatprep.subr.mxu0 0.0
    %1882 = vmatpush1.msra.mxu0 %v495
    %1883 = vmatprep.subr.mxu0 0.0
    %1884 = vmatpush1.msra.mxu0 %v494
    %1885 = vmatprep.subr.mxu0 0.0
    %1886 = vmatpush1.msra.mxu0 %v493
    %1887 = vmatprep.subr.mxu0 0.0
    %1888 = vmatpush1.msra.mxu0 %v492
    %1889 = vmatprep.subr.mxu0 0.0
    %1890 = vmatpush1.msra.mxu0 %v491
    %1891 = vmatprep.subr.mxu0 0.0
    %1892 = vmatpush1.msra.mxu0 %v490
    %1893 = vmatprep.subr.mxu0 0.0
    %1894 = vmatpush1.msra.mxu0 %v489
    %1895 = vmatprep.subr.mxu0 0.0
    %1896 = vmatpush1.msra.mxu0 %v488
    %1897 = vmatprep.subr.mxu0 0.0
    %1898 = vmatpush2.msra.mxu0 0.0
    %1899 = vmatprep.subr.mxu0 0.0
    %1900 = vmatpush2.msra.mxu0 0.0
    %1901 = vmatprep.subr.mxu0 0.0
    %1902 = vmatpush2.msra.mxu0 0.0
    %1903 = vmatprep.subr.mxu0 0.0
    %1904 = vmatpush2.msra.mxu0 0.0
    %1905 = vmatprep.subr.mxu0 0.0
    %1906 = vmatpush2.msra.mxu0 0.0
    %1907 = vmatprep.subr.mxu0 0.0
    %1908 = vmatpush2.msra.mxu0 0.0
    %1909 = vmatprep.subr.mxu0 0.0
    %1910 = vmatpush2.msra.mxu0 0.0
    %1911 = vmatprep.subr.mxu0 0.0
    %1912 = vmatpush2.msra.mxu0 0.0
    %1913 = vmatprep.subr.mxu0 0.0
    %1914 = vmatpush2.msra.mxu0 0.0
    %1915 = vmatprep.subr.mxu0 0.0
    %1916 = vmatpush2.msra.mxu0 0.0
    %1917 = vmatprep.subr.mxu0 0.0
    %1918 = vmatpush2.msra.mxu0 0.0
    %1919 = vmatprep.subr.mxu0 0.0
    %1920 = vmatpush2.msra.mxu0 0.0
    %1921 = vmatprep.subr.mxu0 0.0
    %1922 = vmatpush2.msra.mxu0 0.0
    %1923 = vmatprep.subr.mxu0 0.0
    %1924 = vmatpush2.msra.mxu0 0.0
    %1925 = vmatprep.subr.mxu0 0.0
    %1926 = vmatpush2.msra.mxu0 0.0
    %1927 = vmatprep.subr.mxu0 0.0
    %1928 = vmatpush2.msra.mxu0 0.0
    %1929 = vmatprep.mubr.f32.mxu0 0.0
    %1930 = vmatmul.mubr.f32.gmra.mxu0 %v1863
    %v1931 = vpop.f32.mrf.mxu0
    %v1932 = vadd.f32 0.0, %v1931
    %v1933 = vpop.f32.mrf.mxu0
    %1934 = vdwg.mxu0
    %v1935 = vmul.f32 %v1859, 0.001953125
    %v1936 = vmul.f32 %v1932, 0.001953125
    %v1937 = vmul.f32 %v1935, %v1935
    %v1938 = vsub.f32 %v1936, %v1937
    %v1939 = vadd.f32 %v1938, 1e-05
    %v1940 = vrsqrt.pop %v1939
    %v1941 = vsub.f32 0.0, %v1935
    %v1942 = vmul.f32 %v1941, %v1940
    %v1944 = vsel %vm656, %v1940, 0
    %1946 = vmatprep.subr.mxu0 0.0
    %1947 = vmatpush1.msra.mxu0 0.0
    %1948 = vmatprep.subr.mxu0 0.0
    %1949 = vmatpush1.msra.mxu0 0.0
    %1950 = vmatprep.subr.mxu0 0.0
    %1951 = vmatpush1.msra.mxu0 0.0
    %1952 = vmatprep.subr.mxu0 0.0
    %1953 = vmatpush1.msra.mxu0 0.0
    %1954 = vmatprep.subr.mxu0 0.0
    %1955 = vmatpush1.msra.mxu0 0.0
    %1956 = vmatprep.subr.mxu0 0.0
    %1957 = vmatpush1.msra.mxu0 0.0
    %1958 = vmatprep.subr.mxu0 0.0
    %1959 = vmatpush1.msra.mxu0 0.0
    %1960 = vmatprep.subr.mxu0 0.0
    %1961 = vmatpush1.msra.mxu0 0.0
    %1962 = vmatprep.subr.mxu0 0.0
    %1963 = vmatpush1.msra.mxu0 0.0
    %1964 = vmatprep.subr.mxu0 0.0
    %1965 = vmatpush1.msra.mxu0 0.0
    %1966 = vmatprep.subr.mxu0 0.0
    %1967 = vmatpush1.msra.mxu0 0.0
    %1968 = vmatprep.subr.mxu0 0.0
    %1969 = vmatpush1.msra.mxu0 0.0
    %1970 = vmatprep.subr.mxu0 0.0
    %1971 = vmatpush1.msra.mxu0 0.0
    %1972 = vmatprep.subr.mxu0 0.0
    %1973 = vmatpush1.msra.mxu0 0.0
    %1974 = vmatprep.subr.mxu0 0.0
    %1975 = vmatpush1.msra.mxu0 0.0
    %1976 = vmatprep.subr.mxu0 0.0
    %1977 = vmatpush1.msra.mxu0 %v662
    %1978 = vmatprep.subr.mxu0 0.0
    %1979 = vmatpush2.msra.mxu0 0.0
    %1980 = vmatprep.subr.mxu0 0.0
    %1981 = vmatpush2.msra.mxu0 0.0
    %1982 = vmatprep.subr.mxu0 0.0
    %1983 = vmatpush2.msra.mxu0 0.0
    %1984 = vmatprep.subr.mxu0 0.0
    %1985 = vmatpush2.msra.mxu0 0.0
    %1986 = vmatprep.subr.mxu0 0.0
    %1987 = vmatpush2.msra.mxu0 0.0
    %1988 = vmatprep.subr.mxu0 0.0
    %1989 = vmatpush2.msra.mxu0 0.0
    %1990 = vmatprep.subr.mxu0 0.0
    %1991 = vmatpush2.msra.mxu0 0.0
    %1992 = vmatprep.subr.mxu0 0.0
    %1993 = vmatpush2.msra.mxu0 0.0
    %1994 = vmatprep.subr.mxu0 0.0
    %1995 = vmatpush2.msra.mxu0 0.0
    %1996 = vmatprep.subr.mxu0 0.0
    %1997 = vmatpush2.msra.mxu0 0.0
    %1998 = vmatprep.subr.mxu0 0.0
    %1999 = vmatpush2.msra.mxu0 0.0
    %2000 = vmatprep.subr.mxu0 0.0
    %2001 = vmatpush2.msra.mxu0 0.0
    %2002 = vmatprep.subr.mxu0 0.0
    %2003 = vmatpush2.msra.mxu0 0.0
    %2004 = vmatprep.subr.mxu0 0.0
    %2005 = vmatpush2.msra.mxu0 0.0
    %2006 = vmatprep.subr.mxu0 0.0
    %2007 = vmatpush2.msra.mxu0 0.0
    %2008 = vmatprep.subr.mxu0 0.0
    %2009 = vmatpush2.msra.mxu0 0.0
    %2010 = vmatprep.mubr.f32.mxu0 0.0
    %2011 = vmatmul.mubr.f32.gmra.mxu0 %v1944
    %v2012 = vpop.f32.mrf.mxu0
    %v2013 = vadd.f32 0.0, %v2012
    %v2014 = vpop.f32.mrf.mxu0
    %2015 = vdwg.mxu0
    %v2017 = vsel %vm656, %v1942, 0
    %2019 = vmatprep.subr.mxu0 0.0
    %2020 = vmatpush1.msra.mxu0 0.0
    %2021 = vmatprep.subr.mxu0 0.0
    %2022 = vmatpush1.msra.mxu0 0.0
    %2023 = vmatprep.subr.mxu0 0.0
    %2024 = vmatpush1.msra.mxu0 0.0
    %2025 = vmatprep.subr.mxu0 0.0
    %2026 = vmatpush1.msra.mxu0 0.0
    %2027 = vmatprep.subr.mxu0 0.0
    %2028 = vmatpush1.msra.mxu0 0.0
    %2029 = vmatprep.subr.mxu0 0.0
    %2030 = vmatpush1.msra.mxu0 0.0
    %2031 = vmatprep.subr.mxu0 0.0
    %2032 = vmatpush1.msra.mxu0 0.0
    %2033 = vmatprep.subr.mxu0 0.0
    %2034 = vmatpush1.msra.mxu0 0.0
    %2035 = vmatprep.subr.mxu0 0.0
    %2036 = vmatpush1.msra.mxu0 0.0
    %2037 = vmatprep.subr.mxu0 0.0
    %2038 = vmatpush1.msra.mxu0 0.0
    %2039 = vmatprep.subr.mxu0 0.0
    %2040 = vmatpush1.msra.mxu0 0.0
    %2041 = vmatprep.subr.mxu0 0.0
    %2042 = vmatpush1.msra.mxu0 0.0
    %2043 = vmatprep.subr.mxu0 0.0
    %2044 = vmatpush1.msra.mxu0 0.0
    %2045 = vmatprep.subr.mxu0 0.0
    %2046 = vmatpush1.msra.mxu0 0.0
    %2047 = vmatprep.subr.mxu0 0.0
    %2048 = vmatpush1.msra.mxu0 0.0
    %2049 = vmatprep.subr.mxu0 0.0
    %2050 = vmatpush1.msra.mxu0 %v662
    %2051 = vmatprep.subr.mxu0 0.0
    %2052 = vmatpush2.msra.mxu0 0.0
    %2053 = vmatprep.subr.mxu0 0.0
    %2054 = vmatpush2.msra.mxu0 0.0
    %2055 = vmatprep.subr.mxu0 0.0
    %2056 = vmatpush2.msra.mxu0 0.0
    %2057 = vmatprep.subr.mxu0 0.0
    %2058 = vmatpush2.msra.mxu0 0.0
    %2059 = vmatprep.subr.mxu0 0.0
    %2060 = vmatpush2.msra.mxu0 0.0
    %2061 = vmatprep.subr.mxu0 0.0
    %2062 = vmatpush2.msra.mxu0 0.0
    %2063 = vmatprep.subr.mxu0 0.0
    %2064 = vmatpush2.msra.mxu0 0.0
    %2065 = vmatprep.subr.mxu0 0.0
    %2066 = vmatpush2.msra.mxu0 0.0
    %2067 = vmatprep.subr.mxu0 0.0
    %2068 = vmatpush2.msra.mxu0 0.0
    %2069 = vmatprep.subr.mxu0 0.0
    %2070 = vmatpush2.msra.mxu0 0.0
    %2071 = vmatprep.subr.mxu0 0.0
    %2072 = vmatpush2.msra.mxu0 0.0
    %2073 = vmatprep.subr.mxu0 0.0
    %2074 = vmatpush2.msra.mxu0 0.0
    %2075 = vmatprep.subr.mxu0 0.0
    %2076 = vmatpush2.msra.mxu0 0.0
    %2077 = vmatprep.subr.mxu0 0.0
    %2078 = vmatpush2.msra.mxu0 0.0
    %2079 = vmatprep.subr.mxu0 0.0
    %2080 = vmatpush2.msra.mxu0 0.0
    %2081 = vmatprep.subr.mxu0 0.0
    %2082 = vmatpush2.msra.mxu0 0.0
    %2083 = vmatprep.mubr.f32.mxu0 0.0
    %2084 = vmatmul.mubr.f32.gmra.mxu0 %v2017
    %v2085 = vpop.f32.mrf.mxu0
    %v2086 = vadd.f32 0.0, %v2085
    %v2087 = vpop.f32.mrf.mxu0
    %2088 = vdwg.mxu0
    %v2089 = vlaneseq
    %v2090 = vshrl.u32 %v2089, 7
    %v2091 = vsub.s32 0, %v2090
    %v2092 = vrot.slane %v2013, %v2091
    %v2093 = vmul.f32 %v1741, %v2092
    %v2094 = vmul.f32 %v1746, %v2092
    %v2095 = vmul.f32 %v1751, %v2092
    %v2096 = vmul.f32 %v1756, %v2092
    %v2097 = vlaneseq
    %v2098 = vshrl.u32 %v2097, 7
    %v2099 = vsub.s32 0, %v2098
    %v2100 = vrot.slane %v2086, %v2099
    %v2101 = vadd.f32 %v2093, %v2100
    %v2102 = vadd.f32 %v2094, %v2100
    %v2103 = vadd.f32 %v2095, %v2100
    %v2104 = vadd.f32 %v2096, %v2100
    %v2105 = vmax.f32 %v2101, 0.0
    %v2106 = vmax.f32 %v2102, 0.0
    %v2107 = vmax.f32 %v2103, 0.0
    %v2108 = vmax.f32 %v2104, 0.0
    %2113 = vrot.lane.b32.xlu0 %v2105, 8
    %v2114 = vpop.permute.xlu0 %2113
    %2115 = vrot.lane.b32.xlu0 %v2106, 8
    %v2116 = vpop.permute.xlu0 %2115
    %2117 = vrot.lane.b32.xlu0 %v2107, 8
    %v2118 = vpop.permute.xlu0 %2117
    %2119 = vrot.lane.b32.xlu0 %v2108, 8
    %v2120 = vpop.permute.xlu0 %2119
    %vm2125 = vcmask 588864
    %2126 = vst.msk [vmem:[#allocation3 + $0x2] sm:$0xff] %vm2125, %v2114
    %2127 = vst.msk [vmem:[#allocation3 + $0xa] sm:$0xff] %vm2125, %v2116
    %2128 = vst.msk [vmem:[#allocation3 + $0x1a] sm:$0xff] %vm2125, %v2118
    %2129 = vst.msk [vmem:[#allocation3 + $0x22] sm:$0xff] %vm2125, %v2120
    %v2130 = vld [vmem:[#allocation3 + $0x1] sm:$0xff]
    %v2131 = vld [vmem:[#allocation3 + $0x9] sm:$0xff]
    %v2132 = vld [vmem:[#allocation3 + $0x19] sm:$0xff]
    %v2133 = vld [vmem:[#allocation3 + $0x21] sm:$0xff]
    %v2134 = vld [vmem:[#allocation14] sm:$0x1]
    %v2135 = vlaneseq
    %v2136 = vshrl.u32 %v2135, 7
    %v2137 = vsub.s32 0, %v2136
    %v2138 = vrot.slane %v2134, %v2137
    %2140 = vrot.lane.b32.xlu0 %v2138, 4
    %v2141 = vpop.permute.xlu0 %2140
    %v2143 = vmul.f32 %v2130, %v2141
    %v2144 = vmul.f32 %v2131, %v2141
    %v2145 = vmul.f32 %v2132, %v2141
    %v2146 = vmul.f32 %v2133, %v2141
    %v2147 = vadd.f32 %v2143, 0.0
    %v2148 = vadd.f32 %v2144, 0.0
    %v2149 = vadd.f32 %v2145, 0.0
    %v2150 = vadd.f32 %v2146, 0.0
    %v2151 = vld [vmem:[#allocation14 + $0x1] sm:$0x1]
    %v2152 = vlaneseq
    %v2153 = vshrl.u32 %v2152, 7
    %v2154 = vsub.s32 0, %v2153
    %v2155 = vrot.slane %v2151, %v2154
    %2157 = vrot.lane.b32.xlu0 %v2155, 8
    %v2158 = vpop.permute.xlu0 %2157
    %v2160 = vmul.f32 %v2130, %v2158
    %v2161 = vmul.f32 %v2131, %v2158
    %v2162 = vmul.f32 %v2132, %v2158
    %v2163 = vmul.f32 %v2133, %v2158
    %2168 = vrot.lane.b32.xlu0 %v2160, 124
    %v2169 = vpop.permute.xlu0 %2168
    %2170 = vrot.lane.b32.xlu0 %v2161, 124
    %v2171 = vpop.permute.xlu0 %2170
    %2172 = vrot.lane.b32.xlu0 %v2162, 124
    %v2173 = vpop.permute.xlu0 %2172
    %2174 = vrot.lane.b32.xlu0 %v2163, 124
    %v2175 = vpop.permute.xlu0 %2174
    %v2180 = vadd.f32 %v2147, %v2169
    %v2181 = vadd.f32 %v2148, %v2171
    %v2182 = vadd.f32 %v2149, %v2173
    %v2183 = vadd.f32 %v2150, %v2175
    %v2184 = vld [vmem:[#allocation14 + $0x2] sm:$0x1]
    %v2185 = vlaneseq
    %v2186 = vshrl.u32 %v2185, 7
    %v2187 = vsub.s32 0, %v2186
    %v2188 = vrot.slane %v2184, %v2187
    %2190 = vrot.lane.b32.xlu0 %v2188, 12
    %v2191 = vpop.permute.xlu0 %2190
    %v2193 = vmul.f32 %v2130, %v2191
    %v2194 = vmul.f32 %v2131, %v2191
    %v2195 = vmul.f32 %v2132, %v2191
    %v2196 = vmul.f32 %v2133, %v2191
    %2201 = vrot.lane.b32.xlu0 %v2193, 120
    %v2202 = vpop.permute.xlu0 %2201
    %2203 = vrot.lane.b32.xlu0 %v2194, 120
    %v2204 = vpop.permute.xlu0 %2203
    %2205 = vrot.lane.b32.xlu0 %v2195, 120
    %v2206 = vpop.permute.xlu0 %2205
    %2207 = vrot.lane.b32.xlu0 %v2196, 120
    %v2208 = vpop.permute.xlu0 %2207
    %v2213 = vadd.f32 %v2180, %v2202
    %v2214 = vadd.f32 %v2181, %v2204
    %v2215 = vadd.f32 %v2182, %v2206
    %v2216 = vadd.f32 %v2183, %v2208
    %v2217 = vld [vmem:[#allocation3 + $0x2] sm:$0xff]
    %v2218 = vld [vmem:[#allocation3 + $0xa] sm:$0xff]
    %v2219 = vld [vmem:[#allocation3 + $0x1a] sm:$0xff]
    %v2220 = vld [vmem:[#allocation3 + $0x22] sm:$0xff]
    %s2221 = scalar_lea.vmem [#allocation14], 4
    %v2222 = vld [vmem:[%s2221] sm:$0x1]
    %v2223 = vlaneseq
    %v2224 = vshrl.u32 %v2223, 7
    %v2225 = vsub.s32 0, %v2224
    %v2226 = vrot.slane %v2222, %v2225
    %2228 = vrot.lane.b32.xlu0 %v2226, 4
    %v2229 = vpop.permute.xlu0 %2228
    %v2231 = vmul.f32 %v2217, %v2229
    %v2232 = vmul.f32 %v2218, %v2229
    %v2233 = vmul.f32 %v2219, %v2229
    %v2234 = vmul.f32 %v2220, %v2229
    %v2235 = vadd.f32 %v2213, %v2231
    %v2236 = vadd.f32 %v2214, %v2232
    %v2237 = vadd.f32 %v2215, %v2233
    %v2238 = vadd.f32 %v2216, %v2234
    %v2239 = vld [vmem:[%s2221 + $0x1] sm:$0x1]
    %v2240 = vlaneseq
    %v2241 = vshrl.u32 %v2240, 7
    %v2242 = vsub.s32 0, %v2241
    %v2243 = vrot.slane %v2239, %v2242
    %2245 = vrot.lane.b32.xlu0 %v2243, 8
    %v2246 = vpop.permute.xlu0 %2245
    %v2248 = vmul.f32 %v2217, %v2246
    %v2249 = vmul.f32 %v2218, %v2246
    %v2250 = vmul.f32 %v2219, %v2246
    %v2251 = vmul.f32 %v2220, %v2246
    %2256 = vrot.lane.b32.xlu0 %v2248, 124
    %v2257 = vpop.permute.xlu0 %2256
    %2258 = vrot.lane.b32.xlu0 %v2249, 124
    %v2259 = vpop.permute.xlu0 %2258
    %2260 = vrot.lane.b32.xlu0 %v2250, 124
    %v2261 = vpop.permute.xlu0 %2260
    %2262 = vrot.lane.b32.xlu0 %v2251, 124
    %v2263 = vpop.permute.xlu0 %2262
    %v2268 = vadd.f32 %v2235, %v2257
    %v2269 = vadd.f32 %v2236, %v2259
    %v2270 = vadd.f32 %v2237, %v2261
    %v2271 = vadd.f32 %v2238, %v2263
    %v2272 = vld [vmem:[%s2221 + $0x2] sm:$0x1]
    %v2273 = vlaneseq
    %v2274 = vshrl.u32 %v2273, 7
    %v2275 = vsub.s32 0, %v2274
    %v2276 = vrot.slane %v2272, %v2275
    %2278 = vrot.lane.b32.xlu0 %v2276, 12
    %v2279 = vpop.permute.xlu0 %2278
    %v2281 = vmul.f32 %v2217, %v2279
    %v2282 = vmul.f32 %v2218, %v2279
    %v2283 = vmul.f32 %v2219, %v2279
    %v2284 = vmul.f32 %v2220, %v2279
    %2289 = vrot.lane.b32.xlu0 %v2281, 120
    %v2290 = vpop.permute.xlu0 %2289
    %2291 = vrot.lane.b32.xlu0 %v2282, 120
    %v2292 = vpop.permute.xlu0 %2291
    %2293 = vrot.lane.b32.xlu0 %v2283, 120
    %v2294 = vpop.permute.xlu0 %2293
    %2295 = vrot.lane.b32.xlu0 %v2284, 120
    %v2296 = vpop.permute.xlu0 %2295
    %v2301 = vadd.f32 %v2268, %v2290
    %v2302 = vadd.f32 %v2269, %v2292
    %v2303 = vadd.f32 %v2270, %v2294
    %v2304 = vadd.f32 %v2271, %v2296
    %v2305 = vld [vmem:[#allocation3 + $0x3] sm:$0xff]
    %v2306 = vld [vmem:[#allocation3 + $0xb] sm:$0xff]
    %v2307 = vld [vmem:[#allocation3 + $0x1b] sm:$0xff]
    %v2308 = vld [vmem:[#allocation3 + $0x23] sm:$0xff]
    %s2309 = scalar_lea.vmem [#allocation14], 8
    %v2310 = vld [vmem:[%s2309] sm:$0x1]
    %v2311 = vlaneseq
    %v2312 = vshrl.u32 %v2311, 7
    %v2313 = vsub.s32 0, %v2312
    %v2314 = vrot.slane %v2310, %v2313
    %2316 = vrot.lane.b32.xlu0 %v2314, 4
    %v2317 = vpop.permute.xlu0 %2316
    %v2319 = vmul.f32 %v2305, %v2317
    %v2320 = vmul.f32 %v2306, %v2317
    %v2321 = vmul.f32 %v2307, %v2317
    %v2322 = vmul.f32 %v2308, %v2317
    %v2323 = vadd.f32 %v2301, %v2319
    %v2324 = vadd.f32 %v2302, %v2320
    %v2325 = vadd.f32 %v2303, %v2321
    %v2326 = vadd.f32 %v2304, %v2322
    %v2327 = vld [vmem:[%s2309 + $0x1] sm:$0x1]
    %v2328 = vlaneseq
    %v2329 = vshrl.u32 %v2328, 7
    %v2330 = vsub.s32 0, %v2329
    %v2331 = vrot.slane %v2327, %v2330
    %2333 = vrot.lane.b32.xlu0 %v2331, 8
    %v2334 = vpop.permute.xlu0 %2333
    %v2336 = vmul.f32 %v2305, %v2334
    %v2337 = vmul.f32 %v2306, %v2334
    %v2338 = vmul.f32 %v2307, %v2334
    %v2339 = vmul.f32 %v2308, %v2334
    %2344 = vrot.lane.b32.xlu0 %v2336, 124
    %v2345 = vpop.permute.xlu0 %2344
    %2346 = vrot.lane.b32.xlu0 %v2337, 124
    %v2347 = vpop.permute.xlu0 %2346
    %2348 = vrot.lane.b32.xlu0 %v2338, 124
    %v2349 = vpop.permute.xlu0 %2348
    %2350 = vrot.lane.b32.xlu0 %v2339, 124
    %v2351 = vpop.permute.xlu0 %2350
    %v2356 = vadd.f32 %v2323, %v2345
    %v2357 = vadd.f32 %v2324, %v2347
    %v2358 = vadd.f32 %v2325, %v2349
    %v2359 = vadd.f32 %v2326, %v2351
    %v2360 = vld [vmem:[%s2309 + $0x2] sm:$0x1]
    %v2361 = vlaneseq
    %v2362 = vshrl.u32 %v2361, 7
    %v2363 = vsub.s32 0, %v2362
    %v2364 = vrot.slane %v2360, %v2363
    %2366 = vrot.lane.b32.xlu0 %v2364, 12
    %v2367 = vpop.permute.xlu0 %2366
    %v2369 = vmul.f32 %v2305, %v2367
    %v2370 = vmul.f32 %v2306, %v2367
    %v2371 = vmul.f32 %v2307, %v2367
    %v2372 = vmul.f32 %v2308, %v2367
    %2377 = vrot.lane.b32.xlu0 %v2369, 120
    %v2378 = vpop.permute.xlu0 %2377
    %2379 = vrot.lane.b32.xlu0 %v2370, 120
    %v2380 = vpop.permute.xlu0 %2379
    %2381 = vrot.lane.b32.xlu0 %v2371, 120
    %v2382 = vpop.permute.xlu0 %2381
    %2383 = vrot.lane.b32.xlu0 %v2372, 120
    %v2384 = vpop.permute.xlu0 %2383
    %v2389 = vadd.f32 %v2356, %v2378
    %v2390 = vadd.f32 %v2357, %v2380
    %v2391 = vadd.f32 %v2358, %v2382
    %v2392 = vadd.f32 %v2359, %v2384
    %v2393 = vld [vmem:[#allocation15] sm:$0xff]
    %v2394 = vld [vmem:[#allocation15 + $0x8] sm:$0xff]
    %v2395 = vld [vmem:[#allocation15 + $0x10] sm:$0xff]
    %v2396 = vld [vmem:[#allocation15 + $0x18] sm:$0xff]
    %v2397 = vld [vmem:[#allocation15 + $0x20] sm:$0xff]
    %v2398 = vld [vmem:[#allocation15 + $0x28] sm:$0xff]
    %v2399 = vld [vmem:[#allocation15 + $0x30] sm:$0xff]
    %v2400 = vld [vmem:[#allocation15 + $0x38] sm:$0xff]
    %2405 = vrot.lane.b32.xlu0 %v2389, 124
    %v2406 = vpop.permute.xlu0 %2405
    %2407 = vrot.lane.b32.xlu0 %v2390, 124
    %v2408 = vpop.permute.xlu0 %2407
    %2409 = vrot.lane.b32.xlu0 %v2391, 124
    %v2410 = vpop.permute.xlu0 %2409
    %2411 = vrot.lane.b32.xlu0 %v2392, 124
    %v2412 = vpop.permute.xlu0 %2411
    %v2413 = vsel %vm499, %v2406, 0
    %v2415 = vsel %vm499, %v2408, 0
    %v2417 = vsel %vm499, %v2410, 0
    %v2419 = vsel %vm499, %v2412, 0
    %2421 = vmatprep.subr.mxu0 0.0
    %2422 = vmatpush1.msra.mxu0 0.0
    %2423 = vmatprep.subr.mxu0 0.0
    %2424 = vmatpush1.msra.mxu0 0.0
    %2425 = vmatprep.subr.mxu0 0.0
    %2426 = vmatpush1.msra.mxu0 0.0
    %2427 = vmatprep.subr.mxu0 0.0
    %2428 = vmatpush1.msra.mxu0 0.0
    %2429 = vmatprep.subr.mxu0 0.0
    %2430 = vmatpush1.msra.mxu0 0.0
    %2431 = vmatprep.subr.mxu0 0.0
    %2432 = vmatpush1.msra.mxu0 0.0
    %2433 = vmatprep.subr.mxu0 0.0
    %2434 = vmatpush1.msra.mxu0 0.0
    %2435 = vmatprep.subr.mxu0 0.0
    %2436 = vmatpush1.msra.mxu0 0.0
    %2437 = vmatprep.subr.mxu0 0.0
    %2438 = vmatpush1.msra.mxu0 %v2400
    %2439 = vmatprep.subr.mxu0 0.0
    %2440 = vmatpush1.msra.mxu0 %v2399
    %2441 = vmatprep.subr.mxu0 0.0
    %2442 = vmatpush1.msra.mxu0 %v2398
    %2443 = vmatprep.subr.mxu0 0.0
    %2444 = vmatpush1.msra.mxu0 %v2397
    %2445 = vmatprep.subr.mxu0 0.0
    %2446 = vmatpush1.msra.mxu0 %v2396
    %2447 = vmatprep.subr.mxu0 0.0
    %2448 = vmatpush1.msra.mxu0 %v2395
    %2449 = vmatprep.subr.mxu0 0.0
    %2450 = vmatpush1.msra.mxu0 %v2394
    %2451 = vmatprep.subr.mxu0 0.0
    %2452 = vmatpush1.msra.mxu0 %v2393
    %2453 = vmatprep.subr.mxu0 0.0
    %2454 = vmatpush2.msra.mxu0 0.0
    %2455 = vmatprep.subr.mxu0 0.0
    %2456 = vmatpush2.msra.mxu0 0.0
    %2457 = vmatprep.subr.mxu0 0.0
    %2458 = vmatpush2.msra.mxu0 0.0
    %2459 = vmatprep.subr.mxu0 0.0
    %2460 = vmatpush2.msra.mxu0 0.0
    %2461 = vmatprep.subr.mxu0 0.0
    %2462 = vmatpush2.msra.mxu0 0.0
    %2463 = vmatprep.subr.mxu0 0.0
    %2464 = vmatpush2.msra.mxu0 0.0
    %2465 = vmatprep.subr.mxu0 0.0
    %2466 = vmatpush2.msra.mxu0 0.0
    %2467 = vmatprep.subr.mxu0 0.0
    %2468 = vmatpush2.msra.mxu0 0.0
    %2469 = vmatprep.subr.mxu0 0.0
    %2470 = vmatpush2.msra.mxu0 0.0
    %2471 = vmatprep.subr.mxu0 0.0
    %2472 = vmatpush2.msra.mxu0 0.0
    %2473 = vmatprep.subr.mxu0 0.0
    %2474 = vmatpush2.msra.mxu0 0.0
    %2475 = vmatprep.subr.mxu0 0.0
    %2476 = vmatpush2.msra.mxu0 0.0
    %2477 = vmatprep.subr.mxu0 0.0
    %2478 = vmatpush2.msra.mxu0 0.0
    %2479 = vmatprep.subr.mxu0 0.0
    %2480 = vmatpush2.msra.mxu0 0.0
    %2481 = vmatprep.subr.mxu0 0.0
    %2482 = vmatpush2.msra.mxu0 0.0
    %2483 = vmatprep.subr.mxu0 0.0
    %2484 = vmatpush2.msra.mxu0 0.0
    %2485 = vmatprep.mubr.f32.mxu0 0.0
    %2486 = vmatmul.mubr.f32.gmra.mxu0 %v2413
    %v2487 = vpop.f32.mrf.mxu0
    %v2488 = vadd.f32 0.0, %v2487
    %v2489 = vpop.f32.mrf.mxu0
    %2490 = vmatprep.mubr.f32.mxu0 0.0
    %2491 = vmatmul.mubr.f32.gmra.mxu0 %v2415
    %v2492 = vpop.f32.mrf.mxu0
    %v2493 = vadd.f32 0.0, %v2492
    %v2494 = vpop.f32.mrf.mxu0
    %2495 = vmatprep.mubr.f32.mxu0 0.0
    %2496 = vmatmul.mubr.f32.gmra.mxu0 %v2417
    %v2497 = vpop.f32.mrf.mxu0
    %v2498 = vadd.f32 0.0, %v2497
    %v2499 = vpop.f32.mrf.mxu0
    %2500 = vmatprep.mubr.f32.mxu0 0.0
    %2501 = vmatmul.mubr.f32.gmra.mxu0 %v2419
    %v2502 = vpop.f32.mrf.mxu0
    %v2503 = vadd.f32 0.0, %v2502
    %v2504 = vpop.f32.mrf.mxu0
    %2505 = vdwg.mxu0
    %v2506 = vsel %vm499, %v2488, 0.0
    %v2507 = vsel %vm499, %v2493, 0.0
    %v2508 = vadd.f32 %v2506, %v2507
    %v2509 = vsel %vm499, %v2498, 0.0
    %v2510 = vadd.f32 %v2508, %v2509
    %v2511 = vsel %vm499, %v2503, 0.0
    %v2512 = vadd.f32 %v2510, %v2511
    %v2513 = vrot.slane %v2512, 4
    %v2514 = vadd.f32 %v2512, %v2513
    %v2515 = vrot.slane %v2514, 2
    %v2516 = vadd.f32 %v2514, %v2515
    %v2517 = vrot.slane %v2516, 1
    %v2518 = vadd.f32 %v2516, %v2517
    %v2519 = vmul.f32 %v2488, %v2488
    %v2520 = vmul.f32 %v2493, %v2493
    %v2521 = vmul.f32 %v2498, %v2498
    %v2522 = vmul.f32 %v2503, %v2503
    %v2523 = vsel %vm499, %v2519, 0.0
    %v2524 = vsel %vm499, %v2520, 0.0
    %v2525 = vadd.f32 %v2523, %v2524
    %v2526 = vsel %vm499, %v2521, 0.0
    %v2527 = vadd.f32 %v2525, %v2526
    %v2528 = vsel %vm499, %v2522, 0.0
    %v2529 = vadd.f32 %v2527, %v2528
    %v2530 = vrot.slane %v2529, 4
    %v2531 = vadd.f32 %v2529, %v2530
    %v2532 = vrot.slane %v2531, 2
    %v2533 = vadd.f32 %v2531, %v2532
    %v2534 = vrot.slane %v2533, 1
    %v2535 = vadd.f32 %v2533, %v2534
    %v2536 = vld [vmem:[%s4] sm:$0xff]
    %v2537 = vld [vmem:[%s4 + $0x8] sm:$0xff]
    %v2538 = vld [vmem:[%s4 + $0x10] sm:$0xff]
    %v2539 = vld [vmem:[%s4 + $0x18] sm:$0xff]
    %v2540 = vld [vmem:[%s4 + $0x20] sm:$0xff]
    %v2541 = vld [vmem:[%s4 + $0x28] sm:$0xff]
    %v2542 = vld [vmem:[%s4 + $0x30] sm:$0xff]
    %v2543 = vld [vmem:[%s4 + $0x38] sm:$0xff]
    %v2545 = vsel %vm499, %v2518, 0
    %2547 = vmatprep.subr.mxu0 0.0
    %2548 = vmatpush1.msra.mxu0 0.0
    %2549 = vmatprep.subr.mxu0 0.0
    %2550 = vmatpush1.msra.mxu0 0.0
    %2551 = vmatprep.subr.mxu0 0.0
    %2552 = vmatpush1.msra.mxu0 0.0
    %2553 = vmatprep.subr.mxu0 0.0
    %2554 = vmatpush1.msra.mxu0 0.0
    %2555 = vmatprep.subr.mxu0 0.0
    %2556 = vmatpush1.msra.mxu0 0.0
    %2557 = vmatprep.subr.mxu0 0.0
    %2558 = vmatpush1.msra.mxu0 0.0
    %2559 = vmatprep.subr.mxu0 0.0
    %2560 = vmatpush1.msra.mxu0 0.0
    %2561 = vmatprep.subr.mxu0 0.0
    %2562 = vmatpush1.msra.mxu0 0.0
    %2563 = vmatprep.subr.mxu0 0.0
    %2564 = vmatpush1.msra.mxu0 %v2543
    %2565 = vmatprep.subr.mxu0 0.0
    %2566 = vmatpush1.msra.mxu0 %v2542
    %2567 = vmatprep.subr.mxu0 0.0
    %2568 = vmatpush1.msra.mxu0 %v2541
    %2569 = vmatprep.subr.mxu0 0.0
    %2570 = vmatpush1.msra.mxu0 %v2540
    %2571 = vmatprep.subr.mxu0 0.0
    %2572 = vmatpush1.msra.mxu0 %v2539
    %2573 = vmatprep.subr.mxu0 0.0
    %2574 = vmatpush1.msra.mxu0 %v2538
    %2575 = vmatprep.subr.mxu0 0.0
    %2576 = vmatpush1.msra.mxu0 %v2537
    %2577 = vmatprep.subr.mxu0 0.0
    %2578 = vmatpush1.msra.mxu0 %v2536
    %2579 = vmatprep.subr.mxu0 0.0
    %2580 = vmatpush2.msra.mxu0 0.0
    %2581 = vmatprep.subr.mxu0 0.0
    %2582 = vmatpush2.msra.mxu0 0.0
    %2583 = vmatprep.subr.mxu0 0.0
    %2584 = vmatpush2.msra.mxu0 0.0
    %2585 = vmatprep.subr.mxu0 0.0
    %2586 = vmatpush2.msra.mxu0 0.0
    %2587 = vmatprep.subr.mxu0 0.0
    %2588 = vmatpush2.msra.mxu0 0.0
    %2589 = vmatprep.subr.mxu0 0.0
    %2590 = vmatpush2.msra.mxu0 0.0
    %2591 = vmatprep.subr.mxu0 0.0
    %2592 = vmatpush2.msra.mxu0 0.0
    %2593 = vmatprep.subr.mxu0 0.0
    %2594 = vmatpush2.msra.mxu0 0.0
    %2595 = vmatprep.subr.mxu0 0.0
    %2596 = vmatpush2.msra.mxu0 0.0
    %2597 = vmatprep.subr.mxu0 0.0
    %2598 = vmatpush2.msra.mxu0 0.0
    %2599 = vmatprep.subr.mxu0 0.0
    %2600 = vmatpush2.msra.mxu0 0.0
    %2601 = vmatprep.subr.mxu0 0.0
    %2602 = vmatpush2.msra.mxu0 0.0
    %2603 = vmatprep.subr.mxu0 0.0
    %2604 = vmatpush2.msra.mxu0 0.0
    %2605 = vmatprep.subr.mxu0 0.0
    %2606 = vmatpush2.msra.mxu0 0.0
    %2607 = vmatprep.subr.mxu0 0.0
    %2608 = vmatpush2.msra.mxu0 0.0
    %2609 = vmatprep.subr.mxu0 0.0
    %2610 = vmatpush2.msra.mxu0 0.0
    %2611 = vmatprep.mubr.f32.mxu0 0.0
    %2612 = vmatmul.mubr.f32.gmra.mxu0 %v2545
    %v2613 = vpop.f32.mrf.mxu0
    %v2614 = vadd.f32 0.0, %v2613
    %v2615 = vpop.f32.mrf.mxu0
    %2616 = vdwg.mxu0
    %v2618 = vsel %vm499, %v2535, 0
    %2620 = vmatprep.subr.mxu0 0.0
    %2621 = vmatpush1.msra.mxu0 0.0
    %2622 = vmatprep.subr.mxu0 0.0
    %2623 = vmatpush1.msra.mxu0 0.0
    %2624 = vmatprep.subr.mxu0 0.0
    %2625 = vmatpush1.msra.mxu0 0.0
    %2626 = vmatprep.subr.mxu0 0.0
    %2627 = vmatpush1.msra.mxu0 0.0
    %2628 = vmatprep.subr.mxu0 0.0
    %2629 = vmatpush1.msra.mxu0 0.0
    %2630 = vmatprep.subr.mxu0 0.0
    %2631 = vmatpush1.msra.mxu0 0.0
    %2632 = vmatprep.subr.mxu0 0.0
    %2633 = vmatpush1.msra.mxu0 0.0
    %2634 = vmatprep.subr.mxu0 0.0
    %2635 = vmatpush1.msra.mxu0 0.0
    %2636 = vmatprep.subr.mxu0 0.0
    %2637 = vmatpush1.msra.mxu0 %v2543
    %2638 = vmatprep.subr.mxu0 0.0
    %2639 = vmatpush1.msra.mxu0 %v2542
    %2640 = vmatprep.subr.mxu0 0.0
    %2641 = vmatpush1.msra.mxu0 %v2541
    %2642 = vmatprep.subr.mxu0 0.0
    %2643 = vmatpush1.msra.mxu0 %v2540
    %2644 = vmatprep.subr.mxu0 0.0
    %2645 = vmatpush1.msra.mxu0 %v2539
    %2646 = vmatprep.subr.mxu0 0.0
    %2647 = vmatpush1.msra.mxu0 %v2538
    %2648 = vmatprep.subr.mxu0 0.0
    %2649 = vmatpush1.msra.mxu0 %v2537
    %2650 = vmatprep.subr.mxu0 0.0
    %2651 = vmatpush1.msra.mxu0 %v2536
    %2652 = vmatprep.subr.mxu0 0.0
    %2653 = vmatpush2.msra.mxu0 0.0
    %2654 = vmatprep.subr.mxu0 0.0
    %2655 = vmatpush2.msra.mxu0 0.0
    %2656 = vmatprep.subr.mxu0 0.0
    %2657 = vmatpush2.msra.mxu0 0.0
    %2658 = vmatprep.subr.mxu0 0.0
    %2659 = vmatpush2.msra.mxu0 0.0
    %2660 = vmatprep.subr.mxu0 0.0
    %2661 = vmatpush2.msra.mxu0 0.0
    %2662 = vmatprep.subr.mxu0 0.0
    %2663 = vmatpush2.msra.mxu0 0.0
    %2664 = vmatprep.subr.mxu0 0.0
    %2665 = vmatpush2.msra.mxu0 0.0
    %2666 = vmatprep.subr.mxu0 0.0
    %2667 = vmatpush2.msra.mxu0 0.0
    %2668 = vmatprep.subr.mxu0 0.0
    %2669 = vmatpush2.msra.mxu0 0.0
    %2670 = vmatprep.subr.mxu0 0.0
    %2671 = vmatpush2.msra.mxu0 0.0
    %2672 = vmatprep.subr.mxu0 0.0
    %2673 = vmatpush2.msra.mxu0 0.0
    %2674 = vmatprep.subr.mxu0 0.0
    %2675 = vmatpush2.msra.mxu0 0.0
    %2676 = vmatprep.subr.mxu0 0.0
    %2677 = vmatpush2.msra.mxu0 0.0
    %2678 = vmatprep.subr.mxu0 0.0
    %2679 = vmatpush2.msra.mxu0 0.0
    %2680 = vmatprep.subr.mxu0 0.0
    %2681 = vmatpush2.msra.mxu0 0.0
    %2682 = vmatprep.subr.mxu0 0.0
    %2683 = vmatpush2.msra.mxu0 0.0
    %2684 = vmatprep.mubr.f32.mxu0 0.0
    %2685 = vmatmul.mubr.f32.gmra.mxu0 %v2618
    %v2686 = vpop.f32.mrf.mxu0
    %v2687 = vadd.f32 0.0, %v2686
    %v2688 = vpop.f32.mrf.mxu0
    %2689 = vdwg.mxu0
    %v2690 = vmul.f32 %v2614, 0.001953125
    %v2691 = vmul.f32 %v2687, 0.001953125
    %v2692 = vmul.f32 %v2690, %v2690
    %v2693 = vsub.f32 %v2691, %v2692
    %v2694 = vadd.f32 %v2693, 1e-05
    %v2695 = vrsqrt.pop %v2694
    %v2696 = vsub.f32 0.0, %v2690
    %v2697 = vmul.f32 %v2696, %v2695
    %v2698 = vld [vmem:[#allocation11] sm:$0xf]
    %v2700 = vsel %vm656, %v2695, 0
    %v2703 = vsel %vm660, %v2698, 0
    %2705 = vmatprep.subr.mxu0 0.0
    %2706 = vmatpush1.msra.mxu0 0.0
    %2707 = vmatprep.subr.mxu0 0.0
    %2708 = vmatpush1.msra.mxu0 0.0
    %2709 = vmatprep.subr.mxu0 0.0
    %2710 = vmatpush1.msra.mxu0 0.0
    %2711 = vmatprep.subr.mxu0 0.0
    %2712 = vmatpush1.msra.mxu0 0.0
    %2713 = vmatprep.subr.mxu0 0.0
    %2714 = vmatpush1.msra.mxu0 0.0
    %2715 = vmatprep.subr.mxu0 0.0
    %2716 = vmatpush1.msra.mxu0 0.0
    %2717 = vmatprep.subr.mxu0 0.0
    %2718 = vmatpush1.msra.mxu0 0.0
    %2719 = vmatprep.subr.mxu0 0.0
    %2720 = vmatpush1.msra.mxu0 0.0
    %2721 = vmatprep.subr.mxu0 0.0
    %2722 = vmatpush1.msra.mxu0 0.0
    %2723 = vmatprep.subr.mxu0 0.0
    %2724 = vmatpush1.msra.mxu0 0.0
    %2725 = vmatprep.subr.mxu0 0.0
    %2726 = vmatpush1.msra.mxu0 0.0
    %2727 = vmatprep.subr.mxu0 0.0
    %2728 = vmatpush1.msra.mxu0 0.0
    %2729 = vmatprep.subr.mxu0 0.0
    %2730 = vmatpush1.msra.mxu0 0.0
    %2731 = vmatprep.subr.mxu0 0.0
    %2732 = vmatpush1.msra.mxu0 0.0
    %2733 = vmatprep.subr.mxu0 0.0
    %2734 = vmatpush1.msra.mxu0 0.0
    %2735 = vmatprep.subr.mxu0 0.0
    %2736 = vmatpush1.msra.mxu0 %v2703
    %2737 = vmatprep.subr.mxu0 0.0
    %2738 = vmatpush2.msra.mxu0 0.0
    %2739 = vmatprep.subr.mxu0 0.0
    %2740 = vmatpush2.msra.mxu0 0.0
    %2741 = vmatprep.subr.mxu0 0.0
    %2742 = vmatpush2.msra.mxu0 0.0
    %2743 = vmatprep.subr.mxu0 0.0
    %2744 = vmatpush2.msra.mxu0 0.0
    %2745 = vmatprep.subr.mxu0 0.0
    %2746 = vmatpush2.msra.mxu0 0.0
    %2747 = vmatprep.subr.mxu0 0.0
    %2748 = vmatpush2.msra.mxu0 0.0
    %2749 = vmatprep.subr.mxu0 0.0
    %2750 = vmatpush2.msra.mxu0 0.0
    %2751 = vmatprep.subr.mxu0 0.0
    %2752 = vmatpush2.msra.mxu0 0.0
    %2753 = vmatprep.subr.mxu0 0.0
    %2754 = vmatpush2.msra.mxu0 0.0
    %2755 = vmatprep.subr.mxu0 0.0
    %2756 = vmatpush2.msra.mxu0 0.0
    %2757 = vmatprep.subr.mxu0 0.0
    %2758 = vmatpush2.msra.mxu0 0.0
    %2759 = vmatprep.subr.mxu0 0.0
    %2760 = vmatpush2.msra.mxu0 0.0
    %2761 = vmatprep.subr.mxu0 0.0
    %2762 = vmatpush2.msra.mxu0 0.0
    %2763 = vmatprep.subr.mxu0 0.0
    %2764 = vmatpush2.msra.mxu0 0.0
    %2765 = vmatprep.subr.mxu0 0.0
    %2766 = vmatpush2.msra.mxu0 0.0
    %2767 = vmatprep.subr.mxu0 0.0
    %2768 = vmatpush2.msra.mxu0 0.0
    %2769 = vmatprep.mubr.f32.mxu0 0.0
    %2770 = vmatmul.mubr.f32.gmra.mxu0 %v2700
    %v2771 = vpop.f32.mrf.mxu0
    %v2772 = vadd.f32 0.0, %v2771
    %v2773 = vpop.f32.mrf.mxu0
    %2774 = vdwg.mxu0
    %v2776 = vsel %vm656, %v2697, 0
    %2778 = vmatprep.subr.mxu0 0.0
    %2779 = vmatpush1.msra.mxu0 0.0
    %2780 = vmatprep.subr.mxu0 0.0
    %2781 = vmatpush1.msra.mxu0 0.0
    %2782 = vmatprep.subr.mxu0 0.0
    %2783 = vmatpush1.msra.mxu0 0.0
    %2784 = vmatprep.subr.mxu0 0.0
    %2785 = vmatpush1.msra.mxu0 0.0
    %2786 = vmatprep.subr.mxu0 0.0
    %2787 = vmatpush1.msra.mxu0 0.0
    %2788 = vmatprep.subr.mxu0 0.0
    %2789 = vmatpush1.msra.mxu0 0.0
    %2790 = vmatprep.subr.mxu0 0.0
    %2791 = vmatpush1.msra.mxu0 0.0
    %2792 = vmatprep.subr.mxu0 0.0
    %2793 = vmatpush1.msra.mxu0 0.0
    %2794 = vmatprep.subr.mxu0 0.0
    %2795 = vmatpush1.msra.mxu0 0.0
    %2796 = vmatprep.subr.mxu0 0.0
    %2797 = vmatpush1.msra.mxu0 0.0
    %2798 = vmatprep.subr.mxu0 0.0
    %2799 = vmatpush1.msra.mxu0 0.0
    %2800 = vmatprep.subr.mxu0 0.0
    %2801 = vmatpush1.msra.mxu0 0.0
    %2802 = vmatprep.subr.mxu0 0.0
    %2803 = vmatpush1.msra.mxu0 0.0
    %2804 = vmatprep.subr.mxu0 0.0
    %2805 = vmatpush1.msra.mxu0 0.0
    %2806 = vmatprep.subr.mxu0 0.0
    %2807 = vmatpush1.msra.mxu0 0.0
    %2808 = vmatprep.subr.mxu0 0.0
    %2809 = vmatpush1.msra.mxu0 %v2703
    %2810 = vmatprep.subr.mxu0 0.0
    %2811 = vmatpush2.msra.mxu0 0.0
    %2812 = vmatprep.subr.mxu0 0.0
    %2813 = vmatpush2.msra.mxu0 0.0
    %2814 = vmatprep.subr.mxu0 0.0
    %2815 = vmatpush2.msra.mxu0 0.0
    %2816 = vmatprep.subr.mxu0 0.0
    %2817 = vmatpush2.msra.mxu0 0.0
    %2818 = vmatprep.subr.mxu0 0.0
    %2819 = vmatpush2.msra.mxu0 0.0
    %2820 = vmatprep.subr.mxu0 0.0
    %2821 = vmatpush2.msra.mxu0 0.0
    %2822 = vmatprep.subr.mxu0 0.0
    %2823 = vmatpush2.msra.mxu0 0.0
    %2824 = vmatprep.subr.mxu0 0.0
    %2825 = vmatpush2.msra.mxu0 0.0
    %2826 = vmatprep.subr.mxu0 0.0
    %2827 = vmatpush2.msra.mxu0 0.0
    %2828 = vmatprep.subr.mxu0 0.0
    %2829 = vmatpush2.msra.mxu0 0.0
    %2830 = vmatprep.subr.mxu0 0.0
    %2831 = vmatpush2.msra.mxu0 0.0
    %2832 = vmatprep.subr.mxu0 0.0
    %2833 = vmatpush2.msra.mxu0 0.0
    %2834 = vmatprep.subr.mxu0 0.0
    %2835 = vmatpush2.msra.mxu0 0.0
    %2836 = vmatprep.subr.mxu0 0.0
    %2837 = vmatpush2.msra.mxu0 0.0
    %2838 = vmatprep.subr.mxu0 0.0
    %2839 = vmatpush2.msra.mxu0 0.0
    %2840 = vmatprep.subr.mxu0 0.0
    %2841 = vmatpush2.msra.mxu0 0.0
    %2842 = vmatprep.mubr.f32.mxu0 0.0
    %2843 = vmatmul.mubr.f32.gmra.mxu0 %v2776
    %v2844 = vpop.f32.mrf.mxu0
    %v2845 = vadd.f32 0.0, %v2844
    %v2846 = vpop.f32.mrf.mxu0
    %2847 = vdwg.mxu0
    %v2848 = vlaneseq
    %v2849 = vshrl.u32 %v2848, 7
    %v2850 = vsub.s32 0, %v2849
    %v2851 = vrot.slane %v2772, %v2850
    %v2852 = vmul.f32 %v2488, %v2851
    %v2853 = vmul.f32 %v2493, %v2851
    %v2854 = vmul.f32 %v2498, %v2851
    %v2855 = vmul.f32 %v2503, %v2851
    %v2856 = vlaneseq
    %v2857 = vshrl.u32 %v2856, 7
    %v2858 = vsub.s32 0, %v2857
    %v2859 = vrot.slane %v2845, %v2858
    %v2860 = vadd.f32 %v2852, %v2859
    %v2861 = vadd.f32 %v2853, %v2859
    %v2862 = vadd.f32 %v2854, %v2859
    %v2863 = vadd.f32 %v2855, %v2859
    %v2864 = vstv %s1382
    %v2865 = vmul.f32 %v2864, %v2860
    %v2866 = vmul.f32 %v2864, %v2861
    %v2867 = vmul.f32 %v2864, %v2862
    %v2868 = vmul.f32 %v2864, %v2863
    %2873 = vrot.lane.b32.xlu0 %v2865, 16
    %v2874 = vpop.permute.xlu0 %2873
    %2875 = vrot.lane.b32.xlu0 %v2866, 16
    %v2876 = vpop.permute.xlu0 %2875
    %2877 = vrot.lane.b32.xlu0 %v2867, 16
    %v2878 = vpop.permute.xlu0 %2877
    %2879 = vrot.lane.b32.xlu0 %v2868, 16
    %v2880 = vpop.permute.xlu0 %2879
    %v2885 = vadd.f32 %v1378, %v2874
    %v2886 = vadd.f32 %v1379, %v2876
    %v2887 = vadd.f32 %v1380, %v2878
    %v2888 = vadd.f32 %v1381, %v2880
    %s2889 = sld [smem:[#allocation4 + $0x5]]
    %v2890 = vld [vmem:[#allocation2 + $0x2] sm:$0xff]
    %v2891 = vld [vmem:[#allocation2 + $0xa] sm:$0xff]
    %v2892 = vld [vmem:[#allocation2 + $0x1a] sm:$0xff]
    %v2893 = vld [vmem:[#allocation2 + $0x22] sm:$0xff]
    %v2894 = vld [vmem:[#allocation17] sm:$0x1]
    %v2895 = vlaneseq
    %v2896 = vshrl.u32 %v2895, 7
    %v2897 = vsub.s32 0, %v2896
    %v2898 = vrot.slane %v2894, %v2897
    %2900 = vrot.lane.b32.xlu0 %v2898, 8
    %v2901 = vpop.permute.xlu0 %2900
    %v2903 = vmul.f32 %v2890, %v2901
    %v2904 = vmul.f32 %v2891, %v2901
    %v2905 = vmul.f32 %v2892, %v2901
    %v2906 = vmul.f32 %v2893, %v2901
    %v2907 = vadd.f32 %v2903, 0.0
    %v2908 = vadd.f32 %v2904, 0.0
    %v2909 = vadd.f32 %v2905, 0.0
    %v2910 = vadd.f32 %v2906, 0.0
    %v2911 = vld [vmem:[#allocation17 + $0x1] sm:$0x1]
    %v2912 = vlaneseq
    %v2913 = vshrl.u32 %v2912, 7
    %v2914 = vsub.s32 0, %v2913
    %v2915 = vrot.slane %v2911, %v2914
    %2917 = vrot.lane.b32.xlu0 %v2915, 12
    %v2918 = vpop.permute.xlu0 %2917
    %v2920 = vmul.f32 %v2890, %v2918
    %v2921 = vmul.f32 %v2891, %v2918
    %v2922 = vmul.f32 %v2892, %v2918
    %v2923 = vmul.f32 %v2893, %v2918
    %2928 = vrot.lane.b32.xlu0 %v2920, 124
    %v2929 = vpop.permute.xlu0 %2928
    %2930 = vrot.lane.b32.xlu0 %v2921, 124
    %v2931 = vpop.permute.xlu0 %2930
    %2932 = vrot.lane.b32.xlu0 %v2922, 124
    %v2933 = vpop.permute.xlu0 %2932
    %2934 = vrot.lane.b32.xlu0 %v2923, 124
    %v2935 = vpop.permute.xlu0 %2934
    %v2940 = vadd.f32 %v2907, %v2929
    %v2941 = vadd.f32 %v2908, %v2931
    %v2942 = vadd.f32 %v2909, %v2933
    %v2943 = vadd.f32 %v2910, %v2935
    %v2944 = vld [vmem:[#allocation17 + $0x2] sm:$0x1]
    %v2945 = vlaneseq
    %v2946 = vshrl.u32 %v2945, 7
    %v2947 = vsub.s32 0, %v2946
    %v2948 = vrot.slane %v2944, %v2947
    %2950 = vrot.lane.b32.xlu0 %v2948, 16
    %v2951 = vpop.permute.xlu0 %2950
    %v2953 = vmul.f32 %v2890, %v2951
    %v2954 = vmul.f32 %v2891, %v2951
    %v2955 = vmul.f32 %v2892, %v2951
    %v2956 = vmul.f32 %v2893, %v2951
    %2961 = vrot.lane.b32.xlu0 %v2953, 120
    %v2962 = vpop.permute.xlu0 %2961
    %2963 = vrot.lane.b32.xlu0 %v2954, 120
    %v2964 = vpop.permute.xlu0 %2963
    %2965 = vrot.lane.b32.xlu0 %v2955, 120
    %v2966 = vpop.permute.xlu0 %2965
    %2967 = vrot.lane.b32.xlu0 %v2956, 120
    %v2968 = vpop.permute.xlu0 %2967
    %v2973 = vadd.f32 %v2940, %v2962
    %v2974 = vadd.f32 %v2941, %v2964
    %v2975 = vadd.f32 %v2942, %v2966
    %v2976 = vadd.f32 %v2943, %v2968
    %v2977 = vld [vmem:[#allocation17 + $0x3] sm:$0x1]
    %v2978 = vlaneseq
    %v2979 = vshrl.u32 %v2978, 7
    %v2980 = vsub.s32 0, %v2979
    %v2981 = vrot.slane %v2977, %v2980
    %2983 = vrot.lane.b32.xlu0 %v2981, 20
    %v2984 = vpop.permute.xlu0 %2983
    %v2986 = vmul.f32 %v2890, %v2984
    %v2987 = vmul.f32 %v2891, %v2984
    %v2988 = vmul.f32 %v2892, %v2984
    %v2989 = vmul.f32 %v2893, %v2984
    %2994 = vrot.lane.b32.xlu0 %v2986, 116
    %v2995 = vpop.permute.xlu0 %2994
    %2996 = vrot.lane.b32.xlu0 %v2987, 116
    %v2997 = vpop.permute.xlu0 %2996
    %2998 = vrot.lane.b32.xlu0 %v2988, 116
    %v2999 = vpop.permute.xlu0 %2998
    %3000 = vrot.lane.b32.xlu0 %v2989, 116
    %v3001 = vpop.permute.xlu0 %3000
    %v3006 = vadd.f32 %v2973, %v2995
    %v3007 = vadd.f32 %v2974, %v2997
    %v3008 = vadd.f32 %v2975, %v2999
    %v3009 = vadd.f32 %v2976, %v3001
    %v3010 = vld [vmem:[#allocation17 + $0x4] sm:$0x1]
    %v3011 = vlaneseq
    %v3012 = vshrl.u32 %v3011, 7
    %v3013 = vsub.s32 0, %v3012
    %v3014 = vrot.slane %v3010, %v3013
    %3016 = vrot.lane.b32.xlu0 %v3014, 24
    %v3017 = vpop.permute.xlu0 %3016
    %v3019 = vmul.f32 %v2890, %v3017
    %v3020 = vmul.f32 %v2891, %v3017
    %v3021 = vmul.f32 %v2892, %v3017
    %v3022 = vmul.f32 %v2893, %v3017
    %3027 = vrot.lane.b32.xlu0 %v3019, 112
    %v3028 = vpop.permute.xlu0 %3027
    %3029 = vrot.lane.b32.xlu0 %v3020, 112
    %v3030 = vpop.permute.xlu0 %3029
    %3031 = vrot.lane.b32.xlu0 %v3021, 112
    %v3032 = vpop.permute.xlu0 %3031
    %3033 = vrot.lane.b32.xlu0 %v3022, 112
    %v3034 = vpop.permute.xlu0 %3033
    %v3039 = vadd.f32 %v3006, %v3028
    %v3040 = vadd.f32 %v3007, %v3030
    %v3041 = vadd.f32 %v3008, %v3032
    %v3042 = vadd.f32 %v3009, %v3034
    %v3043 = vld [vmem:[#allocation2 + $0x3] sm:$0xff]
    %v3044 = vld [vmem:[#allocation2 + $0xb] sm:$0xff]
    %v3045 = vld [vmem:[#allocation2 + $0x1b] sm:$0xff]
    %v3046 = vld [vmem:[#allocation2 + $0x23] sm:$0xff]
    %s3047 = scalar_lea.vmem [#allocation17], 8
    %v3048 = vld [vmem:[%s3047] sm:$0x1]
    %v3049 = vlaneseq
    %v3050 = vshrl.u32 %v3049, 7
    %v3051 = vsub.s32 0, %v3050
    %v3052 = vrot.slane %v3048, %v3051
    %3054 = vrot.lane.b32.xlu0 %v3052, 8
    %v3055 = vpop.permute.xlu0 %3054
    %v3057 = vmul.f32 %v3043, %v3055
    %v3058 = vmul.f32 %v3044, %v3055
    %v3059 = vmul.f32 %v3045, %v3055
    %v3060 = vmul.f32 %v3046, %v3055
    %v3061 = vadd.f32 %v3039, %v3057
    %v3062 = vadd.f32 %v3040, %v3058
    %v3063 = vadd.f32 %v3041, %v3059
    %v3064 = vadd.f32 %v3042, %v3060
    %v3065 = vld [vmem:[%s3047 + $0x1] sm:$0x1]
    %v3066 = vlaneseq
    %v3067 = vshrl.u32 %v3066, 7
    %v3068 = vsub.s32 0, %v3067
    %v3069 = vrot.slane %v3065, %v3068
    %3071 = vrot.lane.b32.xlu0 %v3069, 12
    %v3072 = vpop.permute.xlu0 %3071
    %v3074 = vmul.f32 %v3043, %v3072
    %v3075 = vmul.f32 %v3044, %v3072
    %v3076 = vmul.f32 %v3045, %v3072
    %v3077 = vmul.f32 %v3046, %v3072
    %3082 = vrot.lane.b32.xlu0 %v3074, 124
    %v3083 = vpop.permute.xlu0 %3082
    %3084 = vrot.lane.b32.xlu0 %v3075, 124
    %v3085 = vpop.permute.xlu0 %3084
    %3086 = vrot.lane.b32.xlu0 %v3076, 124
    %v3087 = vpop.permute.xlu0 %3086
    %3088 = vrot.lane.b32.xlu0 %v3077, 124
    %v3089 = vpop.permute.xlu0 %3088
    %v3094 = vadd.f32 %v3061, %v3083
    %v3095 = vadd.f32 %v3062, %v3085
    %v3096 = vadd.f32 %v3063, %v3087
    %v3097 = vadd.f32 %v3064, %v3089
    %v3098 = vld [vmem:[%s3047 + $0x2] sm:$0x1]
    %v3099 = vlaneseq
    %v3100 = vshrl.u32 %v3099, 7
    %v3101 = vsub.s32 0, %v3100
    %v3102 = vrot.slane %v3098, %v3101
    %3104 = vrot.lane.b32.xlu0 %v3102, 16
    %v3105 = vpop.permute.xlu0 %3104
    %v3107 = vmul.f32 %v3043, %v3105
    %v3108 = vmul.f32 %v3044, %v3105
    %v3109 = vmul.f32 %v3045, %v3105
    %v3110 = vmul.f32 %v3046, %v3105
    %3115 = vrot.lane.b32.xlu0 %v3107, 120
    %v3116 = vpop.permute.xlu0 %3115
    %3117 = vrot.lane.b32.xlu0 %v3108, 120
    %v3118 = vpop.permute.xlu0 %3117
    %3119 = vrot.lane.b32.xlu0 %v3109, 120
    %v3120 = vpop.permute.xlu0 %3119
    %3121 = vrot.lane.b32.xlu0 %v3110, 120
    %v3122 = vpop.permute.xlu0 %3121
    %v3127 = vadd.f32 %v3094, %v3116
    %v3128 = vadd.f32 %v3095, %v3118
    %v3129 = vadd.f32 %v3096, %v3120
    %v3130 = vadd.f32 %v3097, %v3122
    %v3131 = vld [vmem:[%s3047 + $0x3] sm:$0x1]
    %v3132 = vlaneseq
    %v3133 = vshrl.u32 %v3132, 7
    %v3134 = vsub.s32 0, %v3133
    %v3135 = vrot.slane %v3131, %v3134
    %3137 = vrot.lane.b32.xlu0 %v3135, 20
    %v3138 = vpop.permute.xlu0 %3137
    %v3140 = vmul.f32 %v3043, %v3138
    %v3141 = vmul.f32 %v3044, %v3138
    %v3142 = vmul.f32 %v3045, %v3138
    %v3143 = vmul.f32 %v3046, %v3138
    %3148 = vrot.lane.b32.xlu0 %v3140, 116
    %v3149 = vpop.permute.xlu0 %3148
    %3150 = vrot.lane.b32.xlu0 %v3141, 116
    %v3151 = vpop.permute.xlu0 %3150
    %3152 = vrot.lane.b32.xlu0 %v3142, 116
    %v3153 = vpop.permute.xlu0 %3152
    %3154 = vrot.lane.b32.xlu0 %v3143, 116
    %v3155 = vpop.permute.xlu0 %3154
    %v3160 = vadd.f32 %v3127, %v3149
    %v3161 = vadd.f32 %v3128, %v3151
    %v3162 = vadd.f32 %v3129, %v3153
    %v3163 = vadd.f32 %v3130, %v3155
    %v3164 = vld [vmem:[%s3047 + $0x4] sm:$0x1]
    %v3165 = vlaneseq
    %v3166 = vshrl.u32 %v3165, 7
    %v3167 = vsub.s32 0, %v3166
    %v3168 = vrot.slane %v3164, %v3167
    %3170 = vrot.lane.b32.xlu0 %v3168, 24
    %v3171 = vpop.permute.xlu0 %3170
    %v3173 = vmul.f32 %v3043, %v3171
    %v3174 = vmul.f32 %v3044, %v3171
    %v3175 = vmul.f32 %v3045, %v3171
    %v3176 = vmul.f32 %v3046, %v3171
    %3181 = vrot.lane.b32.xlu0 %v3173, 112
    %v3182 = vpop.permute.xlu0 %3181
    %3183 = vrot.lane.b32.xlu0 %v3174, 112
    %v3184 = vpop.permute.xlu0 %3183
    %3185 = vrot.lane.b32.xlu0 %v3175, 112
    %v3186 = vpop.permute.xlu0 %3185
    %3187 = vrot.lane.b32.xlu0 %v3176, 112
    %v3188 = vpop.permute.xlu0 %3187
    %v3193 = vadd.f32 %v3160, %v3182
    %v3194 = vadd.f32 %v3161, %v3184
    %v3195 = vadd.f32 %v3162, %v3186
    %v3196 = vadd.f32 %v3163, %v3188
    %v3197 = vld [vmem:[#allocation2 + $0x4] sm:$0xff]
    %v3198 = vld [vmem:[#allocation2 + $0xc] sm:$0xff]
    %v3199 = vld [vmem:[#allocation2 + $0x1c] sm:$0xff]
    %v3200 = vld [vmem:[#allocation2 + $0x24] sm:$0xff]
    %s3201 = scalar_lea.vmem [#allocation17], 16
    %v3202 = vld [vmem:[%s3201] sm:$0x1]
    %v3203 = vlaneseq
    %v3204 = vshrl.u32 %v3203, 7
    %v3205 = vsub.s32 0, %v3204
    %v3206 = vrot.slane %v3202, %v3205
    %3208 = vrot.lane.b32.xlu0 %v3206, 8
    %v3209 = vpop.permute.xlu0 %3208
    %v3211 = vmul.f32 %v3197, %v3209
    %v3212 = vmul.f32 %v3198, %v3209
    %v3213 = vmul.f32 %v3199, %v3209
    %v3214 = vmul.f32 %v3200, %v3209
    %v3215 = vadd.f32 %v3193, %v3211
    %v3216 = vadd.f32 %v3194, %v3212
    %v3217 = vadd.f32 %v3195, %v3213
    %v3218 = vadd.f32 %v3196, %v3214
    %v3219 = vld [vmem:[%s3201 + $0x1] sm:$0x1]
    %v3220 = vlaneseq
    %v3221 = vshrl.u32 %v3220, 7
    %v3222 = vsub.s32 0, %v3221
    %v3223 = vrot.slane %v3219, %v3222
    %3225 = vrot.lane.b32.xlu0 %v3223, 12
    %v3226 = vpop.permute.xlu0 %3225
    %v3228 = vmul.f32 %v3197, %v3226
    %v3229 = vmul.f32 %v3198, %v3226
    %v3230 = vmul.f32 %v3199, %v3226
    %v3231 = vmul.f32 %v3200, %v3226
    %3236 = vrot.lane.b32.xlu0 %v3228, 124
    %v3237 = vpop.permute.xlu0 %3236
    %3238 = vrot.lane.b32.xlu0 %v3229, 124
    %v3239 = vpop.permute.xlu0 %3238
    %3240 = vrot.lane.b32.xlu0 %v3230, 124
    %v3241 = vpop.permute.xlu0 %3240
    %3242 = vrot.lane.b32.xlu0 %v3231, 124
    %v3243 = vpop.permute.xlu0 %3242
    %v3248 = vadd.f32 %v3215, %v3237
    %v3249 = vadd.f32 %v3216, %v3239
    %v3250 = vadd.f32 %v3217, %v3241
    %v3251 = vadd.f32 %v3218, %v3243
    %v3252 = vld [vmem:[%s3201 + $0x2] sm:$0x1]
    %v3253 = vlaneseq
    %v3254 = vshrl.u32 %v3253, 7
    %v3255 = vsub.s32 0, %v3254
    %v3256 = vrot.slane %v3252, %v3255
    %3258 = vrot.lane.b32.xlu0 %v3256, 16
    %v3259 = vpop.permute.xlu0 %3258
    %v3261 = vmul.f32 %v3197, %v3259
    %v3262 = vmul.f32 %v3198, %v3259
    %v3263 = vmul.f32 %v3199, %v3259
    %v3264 = vmul.f32 %v3200, %v3259
    %3269 = vrot.lane.b32.xlu0 %v3261, 120
    %v3270 = vpop.permute.xlu0 %3269
    %3271 = vrot.lane.b32.xlu0 %v3262, 120
    %v3272 = vpop.permute.xlu0 %3271
    %3273 = vrot.lane.b32.xlu0 %v3263, 120
    %v3274 = vpop.permute.xlu0 %3273
    %3275 = vrot.lane.b32.xlu0 %v3264, 120
    %v3276 = vpop.permute.xlu0 %3275
    %v3281 = vadd.f32 %v3248, %v3270
    %v3282 = vadd.f32 %v3249, %v3272
    %v3283 = vadd.f32 %v3250, %v3274
    %v3284 = vadd.f32 %v3251, %v3276
    %v3285 = vld [vmem:[%s3201 + $0x3] sm:$0x1]
    %v3286 = vlaneseq
    %v3287 = vshrl.u32 %v3286, 7
    %v3288 = vsub.s32 0, %v3287
    %v3289 = vrot.slane %v3285, %v3288
    %3291 = vrot.lane.b32.xlu0 %v3289, 20
    %v3292 = vpop.permute.xlu0 %3291
    %v3294 = vmul.f32 %v3197, %v3292
    %v3295 = vmul.f32 %v3198, %v3292
    %v3296 = vmul.f32 %v3199, %v3292
    %v3297 = vmul.f32 %v3200, %v3292
    %3302 = vrot.lane.b32.xlu0 %v3294, 116
    %v3303 = vpop.permute.xlu0 %3302
    %3304 = vrot.lane.b32.xlu0 %v3295, 116
    %v3305 = vpop.permute.xlu0 %3304
    %3306 = vrot.lane.b32.xlu0 %v3296, 116
    %v3307 = vpop.permute.xlu0 %3306
    %3308 = vrot.lane.b32.xlu0 %v3297, 116
    %v3309 = vpop.permute.xlu0 %3308
    %v3314 = vadd.f32 %v3281, %v3303
    %v3315 = vadd.f32 %v3282, %v3305
    %v3316 = vadd.f32 %v3283, %v3307
    %v3317 = vadd.f32 %v3284, %v3309
    %v3318 = vld [vmem:[%s3201 + $0x4] sm:$0x1]
    %v3319 = vlaneseq
    %v3320 = vshrl.u32 %v3319, 7
    %v3321 = vsub.s32 0, %v3320
    %v3322 = vrot.slane %v3318, %v3321
    %3324 = vrot.lane.b32.xlu0 %v3322, 24
    %v3325 = vpop.permute.xlu0 %3324
    %v3327 = vmul.f32 %v3197, %v3325
    %v3328 = vmul.f32 %v3198, %v3325
    %v3329 = vmul.f32 %v3199, %v3325
    %v3330 = vmul.f32 %v3200, %v3325
    %3335 = vrot.lane.b32.xlu0 %v3327, 112
    %v3336 = vpop.permute.xlu0 %3335
    %3337 = vrot.lane.b32.xlu0 %v3328, 112
    %v3338 = vpop.permute.xlu0 %3337
    %3339 = vrot.lane.b32.xlu0 %v3329, 112
    %v3340 = vpop.permute.xlu0 %3339
    %3341 = vrot.lane.b32.xlu0 %v3330, 112
    %v3342 = vpop.permute.xlu0 %3341
    %v3347 = vadd.f32 %v3314, %v3336
    %v3348 = vadd.f32 %v3315, %v3338
    %v3349 = vadd.f32 %v3316, %v3340
    %v3350 = vadd.f32 %v3317, %v3342
    %v3351 = vld [vmem:[#allocation2 + $0x5] sm:$0xff]
    %v3352 = vld [vmem:[#allocation2 + $0xd] sm:$0xff]
    %v3353 = vld [vmem:[#allocation2 + $0x1d] sm:$0xff]
    %v3354 = vld [vmem:[#allocation2 + $0x25] sm:$0xff]
    %s3355 = scalar_lea.vmem [#allocation17], 24
    %v3356 = vld [vmem:[%s3355] sm:$0x1]
    %v3357 = vlaneseq
    %v3358 = vshrl.u32 %v3357, 7
    %v3359 = vsub.s32 0, %v3358
    %v3360 = vrot.slane %v3356, %v3359
    %3362 = vrot.lane.b32.xlu0 %v3360, 8
    %v3363 = vpop.permute.xlu0 %3362
    %v3365 = vmul.f32 %v3351, %v3363
    %v3366 = vmul.f32 %v3352, %v3363
    %v3367 = vmul.f32 %v3353, %v3363
    %v3368 = vmul.f32 %v3354, %v3363
    %v3369 = vadd.f32 %v3347, %v3365
    %v3370 = vadd.f32 %v3348, %v3366
    %v3371 = vadd.f32 %v3349, %v3367
    %v3372 = vadd.f32 %v3350, %v3368
    %v3373 = vld [vmem:[%s3355 + $0x1] sm:$0x1]
    %v3374 = vlaneseq
    %v3375 = vshrl.u32 %v3374, 7
    %v3376 = vsub.s32 0, %v3375
    %v3377 = vrot.slane %v3373, %v3376
    %3379 = vrot.lane.b32.xlu0 %v3377, 12
    %v3380 = vpop.permute.xlu0 %3379
    %v3382 = vmul.f32 %v3351, %v3380
    %v3383 = vmul.f32 %v3352, %v3380
    %v3384 = vmul.f32 %v3353, %v3380
    %v3385 = vmul.f32 %v3354, %v3380
    %3390 = vrot.lane.b32.xlu0 %v3382, 124
    %v3391 = vpop.permute.xlu0 %3390
    %3392 = vrot.lane.b32.xlu0 %v3383, 124
    %v3393 = vpop.permute.xlu0 %3392
    %3394 = vrot.lane.b32.xlu0 %v3384, 124
    %v3395 = vpop.permute.xlu0 %3394
    %3396 = vrot.lane.b32.xlu0 %v3385, 124
    %v3397 = vpop.permute.xlu0 %3396
    %v3402 = vadd.f32 %v3369, %v3391
    %v3403 = vadd.f32 %v3370, %v3393
    %v3404 = vadd.f32 %v3371, %v3395
    %v3405 = vadd.f32 %v3372, %v3397
    %v3406 = vld [vmem:[%s3355 + $0x2] sm:$0x1]
    %v3407 = vlaneseq
    %v3408 = vshrl.u32 %v3407, 7
    %v3409 = vsub.s32 0, %v3408
    %v3410 = vrot.slane %v3406, %v3409
    %3412 = vrot.lane.b32.xlu0 %v3410, 16
    %v3413 = vpop.permute.xlu0 %3412
    %v3415 = vmul.f32 %v3351, %v3413
    %v3416 = vmul.f32 %v3352, %v3413
    %v3417 = vmul.f32 %v3353, %v3413
    %v3418 = vmul.f32 %v3354, %v3413
    %3423 = vrot.lane.b32.xlu0 %v3415, 120
    %v3424 = vpop.permute.xlu0 %3423
    %3425 = vrot.lane.b32.xlu0 %v3416, 120
    %v3426 = vpop.permute.xlu0 %3425
    %3427 = vrot.lane.b32.xlu0 %v3417, 120
    %v3428 = vpop.permute.xlu0 %3427
    %3429 = vrot.lane.b32.xlu0 %v3418, 120
    %v3430 = vpop.permute.xlu0 %3429
    %v3435 = vadd.f32 %v3402, %v3424
    %v3436 = vadd.f32 %v3403, %v3426
    %v3437 = vadd.f32 %v3404, %v3428
    %v3438 = vadd.f32 %v3405, %v3430
    %v3439 = vld [vmem:[%s3355 + $0x3] sm:$0x1]
    %v3440 = vlaneseq
    %v3441 = vshrl.u32 %v3440, 7
    %v3442 = vsub.s32 0, %v3441
    %v3443 = vrot.slane %v3439, %v3442
    %3445 = vrot.lane.b32.xlu0 %v3443, 20
    %v3446 = vpop.permute.xlu0 %3445
    %v3448 = vmul.f32 %v3351, %v3446
    %v3449 = vmul.f32 %v3352, %v3446
    %v3450 = vmul.f32 %v3353, %v3446
    %v3451 = vmul.f32 %v3354, %v3446
    %3456 = vrot.lane.b32.xlu0 %v3448, 116
    %v3457 = vpop.permute.xlu0 %3456
    %3458 = vrot.lane.b32.xlu0 %v3449, 116
    %v3459 = vpop.permute.xlu0 %3458
    %3460 = vrot.lane.b32.xlu0 %v3450, 116
    %v3461 = vpop.permute.xlu0 %3460
    %3462 = vrot.lane.b32.xlu0 %v3451, 116
    %v3463 = vpop.permute.xlu0 %3462
    %v3468 = vadd.f32 %v3435, %v3457
    %v3469 = vadd.f32 %v3436, %v3459
    %v3470 = vadd.f32 %v3437, %v3461
    %v3471 = vadd.f32 %v3438, %v3463
    %v3472 = vld [vmem:[%s3355 + $0x4] sm:$0x1]
    %v3473 = vlaneseq
    %v3474 = vshrl.u32 %v3473, 7
    %v3475 = vsub.s32 0, %v3474
    %v3476 = vrot.slane %v3472, %v3475
    %3478 = vrot.lane.b32.xlu0 %v3476, 24
    %v3479 = vpop.permute.xlu0 %3478
    %v3481 = vmul.f32 %v3351, %v3479
    %v3482 = vmul.f32 %v3352, %v3479
    %v3483 = vmul.f32 %v3353, %v3479
    %v3484 = vmul.f32 %v3354, %v3479
    %3489 = vrot.lane.b32.xlu0 %v3481, 112
    %v3490 = vpop.permute.xlu0 %3489
    %3491 = vrot.lane.b32.xlu0 %v3482, 112
    %v3492 = vpop.permute.xlu0 %3491
    %3493 = vrot.lane.b32.xlu0 %v3483, 112
    %v3494 = vpop.permute.xlu0 %3493
    %3495 = vrot.lane.b32.xlu0 %v3484, 112
    %v3496 = vpop.permute.xlu0 %3495
    %v3501 = vadd.f32 %v3468, %v3490
    %v3502 = vadd.f32 %v3469, %v3492
    %v3503 = vadd.f32 %v3470, %v3494
    %v3504 = vadd.f32 %v3471, %v3496
    %v3505 = vld [vmem:[#allocation2 + $0x6] sm:$0xff]
    %v3506 = vld [vmem:[#allocation2 + $0xe] sm:$0xff]
    %v3507 = vld [vmem:[#allocation2 + $0x1e] sm:$0xff]
    %v3508 = vld [vmem:[#allocation2 + $0x26] sm:$0xff]
    %s3509 = scalar_lea.vmem [#allocation17], 32
    %v3510 = vld [vmem:[%s3509] sm:$0x1]
    %v3511 = vlaneseq
    %v3512 = vshrl.u32 %v3511, 7
    %v3513 = vsub.s32 0, %v3512
    %v3514 = vrot.slane %v3510, %v3513
    %3516 = vrot.lane.b32.xlu0 %v3514, 8
    %v3517 = vpop.permute.xlu0 %3516
    %v3519 = vmul.f32 %v3505, %v3517
    %v3520 = vmul.f32 %v3506, %v3517
    %v3521 = vmul.f32 %v3507, %v3517
    %v3522 = vmul.f32 %v3508, %v3517
    %v3523 = vadd.f32 %v3501, %v3519
    %v3524 = vadd.f32 %v3502, %v3520
    %v3525 = vadd.f32 %v3503, %v3521
    %v3526 = vadd.f32 %v3504, %v3522
    %v3527 = vld [vmem:[%s3509 + $0x1] sm:$0x1]
    %v3528 = vlaneseq
    %v3529 = vshrl.u32 %v3528, 7
    %v3530 = vsub.s32 0, %v3529
    %v3531 = vrot.slane %v3527, %v3530
    %3533 = vrot.lane.b32.xlu0 %v3531, 12
    %v3534 = vpop.permute.xlu0 %3533
    %v3536 = vmul.f32 %v3505, %v3534
    %v3537 = vmul.f32 %v3506, %v3534
    %v3538 = vmul.f32 %v3507, %v3534
    %v3539 = vmul.f32 %v3508, %v3534
    %3544 = vrot.lane.b32.xlu0 %v3536, 124
    %v3545 = vpop.permute.xlu0 %3544
    %3546 = vrot.lane.b32.xlu0 %v3537, 124
    %v3547 = vpop.permute.xlu0 %3546
    %3548 = vrot.lane.b32.xlu0 %v3538, 124
    %v3549 = vpop.permute.xlu0 %3548
    %3550 = vrot.lane.b32.xlu0 %v3539, 124
    %v3551 = vpop.permute.xlu0 %3550
    %v3556 = vadd.f32 %v3523, %v3545
    %v3557 = vadd.f32 %v3524, %v3547
    %v3558 = vadd.f32 %v3525, %v3549
    %v3559 = vadd.f32 %v3526, %v3551
    %v3560 = vld [vmem:[%s3509 + $0x2] sm:$0x1]
    %v3561 = vlaneseq
    %v3562 = vshrl.u32 %v3561, 7
    %v3563 = vsub.s32 0, %v3562
    %v3564 = vrot.slane %v3560, %v3563
    %3566 = vrot.lane.b32.xlu0 %v3564, 16
    %v3567 = vpop.permute.xlu0 %3566
    %v3569 = vmul.f32 %v3505, %v3567
    %v3570 = vmul.f32 %v3506, %v3567
    %v3571 = vmul.f32 %v3507, %v3567
    %v3572 = vmul.f32 %v3508, %v3567
    %3577 = vrot.lane.b32.xlu0 %v3569, 120
    %v3578 = vpop.permute.xlu0 %3577
    %3579 = vrot.lane.b32.xlu0 %v3570, 120
    %v3580 = vpop.permute.xlu0 %3579
    %3581 = vrot.lane.b32.xlu0 %v3571, 120
    %v3582 = vpop.permute.xlu0 %3581
    %3583 = vrot.lane.b32.xlu0 %v3572, 120
    %v3584 = vpop.permute.xlu0 %3583
    %v3589 = vadd.f32 %v3556, %v3578
    %v3590 = vadd.f32 %v3557, %v3580
    %v3591 = vadd.f32 %v3558, %v3582
    %v3592 = vadd.f32 %v3559, %v3584
    %v3593 = vld [vmem:[%s3509 + $0x3] sm:$0x1]
    %v3594 = vlaneseq
    %v3595 = vshrl.u32 %v3594, 7
    %v3596 = vsub.s32 0, %v3595
    %v3597 = vrot.slane %v3593, %v3596
    %3599 = vrot.lane.b32.xlu0 %v3597, 20
    %v3600 = vpop.permute.xlu0 %3599
    %v3602 = vmul.f32 %v3505, %v3600
    %v3603 = vmul.f32 %v3506, %v3600
    %v3604 = vmul.f32 %v3507, %v3600
    %v3605 = vmul.f32 %v3508, %v3600
    %3610 = vrot.lane.b32.xlu0 %v3602, 116
    %v3611 = vpop.permute.xlu0 %3610
    %3612 = vrot.lane.b32.xlu0 %v3603, 116
    %v3613 = vpop.permute.xlu0 %3612
    %3614 = vrot.lane.b32.xlu0 %v3604, 116
    %v3615 = vpop.permute.xlu0 %3614
    %3616 = vrot.lane.b32.xlu0 %v3605, 116
    %v3617 = vpop.permute.xlu0 %3616
    %v3622 = vadd.f32 %v3589, %v3611
    %v3623 = vadd.f32 %v3590, %v3613
    %v3624 = vadd.f32 %v3591, %v3615
    %v3625 = vadd.f32 %v3592, %v3617
    %v3626 = vld [vmem:[%s3509 + $0x4] sm:$0x1]
    %v3627 = vlaneseq
    %v3628 = vshrl.u32 %v3627, 7
    %v3629 = vsub.s32 0, %v3628
    %v3630 = vrot.slane %v3626, %v3629
    %3632 = vrot.lane.b32.xlu0 %v3630, 24
    %v3633 = vpop.permute.xlu0 %3632
    %v3635 = vmul.f32 %v3505, %v3633
    %v3636 = vmul.f32 %v3506, %v3633
    %v3637 = vmul.f32 %v3507, %v3633
    %v3638 = vmul.f32 %v3508, %v3633
    %3643 = vrot.lane.b32.xlu0 %v3635, 112
    %v3644 = vpop.permute.xlu0 %3643
    %3645 = vrot.lane.b32.xlu0 %v3636, 112
    %v3646 = vpop.permute.xlu0 %3645
    %3647 = vrot.lane.b32.xlu0 %v3637, 112
    %v3648 = vpop.permute.xlu0 %3647
    %3649 = vrot.lane.b32.xlu0 %v3638, 112
    %v3650 = vpop.permute.xlu0 %3649
    %v3655 = vadd.f32 %v3622, %v3644
    %v3656 = vadd.f32 %v3623, %v3646
    %v3657 = vadd.f32 %v3624, %v3648
    %v3658 = vadd.f32 %v3625, %v3650
    %v3659 = vld [vmem:[#allocation18] sm:$0xff]
    %v3660 = vld [vmem:[#allocation18 + $0x8] sm:$0xff]
    %v3661 = vld [vmem:[#allocation18 + $0x10] sm:$0xff]
    %v3662 = vld [vmem:[#allocation18 + $0x18] sm:$0xff]
    %v3663 = vld [vmem:[#allocation18 + $0x20] sm:$0xff]
    %v3664 = vld [vmem:[#allocation18 + $0x28] sm:$0xff]
    %v3665 = vld [vmem:[#allocation18 + $0x30] sm:$0xff]
    %v3666 = vld [vmem:[#allocation18 + $0x38] sm:$0xff]
    %3671 = vrot.lane.b32.xlu0 %v3655, 120
    %v3672 = vpop.permute.xlu0 %3671
    %3673 = vrot.lane.b32.xlu0 %v3656, 120
    %v3674 = vpop.permute.xlu0 %3673
    %3675 = vrot.lane.b32.xlu0 %v3657, 120
    %v3676 = vpop.permute.xlu0 %3675
    %3677 = vrot.lane.b32.xlu0 %v3658, 120
    %v3678 = vpop.permute.xlu0 %3677
    %v3679 = vsel %vm499, %v3672, 0
    %v3681 = vsel %vm499, %v3674, 0
    %v3683 = vsel %vm499, %v3676, 0
    %v3685 = vsel %vm499, %v3678, 0
    %3687 = vmatprep.subr.mxu0 0.0
    %3688 = vmatpush1.msra.mxu0 0.0
    %3689 = vmatprep.subr.mxu0 0.0
    %3690 = vmatpush1.msra.mxu0 0.0
    %3691 = vmatprep.subr.mxu0 0.0
    %3692 = vmatpush1.msra.mxu0 0.0
    %3693 = vmatprep.subr.mxu0 0.0
    %3694 = vmatpush1.msra.mxu0 0.0
    %3695 = vmatprep.subr.mxu0 0.0
    %3696 = vmatpush1.msra.mxu0 0.0
    %3697 = vmatprep.subr.mxu0 0.0
    %3698 = vmatpush1.msra.mxu0 0.0
    %3699 = vmatprep.subr.mxu0 0.0
    %3700 = vmatpush1.msra.mxu0 0.0
    %3701 = vmatprep.subr.mxu0 0.0
    %3702 = vmatpush1.msra.mxu0 0.0
    %3703 = vmatprep.subr.mxu0 0.0
    %3704 = vmatpush1.msra.mxu0 %v3666
    %3705 = vmatprep.subr.mxu0 0.0
    %3706 = vmatpush1.msra.mxu0 %v3665
    %3707 = vmatprep.subr.mxu0 0.0
    %3708 = vmatpush1.msra.mxu0 %v3664
    %3709 = vmatprep.subr.mxu0 0.0
    %3710 = vmatpush1.msra.mxu0 %v3663
    %3711 = vmatprep.subr.mxu0 0.0
    %3712 = vmatpush1.msra.mxu0 %v3662
    %3713 = vmatprep.subr.mxu0 0.0
    %3714 = vmatpush1.msra.mxu0 %v3661
    %3715 = vmatprep.subr.mxu0 0.0
    %3716 = vmatpush1.msra.mxu0 %v3660
    %3717 = vmatprep.subr.mxu0 0.0
    %3718 = vmatpush1.msra.mxu0 %v3659
    %3719 = vmatprep.subr.mxu0 0.0
    %3720 = vmatpush2.msra.mxu0 0.0
    %3721 = vmatprep.subr.mxu0 0.0
    %3722 = vmatpush2.msra.mxu0 0.0
    %3723 = vmatprep.subr.mxu0 0.0
    %3724 = vmatpush2.msra.mxu0 0.0
    %3725 = vmatprep.subr.mxu0 0.0
    %3726 = vmatpush2.msra.mxu0 0.0
    %3727 = vmatprep.subr.mxu0 0.0
    %3728 = vmatpush2.msra.mxu0 0.0
    %3729 = vmatprep.subr.mxu0 0.0
    %3730 = vmatpush2.msra.mxu0 0.0
    %3731 = vmatprep.subr.mxu0 0.0
    %3732 = vmatpush2.msra.mxu0 0.0
    %3733 = vmatprep.subr.mxu0 0.0
    %3734 = vmatpush2.msra.mxu0 0.0
    %3735 = vmatprep.subr.mxu0 0.0
    %3736 = vmatpush2.msra.mxu0 0.0
    %3737 = vmatprep.subr.mxu0 0.0
    %3738 = vmatpush2.msra.mxu0 0.0
    %3739 = vmatprep.subr.mxu0 0.0
    %3740 = vmatpush2.msra.mxu0 0.0
    %3741 = vmatprep.subr.mxu0 0.0
    %3742 = vmatpush2.msra.mxu0 0.0
    %3743 = vmatprep.subr.mxu0 0.0
    %3744 = vmatpush2.msra.mxu0 0.0
    %3745 = vmatprep.subr.mxu0 0.0
    %3746 = vmatpush2.msra.mxu0 0.0
    %3747 = vmatprep.subr.mxu0 0.0
    %3748 = vmatpush2.msra.mxu0 0.0
    %3749 = vmatprep.subr.mxu0 0.0
    %3750 = vmatpush2.msra.mxu0 0.0
    %3751 = vmatprep.mubr.f32.mxu0 0.0
    %3752 = vmatmul.mubr.f32.gmra.mxu0 %v3679
    %v3753 = vpop.f32.mrf.mxu0
    %v3754 = vadd.f32 0.0, %v3753
    %v3755 = vpop.f32.mrf.mxu0
    %3756 = vmatprep.mubr.f32.mxu0 0.0
    %3757 = vmatmul.mubr.f32.gmra.mxu0 %v3681
    %v3758 = vpop.f32.mrf.mxu0
    %v3759 = vadd.f32 0.0, %v3758
    %v3760 = vpop.f32.mrf.mxu0
    %3761 = vmatprep.mubr.f32.mxu0 0.0
    %3762 = vmatmul.mubr.f32.gmra.mxu0 %v3683
    %v3763 = vpop.f32.mrf.mxu0
    %v3764 = vadd.f32 0.0, %v3763
    %v3765 = vpop.f32.mrf.mxu0
    %3766 = vmatprep.mubr.f32.mxu0 0.0
    %3767 = vmatmul.mubr.f32.gmra.mxu0 %v3685
    %v3768 = vpop.f32.mrf.mxu0
    %v3769 = vadd.f32 0.0, %v3768
    %v3770 = vpop.f32.mrf.mxu0
    %3771 = vdwg.mxu0
    %v3772 = vsel %vm499, %v3754, 0.0
    %v3773 = vsel %vm499, %v3759, 0.0
    %v3774 = vadd.f32 %v3772, %v3773
    %v3775 = vsel %vm499, %v3764, 0.0
    %v3776 = vadd.f32 %v3774, %v3775
    %v3777 = vsel %vm499, %v3769, 0.0
    %v3778 = vadd.f32 %v3776, %v3777
    %v3779 = vrot.slane %v3778, 4
    %v3780 = vadd.f32 %v3778, %v3779
    %v3781 = vrot.slane %v3780, 2
    %v3782 = vadd.f32 %v3780, %v3781
    %v3783 = vrot.slane %v3782, 1
    %v3784 = vadd.f32 %v3782, %v3783
    %v3785 = vmul.f32 %v3754, %v3754
    %v3786 = vmul.f32 %v3759, %v3759
    %v3787 = vmul.f32 %v3764, %v3764
    %v3788 = vmul.f32 %v3769, %v3769
    %v3789 = vsel %vm499, %v3785, 0.0
    %v3790 = vsel %vm499, %v3786, 0.0
    %v3791 = vadd.f32 %v3789, %v3790
    %v3792 = vsel %vm499, %v3787, 0.0
    %v3793 = vadd.f32 %v3791, %v3792
    %v3794 = vsel %vm499, %v3788, 0.0
    %v3795 = vadd.f32 %v3793, %v3794
    %v3796 = vrot.slane %v3795, 4
    %v3797 = vadd.f32 %v3795, %v3796
    %v3798 = vrot.slane %v3797, 2
    %v3799 = vadd.f32 %v3797, %v3798
    %v3800 = vrot.slane %v3799, 1
    %v3801 = vadd.f32 %v3799, %v3800
    %v3803 = vsel %vm499, %v3784, 0
    %3805 = vmatprep.subr.mxu0 0.0
    %3806 = vmatpush1.msra.mxu0 0.0
    %3807 = vmatprep.subr.mxu0 0.0
    %3808 = vmatpush1.msra.mxu0 0.0
    %3809 = vmatprep.subr.mxu0 0.0
    %3810 = vmatpush1.msra.mxu0 0.0
    %3811 = vmatprep.subr.mxu0 0.0
    %3812 = vmatpush1.msra.mxu0 0.0
    %3813 = vmatprep.subr.mxu0 0.0
    %3814 = vmatpush1.msra.mxu0 0.0
    %3815 = vmatprep.subr.mxu0 0.0
    %3816 = vmatpush1.msra.mxu0 0.0
    %3817 = vmatprep.subr.mxu0 0.0
    %3818 = vmatpush1.msra.mxu0 0.0
    %3819 = vmatprep.subr.mxu0 0.0
    %3820 = vmatpush1.msra.mxu0 0.0
    %3821 = vmatprep.subr.mxu0 0.0
    %3822 = vmatpush1.msra.mxu0 %v2543
    %3823 = vmatprep.subr.mxu0 0.0
    %3824 = vmatpush1.msra.mxu0 %v2542
    %3825 = vmatprep.subr.mxu0 0.0
    %3826 = vmatpush1.msra.mxu0 %v2541
    %3827 = vmatprep.subr.mxu0 0.0
    %3828 = vmatpush1.msra.mxu0 %v2540
    %3829 = vmatprep.subr.mxu0 0.0
    %3830 = vmatpush1.msra.mxu0 %v2539
    %3831 = vmatprep.subr.mxu0 0.0
    %3832 = vmatpush1.msra.mxu0 %v2538
    %3833 = vmatprep.subr.mxu0 0.0
    %3834 = vmatpush1.msra.mxu0 %v2537
    %3835 = vmatprep.subr.mxu0 0.0
    %3836 = vmatpush1.msra.mxu0 %v2536
    %3837 = vmatprep.subr.mxu0 0.0
    %3838 = vmatpush2.msra.mxu0 0.0
    %3839 = vmatprep.subr.mxu0 0.0
    %3840 = vmatpush2.msra.mxu0 0.0
    %3841 = vmatprep.subr.mxu0 0.0
    %3842 = vmatpush2.msra.mxu0 0.0
    %3843 = vmatprep.subr.mxu0 0.0
    %3844 = vmatpush2.msra.mxu0 0.0
    %3845 = vmatprep.subr.mxu0 0.0
    %3846 = vmatpush2.msra.mxu0 0.0
    %3847 = vmatprep.subr.mxu0 0.0
    %3848 = vmatpush2.msra.mxu0 0.0
    %3849 = vmatprep.subr.mxu0 0.0
    %3850 = vmatpush2.msra.mxu0 0.0
    %3851 = vmatprep.subr.mxu0 0.0
    %3852 = vmatpush2.msra.mxu0 0.0
    %3853 = vmatprep.subr.mxu0 0.0
    %3854 = vmatpush2.msra.mxu0 0.0
    %3855 = vmatprep.subr.mxu0 0.0
    %3856 = vmatpush2.msra.mxu0 0.0
    %3857 = vmatprep.subr.mxu0 0.0
    %3858 = vmatpush2.msra.mxu0 0.0
    %3859 = vmatprep.subr.mxu0 0.0
    %3860 = vmatpush2.msra.mxu0 0.0
    %3861 = vmatprep.subr.mxu0 0.0
    %3862 = vmatpush2.msra.mxu0 0.0
    %3863 = vmatprep.subr.mxu0 0.0
    %3864 = vmatpush2.msra.mxu0 0.0
    %3865 = vmatprep.subr.mxu0 0.0
    %3866 = vmatpush2.msra.mxu0 0.0
    %3867 = vmatprep.subr.mxu0 0.0
    %3868 = vmatpush2.msra.mxu0 0.0
    %3869 = vmatprep.mubr.f32.mxu0 0.0
    %3870 = vmatmul.mubr.f32.gmra.mxu0 %v3803
    %v3871 = vpop.f32.mrf.mxu0
    %v3872 = vadd.f32 0.0, %v3871
    %v3873 = vpop.f32.mrf.mxu0
    %3874 = vdwg.mxu0
    %v3876 = vsel %vm499, %v3801, 0
    %3878 = vmatprep.subr.mxu0 0.0
    %3879 = vmatpush1.msra.mxu0 0.0
    %3880 = vmatprep.subr.mxu0 0.0
    %3881 = vmatpush1.msra.mxu0 0.0
    %3882 = vmatprep.subr.mxu0 0.0
    %3883 = vmatpush1.msra.mxu0 0.0
    %3884 = vmatprep.subr.mxu0 0.0
    %3885 = vmatpush1.msra.mxu0 0.0
    %3886 = vmatprep.subr.mxu0 0.0
    %3887 = vmatpush1.msra.mxu0 0.0
    %3888 = vmatprep.subr.mxu0 0.0
    %3889 = vmatpush1.msra.mxu0 0.0
    %3890 = vmatprep.subr.mxu0 0.0
    %3891 = vmatpush1.msra.mxu0 0.0
    %3892 = vmatprep.subr.mxu0 0.0
    %3893 = vmatpush1.msra.mxu0 0.0
    %3894 = vmatprep.subr.mxu0 0.0
    %3895 = vmatpush1.msra.mxu0 %v2543
    %3896 = vmatprep.subr.mxu0 0.0
    %3897 = vmatpush1.msra.mxu0 %v2542
    %3898 = vmatprep.subr.mxu0 0.0
    %3899 = vmatpush1.msra.mxu0 %v2541
    %3900 = vmatprep.subr.mxu0 0.0
    %3901 = vmatpush1.msra.mxu0 %v2540
    %3902 = vmatprep.subr.mxu0 0.0
    %3903 = vmatpush1.msra.mxu0 %v2539
    %3904 = vmatprep.subr.mxu0 0.0
    %3905 = vmatpush1.msra.mxu0 %v2538
    %3906 = vmatprep.subr.mxu0 0.0
    %3907 = vmatpush1.msra.mxu0 %v2537
    %3908 = vmatprep.subr.mxu0 0.0
    %3909 = vmatpush1.msra.mxu0 %v2536
    %3910 = vmatprep.subr.mxu0 0.0
    %3911 = vmatpush2.msra.mxu0 0.0
    %3912 = vmatprep.subr.mxu0 0.0
    %3913 = vmatpush2.msra.mxu0 0.0
    %3914 = vmatprep.subr.mxu0 0.0
    %3915 = vmatpush2.msra.mxu0 0.0
    %3916 = vmatprep.subr.mxu0 0.0
    %3917 = vmatpush2.msra.mxu0 0.0
    %3918 = vmatprep.subr.mxu0 0.0
    %3919 = vmatpush2.msra.mxu0 0.0
    %3920 = vmatprep.subr.mxu0 0.0
    %3921 = vmatpush2.msra.mxu0 0.0
    %3922 = vmatprep.subr.mxu0 0.0
    %3923 = vmatpush2.msra.mxu0 0.0
    %3924 = vmatprep.subr.mxu0 0.0
    %3925 = vmatpush2.msra.mxu0 0.0
    %3926 = vmatprep.subr.mxu0 0.0
    %3927 = vmatpush2.msra.mxu0 0.0
    %3928 = vmatprep.subr.mxu0 0.0
    %3929 = vmatpush2.msra.mxu0 0.0
    %3930 = vmatprep.subr.mxu0 0.0
    %3931 = vmatpush2.msra.mxu0 0.0
    %3932 = vmatprep.subr.mxu0 0.0
    %3933 = vmatpush2.msra.mxu0 0.0
    %3934 = vmatprep.subr.mxu0 0.0
    %3935 = vmatpush2.msra.mxu0 0.0
    %3936 = vmatprep.subr.mxu0 0.0
    %3937 = vmatpush2.msra.mxu0 0.0
    %3938 = vmatprep.subr.mxu0 0.0
    %3939 = vmatpush2.msra.mxu0 0.0
    %3940 = vmatprep.subr.mxu0 0.0
    %3941 = vmatpush2.msra.mxu0 0.0
    %3942 = vmatprep.mubr.f32.mxu0 0.0
    %3943 = vmatmul.mubr.f32.gmra.mxu0 %v3876
    %v3944 = vpop.f32.mrf.mxu0
    %v3945 = vadd.f32 0.0, %v3944
    %v3946 = vpop.f32.mrf.mxu0
    %3947 = vdwg.mxu0
    %v3948 = vmul.f32 %v3872, 0.001953125
    %v3949 = vmul.f32 %v3945, 0.001953125
    %v3950 = vmul.f32 %v3948, %v3948
    %v3951 = vsub.f32 %v3949, %v3950
    %v3952 = vadd.f32 %v3951, 1e-05
    %v3953 = vrsqrt.pop %v3952
    %v3954 = vsub.f32 0.0, %v3948
    %v3955 = vmul.f32 %v3954, %v3953
    %v3957 = vsel %vm656, %v3953, 0
    %3959 = vmatprep.subr.mxu0 0.0
    %3960 = vmatpush1.msra.mxu0 0.0
    %3961 = vmatprep.subr.mxu0 0.0
    %3962 = vmatpush1.msra.mxu0 0.0
    %3963 = vmatprep.subr.mxu0 0.0
    %3964 = vmatpush1.msra.mxu0 0.0
    %3965 = vmatprep.subr.mxu0 0.0
    %3966 = vmatpush1.msra.mxu0 0.0
    %3967 = vmatprep.subr.mxu0 0.0
    %3968 = vmatpush1.msra.mxu0 0.0
    %3969 = vmatprep.subr.mxu0 0.0
    %3970 = vmatpush1.msra.mxu0 0.0
    %3971 = vmatprep.subr.mxu0 0.0
    %3972 = vmatpush1.msra.mxu0 0.0
    %3973 = vmatprep.subr.mxu0 0.0
    %3974 = vmatpush1.msra.mxu0 0.0
    %3975 = vmatprep.subr.mxu0 0.0
    %3976 = vmatpush1.msra.mxu0 0.0
    %3977 = vmatprep.subr.mxu0 0.0
    %3978 = vmatpush1.msra.mxu0 0.0
    %3979 = vmatprep.subr.mxu0 0.0
    %3980 = vmatpush1.msra.mxu0 0.0
    %3981 = vmatprep.subr.mxu0 0.0
    %3982 = vmatpush1.msra.mxu0 0.0
    %3983 = vmatprep.subr.mxu0 0.0
    %3984 = vmatpush1.msra.mxu0 0.0
    %3985 = vmatprep.subr.mxu0 0.0
    %3986 = vmatpush1.msra.mxu0 0.0
    %3987 = vmatprep.subr.mxu0 0.0
    %3988 = vmatpush1.msra.mxu0 0.0
    %3989 = vmatprep.subr.mxu0 0.0
    %3990 = vmatpush1.msra.mxu0 %v2703
    %3991 = vmatprep.subr.mxu0 0.0
    %3992 = vmatpush2.msra.mxu0 0.0
    %3993 = vmatprep.subr.mxu0 0.0
    %3994 = vmatpush2.msra.mxu0 0.0
    %3995 = vmatprep.subr.mxu0 0.0
    %3996 = vmatpush2.msra.mxu0 0.0
    %3997 = vmatprep.subr.mxu0 0.0
    %3998 = vmatpush2.msra.mxu0 0.0
    %3999 = vmatprep.subr.mxu0 0.0
    %4000 = vmatpush2.msra.mxu0 0.0
    %4001 = vmatprep.subr.mxu0 0.0
    %4002 = vmatpush2.msra.mxu0 0.0
    %4003 = vmatprep.subr.mxu0 0.0
    %4004 = vmatpush2.msra.mxu0 0.0
    %4005 = vmatprep.subr.mxu0 0.0
    %4006 = vmatpush2.msra.mxu0 0.0
    %4007 = vmatprep.subr.mxu0 0.0
    %4008 = vmatpush2.msra.mxu0 0.0
    %4009 = vmatprep.subr.mxu0 0.0
    %4010 = vmatpush2.msra.mxu0 0.0
    %4011 = vmatprep.subr.mxu0 0.0
    %4012 = vmatpush2.msra.mxu0 0.0
    %4013 = vmatprep.subr.mxu0 0.0
    %4014 = vmatpush2.msra.mxu0 0.0
    %4015 = vmatprep.subr.mxu0 0.0
    %4016 = vmatpush2.msra.mxu0 0.0
    %4017 = vmatprep.subr.mxu0 0.0
    %4018 = vmatpush2.msra.mxu0 0.0
    %4019 = vmatprep.subr.mxu0 0.0
    %4020 = vmatpush2.msra.mxu0 0.0
    %4021 = vmatprep.subr.mxu0 0.0
    %4022 = vmatpush2.msra.mxu0 0.0
    %4023 = vmatprep.mubr.f32.mxu0 0.0
    %4024 = vmatmul.mubr.f32.gmra.mxu0 %v3957
    %v4025 = vpop.f32.mrf.mxu0
    %v4026 = vadd.f32 0.0, %v4025
    %v4027 = vpop.f32.mrf.mxu0
    %4028 = vdwg.mxu0
    %v4030 = vsel %vm656, %v3955, 0
    %4032 = vmatprep.subr.mxu0 0.0
    %4033 = vmatpush1.msra.mxu0 0.0
    %4034 = vmatprep.subr.mxu0 0.0
    %4035 = vmatpush1.msra.mxu0 0.0
    %4036 = vmatprep.subr.mxu0 0.0
    %4037 = vmatpush1.msra.mxu0 0.0
    %4038 = vmatprep.subr.mxu0 0.0
    %4039 = vmatpush1.msra.mxu0 0.0
    %4040 = vmatprep.subr.mxu0 0.0
    %4041 = vmatpush1.msra.mxu0 0.0
    %4042 = vmatprep.subr.mxu0 0.0
    %4043 = vmatpush1.msra.mxu0 0.0
    %4044 = vmatprep.subr.mxu0 0.0
    %4045 = vmatpush1.msra.mxu0 0.0
    %4046 = vmatprep.subr.mxu0 0.0
    %4047 = vmatpush1.msra.mxu0 0.0
    %4048 = vmatprep.subr.mxu0 0.0
    %4049 = vmatpush1.msra.mxu0 0.0
    %4050 = vmatprep.subr.mxu0 0.0
    %4051 = vmatpush1.msra.mxu0 0.0
    %4052 = vmatprep.subr.mxu0 0.0
    %4053 = vmatpush1.msra.mxu0 0.0
    %4054 = vmatprep.subr.mxu0 0.0
    %4055 = vmatpush1.msra.mxu0 0.0
    %4056 = vmatprep.subr.mxu0 0.0
    %4057 = vmatpush1.msra.mxu0 0.0
    %4058 = vmatprep.subr.mxu0 0.0
    %4059 = vmatpush1.msra.mxu0 0.0
    %4060 = vmatprep.subr.mxu0 0.0
    %4061 = vmatpush1.msra.mxu0 0.0
    %4062 = vmatprep.subr.mxu0 0.0
    %4063 = vmatpush1.msra.mxu0 %v2703
    %4064 = vmatprep.subr.mxu0 0.0
    %4065 = vmatpush2.msra.mxu0 0.0
    %4066 = vmatprep.subr.mxu0 0.0
    %4067 = vmatpush2.msra.mxu0 0.0
    %4068 = vmatprep.subr.mxu0 0.0
    %4069 = vmatpush2.msra.mxu0 0.0
    %4070 = vmatprep.subr.mxu0 0.0
    %4071 = vmatpush2.msra.mxu0 0.0
    %4072 = vmatprep.subr.mxu0 0.0
    %4073 = vmatpush2.msra.mxu0 0.0
    %4074 = vmatprep.subr.mxu0 0.0
    %4075 = vmatpush2.msra.mxu0 0.0
    %4076 = vmatprep.subr.mxu0 0.0
    %4077 = vmatpush2.msra.mxu0 0.0
    %4078 = vmatprep.subr.mxu0 0.0
    %4079 = vmatpush2.msra.mxu0 0.0
    %4080 = vmatprep.subr.mxu0 0.0
    %4081 = vmatpush2.msra.mxu0 0.0
    %4082 = vmatprep.subr.mxu0 0.0
    %4083 = vmatpush2.msra.mxu0 0.0
    %4084 = vmatprep.subr.mxu0 0.0
    %4085 = vmatpush2.msra.mxu0 0.0
    %4086 = vmatprep.subr.mxu0 0.0
    %4087 = vmatpush2.msra.mxu0 0.0
    %4088 = vmatprep.subr.mxu0 0.0
    %4089 = vmatpush2.msra.mxu0 0.0
    %4090 = vmatprep.subr.mxu0 0.0
    %4091 = vmatpush2.msra.mxu0 0.0
    %4092 = vmatprep.subr.mxu0 0.0
    %4093 = vmatpush2.msra.mxu0 0.0
    %4094 = vmatprep.subr.mxu0 0.0
    %4095 = vmatpush2.msra.mxu0 0.0
    %4096 = vmatprep.mubr.f32.mxu0 0.0
    %4097 = vmatmul.mubr.f32.gmra.mxu0 %v4030
    %v4098 = vpop.f32.mrf.mxu0
    %v4099 = vadd.f32 0.0, %v4098
    %v4100 = vpop.f32.mrf.mxu0
    %4101 = vdwg.mxu0
    %v4102 = vlaneseq
    %v4103 = vshrl.u32 %v4102, 7
    %v4104 = vsub.s32 0, %v4103
    %v4105 = vrot.slane %v4026, %v4104
    %v4106 = vmul.f32 %v3754, %v4105
    %v4107 = vmul.f32 %v3759, %v4105
    %v4108 = vmul.f32 %v3764, %v4105
    %v4109 = vmul.f32 %v3769, %v4105
    %v4110 = vlaneseq
    %v4111 = vshrl.u32 %v4110, 7
    %v4112 = vsub.s32 0, %v4111
    %v4113 = vrot.slane %v4099, %v4112
    %v4114 = vadd.f32 %v4106, %v4113
    %v4115 = vadd.f32 %v4107, %v4113
    %v4116 = vadd.f32 %v4108, %v4113
    %v4117 = vadd.f32 %v4109, %v4113
    %v4118 = vmax.f32 %v4114, 0.0
    %v4119 = vmax.f32 %v4115, 0.0
    %v4120 = vmax.f32 %v4116, 0.0
    %v4121 = vmax.f32 %v4117, 0.0
    %4126 = vrot.lane.b32.xlu0 %v4118, 8
    %v4127 = vpop.permute.xlu0 %4126
    %4128 = vrot.lane.b32.xlu0 %v4119, 8
    %v4129 = vpop.permute.xlu0 %4128
    %4130 = vrot.lane.b32.xlu0 %v4120, 8
    %v4131 = vpop.permute.xlu0 %4130
    %4132 = vrot.lane.b32.xlu0 %v4121, 8
    %v4133 = vpop.permute.xlu0 %4132
    %4138 = vst.msk [vmem:[#allocation3 + $0x2] sm:$0xff] %vm2125, %v4127
    %4139 = vst.msk [vmem:[#allocation3 + $0xa] sm:$0xff] %vm2125, %v4129
    %4140 = vst.msk [vmem:[#allocation3 + $0x1a] sm:$0xff] %vm2125, %v4131
    %4141 = vst.msk [vmem:[#allocation3 + $0x22] sm:$0xff] %vm2125, %v4133
    %v4142 = vld [vmem:[#allocation3] sm:$0xff]
    %v4143 = vld [vmem:[#allocation3 + $0x8] sm:$0xff]
    %v4144 = vld [vmem:[#allocation3 + $0x18] sm:$0xff]
    %v4145 = vld [vmem:[#allocation3 + $0x20] sm:$0xff]
    %v4146 = vld [vmem:[#allocation20] sm:$0x1]
    %v4147 = vlaneseq
    %v4148 = vshrl.u32 %v4147, 7
    %v4149 = vsub.s32 0, %v4148
    %v4150 = vrot.slane %v4146, %v4149
    %v4151 = vmul.f32 %v4142, %v4150
    %v4152 = vmul.f32 %v4143, %v4150
    %v4153 = vmul.f32 %v4144, %v4150
    %v4154 = vmul.f32 %v4145, %v4150
    %v4155 = vadd.f32 %v4151, 0.0
    %v4156 = vadd.f32 %v4152, 0.0
    %v4157 = vadd.f32 %v4153, 0.0
    %v4158 = vadd.f32 %v4154, 0.0
    %v4159 = vld [vmem:[#allocation20 + $0x1] sm:$0x1]
    %v4160 = vlaneseq
    %v4161 = vshrl.u32 %v4160, 7
    %v4162 = vsub.s32 0, %v4161
    %v4163 = vrot.slane %v4159, %v4162
    %4165 = vrot.lane.b32.xlu0 %v4163, 4
    %v4166 = vpop.permute.xlu0 %4165
    %v4168 = vmul.f32 %v4142, %v4166
    %v4169 = vmul.f32 %v4143, %v4166
    %v4170 = vmul.f32 %v4144, %v4166
    %v4171 = vmul.f32 %v4145, %v4166
    %4176 = vrot.lane.b32.xlu0 %v4168, 124
    %v4177 = vpop.permute.xlu0 %4176
    %4178 = vrot.lane.b32.xlu0 %v4169, 124
    %v4179 = vpop.permute.xlu0 %4178
    %4180 = vrot.lane.b32.xlu0 %v4170, 124
    %v4181 = vpop.permute.xlu0 %4180
    %4182 = vrot.lane.b32.xlu0 %v4171, 124
    %v4183 = vpop.permute.xlu0 %4182
    %v4188 = vadd.f32 %v4155, %v4177
    %v4189 = vadd.f32 %v4156, %v4179
    %v4190 = vadd.f32 %v4157, %v4181
    %v4191 = vadd.f32 %v4158, %v4183
    %v4192 = vld [vmem:[#allocation20 + $0x2] sm:$0x1]
    %v4193 = vlaneseq
    %v4194 = vshrl.u32 %v4193, 7
    %v4195 = vsub.s32 0, %v4194
    %v4196 = vrot.slane %v4192, %v4195
    %4198 = vrot.lane.b32.xlu0 %v4196, 8
    %v4199 = vpop.permute.xlu0 %4198
    %v4201 = vmul.f32 %v4142, %v4199
    %v4202 = vmul.f32 %v4143, %v4199
    %v4203 = vmul.f32 %v4144, %v4199
    %v4204 = vmul.f32 %v4145, %v4199
    %4209 = vrot.lane.b32.xlu0 %v4201, 120
    %v4210 = vpop.permute.xlu0 %4209
    %4211 = vrot.lane.b32.xlu0 %v4202, 120
    %v4212 = vpop.permute.xlu0 %4211
    %4213 = vrot.lane.b32.xlu0 %v4203, 120
    %v4214 = vpop.permute.xlu0 %4213
    %4215 = vrot.lane.b32.xlu0 %v4204, 120
    %v4216 = vpop.permute.xlu0 %4215
    %v4221 = vadd.f32 %v4188, %v4210
    %v4222 = vadd.f32 %v4189, %v4212
    %v4223 = vadd.f32 %v4190, %v4214
    %v4224 = vadd.f32 %v4191, %v4216
    %v4225 = vld [vmem:[#allocation20 + $0x3] sm:$0x1]
    %v4226 = vlaneseq
    %v4227 = vshrl.u32 %v4226, 7
    %v4228 = vsub.s32 0, %v4227
    %v4229 = vrot.slane %v4225, %v4228
    %4231 = vrot.lane.b32.xlu0 %v4229, 12
    %v4232 = vpop.permute.xlu0 %4231
    %v4234 = vmul.f32 %v4142, %v4232
    %v4235 = vmul.f32 %v4143, %v4232
    %v4236 = vmul.f32 %v4144, %v4232
    %v4237 = vmul.f32 %v4145, %v4232
    %4242 = vrot.lane.b32.xlu0 %v4234, 116
    %v4243 = vpop.permute.xlu0 %4242
    %4244 = vrot.lane.b32.xlu0 %v4235, 116
    %v4245 = vpop.permute.xlu0 %4244
    %4246 = vrot.lane.b32.xlu0 %v4236, 116
    %v4247 = vpop.permute.xlu0 %4246
    %4248 = vrot.lane.b32.xlu0 %v4237, 116
    %v4249 = vpop.permute.xlu0 %4248
    %v4254 = vadd.f32 %v4221, %v4243
    %v4255 = vadd.f32 %v4222, %v4245
    %v4256 = vadd.f32 %v4223, %v4247
    %v4257 = vadd.f32 %v4224, %v4249
    %v4258 = vld [vmem:[#allocation20 + $0x4] sm:$0x1]
    %v4259 = vlaneseq
    %v4260 = vshrl.u32 %v4259, 7
    %v4261 = vsub.s32 0, %v4260
    %v4262 = vrot.slane %v4258, %v4261
    %4264 = vrot.lane.b32.xlu0 %v4262, 16
    %v4265 = vpop.permute.xlu0 %4264
    %v4267 = vmul.f32 %v4142, %v4265
    %v4268 = vmul.f32 %v4143, %v4265
    %v4269 = vmul.f32 %v4144, %v4265
    %v4270 = vmul.f32 %v4145, %v4265
    %4275 = vrot.lane.b32.xlu0 %v4267, 112
    %v4276 = vpop.permute.xlu0 %4275
    %4277 = vrot.lane.b32.xlu0 %v4268, 112
    %v4278 = vpop.permute.xlu0 %4277
    %4279 = vrot.lane.b32.xlu0 %v4269, 112
    %v4280 = vpop.permute.xlu0 %4279
    %4281 = vrot.lane.b32.xlu0 %v4270, 112
    %v4282 = vpop.permute.xlu0 %4281
    %v4287 = vadd.f32 %v4254, %v4276
    %v4288 = vadd.f32 %v4255, %v4278
    %v4289 = vadd.f32 %v4256, %v4280
    %v4290 = vadd.f32 %v4257, %v4282
    %v4291 = vld [vmem:[#allocation3 + $0x1] sm:$0xff]
    %v4292 = vld [vmem:[#allocation3 + $0x9] sm:$0xff]
    %v4293 = vld [vmem:[#allocation3 + $0x19] sm:$0xff]
    %v4294 = vld [vmem:[#allocation3 + $0x21] sm:$0xff]
    %s4295 = scalar_lea.vmem [#allocation20], 8
    %v4296 = vld [vmem:[%s4295] sm:$0x1]
    %v4297 = vlaneseq
    %v4298 = vshrl.u32 %v4297, 7
    %v4299 = vsub.s32 0, %v4298
    %v4300 = vrot.slane %v4296, %v4299
    %v4301 = vmul.f32 %v4291, %v4300
    %v4302 = vmul.f32 %v4292, %v4300
    %v4303 = vmul.f32 %v4293, %v4300
    %v4304 = vmul.f32 %v4294, %v4300
    %v4305 = vadd.f32 %v4287, %v4301
    %v4306 = vadd.f32 %v4288, %v4302
    %v4307 = vadd.f32 %v4289, %v4303
    %v4308 = vadd.f32 %v4290, %v4304
    %v4309 = vld [vmem:[%s4295 + $0x1] sm:$0x1]
    %v4310 = vlaneseq
    %v4311 = vshrl.u32 %v4310, 7
    %v4312 = vsub.s32 0, %v4311
    %v4313 = vrot.slane %v4309, %v4312
    %4315 = vrot.lane.b32.xlu0 %v4313, 4
    %v4316 = vpop.permute.xlu0 %4315
    %v4318 = vmul.f32 %v4291, %v4316
    %v4319 = vmul.f32 %v4292, %v4316
    %v4320 = vmul.f32 %v4293, %v4316
    %v4321 = vmul.f32 %v4294, %v4316
    %4326 = vrot.lane.b32.xlu0 %v4318, 124
    %v4327 = vpop.permute.xlu0 %4326
    %4328 = vrot.lane.b32.xlu0 %v4319, 124
    %v4329 = vpop.permute.xlu0 %4328
    %4330 = vrot.lane.b32.xlu0 %v4320, 124
    %v4331 = vpop.permute.xlu0 %4330
    %4332 = vrot.lane.b32.xlu0 %v4321, 124
    %v4333 = vpop.permute.xlu0 %4332
    %v4338 = vadd.f32 %v4305, %v4327
    %v4339 = vadd.f32 %v4306, %v4329
    %v4340 = vadd.f32 %v4307, %v4331
    %v4341 = vadd.f32 %v4308, %v4333
    %v4342 = vld [vmem:[%s4295 + $0x2] sm:$0x1]
    %v4343 = vlaneseq
    %v4344 = vshrl.u32 %v4343, 7
    %v4345 = vsub.s32 0, %v4344
    %v4346 = vrot.slane %v4342, %v4345
    %4348 = vrot.lane.b32.xlu0 %v4346, 8
    %v4349 = vpop.permute.xlu0 %4348
    %v4351 = vmul.f32 %v4291, %v4349
    %v4352 = vmul.f32 %v4292, %v4349
    %v4353 = vmul.f32 %v4293, %v4349
    %v4354 = vmul.f32 %v4294, %v4349
    %4359 = vrot.lane.b32.xlu0 %v4351, 120
    %v4360 = vpop.permute.xlu0 %4359
    %4361 = vrot.lane.b32.xlu0 %v4352, 120
    %v4362 = vpop.permute.xlu0 %4361
    %4363 = vrot.lane.b32.xlu0 %v4353, 120
    %v4364 = vpop.permute.xlu0 %4363
    %4365 = vrot.lane.b32.xlu0 %v4354, 120
    %v4366 = vpop.permute.xlu0 %4365
    %v4371 = vadd.f32 %v4338, %v4360
    %v4372 = vadd.f32 %v4339, %v4362
    %v4373 = vadd.f32 %v4340, %v4364
    %v4374 = vadd.f32 %v4341, %v4366
    %v4375 = vld [vmem:[%s4295 + $0x3] sm:$0x1]
    %v4376 = vlaneseq
    %v4377 = vshrl.u32 %v4376, 7
    %v4378 = vsub.s32 0, %v4377
    %v4379 = vrot.slane %v4375, %v4378
    %4381 = vrot.lane.b32.xlu0 %v4379, 12
    %v4382 = vpop.permute.xlu0 %4381
    %v4384 = vmul.f32 %v4291, %v4382
    %v4385 = vmul.f32 %v4292, %v4382
    %v4386 = vmul.f32 %v4293, %v4382
    %v4387 = vmul.f32 %v4294, %v4382
    %4392 = vrot.lane.b32.xlu0 %v4384, 116
    %v4393 = vpop.permute.xlu0 %4392
    %4394 = vrot.lane.b32.xlu0 %v4385, 116
    %v4395 = vpop.permute.xlu0 %4394
    %4396 = vrot.lane.b32.xlu0 %v4386, 116
    %v4397 = vpop.permute.xlu0 %4396
    %4398 = vrot.lane.b32.xlu0 %v4387, 116
    %v4399 = vpop.permute.xlu0 %4398
    %v4404 = vadd.f32 %v4371, %v4393
    %v4405 = vadd.f32 %v4372, %v4395
    %v4406 = vadd.f32 %v4373, %v4397
    %v4407 = vadd.f32 %v4374, %v4399
    %v4408 = vld [vmem:[%s4295 + $0x4] sm:$0x1]
    %v4409 = vlaneseq
    %v4410 = vshrl.u32 %v4409, 7
    %v4411 = vsub.s32 0, %v4410
    %v4412 = vrot.slane %v4408, %v4411
    %4414 = vrot.lane.b32.xlu0 %v4412, 16
    %v4415 = vpop.permute.xlu0 %4414
    %v4417 = vmul.f32 %v4291, %v4415
    %v4418 = vmul.f32 %v4292, %v4415
    %v4419 = vmul.f32 %v4293, %v4415
    %v4420 = vmul.f32 %v4294, %v4415
    %4425 = vrot.lane.b32.xlu0 %v4417, 112
    %v4426 = vpop.permute.xlu0 %4425
    %4427 = vrot.lane.b32.xlu0 %v4418, 112
    %v4428 = vpop.permute.xlu0 %4427
    %4429 = vrot.lane.b32.xlu0 %v4419, 112
    %v4430 = vpop.permute.xlu0 %4429
    %4431 = vrot.lane.b32.xlu0 %v4420, 112
    %v4432 = vpop.permute.xlu0 %4431
    %v4437 = vadd.f32 %v4404, %v4426
    %v4438 = vadd.f32 %v4405, %v4428
    %v4439 = vadd.f32 %v4406, %v4430
    %v4440 = vadd.f32 %v4407, %v4432
    %v4441 = vld [vmem:[#allocation3 + $0x2] sm:$0xff]
    %v4442 = vld [vmem:[#allocation3 + $0xa] sm:$0xff]
    %v4443 = vld [vmem:[#allocation3 + $0x1a] sm:$0xff]
    %v4444 = vld [vmem:[#allocation3 + $0x22] sm:$0xff]
    %s4445 = scalar_lea.vmem [#allocation20], 16
    %v4446 = vld [vmem:[%s4445] sm:$0x1]
    %v4447 = vlaneseq
    %v4448 = vshrl.u32 %v4447, 7
    %v4449 = vsub.s32 0, %v4448
    %v4450 = vrot.slane %v4446, %v4449
    %v4451 = vmul.f32 %v4441, %v4450
    %v4452 = vmul.f32 %v4442, %v4450
    %v4453 = vmul.f32 %v4443, %v4450
    %v4454 = vmul.f32 %v4444, %v4450
    %v4455 = vadd.f32 %v4437, %v4451
    %v4456 = vadd.f32 %v4438, %v4452
    %v4457 = vadd.f32 %v4439, %v4453
    %v4458 = vadd.f32 %v4440, %v4454
    %v4459 = vld [vmem:[%s4445 + $0x1] sm:$0x1]
    %v4460 = vlaneseq
    %v4461 = vshrl.u32 %v4460, 7
    %v4462 = vsub.s32 0, %v4461
    %v4463 = vrot.slane %v4459, %v4462
    %4465 = vrot.lane.b32.xlu0 %v4463, 4
    %v4466 = vpop.permute.xlu0 %4465
    %v4468 = vmul.f32 %v4441, %v4466
    %v4469 = vmul.f32 %v4442, %v4466
    %v4470 = vmul.f32 %v4443, %v4466
    %v4471 = vmul.f32 %v4444, %v4466
    %4476 = vrot.lane.b32.xlu0 %v4468, 124
    %v4477 = vpop.permute.xlu0 %4476
    %4478 = vrot.lane.b32.xlu0 %v4469, 124
    %v4479 = vpop.permute.xlu0 %4478
    %4480 = vrot.lane.b32.xlu0 %v4470, 124
    %v4481 = vpop.permute.xlu0 %4480
    %4482 = vrot.lane.b32.xlu0 %v4471, 124
    %v4483 = vpop.permute.xlu0 %4482
    %v4488 = vadd.f32 %v4455, %v4477
    %v4489 = vadd.f32 %v4456, %v4479
    %v4490 = vadd.f32 %v4457, %v4481
    %v4491 = vadd.f32 %v4458, %v4483
    %v4492 = vld [vmem:[%s4445 + $0x2] sm:$0x1]
    %v4493 = vlaneseq
    %v4494 = vshrl.u32 %v4493, 7
    %v4495 = vsub.s32 0, %v4494
    %v4496 = vrot.slane %v4492, %v4495
    %4498 = vrot.lane.b32.xlu0 %v4496, 8
    %v4499 = vpop.permute.xlu0 %4498
    %v4501 = vmul.f32 %v4441, %v4499
    %v4502 = vmul.f32 %v4442, %v4499
    %v4503 = vmul.f32 %v4443, %v4499
    %v4504 = vmul.f32 %v4444, %v4499
    %4509 = vrot.lane.b32.xlu0 %v4501, 120
    %v4510 = vpop.permute.xlu0 %4509
    %4511 = vrot.lane.b32.xlu0 %v4502, 120
    %v4512 = vpop.permute.xlu0 %4511
    %4513 = vrot.lane.b32.xlu0 %v4503, 120
    %v4514 = vpop.permute.xlu0 %4513
    %4515 = vrot.lane.b32.xlu0 %v4504, 120
    %v4516 = vpop.permute.xlu0 %4515
    %v4521 = vadd.f32 %v4488, %v4510
    %v4522 = vadd.f32 %v4489, %v4512
    %v4523 = vadd.f32 %v4490, %v4514
    %v4524 = vadd.f32 %v4491, %v4516
    %v4525 = vld [vmem:[%s4445 + $0x3] sm:$0x1]
    %v4526 = vlaneseq
    %v4527 = vshrl.u32 %v4526, 7
    %v4528 = vsub.s32 0, %v4527
    %v4529 = vrot.slane %v4525, %v4528
    %4531 = vrot.lane.b32.xlu0 %v4529, 12
    %v4532 = vpop.permute.xlu0 %4531
    %v4534 = vmul.f32 %v4441, %v4532
    %v4535 = vmul.f32 %v4442, %v4532
    %v4536 = vmul.f32 %v4443, %v4532
    %v4537 = vmul.f32 %v4444, %v4532
    %4542 = vrot.lane.b32.xlu0 %v4534, 116
    %v4543 = vpop.permute.xlu0 %4542
    %4544 = vrot.lane.b32.xlu0 %v4535, 116
    %v4545 = vpop.permute.xlu0 %4544
    %4546 = vrot.lane.b32.xlu0 %v4536, 116
    %v4547 = vpop.permute.xlu0 %4546
    %4548 = vrot.lane.b32.xlu0 %v4537, 116
    %v4549 = vpop.permute.xlu0 %4548
    %v4554 = vadd.f32 %v4521, %v4543
    %v4555 = vadd.f32 %v4522, %v4545
    %v4556 = vadd.f32 %v4523, %v4547
    %v4557 = vadd.f32 %v4524, %v4549
    %v4558 = vld [vmem:[%s4445 + $0x4] sm:$0x1]
    %v4559 = vlaneseq
    %v4560 = vshrl.u32 %v4559, 7
    %v4561 = vsub.s32 0, %v4560
    %v4562 = vrot.slane %v4558, %v4561
    %4564 = vrot.lane.b32.xlu0 %v4562, 16
    %v4565 = vpop.permute.xlu0 %4564
    %v4567 = vmul.f32 %v4441, %v4565
    %v4568 = vmul.f32 %v4442, %v4565
    %v4569 = vmul.f32 %v4443, %v4565
    %v4570 = vmul.f32 %v4444, %v4565
    %4575 = vrot.lane.b32.xlu0 %v4567, 112
    %v4576 = vpop.permute.xlu0 %4575
    %4577 = vrot.lane.b32.xlu0 %v4568, 112
    %v4578 = vpop.permute.xlu0 %4577
    %4579 = vrot.lane.b32.xlu0 %v4569, 112
    %v4580 = vpop.permute.xlu0 %4579
    %4581 = vrot.lane.b32.xlu0 %v4570, 112
    %v4582 = vpop.permute.xlu0 %4581
    %v4587 = vadd.f32 %v4554, %v4576
    %v4588 = vadd.f32 %v4555, %v4578
    %v4589 = vadd.f32 %v4556, %v4580
    %v4590 = vadd.f32 %v4557, %v4582
    %v4591 = vld [vmem:[#allocation3 + $0x3] sm:$0xff]
    %v4592 = vld [vmem:[#allocation3 + $0xb] sm:$0xff]
    %v4593 = vld [vmem:[#allocation3 + $0x1b] sm:$0xff]
    %v4594 = vld [vmem:[#allocation3 + $0x23] sm:$0xff]
    %s4595 = scalar_lea.vmem [#allocation20], 24
    %v4596 = vld [vmem:[%s4595] sm:$0x1]
    %v4597 = vlaneseq
    %v4598 = vshrl.u32 %v4597, 7
    %v4599 = vsub.s32 0, %v4598
    %v4600 = vrot.slane %v4596, %v4599
    %v4601 = vmul.f32 %v4591, %v4600
    %v4602 = vmul.f32 %v4592, %v4600
    %v4603 = vmul.f32 %v4593, %v4600
    %v4604 = vmul.f32 %v4594, %v4600
    %v4605 = vadd.f32 %v4587, %v4601
    %v4606 = vadd.f32 %v4588, %v4602
    %v4607 = vadd.f32 %v4589, %v4603
    %v4608 = vadd.f32 %v4590, %v4604
    %v4609 = vld [vmem:[%s4595 + $0x1] sm:$0x1]
    %v4610 = vlaneseq
    %v4611 = vshrl.u32 %v4610, 7
    %v4612 = vsub.s32 0, %v4611
    %v4613 = vrot.slane %v4609, %v4612
    %4615 = vrot.lane.b32.xlu0 %v4613, 4
    %v4616 = vpop.permute.xlu0 %4615
    %v4618 = vmul.f32 %v4591, %v4616
    %v4619 = vmul.f32 %v4592, %v4616
    %v4620 = vmul.f32 %v4593, %v4616
    %v4621 = vmul.f32 %v4594, %v4616
    %4626 = vrot.lane.b32.xlu0 %v4618, 124
    %v4627 = vpop.permute.xlu0 %4626
    %4628 = vrot.lane.b32.xlu0 %v4619, 124
    %v4629 = vpop.permute.xlu0 %4628
    %4630 = vrot.lane.b32.xlu0 %v4620, 124
    %v4631 = vpop.permute.xlu0 %4630
    %4632 = vrot.lane.b32.xlu0 %v4621, 124
    %v4633 = vpop.permute.xlu0 %4632
    %v4638 = vadd.f32 %v4605, %v4627
    %v4639 = vadd.f32 %v4606, %v4629
    %v4640 = vadd.f32 %v4607, %v4631
    %v4641 = vadd.f32 %v4608, %v4633
    %v4642 = vld [vmem:[%s4595 + $0x2] sm:$0x1]
    %v4643 = vlaneseq
    %v4644 = vshrl.u32 %v4643, 7
    %v4645 = vsub.s32 0, %v4644
    %v4646 = vrot.slane %v4642, %v4645
    %4648 = vrot.lane.b32.xlu0 %v4646, 8
    %v4649 = vpop.permute.xlu0 %4648
    %v4651 = vmul.f32 %v4591, %v4649
    %v4652 = vmul.f32 %v4592, %v4649
    %v4653 = vmul.f32 %v4593, %v4649
    %v4654 = vmul.f32 %v4594, %v4649
    %4659 = vrot.lane.b32.xlu0 %v4651, 120
    %v4660 = vpop.permute.xlu0 %4659
    %4661 = vrot.lane.b32.xlu0 %v4652, 120
    %v4662 = vpop.permute.xlu0 %4661
    %4663 = vrot.lane.b32.xlu0 %v4653, 120
    %v4664 = vpop.permute.xlu0 %4663
    %4665 = vrot.lane.b32.xlu0 %v4654, 120
    %v4666 = vpop.permute.xlu0 %4665
    %v4671 = vadd.f32 %v4638, %v4660
    %v4672 = vadd.f32 %v4639, %v4662
    %v4673 = vadd.f32 %v4640, %v4664
    %v4674 = vadd.f32 %v4641, %v4666
    %v4675 = vld [vmem:[%s4595 + $0x3] sm:$0x1]
    %v4676 = vlaneseq
    %v4677 = vshrl.u32 %v4676, 7
    %v4678 = vsub.s32 0, %v4677
    %v4679 = vrot.slane %v4675, %v4678
    %4681 = vrot.lane.b32.xlu0 %v4679, 12
    %v4682 = vpop.permute.xlu0 %4681
    %v4684 = vmul.f32 %v4591, %v4682
    %v4685 = vmul.f32 %v4592, %v4682
    %v4686 = vmul.f32 %v4593, %v4682
    %v4687 = vmul.f32 %v4594, %v4682
    %4692 = vrot.lane.b32.xlu0 %v4684, 116
    %v4693 = vpop.permute.xlu0 %4692
    %4694 = vrot.lane.b32.xlu0 %v4685, 116
    %v4695 = vpop.permute.xlu0 %4694
    %4696 = vrot.lane.b32.xlu0 %v4686, 116
    %v4697 = vpop.permute.xlu0 %4696
    %4698 = vrot.lane.b32.xlu0 %v4687, 116
    %v4699 = vpop.permute.xlu0 %4698
    %v4704 = vadd.f32 %v4671, %v4693
    %v4705 = vadd.f32 %v4672, %v4695
    %v4706 = vadd.f32 %v4673, %v4697
    %v4707 = vadd.f32 %v4674, %v4699
    %v4708 = vld [vmem:[%s4595 + $0x4] sm:$0x1]
    %v4709 = vlaneseq
    %v4710 = vshrl.u32 %v4709, 7
    %v4711 = vsub.s32 0, %v4710
    %v4712 = vrot.slane %v4708, %v4711
    %4714 = vrot.lane.b32.xlu0 %v4712, 16
    %v4715 = vpop.permute.xlu0 %4714
    %v4717 = vmul.f32 %v4591, %v4715
    %v4718 = vmul.f32 %v4592, %v4715
    %v4719 = vmul.f32 %v4593, %v4715
    %v4720 = vmul.f32 %v4594, %v4715
    %4725 = vrot.lane.b32.xlu0 %v4717, 112
    %v4726 = vpop.permute.xlu0 %4725
    %4727 = vrot.lane.b32.xlu0 %v4718, 112
    %v4728 = vpop.permute.xlu0 %4727
    %4729 = vrot.lane.b32.xlu0 %v4719, 112
    %v4730 = vpop.permute.xlu0 %4729
    %4731 = vrot.lane.b32.xlu0 %v4720, 112
    %v4732 = vpop.permute.xlu0 %4731
    %v4737 = vadd.f32 %v4704, %v4726
    %v4738 = vadd.f32 %v4705, %v4728
    %v4739 = vadd.f32 %v4706, %v4730
    %v4740 = vadd.f32 %v4707, %v4732
    %v4741 = vld [vmem:[#allocation3 + $0x4] sm:$0xff]
    %v4742 = vld [vmem:[#allocation3 + $0xc] sm:$0xff]
    %v4743 = vld [vmem:[#allocation3 + $0x1c] sm:$0xff]
    %v4744 = vld [vmem:[#allocation3 + $0x24] sm:$0xff]
    %s4745 = scalar_lea.vmem [#allocation20], 32
    %v4746 = vld [vmem:[%s4745] sm:$0x1]
    %v4747 = vlaneseq
    %v4748 = vshrl.u32 %v4747, 7
    %v4749 = vsub.s32 0, %v4748
    %v4750 = vrot.slane %v4746, %v4749
    %v4751 = vmul.f32 %v4741, %v4750
    %v4752 = vmul.f32 %v4742, %v4750
    %v4753 = vmul.f32 %v4743, %v4750
    %v4754 = vmul.f32 %v4744, %v4750
    %v4755 = vadd.f32 %v4737, %v4751
    %v4756 = vadd.f32 %v4738, %v4752
    %v4757 = vadd.f32 %v4739, %v4753
    %v4758 = vadd.f32 %v4740, %v4754
    %v4759 = vld [vmem:[%s4745 + $0x1] sm:$0x1]
    %v4760 = vlaneseq
    %v4761 = vshrl.u32 %v4760, 7
    %v4762 = vsub.s32 0, %v4761
    %v4763 = vrot.slane %v4759, %v4762
    %4765 = vrot.lane.b32.xlu0 %v4763, 4
    %v4766 = vpop.permute.xlu0 %4765
    %v4768 = vmul.f32 %v4741, %v4766
    %v4769 = vmul.f32 %v4742, %v4766
    %v4770 = vmul.f32 %v4743, %v4766
    %v4771 = vmul.f32 %v4744, %v4766
    %4776 = vrot.lane.b32.xlu0 %v4768, 124
    %v4777 = vpop.permute.xlu0 %4776
    %4778 = vrot.lane.b32.xlu0 %v4769, 124
    %v4779 = vpop.permute.xlu0 %4778
    %4780 = vrot.lane.b32.xlu0 %v4770, 124
    %v4781 = vpop.permute.xlu0 %4780
    %4782 = vrot.lane.b32.xlu0 %v4771, 124
    %v4783 = vpop.permute.xlu0 %4782
    %v4788 = vadd.f32 %v4755, %v4777
    %v4789 = vadd.f32 %v4756, %v4779
    %v4790 = vadd.f32 %v4757, %v4781
    %v4791 = vadd.f32 %v4758, %v4783
    %v4792 = vld [vmem:[%s4745 + $0x2] sm:$0x1]
    %v4793 = vlaneseq
    %v4794 = vshrl.u32 %v4793, 7
    %v4795 = vsub.s32 0, %v4794
    %v4796 = vrot.slane %v4792, %v4795
    %4798 = vrot.lane.b32.xlu0 %v4796, 8
    %v4799 = vpop.permute.xlu0 %4798
    %v4801 = vmul.f32 %v4741, %v4799
    %v4802 = vmul.f32 %v4742, %v4799
    %v4803 = vmul.f32 %v4743, %v4799
    %v4804 = vmul.f32 %v4744, %v4799
    %4809 = vrot.lane.b32.xlu0 %v4801, 120
    %v4810 = vpop.permute.xlu0 %4809
    %4811 = vrot.lane.b32.xlu0 %v4802, 120
    %v4812 = vpop.permute.xlu0 %4811
    %4813 = vrot.lane.b32.xlu0 %v4803, 120
    %v4814 = vpop.permute.xlu0 %4813
    %4815 = vrot.lane.b32.xlu0 %v4804, 120
    %v4816 = vpop.permute.xlu0 %4815
    %v4821 = vadd.f32 %v4788, %v4810
    %v4822 = vadd.f32 %v4789, %v4812
    %v4823 = vadd.f32 %v4790, %v4814
    %v4824 = vadd.f32 %v4791, %v4816
    %v4825 = vld [vmem:[%s4745 + $0x3] sm:$0x1]
    %v4826 = vlaneseq
    %v4827 = vshrl.u32 %v4826, 7
    %v4828 = vsub.s32 0, %v4827
    %v4829 = vrot.slane %v4825, %v4828
    %4831 = vrot.lane.b32.xlu0 %v4829, 12
    %v4832 = vpop.permute.xlu0 %4831
    %v4834 = vmul.f32 %v4741, %v4832
    %v4835 = vmul.f32 %v4742, %v4832
    %v4836 = vmul.f32 %v4743, %v4832
    %v4837 = vmul.f32 %v4744, %v4832
    %4842 = vrot.lane.b32.xlu0 %v4834, 116
    %v4843 = vpop.permute.xlu0 %4842
    %4844 = vrot.lane.b32.xlu0 %v4835, 116
    %v4845 = vpop.permute.xlu0 %4844
    %4846 = vrot.lane.b32.xlu0 %v4836, 116
    %v4847 = vpop.permute.xlu0 %4846
    %4848 = vrot.lane.b32.xlu0 %v4837, 116
    %v4849 = vpop.permute.xlu0 %4848
    %v4854 = vadd.f32 %v4821, %v4843
    %v4855 = vadd.f32 %v4822, %v4845
    %v4856 = vadd.f32 %v4823, %v4847
    %v4857 = vadd.f32 %v4824, %v4849
    %v4858 = vld [vmem:[%s4745 + $0x4] sm:$0x1]
    %v4859 = vlaneseq
    %v4860 = vshrl.u32 %v4859, 7
    %v4861 = vsub.s32 0, %v4860
    %v4862 = vrot.slane %v4858, %v4861
    %4864 = vrot.lane.b32.xlu0 %v4862, 16
    %v4865 = vpop.permute.xlu0 %4864
    %v4867 = vmul.f32 %v4741, %v4865
    %v4868 = vmul.f32 %v4742, %v4865
    %v4869 = vmul.f32 %v4743, %v4865
    %v4870 = vmul.f32 %v4744, %v4865
    %4875 = vrot.lane.b32.xlu0 %v4867, 112
    %v4876 = vpop.permute.xlu0 %4875
    %4877 = vrot.lane.b32.xlu0 %v4868, 112
    %v4878 = vpop.permute.xlu0 %4877
    %4879 = vrot.lane.b32.xlu0 %v4869, 112
    %v4880 = vpop.permute.xlu0 %4879
    %4881 = vrot.lane.b32.xlu0 %v4870, 112
    %v4882 = vpop.permute.xlu0 %4881
    %v4887 = vadd.f32 %v4854, %v4876
    %v4888 = vadd.f32 %v4855, %v4878
    %v4889 = vadd.f32 %v4856, %v4880
    %v4890 = vadd.f32 %v4857, %v4882
    %v4891 = vld [vmem:[#allocation21] sm:$0xff]
    %v4892 = vld [vmem:[#allocation21 + $0x8] sm:$0xff]
    %v4893 = vld [vmem:[#allocation21 + $0x10] sm:$0xff]
    %v4894 = vld [vmem:[#allocation21 + $0x18] sm:$0xff]
    %v4895 = vld [vmem:[#allocation21 + $0x20] sm:$0xff]
    %v4896 = vld [vmem:[#allocation21 + $0x28] sm:$0xff]
    %v4897 = vld [vmem:[#allocation21 + $0x30] sm:$0xff]
    %v4898 = vld [vmem:[#allocation21 + $0x38] sm:$0xff]
    %v4900 = vsel %vm499, %v4887, 0
    %v4903 = vsel %vm499, %v4888, 0
    %v4906 = vsel %vm499, %v4889, 0
    %v4909 = vsel %vm499, %v4890, 0
    %4911 = vmatprep.subr.mxu0 0.0
    %4912 = vmatpush1.msra.mxu0 0.0
    %4913 = vmatprep.subr.mxu0 0.0
    %4914 = vmatpush1.msra.mxu0 0.0
    %4915 = vmatprep.subr.mxu0 0.0
    %4916 = vmatpush1.msra.mxu0 0.0
    %4917 = vmatprep.subr.mxu0 0.0
    %4918 = vmatpush1.msra.mxu0 0.0
    %4919 = vmatprep.subr.mxu0 0.0
    %4920 = vmatpush1.msra.mxu0 0.0
    %4921 = vmatprep.subr.mxu0 0.0
    %4922 = vmatpush1.msra.mxu0 0.0
    %4923 = vmatprep.subr.mxu0 0.0
    %4924 = vmatpush1.msra.mxu0 0.0
    %4925 = vmatprep.subr.mxu0 0.0
    %4926 = vmatpush1.msra.mxu0 0.0
    %4927 = vmatprep.subr.mxu0 0.0
    %4928 = vmatpush1.msra.mxu0 %v4898
    %4929 = vmatprep.subr.mxu0 0.0
    %4930 = vmatpush1.msra.mxu0 %v4897
    %4931 = vmatprep.subr.mxu0 0.0
    %4932 = vmatpush1.msra.mxu0 %v4896
    %4933 = vmatprep.subr.mxu0 0.0
    %4934 = vmatpush1.msra.mxu0 %v4895
    %4935 = vmatprep.subr.mxu0 0.0
    %4936 = vmatpush1.msra.mxu0 %v4894
    %4937 = vmatprep.subr.mxu0 0.0
    %4938 = vmatpush1.msra.mxu0 %v4893
    %4939 = vmatprep.subr.mxu0 0.0
    %4940 = vmatpush1.msra.mxu0 %v4892
    %4941 = vmatprep.subr.mxu0 0.0
    %4942 = vmatpush1.msra.mxu0 %v4891
    %4943 = vmatprep.subr.mxu0 0.0
    %4944 = vmatpush2.msra.mxu0 0.0
    %4945 = vmatprep.subr.mxu0 0.0
    %4946 = vmatpush2.msra.mxu0 0.0
    %4947 = vmatprep.subr.mxu0 0.0
    %4948 = vmatpush2.msra.mxu0 0.0
    %4949 = vmatprep.subr.mxu0 0.0
    %4950 = vmatpush2.msra.mxu0 0.0
    %4951 = vmatprep.subr.mxu0 0.0
    %4952 = vmatpush2.msra.mxu0 0.0
    %4953 = vmatprep.subr.mxu0 0.0
    %4954 = vmatpush2.msra.mxu0 0.0
    %4955 = vmatprep.subr.mxu0 0.0
    %4956 = vmatpush2.msra.mxu0 0.0
    %4957 = vmatprep.subr.mxu0 0.0
    %4958 = vmatpush2.msra.mxu0 0.0
    %4959 = vmatprep.subr.mxu0 0.0
    %4960 = vmatpush2.msra.mxu0 0.0
    %4961 = vmatprep.subr.mxu0 0.0
    %4962 = vmatpush2.msra.mxu0 0.0
    %4963 = vmatprep.subr.mxu0 0.0
    %4964 = vmatpush2.msra.mxu0 0.0
    %4965 = vmatprep.subr.mxu0 0.0
    %4966 = vmatpush2.msra.mxu0 0.0
    %4967 = vmatprep.subr.mxu0 0.0
    %4968 = vmatpush2.msra.mxu0 0.0
    %4969 = vmatprep.subr.mxu0 0.0
    %4970 = vmatpush2.msra.mxu0 0.0
    %4971 = vmatprep.subr.mxu0 0.0
    %4972 = vmatpush2.msra.mxu0 0.0
    %4973 = vmatprep.subr.mxu0 0.0
    %4974 = vmatpush2.msra.mxu0 0.0
    %4975 = vmatprep.mubr.f32.mxu0 0.0
    %4976 = vmatmul.mubr.f32.gmra.mxu0 %v4900
    %v4977 = vpop.f32.mrf.mxu0
    %v4978 = vadd.f32 0.0, %v4977
    %v4979 = vpop.f32.mrf.mxu0
    %4980 = vmatprep.mubr.f32.mxu0 0.0
    %4981 = vmatmul.mubr.f32.gmra.mxu0 %v4903
    %v4982 = vpop.f32.mrf.mxu0
    %v4983 = vadd.f32 0.0, %v4982
    %v4984 = vpop.f32.mrf.mxu0
    %4985 = vmatprep.mubr.f32.mxu0 0.0
    %4986 = vmatmul.mubr.f32.gmra.mxu0 %v4906
    %v4987 = vpop.f32.mrf.mxu0
    %v4988 = vadd.f32 0.0, %v4987
    %v4989 = vpop.f32.mrf.mxu0
    %4990 = vmatprep.mubr.f32.mxu0 0.0
    %4991 = vmatmul.mubr.f32.gmra.mxu0 %v4909
    %v4992 = vpop.f32.mrf.mxu0
    %v4993 = vadd.f32 0.0, %v4992
    %v4994 = vpop.f32.mrf.mxu0
    %4995 = vdwg.mxu0
    %v4996 = vsel %vm499, %v4978, 0.0
    %v4997 = vsel %vm499, %v4983, 0.0
    %v4998 = vadd.f32 %v4996, %v4997
    %v4999 = vsel %vm499, %v4988, 0.0
    %v5000 = vadd.f32 %v4998, %v4999
    %v5001 = vsel %vm499, %v4993, 0.0
    %v5002 = vadd.f32 %v5000, %v5001
    %v5003 = vrot.slane %v5002, 4
    %v5004 = vadd.f32 %v5002, %v5003
    %v5005 = vrot.slane %v5004, 2
    %v5006 = vadd.f32 %v5004, %v5005
    %v5007 = vrot.slane %v5006, 1
    %v5008 = vadd.f32 %v5006, %v5007
    %v5009 = vmul.f32 %v4978, %v4978
    %v5010 = vmul.f32 %v4983, %v4983
    %v5011 = vmul.f32 %v4988, %v4988
    %v5012 = vmul.f32 %v4993, %v4993
    %v5013 = vsel %vm499, %v5009, 0.0
    %v5014 = vsel %vm499, %v5010, 0.0
    %v5015 = vadd.f32 %v5013, %v5014
    %v5016 = vsel %vm499, %v5011, 0.0
    %v5017 = vadd.f32 %v5015, %v5016
    %v5018 = vsel %vm499, %v5012, 0.0
    %v5019 = vadd.f32 %v5017, %v5018
    %v5020 = vrot.slane %v5019, 4
    %v5021 = vadd.f32 %v5019, %v5020
    %v5022 = vrot.slane %v5021, 2
    %v5023 = vadd.f32 %v5021, %v5022
    %v5024 = vrot.slane %v5023, 1
    %v5025 = vadd.f32 %v5023, %v5024
    %v5026 = vld [vmem:[%s4] sm:$0xff]
    %v5027 = vld [vmem:[%s4 + $0x8] sm:$0xff]
    %v5028 = vld [vmem:[%s4 + $0x10] sm:$0xff]
    %v5029 = vld [vmem:[%s4 + $0x18] sm:$0xff]
    %v5030 = vld [vmem:[%s4 + $0x20] sm:$0xff]
    %v5031 = vld [vmem:[%s4 + $0x28] sm:$0xff]
    %v5032 = vld [vmem:[%s4 + $0x30] sm:$0xff]
    %v5033 = vld [vmem:[%s4 + $0x38] sm:$0xff]
    %v5035 = vsel %vm499, %v5008, 0
    %5037 = vmatprep.subr.mxu0 0.0
    %5038 = vmatpush1.msra.mxu0 0.0
    %5039 = vmatprep.subr.mxu0 0.0
    %5040 = vmatpush1.msra.mxu0 0.0
    %5041 = vmatprep.subr.mxu0 0.0
    %5042 = vmatpush1.msra.mxu0 0.0
    %5043 = vmatprep.subr.mxu0 0.0
    %5044 = vmatpush1.msra.mxu0 0.0
    %5045 = vmatprep.subr.mxu0 0.0
    %5046 = vmatpush1.msra.mxu0 0.0
    %5047 = vmatprep.subr.mxu0 0.0
    %5048 = vmatpush1.msra.mxu0 0.0
    %5049 = vmatprep.subr.mxu0 0.0
    %5050 = vmatpush1.msra.mxu0 0.0
    %5051 = vmatprep.subr.mxu0 0.0
    %5052 = vmatpush1.msra.mxu0 0.0
    %5053 = vmatprep.subr.mxu0 0.0
    %5054 = vmatpush1.msra.mxu0 %v5033
    %5055 = vmatprep.subr.mxu0 0.0
    %5056 = vmatpush1.msra.mxu0 %v5032
    %5057 = vmatprep.subr.mxu0 0.0
    %5058 = vmatpush1.msra.mxu0 %v5031
    %5059 = vmatprep.subr.mxu0 0.0
    %5060 = vmatpush1.msra.mxu0 %v5030
    %5061 = vmatprep.subr.mxu0 0.0
    %5062 = vmatpush1.msra.mxu0 %v5029
    %5063 = vmatprep.subr.mxu0 0.0
    %5064 = vmatpush1.msra.mxu0 %v5028
    %5065 = vmatprep.subr.mxu0 0.0
    %5066 = vmatpush1.msra.mxu0 %v5027
    %5067 = vmatprep.subr.mxu0 0.0
    %5068 = vmatpush1.msra.mxu0 %v5026
    %5069 = vmatprep.subr.mxu0 0.0
    %5070 = vmatpush2.msra.mxu0 0.0
    %5071 = vmatprep.subr.mxu0 0.0
    %5072 = vmatpush2.msra.mxu0 0.0
    %5073 = vmatprep.subr.mxu0 0.0
    %5074 = vmatpush2.msra.mxu0 0.0
    %5075 = vmatprep.subr.mxu0 0.0
    %5076 = vmatpush2.msra.mxu0 0.0
    %5077 = vmatprep.subr.mxu0 0.0
    %5078 = vmatpush2.msra.mxu0 0.0
    %5079 = vmatprep.subr.mxu0 0.0
    %5080 = vmatpush2.msra.mxu0 0.0
    %5081 = vmatprep.subr.mxu0 0.0
    %5082 = vmatpush2.msra.mxu0 0.0
    %5083 = vmatprep.subr.mxu0 0.0
    %5084 = vmatpush2.msra.mxu0 0.0
    %5085 = vmatprep.subr.mxu0 0.0
    %5086 = vmatpush2.msra.mxu0 0.0
    %5087 = vmatprep.subr.mxu0 0.0
    %5088 = vmatpush2.msra.mxu0 0.0
    %5089 = vmatprep.subr.mxu0 0.0
    %5090 = vmatpush2.msra.mxu0 0.0
    %5091 = vmatprep.subr.mxu0 0.0
    %5092 = vmatpush2.msra.mxu0 0.0
    %5093 = vmatprep.subr.mxu0 0.0
    %5094 = vmatpush2.msra.mxu0 0.0
    %5095 = vmatprep.subr.mxu0 0.0
    %5096 = vmatpush2.msra.mxu0 0.0
    %5097 = vmatprep.subr.mxu0 0.0
    %5098 = vmatpush2.msra.mxu0 0.0
    %5099 = vmatprep.subr.mxu0 0.0
    %5100 = vmatpush2.msra.mxu0 0.0
    %5101 = vmatprep.mubr.f32.mxu0 0.0
    %5102 = vmatmul.mubr.f32.gmra.mxu0 %v5035
    %v5103 = vpop.f32.mrf.mxu0
    %v5104 = vadd.f32 0.0, %v5103
    %v5105 = vpop.f32.mrf.mxu0
    %5106 = vdwg.mxu0
    %v5108 = vsel %vm499, %v5025, 0
    %5110 = vmatprep.subr.mxu0 0.0
    %5111 = vmatpush1.msra.mxu0 0.0
    %5112 = vmatprep.subr.mxu0 0.0
    %5113 = vmatpush1.msra.mxu0 0.0
    %5114 = vmatprep.subr.mxu0 0.0
    %5115 = vmatpush1.msra.mxu0 0.0
    %5116 = vmatprep.subr.mxu0 0.0
    %5117 = vmatpush1.msra.mxu0 0.0
    %5118 = vmatprep.subr.mxu0 0.0
    %5119 = vmatpush1.msra.mxu0 0.0
    %5120 = vmatprep.subr.mxu0 0.0
    %5121 = vmatpush1.msra.mxu0 0.0
    %5122 = vmatprep.subr.mxu0 0.0
    %5123 = vmatpush1.msra.mxu0 0.0
    %5124 = vmatprep.subr.mxu0 0.0
    %5125 = vmatpush1.msra.mxu0 0.0
    %5126 = vmatprep.subr.mxu0 0.0
    %5127 = vmatpush1.msra.mxu0 %v5033
    %5128 = vmatprep.subr.mxu0 0.0
    %5129 = vmatpush1.msra.mxu0 %v5032
    %5130 = vmatprep.subr.mxu0 0.0
    %5131 = vmatpush1.msra.mxu0 %v5031
    %5132 = vmatprep.subr.mxu0 0.0
    %5133 = vmatpush1.msra.mxu0 %v5030
    %5134 = vmatprep.subr.mxu0 0.0
    %5135 = vmatpush1.msra.mxu0 %v5029
    %5136 = vmatprep.subr.mxu0 0.0
    %5137 = vmatpush1.msra.mxu0 %v5028
    %5138 = vmatprep.subr.mxu0 0.0
    %5139 = vmatpush1.msra.mxu0 %v5027
    %5140 = vmatprep.subr.mxu0 0.0
    %5141 = vmatpush1.msra.mxu0 %v5026
    %5142 = vmatprep.subr.mxu0 0.0
    %5143 = vmatpush2.msra.mxu0 0.0
    %5144 = vmatprep.subr.mxu0 0.0
    %5145 = vmatpush2.msra.mxu0 0.0
    %5146 = vmatprep.subr.mxu0 0.0
    %5147 = vmatpush2.msra.mxu0 0.0
    %5148 = vmatprep.subr.mxu0 0.0
    %5149 = vmatpush2.msra.mxu0 0.0
    %5150 = vmatprep.subr.mxu0 0.0
    %5151 = vmatpush2.msra.mxu0 0.0
    %5152 = vmatprep.subr.mxu0 0.0
    %5153 = vmatpush2.msra.mxu0 0.0
    %5154 = vmatprep.subr.mxu0 0.0
    %5155 = vmatpush2.msra.mxu0 0.0
    %5156 = vmatprep.subr.mxu0 0.0
    %5157 = vmatpush2.msra.mxu0 0.0
    %5158 = vmatprep.subr.mxu0 0.0
    %5159 = vmatpush2.msra.mxu0 0.0
    %5160 = vmatprep.subr.mxu0 0.0
    %5161 = vmatpush2.msra.mxu0 0.0
    %5162 = vmatprep.subr.mxu0 0.0
    %5163 = vmatpush2.msra.mxu0 0.0
    %5164 = vmatprep.subr.mxu0 0.0
    %5165 = vmatpush2.msra.mxu0 0.0
    %5166 = vmatprep.subr.mxu0 0.0
    %5167 = vmatpush2.msra.mxu0 0.0
    %5168 = vmatprep.subr.mxu0 0.0
    %5169 = vmatpush2.msra.mxu0 0.0
    %5170 = vmatprep.subr.mxu0 0.0
    %5171 = vmatpush2.msra.mxu0 0.0
    %5172 = vmatprep.subr.mxu0 0.0
    %5173 = vmatpush2.msra.mxu0 0.0
    %5174 = vmatprep.mubr.f32.mxu0 0.0
    %5175 = vmatmul.mubr.f32.gmra.mxu0 %v5108
    %v5176 = vpop.f32.mrf.mxu0
    %v5177 = vadd.f32 0.0, %v5176
    %v5178 = vpop.f32.mrf.mxu0
    %5179 = vdwg.mxu0
    %v5180 = vmul.f32 %v5104, 0.001953125
    %v5181 = vmul.f32 %v5177, 0.001953125
    %v5182 = vmul.f32 %v5180, %v5180
    %v5183 = vsub.f32 %v5181, %v5182
    %v5184 = vadd.f32 %v5183, 1e-05
    %v5185 = vrsqrt.pop %v5184
    %v5186 = vsub.f32 0.0, %v5180
    %v5187 = vmul.f32 %v5186, %v5185
    %v5188 = vld [vmem:[#allocation11] sm:$0xf]
    %v5190 = vsel %vm656, %v5185, 0
    %v5193 = vsel %vm660, %v5188, 0
    %5195 = vmatprep.subr.mxu0 0.0
    %5196 = vmatpush1.msra.mxu0 0.0
    %5197 = vmatprep.subr.mxu0 0.0
    %5198 = vmatpush1.msra.mxu0 0.0
    %5199 = vmatprep.subr.mxu0 0.0
    %5200 = vmatpush1.msra.mxu0 0.0
    %5201 = vmatprep.subr.mxu0 0.0
    %5202 = vmatpush1.msra.mxu0 0.0
    %5203 = vmatprep.subr.mxu0 0.0
    %5204 = vmatpush1.msra.mxu0 0.0
    %5205 = vmatprep.subr.mxu0 0.0
    %5206 = vmatpush1.msra.mxu0 0.0
    %5207 = vmatprep.subr.mxu0 0.0
    %5208 = vmatpush1.msra.mxu0 0.0
    %5209 = vmatprep.subr.mxu0 0.0
    %5210 = vmatpush1.msra.mxu0 0.0
    %5211 = vmatprep.subr.mxu0 0.0
    %5212 = vmatpush1.msra.mxu0 0.0
    %5213 = vmatprep.subr.mxu0 0.0
    %5214 = vmatpush1.msra.mxu0 0.0
    %5215 = vmatprep.subr.mxu0 0.0
    %5216 = vmatpush1.msra.mxu0 0.0
    %5217 = vmatprep.subr.mxu0 0.0
    %5218 = vmatpush1.msra.mxu0 0.0
    %5219 = vmatprep.subr.mxu0 0.0
    %5220 = vmatpush1.msra.mxu0 0.0
    %5221 = vmatprep.subr.mxu0 0.0
    %5222 = vmatpush1.msra.mxu0 0.0
    %5223 = vmatprep.subr.mxu0 0.0
    %5224 = vmatpush1.msra.mxu0 0.0
    %5225 = vmatprep.subr.mxu0 0.0
    %5226 = vmatpush1.msra.mxu0 %v5193
    %5227 = vmatprep.subr.mxu0 0.0
    %5228 = vmatpush2.msra.mxu0 0.0
    %5229 = vmatprep.subr.mxu0 0.0
    %5230 = vmatpush2.msra.mxu0 0.0
    %5231 = vmatprep.subr.mxu0 0.0
    %5232 = vmatpush2.msra.mxu0 0.0
    %5233 = vmatprep.subr.mxu0 0.0
    %5234 = vmatpush2.msra.mxu0 0.0
    %5235 = vmatprep.subr.mxu0 0.0
    %5236 = vmatpush2.msra.mxu0 0.0
    %5237 = vmatprep.subr.mxu0 0.0
    %5238 = vmatpush2.msra.mxu0 0.0
    %5239 = vmatprep.subr.mxu0 0.0
    %5240 = vmatpush2.msra.mxu0 0.0
    %5241 = vmatprep.subr.mxu0 0.0
    %5242 = vmatpush2.msra.mxu0 0.0
    %5243 = vmatprep.subr.mxu0 0.0
    %5244 = vmatpush2.msra.mxu0 0.0
    %5245 = vmatprep.subr.mxu0 0.0
    %5246 = vmatpush2.msra.mxu0 0.0
    %5247 = vmatprep.subr.mxu0 0.0
    %5248 = vmatpush2.msra.mxu0 0.0
    %5249 = vmatprep.subr.mxu0 0.0
    %5250 = vmatpush2.msra.mxu0 0.0
    %5251 = vmatprep.subr.mxu0 0.0
    %5252 = vmatpush2.msra.mxu0 0.0
    %5253 = vmatprep.subr.mxu0 0.0
    %5254 = vmatpush2.msra.mxu0 0.0
    %5255 = vmatprep.subr.mxu0 0.0
    %5256 = vmatpush2.msra.mxu0 0.0
    %5257 = vmatprep.subr.mxu0 0.0
    %5258 = vmatpush2.msra.mxu0 0.0
    %5259 = vmatprep.mubr.f32.mxu0 0.0
    %5260 = vmatmul.mubr.f32.gmra.mxu0 %v5190
    %v5261 = vpop.f32.mrf.mxu0
    %v5262 = vadd.f32 0.0, %v5261
    %v5263 = vpop.f32.mrf.mxu0
    %5264 = vdwg.mxu0
    %v5266 = vsel %vm656, %v5187, 0
    %5268 = vmatprep.subr.mxu0 0.0
    %5269 = vmatpush1.msra.mxu0 0.0
    %5270 = vmatprep.subr.mxu0 0.0
    %5271 = vmatpush1.msra.mxu0 0.0
    %5272 = vmatprep.subr.mxu0 0.0
    %5273 = vmatpush1.msra.mxu0 0.0
    %5274 = vmatprep.subr.mxu0 0.0
    %5275 = vmatpush1.msra.mxu0 0.0
    %5276 = vmatprep.subr.mxu0 0.0
    %5277 = vmatpush1.msra.mxu0 0.0
    %5278 = vmatprep.subr.mxu0 0.0
    %5279 = vmatpush1.msra.mxu0 0.0
    %5280 = vmatprep.subr.mxu0 0.0
    %5281 = vmatpush1.msra.mxu0 0.0
    %5282 = vmatprep.subr.mxu0 0.0
    %5283 = vmatpush1.msra.mxu0 0.0
    %5284 = vmatprep.subr.mxu0 0.0
    %5285 = vmatpush1.msra.mxu0 0.0
    %5286 = vmatprep.subr.mxu0 0.0
    %5287 = vmatpush1.msra.mxu0 0.0
    %5288 = vmatprep.subr.mxu0 0.0
    %5289 = vmatpush1.msra.mxu0 0.0
    %5290 = vmatprep.subr.mxu0 0.0
    %5291 = vmatpush1.msra.mxu0 0.0
    %5292 = vmatprep.subr.mxu0 0.0
    %5293 = vmatpush1.msra.mxu0 0.0
    %5294 = vmatprep.subr.mxu0 0.0
    %5295 = vmatpush1.msra.mxu0 0.0
    %5296 = vmatprep.subr.mxu0 0.0
    %5297 = vmatpush1.msra.mxu0 0.0
    %5298 = vmatprep.subr.mxu0 0.0
    %5299 = vmatpush1.msra.mxu0 %v5193
    %5300 = vmatprep.subr.mxu0 0.0
    %5301 = vmatpush2.msra.mxu0 0.0
    %5302 = vmatprep.subr.mxu0 0.0
    %5303 = vmatpush2.msra.mxu0 0.0
    %5304 = vmatprep.subr.mxu0 0.0
    %5305 = vmatpush2.msra.mxu0 0.0
    %5306 = vmatprep.subr.mxu0 0.0
    %5307 = vmatpush2.msra.mxu0 0.0
    %5308 = vmatprep.subr.mxu0 0.0
    %5309 = vmatpush2.msra.mxu0 0.0
    %5310 = vmatprep.subr.mxu0 0.0
    %5311 = vmatpush2.msra.mxu0 0.0
    %5312 = vmatprep.subr.mxu0 0.0
    %5313 = vmatpush2.msra.mxu0 0.0
    %5314 = vmatprep.subr.mxu0 0.0
    %5315 = vmatpush2.msra.mxu0 0.0
    %5316 = vmatprep.subr.mxu0 0.0
    %5317 = vmatpush2.msra.mxu0 0.0
    %5318 = vmatprep.subr.mxu0 0.0
    %5319 = vmatpush2.msra.mxu0 0.0
    %5320 = vmatprep.subr.mxu0 0.0
    %5321 = vmatpush2.msra.mxu0 0.0
    %5322 = vmatprep.subr.mxu0 0.0
    %5323 = vmatpush2.msra.mxu0 0.0
    %5324 = vmatprep.subr.mxu0 0.0
    %5325 = vmatpush2.msra.mxu0 0.0
    %5326 = vmatprep.subr.mxu0 0.0
    %5327 = vmatpush2.msra.mxu0 0.0
    %5328 = vmatprep.subr.mxu0 0.0
    %5329 = vmatpush2.msra.mxu0 0.0
    %5330 = vmatprep.subr.mxu0 0.0
    %5331 = vmatpush2.msra.mxu0 0.0
    %5332 = vmatprep.mubr.f32.mxu0 0.0
    %5333 = vmatmul.mubr.f32.gmra.mxu0 %v5266
    %v5334 = vpop.f32.mrf.mxu0
    %v5335 = vadd.f32 0.0, %v5334
    %v5336 = vpop.f32.mrf.mxu0
    %5337 = vdwg.mxu0
    %v5338 = vlaneseq
    %v5339 = vshrl.u32 %v5338, 7
    %v5340 = vsub.s32 0, %v5339
    %v5341 = vrot.slane %v5262, %v5340
    %v5342 = vmul.f32 %v4978, %v5341
    %v5343 = vmul.f32 %v4983, %v5341
    %v5344 = vmul.f32 %v4988, %v5341
    %v5345 = vmul.f32 %v4993, %v5341
    %v5346 = vlaneseq
    %v5347 = vshrl.u32 %v5346, 7
    %v5348 = vsub.s32 0, %v5347
    %v5349 = vrot.slane %v5335, %v5348
    %v5350 = vadd.f32 %v5342, %v5349
    %v5351 = vadd.f32 %v5343, %v5349
    %v5352 = vadd.f32 %v5344, %v5349
    %v5353 = vadd.f32 %v5345, %v5349
    %v5354 = vstv %s2889
    %v5355 = vmul.f32 %v5354, %v5350
    %v5356 = vmul.f32 %v5354, %v5351
    %v5357 = vmul.f32 %v5354, %v5352
    %v5358 = vmul.f32 %v5354, %v5353
    %5363 = vrot.lane.b32.xlu0 %v5355, 16
    %v5364 = vpop.permute.xlu0 %5363
    %5365 = vrot.lane.b32.xlu0 %v5356, 16
    %v5366 = vpop.permute.xlu0 %5365
    %5367 = vrot.lane.b32.xlu0 %v5357, 16
    %v5368 = vpop.permute.xlu0 %5367
    %5369 = vrot.lane.b32.xlu0 %v5358, 16
    %v5370 = vpop.permute.xlu0 %5369
    %v5375 = vadd.f32 %v2885, %v5364
    %v5376 = vadd.f32 %v2886, %v5366
    %v5377 = vadd.f32 %v2887, %v5368
    %v5378 = vadd.f32 %v2888, %v5370
    %s5379 = sld [smem:[#allocation4 + $0x6]]
    %v5380 = vld [vmem:[#allocation2 + $0x2] sm:$0xff]
    %v5381 = vld [vmem:[#allocation2 + $0xa] sm:$0xff]
    %v5382 = vld [vmem:[#allocation2 + $0x1a] sm:$0xff]
    %v5383 = vld [vmem:[#allocation2 + $0x22] sm:$0xff]
    %v5384 = vld [vmem:[%s14] sm:$0x1]
    %v5385 = vlaneseq
    %v5386 = vshrl.u32 %v5385, 7
    %v5387 = vsub.s32 0, %v5386
    %v5388 = vrot.slane %v5384, %v5387
    %5390 = vrot.lane.b32.xlu0 %v5388, 8
    %v5391 = vpop.permute.xlu0 %5390
    %v5393 = vmul.f32 %v5380, %v5391
    %v5394 = vmul.f32 %v5381, %v5391
    %v5395 = vmul.f32 %v5382, %v5391
    %v5396 = vmul.f32 %v5383, %v5391
    %v5397 = vadd.f32 %v5393, 0.0
    %v5398 = vadd.f32 %v5394, 0.0
    %v5399 = vadd.f32 %v5395, 0.0
    %v5400 = vadd.f32 %v5396, 0.0
    %v5401 = vld [vmem:[%s14 + $0x1] sm:$0x1]
    %v5402 = vlaneseq
    %v5403 = vshrl.u32 %v5402, 7
    %v5404 = vsub.s32 0, %v5403
    %v5405 = vrot.slane %v5401, %v5404
    %5407 = vrot.lane.b32.xlu0 %v5405, 16
    %v5408 = vpop.permute.xlu0 %5407
    %v5410 = vmul.f32 %v5380, %v5408
    %v5411 = vmul.f32 %v5381, %v5408
    %v5412 = vmul.f32 %v5382, %v5408
    %v5413 = vmul.f32 %v5383, %v5408
    %5418 = vrot.lane.b32.xlu0 %v5410, 120
    %v5419 = vpop.permute.xlu0 %5418
    %5420 = vrot.lane.b32.xlu0 %v5411, 120
    %v5421 = vpop.permute.xlu0 %5420
    %5422 = vrot.lane.b32.xlu0 %v5412, 120
    %v5423 = vpop.permute.xlu0 %5422
    %5424 = vrot.lane.b32.xlu0 %v5413, 120
    %v5425 = vpop.permute.xlu0 %5424
    %v5430 = vadd.f32 %v5397, %v5419
    %v5431 = vadd.f32 %v5398, %v5421
    %v5432 = vadd.f32 %v5399, %v5423
    %v5433 = vadd.f32 %v5400, %v5425
    %v5434 = vld [vmem:[%s14 + $0x2] sm:$0x1]
    %v5435 = vlaneseq
    %v5436 = vshrl.u32 %v5435, 7
    %v5437 = vsub.s32 0, %v5436
    %v5438 = vrot.slane %v5434, %v5437
    %5440 = vrot.lane.b32.xlu0 %v5438, 24
    %v5441 = vpop.permute.xlu0 %5440
    %v5443 = vmul.f32 %v5380, %v5441
    %v5444 = vmul.f32 %v5381, %v5441
    %v5445 = vmul.f32 %v5382, %v5441
    %v5446 = vmul.f32 %v5383, %v5441
    %5451 = vrot.lane.b32.xlu0 %v5443, 112
    %v5452 = vpop.permute.xlu0 %5451
    %5453 = vrot.lane.b32.xlu0 %v5444, 112
    %v5454 = vpop.permute.xlu0 %5453
    %5455 = vrot.lane.b32.xlu0 %v5445, 112
    %v5456 = vpop.permute.xlu0 %5455
    %5457 = vrot.lane.b32.xlu0 %v5446, 112
    %v5458 = vpop.permute.xlu0 %5457
    %v5463 = vadd.f32 %v5430, %v5452
    %v5464 = vadd.f32 %v5431, %v5454
    %v5465 = vadd.f32 %v5432, %v5456
    %v5466 = vadd.f32 %v5433, %v5458
    %v5467 = vld [vmem:[#allocation2 + $0x4] sm:$0xff]
    %v5468 = vld [vmem:[#allocation2 + $0xc] sm:$0xff]
    %v5469 = vld [vmem:[#allocation2 + $0x1c] sm:$0xff]
    %v5470 = vld [vmem:[#allocation2 + $0x24] sm:$0xff]
    %s5471 = scalar_lea.vmem %s14, 4
    %v5472 = vld [vmem:[%s5471] sm:$0x1]
    %v5473 = vlaneseq
    %v5474 = vshrl.u32 %v5473, 7
    %v5475 = vsub.s32 0, %v5474
    %v5476 = vrot.slane %v5472, %v5475
    %5478 = vrot.lane.b32.xlu0 %v5476, 8
    %v5479 = vpop.permute.xlu0 %5478
    %v5481 = vmul.f32 %v5467, %v5479
    %v5482 = vmul.f32 %v5468, %v5479
    %v5483 = vmul.f32 %v5469, %v5479
    %v5484 = vmul.f32 %v5470, %v5479
    %v5485 = vadd.f32 %v5463, %v5481
    %v5486 = vadd.f32 %v5464, %v5482
    %v5487 = vadd.f32 %v5465, %v5483
    %v5488 = vadd.f32 %v5466, %v5484
    %v5489 = vld [vmem:[%s5471 + $0x1] sm:$0x1]
    %v5490 = vlaneseq
    %v5491 = vshrl.u32 %v5490, 7
    %v5492 = vsub.s32 0, %v5491
    %v5493 = vrot.slane %v5489, %v5492
    %5495 = vrot.lane.b32.xlu0 %v5493, 16
    %v5496 = vpop.permute.xlu0 %5495
    %v5498 = vmul.f32 %v5467, %v5496
    %v5499 = vmul.f32 %v5468, %v5496
    %v5500 = vmul.f32 %v5469, %v5496
    %v5501 = vmul.f32 %v5470, %v5496
    %5506 = vrot.lane.b32.xlu0 %v5498, 120
    %v5507 = vpop.permute.xlu0 %5506
    %5508 = vrot.lane.b32.xlu0 %v5499, 120
    %v5509 = vpop.permute.xlu0 %5508
    %5510 = vrot.lane.b32.xlu0 %v5500, 120
    %v5511 = vpop.permute.xlu0 %5510
    %5512 = vrot.lane.b32.xlu0 %v5501, 120
    %v5513 = vpop.permute.xlu0 %5512
    %v5518 = vadd.f32 %v5485, %v5507
    %v5519 = vadd.f32 %v5486, %v5509
    %v5520 = vadd.f32 %v5487, %v5511
    %v5521 = vadd.f32 %v5488, %v5513
    %v5522 = vld [vmem:[%s5471 + $0x2] sm:$0x1]
    %v5523 = vlaneseq
    %v5524 = vshrl.u32 %v5523, 7
    %v5525 = vsub.s32 0, %v5524
    %v5526 = vrot.slane %v5522, %v5525
    %5528 = vrot.lane.b32.xlu0 %v5526, 24
    %v5529 = vpop.permute.xlu0 %5528
    %v5531 = vmul.f32 %v5467, %v5529
    %v5532 = vmul.f32 %v5468, %v5529
    %v5533 = vmul.f32 %v5469, %v5529
    %v5534 = vmul.f32 %v5470, %v5529
    %5539 = vrot.lane.b32.xlu0 %v5531, 112
    %v5540 = vpop.permute.xlu0 %5539
    %5541 = vrot.lane.b32.xlu0 %v5532, 112
    %v5542 = vpop.permute.xlu0 %5541
    %5543 = vrot.lane.b32.xlu0 %v5533, 112
    %v5544 = vpop.permute.xlu0 %5543
    %5545 = vrot.lane.b32.xlu0 %v5534, 112
    %v5546 = vpop.permute.xlu0 %5545
    %v5551 = vadd.f32 %v5518, %v5540
    %v5552 = vadd.f32 %v5519, %v5542
    %v5553 = vadd.f32 %v5520, %v5544
    %v5554 = vadd.f32 %v5521, %v5546
    %v5555 = vld [vmem:[#allocation2 + $0x6] sm:$0xff]
    %v5556 = vld [vmem:[#allocation2 + $0xe] sm:$0xff]
    %v5557 = vld [vmem:[#allocation2 + $0x1e] sm:$0xff]
    %v5558 = vld [vmem:[#allocation2 + $0x26] sm:$0xff]
    %s5559 = scalar_lea.vmem %s14, 8
    %v5560 = vld [vmem:[%s5559] sm:$0x1]
    %v5561 = vlaneseq
    %v5562 = vshrl.u32 %v5561, 7
    %v5563 = vsub.s32 0, %v5562
    %v5564 = vrot.slane %v5560, %v5563
    %5566 = vrot.lane.b32.xlu0 %v5564, 8
    %v5567 = vpop.permute.xlu0 %5566
    %v5569 = vmul.f32 %v5555, %v5567
    %v5570 = vmul.f32 %v5556, %v5567
    %v5571 = vmul.f32 %v5557, %v5567
    %v5572 = vmul.f32 %v5558, %v5567
    %v5573 = vadd.f32 %v5551, %v5569
    %v5574 = vadd.f32 %v5552, %v5570
    %v5575 = vadd.f32 %v5553, %v5571
    %v5576 = vadd.f32 %v5554, %v5572
    %v5577 = vld [vmem:[%s5559 + $0x1] sm:$0x1]
    %v5578 = vlaneseq
    %v5579 = vshrl.u32 %v5578, 7
    %v5580 = vsub.s32 0, %v5579
    %v5581 = vrot.slane %v5577, %v5580
    %5583 = vrot.lane.b32.xlu0 %v5581, 16
    %v5584 = vpop.permute.xlu0 %5583
    %v5586 = vmul.f32 %v5555, %v5584
    %v5587 = vmul.f32 %v5556, %v5584
    %v5588 = vmul.f32 %v5557, %v5584
    %v5589 = vmul.f32 %v5558, %v5584
    %5594 = vrot.lane.b32.xlu0 %v5586, 120
    %v5595 = vpop.permute.xlu0 %5594
    %5596 = vrot.lane.b32.xlu0 %v5587, 120
    %v5597 = vpop.permute.xlu0 %5596
    %5598 = vrot.lane.b32.xlu0 %v5588, 120
    %v5599 = vpop.permute.xlu0 %5598
    %5600 = vrot.lane.b32.xlu0 %v5589, 120
    %v5601 = vpop.permute.xlu0 %5600
    %v5606 = vadd.f32 %v5573, %v5595
    %v5607 = vadd.f32 %v5574, %v5597
    %v5608 = vadd.f32 %v5575, %v5599
    %v5609 = vadd.f32 %v5576, %v5601
    %v5610 = vld [vmem:[%s5559 + $0x2] sm:$0x1]
    %v5611 = vlaneseq
    %v5612 = vshrl.u32 %v5611, 7
    %v5613 = vsub.s32 0, %v5612
    %v5614 = vrot.slane %v5610, %v5613
    %5616 = vrot.lane.b32.xlu0 %v5614, 24
    %v5617 = vpop.permute.xlu0 %5616
    %v5619 = vmul.f32 %v5555, %v5617
    %v5620 = vmul.f32 %v5556, %v5617
    %v5621 = vmul.f32 %v5557, %v5617
    %v5622 = vmul.f32 %v5558, %v5617
    %5627 = vrot.lane.b32.xlu0 %v5619, 112
    %v5628 = vpop.permute.xlu0 %5627
    %5629 = vrot.lane.b32.xlu0 %v5620, 112
    %v5630 = vpop.permute.xlu0 %5629
    %5631 = vrot.lane.b32.xlu0 %v5621, 112
    %v5632 = vpop.permute.xlu0 %5631
    %5633 = vrot.lane.b32.xlu0 %v5622, 112
    %v5634 = vpop.permute.xlu0 %5633
    %v5639 = vadd.f32 %v5606, %v5628
    %v5640 = vadd.f32 %v5607, %v5630
    %v5641 = vadd.f32 %v5608, %v5632
    %v5642 = vadd.f32 %v5609, %v5634
    %v5643 = vld [vmem:[#allocation23] sm:$0xff]
    %v5644 = vld [vmem:[#allocation23 + $0x8] sm:$0xff]
    %v5645 = vld [vmem:[#allocation23 + $0x10] sm:$0xff]
    %v5646 = vld [vmem:[#allocation23 + $0x18] sm:$0xff]
    %v5647 = vld [vmem:[#allocation23 + $0x20] sm:$0xff]
    %v5648 = vld [vmem:[#allocation23 + $0x28] sm:$0xff]
    %v5649 = vld [vmem:[#allocation23 + $0x30] sm:$0xff]
    %v5650 = vld [vmem:[#allocation23 + $0x38] sm:$0xff]
    %5655 = vrot.lane.b32.xlu0 %v5639, 120
    %v5656 = vpop.permute.xlu0 %5655
    %5657 = vrot.lane.b32.xlu0 %v5640, 120
    %v5658 = vpop.permute.xlu0 %5657
    %5659 = vrot.lane.b32.xlu0 %v5641, 120
    %v5660 = vpop.permute.xlu0 %5659
    %5661 = vrot.lane.b32.xlu0 %v5642, 120
    %v5662 = vpop.permute.xlu0 %5661
    %v5663 = vsel %vm499, %v5656, 0
    %v5665 = vsel %vm499, %v5658, 0
    %v5667 = vsel %vm499, %v5660, 0
    %v5669 = vsel %vm499, %v5662, 0
    %5671 = vmatprep.subr.mxu0 0.0
    %5672 = vmatpush1.msra.mxu0 0.0
    %5673 = vmatprep.subr.mxu0 0.0
    %5674 = vmatpush1.msra.mxu0 0.0
    %5675 = vmatprep.subr.mxu0 0.0
    %5676 = vmatpush1.msra.mxu0 0.0
    %5677 = vmatprep.subr.mxu0 0.0
    %5678 = vmatpush1.msra.mxu0 0.0
    %5679 = vmatprep.subr.mxu0 0.0
    %5680 = vmatpush1.msra.mxu0 0.0
    %5681 = vmatprep.subr.mxu0 0.0
    %5682 = vmatpush1.msra.mxu0 0.0
    %5683 = vmatprep.subr.mxu0 0.0
    %5684 = vmatpush1.msra.mxu0 0.0
    %5685 = vmatprep.subr.mxu0 0.0
    %5686 = vmatpush1.msra.mxu0 0.0
    %5687 = vmatprep.subr.mxu0 0.0
    %5688 = vmatpush1.msra.mxu0 %v5650
    %5689 = vmatprep.subr.mxu0 0.0
    %5690 = vmatpush1.msra.mxu0 %v5649
    %5691 = vmatprep.subr.mxu0 0.0
    %5692 = vmatpush1.msra.mxu0 %v5648
    %5693 = vmatprep.subr.mxu0 0.0
    %5694 = vmatpush1.msra.mxu0 %v5647
    %5695 = vmatprep.subr.mxu0 0.0
    %5696 = vmatpush1.msra.mxu0 %v5646
    %5697 = vmatprep.subr.mxu0 0.0
    %5698 = vmatpush1.msra.mxu0 %v5645
    %5699 = vmatprep.subr.mxu0 0.0
    %5700 = vmatpush1.msra.mxu0 %v5644
    %5701 = vmatprep.subr.mxu0 0.0
    %5702 = vmatpush1.msra.mxu0 %v5643
    %5703 = vmatprep.subr.mxu0 0.0
    %5704 = vmatpush2.msra.mxu0 0.0
    %5705 = vmatprep.subr.mxu0 0.0
    %5706 = vmatpush2.msra.mxu0 0.0
    %5707 = vmatprep.subr.mxu0 0.0
    %5708 = vmatpush2.msra.mxu0 0.0
    %5709 = vmatprep.subr.mxu0 0.0
    %5710 = vmatpush2.msra.mxu0 0.0
    %5711 = vmatprep.subr.mxu0 0.0
    %5712 = vmatpush2.msra.mxu0 0.0
    %5713 = vmatprep.subr.mxu0 0.0
    %5714 = vmatpush2.msra.mxu0 0.0
    %5715 = vmatprep.subr.mxu0 0.0
    %5716 = vmatpush2.msra.mxu0 0.0
    %5717 = vmatprep.subr.mxu0 0.0
    %5718 = vmatpush2.msra.mxu0 0.0
    %5719 = vmatprep.subr.mxu0 0.0
    %5720 = vmatpush2.msra.mxu0 0.0
    %5721 = vmatprep.subr.mxu0 0.0
    %5722 = vmatpush2.msra.mxu0 0.0
    %5723 = vmatprep.subr.mxu0 0.0
    %5724 = vmatpush2.msra.mxu0 0.0
    %5725 = vmatprep.subr.mxu0 0.0
    %5726 = vmatpush2.msra.mxu0 0.0
    %5727 = vmatprep.subr.mxu0 0.0
    %5728 = vmatpush2.msra.mxu0 0.0
    %5729 = vmatprep.subr.mxu0 0.0
    %5730 = vmatpush2.msra.mxu0 0.0
    %5731 = vmatprep.subr.mxu0 0.0
    %5732 = vmatpush2.msra.mxu0 0.0
    %5733 = vmatprep.subr.mxu0 0.0
    %5734 = vmatpush2.msra.mxu0 0.0
    %5735 = vmatprep.mubr.f32.mxu0 0.0
    %5736 = vmatmul.mubr.f32.gmra.mxu0 %v5663
    %v5737 = vpop.f32.mrf.mxu0
    %v5738 = vadd.f32 0.0, %v5737
    %v5739 = vpop.f32.mrf.mxu0
    %5740 = vmatprep.mubr.f32.mxu0 0.0
    %5741 = vmatmul.mubr.f32.gmra.mxu0 %v5665
    %v5742 = vpop.f32.mrf.mxu0
    %v5743 = vadd.f32 0.0, %v5742
    %v5744 = vpop.f32.mrf.mxu0
    %5745 = vmatprep.mubr.f32.mxu0 0.0
    %5746 = vmatmul.mubr.f32.gmra.mxu0 %v5667
    %v5747 = vpop.f32.mrf.mxu0
    %v5748 = vadd.f32 0.0, %v5747
    %v5749 = vpop.f32.mrf.mxu0
    %5750 = vmatprep.mubr.f32.mxu0 0.0
    %5751 = vmatmul.mubr.f32.gmra.mxu0 %v5669
    %v5752 = vpop.f32.mrf.mxu0
    %v5753 = vadd.f32 0.0, %v5752
    %v5754 = vpop.f32.mrf.mxu0
    %5755 = vdwg.mxu0
    %v5756 = vsel %vm499, %v5738, 0.0
    %v5757 = vsel %vm499, %v5743, 0.0
    %v5758 = vadd.f32 %v5756, %v5757
    %v5759 = vsel %vm499, %v5748, 0.0
    %v5760 = vadd.f32 %v5758, %v5759
    %v5761 = vsel %vm499, %v5753, 0.0
    %v5762 = vadd.f32 %v5760, %v5761
    %v5763 = vrot.slane %v5762, 4
    %v5764 = vadd.f32 %v5762, %v5763
    %v5765 = vrot.slane %v5764, 2
    %v5766 = vadd.f32 %v5764, %v5765
    %v5767 = vrot.slane %v5766, 1
    %v5768 = vadd.f32 %v5766, %v5767
    %v5769 = vmul.f32 %v5738, %v5738
    %v5770 = vmul.f32 %v5743, %v5743
    %v5771 = vmul.f32 %v5748, %v5748
    %v5772 = vmul.f32 %v5753, %v5753
    %v5773 = vsel %vm499, %v5769, 0.0
    %v5774 = vsel %vm499, %v5770, 0.0
    %v5775 = vadd.f32 %v5773, %v5774
    %v5776 = vsel %vm499, %v5771, 0.0
    %v5777 = vadd.f32 %v5775, %v5776
    %v5778 = vsel %vm499, %v5772, 0.0
    %v5779 = vadd.f32 %v5777, %v5778
    %v5780 = vrot.slane %v5779, 4
    %v5781 = vadd.f32 %v5779, %v5780
    %v5782 = vrot.slane %v5781, 2
    %v5783 = vadd.f32 %v5781, %v5782
    %v5784 = vrot.slane %v5783, 1
    %v5785 = vadd.f32 %v5783, %v5784
    %v5787 = vsel %vm499, %v5768, 0
    %5789 = vmatprep.subr.mxu0 0.0
    %5790 = vmatpush1.msra.mxu0 0.0
    %5791 = vmatprep.subr.mxu0 0.0
    %5792 = vmatpush1.msra.mxu0 0.0
    %5793 = vmatprep.subr.mxu0 0.0
    %5794 = vmatpush1.msra.mxu0 0.0
    %5795 = vmatprep.subr.mxu0 0.0
    %5796 = vmatpush1.msra.mxu0 0.0
    %5797 = vmatprep.subr.mxu0 0.0
    %5798 = vmatpush1.msra.mxu0 0.0
    %5799 = vmatprep.subr.mxu0 0.0
    %5800 = vmatpush1.msra.mxu0 0.0
    %5801 = vmatprep.subr.mxu0 0.0
    %5802 = vmatpush1.msra.mxu0 0.0
    %5803 = vmatprep.subr.mxu0 0.0
    %5804 = vmatpush1.msra.mxu0 0.0
    %5805 = vmatprep.subr.mxu0 0.0
    %5806 = vmatpush1.msra.mxu0 %v5033
    %5807 = vmatprep.subr.mxu0 0.0
    %5808 = vmatpush1.msra.mxu0 %v5032
    %5809 = vmatprep.subr.mxu0 0.0
    %5810 = vmatpush1.msra.mxu0 %v5031
    %5811 = vmatprep.subr.mxu0 0.0
    %5812 = vmatpush1.msra.mxu0 %v5030
    %5813 = vmatprep.subr.mxu0 0.0
    %5814 = vmatpush1.msra.mxu0 %v5029
    %5815 = vmatprep.subr.mxu0 0.0
    %5816 = vmatpush1.msra.mxu0 %v5028
    %5817 = vmatprep.subr.mxu0 0.0
    %5818 = vmatpush1.msra.mxu0 %v5027
    %5819 = vmatprep.subr.mxu0 0.0
    %5820 = vmatpush1.msra.mxu0 %v5026
    %5821 = vmatprep.subr.mxu0 0.0
    %5822 = vmatpush2.msra.mxu0 0.0
    %5823 = vmatprep.subr.mxu0 0.0
    %5824 = vmatpush2.msra.mxu0 0.0
    %5825 = vmatprep.subr.mxu0 0.0
    %5826 = vmatpush2.msra.mxu0 0.0
    %5827 = vmatprep.subr.mxu0 0.0
    %5828 = vmatpush2.msra.mxu0 0.0
    %5829 = vmatprep.subr.mxu0 0.0
    %5830 = vmatpush2.msra.mxu0 0.0
    %5831 = vmatprep.subr.mxu0 0.0
    %5832 = vmatpush2.msra.mxu0 0.0
    %5833 = vmatprep.subr.mxu0 0.0
    %5834 = vmatpush2.msra.mxu0 0.0
    %5835 = vmatprep.subr.mxu0 0.0
    %5836 = vmatpush2.msra.mxu0 0.0
    %5837 = vmatprep.subr.mxu0 0.0
    %5838 = vmatpush2.msra.mxu0 0.0
    %5839 = vmatprep.subr.mxu0 0.0
    %5840 = vmatpush2.msra.mxu0 0.0
    %5841 = vmatprep.subr.mxu0 0.0
    %5842 = vmatpush2.msra.mxu0 0.0
    %5843 = vmatprep.subr.mxu0 0.0
    %5844 = vmatpush2.msra.mxu0 0.0
    %5845 = vmatprep.subr.mxu0 0.0
    %5846 = vmatpush2.msra.mxu0 0.0
    %5847 = vmatprep.subr.mxu0 0.0
    %5848 = vmatpush2.msra.mxu0 0.0
    %5849 = vmatprep.subr.mxu0 0.0
    %5850 = vmatpush2.msra.mxu0 0.0
    %5851 = vmatprep.subr.mxu0 0.0
    %5852 = vmatpush2.msra.mxu0 0.0
    %5853 = vmatprep.mubr.f32.mxu0 0.0
    %5854 = vmatmul.mubr.f32.gmra.mxu0 %v5787
    %v5855 = vpop.f32.mrf.mxu0
    %v5856 = vadd.f32 0.0, %v5855
    %v5857 = vpop.f32.mrf.mxu0
    %5858 = vdwg.mxu0
    %v5860 = vsel %vm499, %v5785, 0
    %5862 = vmatprep.subr.mxu0 0.0
    %5863 = vmatpush1.msra.mxu0 0.0
    %5864 = vmatprep.subr.mxu0 0.0
    %5865 = vmatpush1.msra.mxu0 0.0
    %5866 = vmatprep.subr.mxu0 0.0
    %5867 = vmatpush1.msra.mxu0 0.0
    %5868 = vmatprep.subr.mxu0 0.0
    %5869 = vmatpush1.msra.mxu0 0.0
    %5870 = vmatprep.subr.mxu0 0.0
    %5871 = vmatpush1.msra.mxu0 0.0
    %5872 = vmatprep.subr.mxu0 0.0
    %5873 = vmatpush1.msra.mxu0 0.0
    %5874 = vmatprep.subr.mxu0 0.0
    %5875 = vmatpush1.msra.mxu0 0.0
    %5876 = vmatprep.subr.mxu0 0.0
    %5877 = vmatpush1.msra.mxu0 0.0
    %5878 = vmatprep.subr.mxu0 0.0
    %5879 = vmatpush1.msra.mxu0 %v5033
    %5880 = vmatprep.subr.mxu0 0.0
    %5881 = vmatpush1.msra.mxu0 %v5032
    %5882 = vmatprep.subr.mxu0 0.0
    %5883 = vmatpush1.msra.mxu0 %v5031
    %5884 = vmatprep.subr.mxu0 0.0
    %5885 = vmatpush1.msra.mxu0 %v5030
    %5886 = vmatprep.subr.mxu0 0.0
    %5887 = vmatpush1.msra.mxu0 %v5029
    %5888 = vmatprep.subr.mxu0 0.0
    %5889 = vmatpush1.msra.mxu0 %v5028
    %5890 = vmatprep.subr.mxu0 0.0
    %5891 = vmatpush1.msra.mxu0 %v5027
    %5892 = vmatprep.subr.mxu0 0.0
    %5893 = vmatpush1.msra.mxu0 %v5026
    %5894 = vmatprep.subr.mxu0 0.0
    %5895 = vmatpush2.msra.mxu0 0.0
    %5896 = vmatprep.subr.mxu0 0.0
    %5897 = vmatpush2.msra.mxu0 0.0
    %5898 = vmatprep.subr.mxu0 0.0
    %5899 = vmatpush2.msra.mxu0 0.0
    %5900 = vmatprep.subr.mxu0 0.0
    %5901 = vmatpush2.msra.mxu0 0.0
    %5902 = vmatprep.subr.mxu0 0.0
    %5903 = vmatpush2.msra.mxu0 0.0
    %5904 = vmatprep.subr.mxu0 0.0
    %5905 = vmatpush2.msra.mxu0 0.0
    %5906 = vmatprep.subr.mxu0 0.0
    %5907 = vmatpush2.msra.mxu0 0.0
    %5908 = vmatprep.subr.mxu0 0.0
    %5909 = vmatpush2.msra.mxu0 0.0
    %5910 = vmatprep.subr.mxu0 0.0
    %5911 = vmatpush2.msra.mxu0 0.0
    %5912 = vmatprep.subr.mxu0 0.0
    %5913 = vmatpush2.msra.mxu0 0.0
    %5914 = vmatprep.subr.mxu0 0.0
    %5915 = vmatpush2.msra.mxu0 0.0
    %5916 = vmatprep.subr.mxu0 0.0
    %5917 = vmatpush2.msra.mxu0 0.0
    %5918 = vmatprep.subr.mxu0 0.0
    %5919 = vmatpush2.msra.mxu0 0.0
    %5920 = vmatprep.subr.mxu0 0.0
    %5921 = vmatpush2.msra.mxu0 0.0
    %5922 = vmatprep.subr.mxu0 0.0
    %5923 = vmatpush2.msra.mxu0 0.0
    %5924 = vmatprep.subr.mxu0 0.0
    %5925 = vmatpush2.msra.mxu0 0.0
    %5926 = vmatprep.mubr.f32.mxu0 0.0
    %5927 = vmatmul.mubr.f32.gmra.mxu0 %v5860
    %v5928 = vpop.f32.mrf.mxu0
    %v5929 = vadd.f32 0.0, %v5928
    %v5930 = vpop.f32.mrf.mxu0
    %5931 = vdwg.mxu0
    %v5932 = vmul.f32 %v5856, 0.001953125
    %v5933 = vmul.f32 %v5929, 0.001953125
    %v5934 = vmul.f32 %v5932, %v5932
    %v5935 = vsub.f32 %v5933, %v5934
    %v5936 = vadd.f32 %v5935, 1e-05
    %v5937 = vrsqrt.pop %v5936
    %v5938 = vsub.f32 0.0, %v5932
    %v5939 = vmul.f32 %v5938, %v5937
    %v5941 = vsel %vm656, %v5937, 0
    %5943 = vmatprep.subr.mxu0 0.0
    %5944 = vmatpush1.msra.mxu0 0.0
    %5945 = vmatprep.subr.mxu0 0.0
    %5946 = vmatpush1.msra.mxu0 0.0
    %5947 = vmatprep.subr.mxu0 0.0
    %5948 = vmatpush1.msra.mxu0 0.0
    %5949 = vmatprep.subr.mxu0 0.0
    %5950 = vmatpush1.msra.mxu0 0.0
    %5951 = vmatprep.subr.mxu0 0.0
    %5952 = vmatpush1.msra.mxu0 0.0
    %5953 = vmatprep.subr.mxu0 0.0
    %5954 = vmatpush1.msra.mxu0 0.0
    %5955 = vmatprep.subr.mxu0 0.0
    %5956 = vmatpush1.msra.mxu0 0.0
    %5957 = vmatprep.subr.mxu0 0.0
    %5958 = vmatpush1.msra.mxu0 0.0
    %5959 = vmatprep.subr.mxu0 0.0
    %5960 = vmatpush1.msra.mxu0 0.0
    %5961 = vmatprep.subr.mxu0 0.0
    %5962 = vmatpush1.msra.mxu0 0.0
    %5963 = vmatprep.subr.mxu0 0.0
    %5964 = vmatpush1.msra.mxu0 0.0
    %5965 = vmatprep.subr.mxu0 0.0
    %5966 = vmatpush1.msra.mxu0 0.0
    %5967 = vmatprep.subr.mxu0 0.0
    %5968 = vmatpush1.msra.mxu0 0.0
    %5969 = vmatprep.subr.mxu0 0.0
    %5970 = vmatpush1.msra.mxu0 0.0
    %5971 = vmatprep.subr.mxu0 0.0
    %5972 = vmatpush1.msra.mxu0 0.0
    %5973 = vmatprep.subr.mxu0 0.0
    %5974 = vmatpush1.msra.mxu0 %v5193
    %5975 = vmatprep.subr.mxu0 0.0
    %5976 = vmatpush2.msra.mxu0 0.0
    %5977 = vmatprep.subr.mxu0 0.0
    %5978 = vmatpush2.msra.mxu0 0.0
    %5979 = vmatprep.subr.mxu0 0.0
    %5980 = vmatpush2.msra.mxu0 0.0
    %5981 = vmatprep.subr.mxu0 0.0
    %5982 = vmatpush2.msra.mxu0 0.0
    %5983 = vmatprep.subr.mxu0 0.0
    %5984 = vmatpush2.msra.mxu0 0.0
    %5985 = vmatprep.subr.mxu0 0.0
    %5986 = vmatpush2.msra.mxu0 0.0
    %5987 = vmatprep.subr.mxu0 0.0
    %5988 = vmatpush2.msra.mxu0 0.0
    %5989 = vmatprep.subr.mxu0 0.0
    %5990 = vmatpush2.msra.mxu0 0.0
    %5991 = vmatprep.subr.mxu0 0.0
    %5992 = vmatpush2.msra.mxu0 0.0
    %5993 = vmatprep.subr.mxu0 0.0
    %5994 = vmatpush2.msra.mxu0 0.0
    %5995 = vmatprep.subr.mxu0 0.0
    %5996 = vmatpush2.msra.mxu0 0.0
    %5997 = vmatprep.subr.mxu0 0.0
    %5998 = vmatpush2.msra.mxu0 0.0
    %5999 = vmatprep.subr.mxu0 0.0
    %6000 = vmatpush2.msra.mxu0 0.0
    %6001 = vmatprep.subr.mxu0 0.0
    %6002 = vmatpush2.msra.mxu0 0.0
    %6003 = vmatprep.subr.mxu0 0.0
    %6004 = vmatpush2.msra.mxu0 0.0
    %6005 = vmatprep.subr.mxu0 0.0
    %6006 = vmatpush2.msra.mxu0 0.0
    %6007 = vmatprep.mubr.f32.mxu0 0.0
    %6008 = vmatmul.mubr.f32.gmra.mxu0 %v5941
    %v6009 = vpop.f32.mrf.mxu0
    %v6010 = vadd.f32 0.0, %v6009
    %v6011 = vpop.f32.mrf.mxu0
    %6012 = vdwg.mxu0
    %v6014 = vsel %vm656, %v5939, 0
    %6016 = vmatprep.subr.mxu0 0.0
    %6017 = vmatpush1.msra.mxu0 0.0
    %6018 = vmatprep.subr.mxu0 0.0
    %6019 = vmatpush1.msra.mxu0 0.0
    %6020 = vmatprep.subr.mxu0 0.0
    %6021 = vmatpush1.msra.mxu0 0.0
    %6022 = vmatprep.subr.mxu0 0.0
    %6023 = vmatpush1.msra.mxu0 0.0
    %6024 = vmatprep.subr.mxu0 0.0
    %6025 = vmatpush1.msra.mxu0 0.0
    %6026 = vmatprep.subr.mxu0 0.0
    %6027 = vmatpush1.msra.mxu0 0.0
    %6028 = vmatprep.subr.mxu0 0.0
    %6029 = vmatpush1.msra.mxu0 0.0
    %6030 = vmatprep.subr.mxu0 0.0
    %6031 = vmatpush1.msra.mxu0 0.0
    %6032 = vmatprep.subr.mxu0 0.0
    %6033 = vmatpush1.msra.mxu0 0.0
    %6034 = vmatprep.subr.mxu0 0.0
    %6035 = vmatpush1.msra.mxu0 0.0
    %6036 = vmatprep.subr.mxu0 0.0
    %6037 = vmatpush1.msra.mxu0 0.0
    %6038 = vmatprep.subr.mxu0 0.0
    %6039 = vmatpush1.msra.mxu0 0.0
    %6040 = vmatprep.subr.mxu0 0.0
    %6041 = vmatpush1.msra.mxu0 0.0
    %6042 = vmatprep.subr.mxu0 0.0
    %6043 = vmatpush1.msra.mxu0 0.0
    %6044 = vmatprep.subr.mxu0 0.0
    %6045 = vmatpush1.msra.mxu0 0.0
    %6046 = vmatprep.subr.mxu0 0.0
    %6047 = vmatpush1.msra.mxu0 %v5193
    %6048 = vmatprep.subr.mxu0 0.0
    %6049 = vmatpush2.msra.mxu0 0.0
    %6050 = vmatprep.subr.mxu0 0.0
    %6051 = vmatpush2.msra.mxu0 0.0
    %6052 = vmatprep.subr.mxu0 0.0
    %6053 = vmatpush2.msra.mxu0 0.0
    %6054 = vmatprep.subr.mxu0 0.0
    %6055 = vmatpush2.msra.mxu0 0.0
    %6056 = vmatprep.subr.mxu0 0.0
    %6057 = vmatpush2.msra.mxu0 0.0
    %6058 = vmatprep.subr.mxu0 0.0
    %6059 = vmatpush2.msra.mxu0 0.0
    %6060 = vmatprep.subr.mxu0 0.0
    %6061 = vmatpush2.msra.mxu0 0.0
    %6062 = vmatprep.subr.mxu0 0.0
    %6063 = vmatpush2.msra.mxu0 0.0
    %6064 = vmatprep.subr.mxu0 0.0
    %6065 = vmatpush2.msra.mxu0 0.0
    %6066 = vmatprep.subr.mxu0 0.0
    %6067 = vmatpush2.msra.mxu0 0.0
    %6068 = vmatprep.subr.mxu0 0.0
    %6069 = vmatpush2.msra.mxu0 0.0
    %6070 = vmatprep.subr.mxu0 0.0
    %6071 = vmatpush2.msra.mxu0 0.0
    %6072 = vmatprep.subr.mxu0 0.0
    %6073 = vmatpush2.msra.mxu0 0.0
    %6074 = vmatprep.subr.mxu0 0.0
    %6075 = vmatpush2.msra.mxu0 0.0
    %6076 = vmatprep.subr.mxu0 0.0
    %6077 = vmatpush2.msra.mxu0 0.0
    %6078 = vmatprep.subr.mxu0 0.0
    %6079 = vmatpush2.msra.mxu0 0.0
    %6080 = vmatprep.mubr.f32.mxu0 0.0
    %6081 = vmatmul.mubr.f32.gmra.mxu0 %v6014
    %v6082 = vpop.f32.mrf.mxu0
    %v6083 = vadd.f32 0.0, %v6082
    %v6084 = vpop.f32.mrf.mxu0
    %6085 = vdwg.mxu0
    %v6086 = vlaneseq
    %v6087 = vshrl.u32 %v6086, 7
    %v6088 = vsub.s32 0, %v6087
    %v6089 = vrot.slane %v6010, %v6088
    %v6090 = vmul.f32 %v5738, %v6089
    %v6091 = vmul.f32 %v5743, %v6089
    %v6092 = vmul.f32 %v5748, %v6089
    %v6093 = vmul.f32 %v5753, %v6089
    %v6094 = vlaneseq
    %v6095 = vshrl.u32 %v6094, 7
    %v6096 = vsub.s32 0, %v6095
    %v6097 = vrot.slane %v6083, %v6096
    %v6098 = vadd.f32 %v6090, %v6097
    %v6099 = vadd.f32 %v6091, %v6097
    %v6100 = vadd.f32 %v6092, %v6097
    %v6101 = vadd.f32 %v6093, %v6097
    %v6102 = vstv %s5379
    %v6103 = vmul.f32 %v6102, %v6098
    %v6104 = vmul.f32 %v6102, %v6099
    %v6105 = vmul.f32 %v6102, %v6100
    %v6106 = vmul.f32 %v6102, %v6101
    %6111 = vrot.lane.b32.xlu0 %v6103, 16
    %v6112 = vpop.permute.xlu0 %6111
    %6113 = vrot.lane.b32.xlu0 %v6104, 16
    %v6114 = vpop.permute.xlu0 %6113
    %6115 = vrot.lane.b32.xlu0 %v6105, 16
    %v6116 = vpop.permute.xlu0 %6115
    %6117 = vrot.lane.b32.xlu0 %v6106, 16
    %v6118 = vpop.permute.xlu0 %6117
    %v6123 = vadd.f32 %v5375, %v6112
    %v6124 = vadd.f32 %v5376, %v6114
    %v6125 = vadd.f32 %v5377, %v6116
    %v6126 = vadd.f32 %v5378, %v6118
    %s6127 = sld [smem:[#allocation4 + $0x7]]
    %v6128 = vld [vmem:[#allocation2] sm:$0xff]
    %v6129 = vld [vmem:[#allocation2 + $0x8] sm:$0xff]
    %v6130 = vld [vmem:[#allocation2 + $0x18] sm:$0xff]
    %v6131 = vld [vmem:[#allocation2 + $0x20] sm:$0xff]
    %v6132 = vld [vmem:[#allocation24] sm:$0x1]
    %v6133 = vlaneseq
    %v6134 = vshrl.u32 %v6133, 7
    %v6135 = vsub.s32 0, %v6134
    %v6136 = vrot.slane %v6132, %v6135
    %v6137 = vmul.f32 %v6128, %v6136
    %v6138 = vmul.f32 %v6129, %v6136
    %v6139 = vmul.f32 %v6130, %v6136
    %v6140 = vmul.f32 %v6131, %v6136
    %v6141 = vadd.f32 %v6137, 0.0
    %v6142 = vadd.f32 %v6138, 0.0
    %v6143 = vadd.f32 %v6139, 0.0
    %v6144 = vadd.f32 %v6140, 0.0
    %v6145 = vld [vmem:[#allocation24 + $0x1] sm:$0x1]
    %v6146 = vlaneseq
    %v6147 = vshrl.u32 %v6146, 7
    %v6148 = vsub.s32 0, %v6147
    %v6149 = vrot.slane %v6145, %v6148
    %6151 = vrot.lane.b32.xlu0 %v6149, 8
    %v6152 = vpop.permute.xlu0 %6151
    %v6154 = vmul.f32 %v6128, %v6152
    %v6155 = vmul.f32 %v6129, %v6152
    %v6156 = vmul.f32 %v6130, %v6152
    %v6157 = vmul.f32 %v6131, %v6152
    %6162 = vrot.lane.b32.xlu0 %v6154, 120
    %v6163 = vpop.permute.xlu0 %6162
    %6164 = vrot.lane.b32.xlu0 %v6155, 120
    %v6165 = vpop.permute.xlu0 %6164
    %6166 = vrot.lane.b32.xlu0 %v6156, 120
    %v6167 = vpop.permute.xlu0 %6166
    %6168 = vrot.lane.b32.xlu0 %v6157, 120
    %v6169 = vpop.permute.xlu0 %6168
    %v6174 = vadd.f32 %v6141, %v6163
    %v6175 = vadd.f32 %v6142, %v6165
    %v6176 = vadd.f32 %v6143, %v6167
    %v6177 = vadd.f32 %v6144, %v6169
    %v6178 = vld [vmem:[#allocation24 + $0x2] sm:$0x1]
    %v6179 = vlaneseq
    %v6180 = vshrl.u32 %v6179, 7
    %v6181 = vsub.s32 0, %v6180
    %v6182 = vrot.slane %v6178, %v6181
    %6184 = vrot.lane.b32.xlu0 %v6182, 16
    %v6185 = vpop.permute.xlu0 %6184
    %v6187 = vmul.f32 %v6128, %v6185
    %v6188 = vmul.f32 %v6129, %v6185
    %v6189 = vmul.f32 %v6130, %v6185
    %v6190 = vmul.f32 %v6131, %v6185
    %6195 = vrot.lane.b32.xlu0 %v6187, 112
    %v6196 = vpop.permute.xlu0 %6195
    %6197 = vrot.lane.b32.xlu0 %v6188, 112
    %v6198 = vpop.permute.xlu0 %6197
    %6199 = vrot.lane.b32.xlu0 %v6189, 112
    %v6200 = vpop.permute.xlu0 %6199
    %6201 = vrot.lane.b32.xlu0 %v6190, 112
    %v6202 = vpop.permute.xlu0 %6201
    %v6207 = vadd.f32 %v6174, %v6196
    %v6208 = vadd.f32 %v6175, %v6198
    %v6209 = vadd.f32 %v6176, %v6200
    %v6210 = vadd.f32 %v6177, %v6202
    %v6211 = vld [vmem:[#allocation24 + $0x3] sm:$0x1]
    %v6212 = vlaneseq
    %v6213 = vshrl.u32 %v6212, 7
    %v6214 = vsub.s32 0, %v6213
    %v6215 = vrot.slane %v6211, %v6214
    %6217 = vrot.lane.b32.xlu0 %v6215, 24
    %v6218 = vpop.permute.xlu0 %6217
    %v6220 = vmul.f32 %v6128, %v6218
    %v6221 = vmul.f32 %v6129, %v6218
    %v6222 = vmul.f32 %v6130, %v6218
    %v6223 = vmul.f32 %v6131, %v6218
    %6228 = vrot.lane.b32.xlu0 %v6220, 104
    %v6229 = vpop.permute.xlu0 %6228
    %6230 = vrot.lane.b32.xlu0 %v6221, 104
    %v6231 = vpop.permute.xlu0 %6230
    %6232 = vrot.lane.b32.xlu0 %v6222, 104
    %v6233 = vpop.permute.xlu0 %6232
    %6234 = vrot.lane.b32.xlu0 %v6223, 104
    %v6235 = vpop.permute.xlu0 %6234
    %v6240 = vadd.f32 %v6207, %v6229
    %v6241 = vadd.f32 %v6208, %v6231
    %v6242 = vadd.f32 %v6209, %v6233
    %v6243 = vadd.f32 %v6210, %v6235
    %v6244 = vld [vmem:[#allocation24 + $0x4] sm:$0x1]
    %v6245 = vlaneseq
    %v6246 = vshrl.u32 %v6245, 7
    %v6247 = vsub.s32 0, %v6246
    %v6248 = vrot.slane %v6244, %v6247
    %6250 = vrot.lane.b32.xlu0 %v6248, 32
    %v6251 = vpop.permute.xlu0 %6250
    %v6253 = vmul.f32 %v6128, %v6251
    %v6254 = vmul.f32 %v6129, %v6251
    %v6255 = vmul.f32 %v6130, %v6251
    %v6256 = vmul.f32 %v6131, %v6251
    %6261 = vrot.lane.b32.xlu0 %v6253, 96
    %v6262 = vpop.permute.xlu0 %6261
    %6263 = vrot.lane.b32.xlu0 %v6254, 96
    %v6264 = vpop.permute.xlu0 %6263
    %6265 = vrot.lane.b32.xlu0 %v6255, 96
    %v6266 = vpop.permute.xlu0 %6265
    %6267 = vrot.lane.b32.xlu0 %v6256, 96
    %v6268 = vpop.permute.xlu0 %6267
    %v6273 = vadd.f32 %v6240, %v6262
    %v6274 = vadd.f32 %v6241, %v6264
    %v6275 = vadd.f32 %v6242, %v6266
    %v6276 = vadd.f32 %v6243, %v6268
    %s6277 = scalar_lea.vmem [#allocation24], 8
    %v6278 = vld [vmem:[%s6277] sm:$0x1]
    %v6279 = vlaneseq
    %v6280 = vshrl.u32 %v6279, 7
    %v6281 = vsub.s32 0, %v6280
    %v6282 = vrot.slane %v6278, %v6281
    %v6283 = vmul.f32 %v5380, %v6282
    %v6284 = vmul.f32 %v5381, %v6282
    %v6285 = vmul.f32 %v5382, %v6282
    %v6286 = vmul.f32 %v5383, %v6282
    %v6287 = vadd.f32 %v6273, %v6283
    %v6288 = vadd.f32 %v6274, %v6284
    %v6289 = vadd.f32 %v6275, %v6285
    %v6290 = vadd.f32 %v6276, %v6286
    %v6291 = vld [vmem:[%s6277 + $0x1] sm:$0x1]
    %v6292 = vlaneseq
    %v6293 = vshrl.u32 %v6292, 7
    %v6294 = vsub.s32 0, %v6293
    %v6295 = vrot.slane %v6291, %v6294
    %6297 = vrot.lane.b32.xlu0 %v6295, 8
    %v6298 = vpop.permute.xlu0 %6297
    %v6300 = vmul.f32 %v5380, %v6298
    %v6301 = vmul.f32 %v5381, %v6298
    %v6302 = vmul.f32 %v5382, %v6298
    %v6303 = vmul.f32 %v5383, %v6298
    %6308 = vrot.lane.b32.xlu0 %v6300, 120
    %v6309 = vpop.permute.xlu0 %6308
    %6310 = vrot.lane.b32.xlu0 %v6301, 120
    %v6311 = vpop.permute.xlu0 %6310
    %6312 = vrot.lane.b32.xlu0 %v6302, 120
    %v6313 = vpop.permute.xlu0 %6312
    %6314 = vrot.lane.b32.xlu0 %v6303, 120
    %v6315 = vpop.permute.xlu0 %6314
    %v6320 = vadd.f32 %v6287, %v6309
    %v6321 = vadd.f32 %v6288, %v6311
    %v6322 = vadd.f32 %v6289, %v6313
    %v6323 = vadd.f32 %v6290, %v6315
    %v6324 = vld [vmem:[%s6277 + $0x2] sm:$0x1]
    %v6325 = vlaneseq
    %v6326 = vshrl.u32 %v6325, 7
    %v6327 = vsub.s32 0, %v6326
    %v6328 = vrot.slane %v6324, %v6327
    %6330 = vrot.lane.b32.xlu0 %v6328, 16
    %v6331 = vpop.permute.xlu0 %6330
    %v6333 = vmul.f32 %v5380, %v6331
    %v6334 = vmul.f32 %v5381, %v6331
    %v6335 = vmul.f32 %v5382, %v6331
    %v6336 = vmul.f32 %v5383, %v6331
    %6341 = vrot.lane.b32.xlu0 %v6333, 112
    %v6342 = vpop.permute.xlu0 %6341
    %6343 = vrot.lane.b32.xlu0 %v6334, 112
    %v6344 = vpop.permute.xlu0 %6343
    %6345 = vrot.lane.b32.xlu0 %v6335, 112
    %v6346 = vpop.permute.xlu0 %6345
    %6347 = vrot.lane.b32.xlu0 %v6336, 112
    %v6348 = vpop.permute.xlu0 %6347
    %v6353 = vadd.f32 %v6320, %v6342
    %v6354 = vadd.f32 %v6321, %v6344
    %v6355 = vadd.f32 %v6322, %v6346
    %v6356 = vadd.f32 %v6323, %v6348
    %v6357 = vld [vmem:[%s6277 + $0x3] sm:$0x1]
    %v6358 = vlaneseq
    %v6359 = vshrl.u32 %v6358, 7
    %v6360 = vsub.s32 0, %v6359
    %v6361 = vrot.slane %v6357, %v6360
    %6363 = vrot.lane.b32.xlu0 %v6361, 24
    %v6364 = vpop.permute.xlu0 %6363
    %v6366 = vmul.f32 %v5380, %v6364
    %v6367 = vmul.f32 %v5381, %v6364
    %v6368 = vmul.f32 %v5382, %v6364
    %v6369 = vmul.f32 %v5383, %v6364
    %6374 = vrot.lane.b32.xlu0 %v6366, 104
    %v6375 = vpop.permute.xlu0 %6374
    %6376 = vrot.lane.b32.xlu0 %v6367, 104
    %v6377 = vpop.permute.xlu0 %6376
    %6378 = vrot.lane.b32.xlu0 %v6368, 104
    %v6379 = vpop.permute.xlu0 %6378
    %6380 = vrot.lane.b32.xlu0 %v6369, 104
    %v6381 = vpop.permute.xlu0 %6380
    %v6386 = vadd.f32 %v6353, %v6375
    %v6387 = vadd.f32 %v6354, %v6377
    %v6388 = vadd.f32 %v6355, %v6379
    %v6389 = vadd.f32 %v6356, %v6381
    %v6390 = vld [vmem:[%s6277 + $0x4] sm:$0x1]
    %v6391 = vlaneseq
    %v6392 = vshrl.u32 %v6391, 7
    %v6393 = vsub.s32 0, %v6392
    %v6394 = vrot.slane %v6390, %v6393
    %6396 = vrot.lane.b32.xlu0 %v6394, 32
    %v6397 = vpop.permute.xlu0 %6396
    %v6399 = vmul.f32 %v5380, %v6397
    %v6400 = vmul.f32 %v5381, %v6397
    %v6401 = vmul.f32 %v5382, %v6397
    %v6402 = vmul.f32 %v5383, %v6397
    %6407 = vrot.lane.b32.xlu0 %v6399, 96
    %v6408 = vpop.permute.xlu0 %6407
    %6409 = vrot.lane.b32.xlu0 %v6400, 96
    %v6410 = vpop.permute.xlu0 %6409
    %6411 = vrot.lane.b32.xlu0 %v6401, 96
    %v6412 = vpop.permute.xlu0 %6411
    %6413 = vrot.lane.b32.xlu0 %v6402, 96
    %v6414 = vpop.permute.xlu0 %6413
    %v6419 = vadd.f32 %v6386, %v6408
    %v6420 = vadd.f32 %v6387, %v6410
    %v6421 = vadd.f32 %v6388, %v6412
    %v6422 = vadd.f32 %v6389, %v6414
    %s6423 = scalar_lea.vmem [#allocation24], 16
    %v6424 = vld [vmem:[%s6423] sm:$0x1]
    %v6425 = vlaneseq
    %v6426 = vshrl.u32 %v6425, 7
    %v6427 = vsub.s32 0, %v6426
    %v6428 = vrot.slane %v6424, %v6427
    %v6429 = vmul.f32 %v5467, %v6428
    %v6430 = vmul.f32 %v5468, %v6428
    %v6431 = vmul.f32 %v5469, %v6428
    %v6432 = vmul.f32 %v5470, %v6428
    %v6433 = vadd.f32 %v6419, %v6429
    %v6434 = vadd.f32 %v6420, %v6430
    %v6435 = vadd.f32 %v6421, %v6431
    %v6436 = vadd.f32 %v6422, %v6432
    %v6437 = vld [vmem:[%s6423 + $0x1] sm:$0x1]
    %v6438 = vlaneseq
    %v6439 = vshrl.u32 %v6438, 7
    %v6440 = vsub.s32 0, %v6439
    %v6441 = vrot.slane %v6437, %v6440
    %6443 = vrot.lane.b32.xlu0 %v6441, 8
    %v6444 = vpop.permute.xlu0 %6443
    %v6446 = vmul.f32 %v5467, %v6444
    %v6447 = vmul.f32 %v5468, %v6444
    %v6448 = vmul.f32 %v5469, %v6444
    %v6449 = vmul.f32 %v5470, %v6444
    %6454 = vrot.lane.b32.xlu0 %v6446, 120
    %v6455 = vpop.permute.xlu0 %6454
    %6456 = vrot.lane.b32.xlu0 %v6447, 120
    %v6457 = vpop.permute.xlu0 %6456
    %6458 = vrot.lane.b32.xlu0 %v6448, 120
    %v6459 = vpop.permute.xlu0 %6458
    %6460 = vrot.lane.b32.xlu0 %v6449, 120
    %v6461 = vpop.permute.xlu0 %6460
    %v6466 = vadd.f32 %v6433, %v6455
    %v6467 = vadd.f32 %v6434, %v6457
    %v6468 = vadd.f32 %v6435, %v6459
    %v6469 = vadd.f32 %v6436, %v6461
    %v6470 = vld [vmem:[%s6423 + $0x2] sm:$0x1]
    %v6471 = vlaneseq
    %v6472 = vshrl.u32 %v6471, 7
    %v6473 = vsub.s32 0, %v6472
    %v6474 = vrot.slane %v6470, %v6473
    %6476 = vrot.lane.b32.xlu0 %v6474, 16
    %v6477 = vpop.permute.xlu0 %6476
    %v6479 = vmul.f32 %v5467, %v6477
    %v6480 = vmul.f32 %v5468, %v6477
    %v6481 = vmul.f32 %v5469, %v6477
    %v6482 = vmul.f32 %v5470, %v6477
    %6487 = vrot.lane.b32.xlu0 %v6479, 112
    %v6488 = vpop.permute.xlu0 %6487
    %6489 = vrot.lane.b32.xlu0 %v6480, 112
    %v6490 = vpop.permute.xlu0 %6489
    %6491 = vrot.lane.b32.xlu0 %v6481, 112
    %v6492 = vpop.permute.xlu0 %6491
    %6493 = vrot.lane.b32.xlu0 %v6482, 112
    %v6494 = vpop.permute.xlu0 %6493
    %v6499 = vadd.f32 %v6466, %v6488
    %v6500 = vadd.f32 %v6467, %v6490
    %v6501 = vadd.f32 %v6468, %v6492
    %v6502 = vadd.f32 %v6469, %v6494
    %v6503 = vld [vmem:[%s6423 + $0x3] sm:$0x1]
    %v6504 = vlaneseq
    %v6505 = vshrl.u32 %v6504, 7
    %v6506 = vsub.s32 0, %v6505
    %v6507 = vrot.slane %v6503, %v6506
    %6509 = vrot.lane.b32.xlu0 %v6507, 24
    %v6510 = vpop.permute.xlu0 %6509
    %v6512 = vmul.f32 %v5467, %v6510
    %v6513 = vmul.f32 %v5468, %v6510
    %v6514 = vmul.f32 %v5469, %v6510
    %v6515 = vmul.f32 %v5470, %v6510
    %6520 = vrot.lane.b32.xlu0 %v6512, 104
    %v6521 = vpop.permute.xlu0 %6520
    %6522 = vrot.lane.b32.xlu0 %v6513, 104
    %v6523 = vpop.permute.xlu0 %6522
    %6524 = vrot.lane.b32.xlu0 %v6514, 104
    %v6525 = vpop.permute.xlu0 %6524
    %6526 = vrot.lane.b32.xlu0 %v6515, 104
    %v6527 = vpop.permute.xlu0 %6526
    %v6532 = vadd.f32 %v6499, %v6521
    %v6533 = vadd.f32 %v6500, %v6523
    %v6534 = vadd.f32 %v6501, %v6525
    %v6535 = vadd.f32 %v6502, %v6527
    %v6536 = vld [vmem:[%s6423 + $0x4] sm:$0x1]
    %v6537 = vlaneseq
    %v6538 = vshrl.u32 %v6537, 7
    %v6539 = vsub.s32 0, %v6538
    %v6540 = vrot.slane %v6536, %v6539
    %6542 = vrot.lane.b32.xlu0 %v6540, 32
    %v6543 = vpop.permute.xlu0 %6542
    %v6545 = vmul.f32 %v5467, %v6543
    %v6546 = vmul.f32 %v5468, %v6543
    %v6547 = vmul.f32 %v5469, %v6543
    %v6548 = vmul.f32 %v5470, %v6543
    %6553 = vrot.lane.b32.xlu0 %v6545, 96
    %v6554 = vpop.permute.xlu0 %6553
    %6555 = vrot.lane.b32.xlu0 %v6546, 96
    %v6556 = vpop.permute.xlu0 %6555
    %6557 = vrot.lane.b32.xlu0 %v6547, 96
    %v6558 = vpop.permute.xlu0 %6557
    %6559 = vrot.lane.b32.xlu0 %v6548, 96
    %v6560 = vpop.permute.xlu0 %6559
    %v6565 = vadd.f32 %v6532, %v6554
    %v6566 = vadd.f32 %v6533, %v6556
    %v6567 = vadd.f32 %v6534, %v6558
    %v6568 = vadd.f32 %v6535, %v6560
    %s6569 = scalar_lea.vmem [#allocation24], 24
    %v6570 = vld [vmem:[%s6569] sm:$0x1]
    %v6571 = vlaneseq
    %v6572 = vshrl.u32 %v6571, 7
    %v6573 = vsub.s32 0, %v6572
    %v6574 = vrot.slane %v6570, %v6573
    %v6575 = vmul.f32 %v5555, %v6574
    %v6576 = vmul.f32 %v5556, %v6574
    %v6577 = vmul.f32 %v5557, %v6574
    %v6578 = vmul.f32 %v5558, %v6574
    %v6579 = vadd.f32 %v6565, %v6575
    %v6580 = vadd.f32 %v6566, %v6576
    %v6581 = vadd.f32 %v6567, %v6577
    %v6582 = vadd.f32 %v6568, %v6578
    %v6583 = vld [vmem:[%s6569 + $0x1] sm:$0x1]
    %v6584 = vlaneseq
    %v6585 = vshrl.u32 %v6584, 7
    %v6586 = vsub.s32 0, %v6585
    %v6587 = vrot.slane %v6583, %v6586
    %6589 = vrot.lane.b32.xlu0 %v6587, 8
    %v6590 = vpop.permute.xlu0 %6589
    %v6592 = vmul.f32 %v5555, %v6590
    %v6593 = vmul.f32 %v5556, %v6590
    %v6594 = vmul.f32 %v5557, %v6590
    %v6595 = vmul.f32 %v5558, %v6590
    %6600 = vrot.lane.b32.xlu0 %v6592, 120
    %v6601 = vpop.permute.xlu0 %6600
    %6602 = vrot.lane.b32.xlu0 %v6593, 120
    %v6603 = vpop.permute.xlu0 %6602
    %6604 = vrot.lane.b32.xlu0 %v6594, 120
    %v6605 = vpop.permute.xlu0 %6604
    %6606 = vrot.lane.b32.xlu0 %v6595, 120
    %v6607 = vpop.permute.xlu0 %6606
    %v6612 = vadd.f32 %v6579, %v6601
    %v6613 = vadd.f32 %v6580, %v6603
    %v6614 = vadd.f32 %v6581, %v6605
    %v6615 = vadd.f32 %v6582, %v6607
    %v6616 = vld [vmem:[%s6569 + $0x2] sm:$0x1]
    %v6617 = vlaneseq
    %v6618 = vshrl.u32 %v6617, 7
    %v6619 = vsub.s32 0, %v6618
    %v6620 = vrot.slane %v6616, %v6619
    %6622 = vrot.lane.b32.xlu0 %v6620, 16
    %v6623 = vpop.permute.xlu0 %6622
    %v6625 = vmul.f32 %v5555, %v6623
    %v6626 = vmul.f32 %v5556, %v6623
    %v6627 = vmul.f32 %v5557, %v6623
    %v6628 = vmul.f32 %v5558, %v6623
    %6633 = vrot.lane.b32.xlu0 %v6625, 112
    %v6634 = vpop.permute.xlu0 %6633
    %6635 = vrot.lane.b32.xlu0 %v6626, 112
    %v6636 = vpop.permute.xlu0 %6635
    %6637 = vrot.lane.b32.xlu0 %v6627, 112
    %v6638 = vpop.permute.xlu0 %6637
    %6639 = vrot.lane.b32.xlu0 %v6628, 112
    %v6640 = vpop.permute.xlu0 %6639
    %v6645 = vadd.f32 %v6612, %v6634
    %v6646 = vadd.f32 %v6613, %v6636
    %v6647 = vadd.f32 %v6614, %v6638
    %v6648 = vadd.f32 %v6615, %v6640
    %v6649 = vld [vmem:[%s6569 + $0x3] sm:$0x1]
    %v6650 = vlaneseq
    %v6651 = vshrl.u32 %v6650, 7
    %v6652 = vsub.s32 0, %v6651
    %v6653 = vrot.slane %v6649, %v6652
    %6655 = vrot.lane.b32.xlu0 %v6653, 24
    %v6656 = vpop.permute.xlu0 %6655
    %v6658 = vmul.f32 %v5555, %v6656
    %v6659 = vmul.f32 %v5556, %v6656
    %v6660 = vmul.f32 %v5557, %v6656
    %v6661 = vmul.f32 %v5558, %v6656
    %6666 = vrot.lane.b32.xlu0 %v6658, 104
    %v6667 = vpop.permute.xlu0 %6666
    %6668 = vrot.lane.b32.xlu0 %v6659, 104
    %v6669 = vpop.permute.xlu0 %6668
    %6670 = vrot.lane.b32.xlu0 %v6660, 104
    %v6671 = vpop.permute.xlu0 %6670
    %6672 = vrot.lane.b32.xlu0 %v6661, 104
    %v6673 = vpop.permute.xlu0 %6672
    %v6678 = vadd.f32 %v6645, %v6667
    %v6679 = vadd.f32 %v6646, %v6669
    %v6680 = vadd.f32 %v6647, %v6671
    %v6681 = vadd.f32 %v6648, %v6673
    %v6682 = vld [vmem:[%s6569 + $0x4] sm:$0x1]
    %v6683 = vlaneseq
    %v6684 = vshrl.u32 %v6683, 7
    %v6685 = vsub.s32 0, %v6684
    %v6686 = vrot.slane %v6682, %v6685
    %6688 = vrot.lane.b32.xlu0 %v6686, 32
    %v6689 = vpop.permute.xlu0 %6688
    %v6691 = vmul.f32 %v5555, %v6689
    %v6692 = vmul.f32 %v5556, %v6689
    %v6693 = vmul.f32 %v5557, %v6689
    %v6694 = vmul.f32 %v5558, %v6689
    %6699 = vrot.lane.b32.xlu0 %v6691, 96
    %v6700 = vpop.permute.xlu0 %6699
    %6701 = vrot.lane.b32.xlu0 %v6692, 96
    %v6702 = vpop.permute.xlu0 %6701
    %6703 = vrot.lane.b32.xlu0 %v6693, 96
    %v6704 = vpop.permute.xlu0 %6703
    %6705 = vrot.lane.b32.xlu0 %v6694, 96
    %v6706 = vpop.permute.xlu0 %6705
    %v6711 = vadd.f32 %v6678, %v6700
    %v6712 = vadd.f32 %v6679, %v6702
    %v6713 = vadd.f32 %v6680, %v6704
    %v6714 = vadd.f32 %v6681, %v6706
    %v6715 = vld [vmem:[#allocation2 + $0x10] sm:$0xff]
    %v6716 = vld [vmem:[#allocation2 + $0x28] sm:$0xff]
    %s6717 = scalar_lea.vmem [#allocation24], 32
    %v6718 = vld [vmem:[%s6717] sm:$0x1]
    %v6719 = vlaneseq
    %v6720 = vshrl.u32 %v6719, 7
    %v6721 = vsub.s32 0, %v6720
    %v6722 = vrot.slane %v6718, %v6721
    %v6723 = vmul.f32 %v6129, %v6722
    %v6724 = vmul.f32 %v6715, %v6722
    %v6725 = vmul.f32 %v6131, %v6722
    %v6726 = vmul.f32 %v6716, %v6722
    %v6727 = vadd.f32 %v6711, %v6723
    %v6728 = vadd.f32 %v6712, %v6724
    %v6729 = vadd.f32 %v6713, %v6725
    %v6730 = vadd.f32 %v6714, %v6726
    %v6731 = vld [vmem:[%s6717 + $0x1] sm:$0x1]
    %v6732 = vlaneseq
    %v6733 = vshrl.u32 %v6732, 7
    %v6734 = vsub.s32 0, %v6733
    %v6735 = vrot.slane %v6731, %v6734
    %6737 = vrot.lane.b32.xlu0 %v6735, 8
    %v6738 = vpop.permute.xlu0 %6737
    %v6740 = vmul.f32 %v6129, %v6738
    %v6741 = vmul.f32 %v6715, %v6738
    %v6742 = vmul.f32 %v6131, %v6738
    %v6743 = vmul.f32 %v6716, %v6738
    %6748 = vrot.lane.b32.xlu0 %v6740, 120
    %v6749 = vpop.permute.xlu0 %6748
    %6750 = vrot.lane.b32.xlu0 %v6741, 120
    %v6751 = vpop.permute.xlu0 %6750
    %6752 = vrot.lane.b32.xlu0 %v6742, 120
    %v6753 = vpop.permute.xlu0 %6752
    %6754 = vrot.lane.b32.xlu0 %v6743, 120
    %v6755 = vpop.permute.xlu0 %6754
    %v6760 = vadd.f32 %v6727, %v6749
    %v6761 = vadd.f32 %v6728, %v6751
    %v6762 = vadd.f32 %v6729, %v6753
    %v6763 = vadd.f32 %v6730, %v6755
    %v6764 = vld [vmem:[%s6717 + $0x2] sm:$0x1]
    %v6765 = vlaneseq
    %v6766 = vshrl.u32 %v6765, 7
    %v6767 = vsub.s32 0, %v6766
    %v6768 = vrot.slane %v6764, %v6767
    %6770 = vrot.lane.b32.xlu0 %v6768, 16
    %v6771 = vpop.permute.xlu0 %6770
    %v6773 = vmul.f32 %v6129, %v6771
    %v6774 = vmul.f32 %v6715, %v6771
    %v6775 = vmul.f32 %v6131, %v6771
    %v6776 = vmul.f32 %v6716, %v6771
    %6781 = vrot.lane.b32.xlu0 %v6773, 112
    %v6782 = vpop.permute.xlu0 %6781
    %6783 = vrot.lane.b32.xlu0 %v6774, 112
    %v6784 = vpop.permute.xlu0 %6783
    %6785 = vrot.lane.b32.xlu0 %v6775, 112
    %v6786 = vpop.permute.xlu0 %6785
    %6787 = vrot.lane.b32.xlu0 %v6776, 112
    %v6788 = vpop.permute.xlu0 %6787
    %v6793 = vadd.f32 %v6760, %v6782
    %v6794 = vadd.f32 %v6761, %v6784
    %v6795 = vadd.f32 %v6762, %v6786
    %v6796 = vadd.f32 %v6763, %v6788
    %v6797 = vld [vmem:[%s6717 + $0x3] sm:$0x1]
    %v6798 = vlaneseq
    %v6799 = vshrl.u32 %v6798, 7
    %v6800 = vsub.s32 0, %v6799
    %v6801 = vrot.slane %v6797, %v6800
    %6803 = vrot.lane.b32.xlu0 %v6801, 24
    %v6804 = vpop.permute.xlu0 %6803
    %v6806 = vmul.f32 %v6129, %v6804
    %v6807 = vmul.f32 %v6715, %v6804
    %v6808 = vmul.f32 %v6131, %v6804
    %v6809 = vmul.f32 %v6716, %v6804
    %6814 = vrot.lane.b32.xlu0 %v6806, 104
    %v6815 = vpop.permute.xlu0 %6814
    %6816 = vrot.lane.b32.xlu0 %v6807, 104
    %v6817 = vpop.permute.xlu0 %6816
    %6818 = vrot.lane.b32.xlu0 %v6808, 104
    %v6819 = vpop.permute.xlu0 %6818
    %6820 = vrot.lane.b32.xlu0 %v6809, 104
    %v6821 = vpop.permute.xlu0 %6820
    %v6826 = vadd.f32 %v6793, %v6815
    %v6827 = vadd.f32 %v6794, %v6817
    %v6828 = vadd.f32 %v6795, %v6819
    %v6829 = vadd.f32 %v6796, %v6821
    %v6830 = vld [vmem:[%s6717 + $0x4] sm:$0x1]
    %v6831 = vlaneseq
    %v6832 = vshrl.u32 %v6831, 7
    %v6833 = vsub.s32 0, %v6832
    %v6834 = vrot.slane %v6830, %v6833
    %6836 = vrot.lane.b32.xlu0 %v6834, 32
    %v6837 = vpop.permute.xlu0 %6836
    %v6839 = vmul.f32 %v6129, %v6837
    %v6840 = vmul.f32 %v6715, %v6837
    %v6841 = vmul.f32 %v6131, %v6837
    %v6842 = vmul.f32 %v6716, %v6837
    %6847 = vrot.lane.b32.xlu0 %v6839, 96
    %v6848 = vpop.permute.xlu0 %6847
    %6849 = vrot.lane.b32.xlu0 %v6840, 96
    %v6850 = vpop.permute.xlu0 %6849
    %6851 = vrot.lane.b32.xlu0 %v6841, 96
    %v6852 = vpop.permute.xlu0 %6851
    %6853 = vrot.lane.b32.xlu0 %v6842, 96
    %v6854 = vpop.permute.xlu0 %6853
    %v6859 = vadd.f32 %v6826, %v6848
    %v6860 = vadd.f32 %v6827, %v6850
    %v6861 = vadd.f32 %v6828, %v6852
    %v6862 = vadd.f32 %v6829, %v6854
    %v6863 = vld [vmem:[#allocation26] sm:$0xff]
    %v6864 = vld [vmem:[#allocation26 + $0x8] sm:$0xff]
    %v6865 = vld [vmem:[#allocation26 + $0x10] sm:$0xff]
    %v6866 = vld [vmem:[#allocation26 + $0x18] sm:$0xff]
    %v6867 = vld [vmem:[#allocation26 + $0x20] sm:$0xff]
    %v6868 = vld [vmem:[#allocation26 + $0x28] sm:$0xff]
    %v6869 = vld [vmem:[#allocation26 + $0x30] sm:$0xff]
    %v6870 = vld [vmem:[#allocation26 + $0x38] sm:$0xff]
    %v6872 = vsel %vm499, %v6859, 0
    %v6875 = vsel %vm499, %v6860, 0
    %v6878 = vsel %vm499, %v6861, 0
    %v6881 = vsel %vm499, %v6862, 0
    %6883 = vmatprep.subr.mxu0 0.0
    %6884 = vmatpush1.msra.mxu0 0.0
    %6885 = vmatprep.subr.mxu0 0.0
    %6886 = vmatpush1.msra.mxu0 0.0
    %6887 = vmatprep.subr.mxu0 0.0
    %6888 = vmatpush1.msra.mxu0 0.0
    %6889 = vmatprep.subr.mxu0 0.0
    %6890 = vmatpush1.msra.mxu0 0.0
    %6891 = vmatprep.subr.mxu0 0.0
    %6892 = vmatpush1.msra.mxu0 0.0
    %6893 = vmatprep.subr.mxu0 0.0
    %6894 = vmatpush1.msra.mxu0 0.0
    %6895 = vmatprep.subr.mxu0 0.0
    %6896 = vmatpush1.msra.mxu0 0.0
    %6897 = vmatprep.subr.mxu0 0.0
    %6898 = vmatpush1.msra.mxu0 0.0
    %6899 = vmatprep.subr.mxu0 0.0
    %6900 = vmatpush1.msra.mxu0 %v6870
    %6901 = vmatprep.subr.mxu0 0.0
    %6902 = vmatpush1.msra.mxu0 %v6869
    %6903 = vmatprep.subr.mxu0 0.0
    %6904 = vmatpush1.msra.mxu0 %v6868
    %6905 = vmatprep.subr.mxu0 0.0
    %6906 = vmatpush1.msra.mxu0 %v6867
    %6907 = vmatprep.subr.mxu0 0.0
    %6908 = vmatpush1.msra.mxu0 %v6866
    %6909 = vmatprep.subr.mxu0 0.0
    %6910 = vmatpush1.msra.mxu0 %v6865
    %6911 = vmatprep.subr.mxu0 0.0
    %6912 = vmatpush1.msra.mxu0 %v6864
    %6913 = vmatprep.subr.mxu0 0.0
    %6914 = vmatpush1.msra.mxu0 %v6863
    %6915 = vmatprep.subr.mxu0 0.0
    %6916 = vmatpush2.msra.mxu0 0.0
    %6917 = vmatprep.subr.mxu0 0.0
    %6918 = vmatpush2.msra.mxu0 0.0
    %6919 = vmatprep.subr.mxu0 0.0
    %6920 = vmatpush2.msra.mxu0 0.0
    %6921 = vmatprep.subr.mxu0 0.0
    %6922 = vmatpush2.msra.mxu0 0.0
    %6923 = vmatprep.subr.mxu0 0.0
    %6924 = vmatpush2.msra.mxu0 0.0
    %6925 = vmatprep.subr.mxu0 0.0
    %6926 = vmatpush2.msra.mxu0 0.0
    %6927 = vmatprep.subr.mxu0 0.0
    %6928 = vmatpush2.msra.mxu0 0.0
    %6929 = vmatprep.subr.mxu0 0.0
    %6930 = vmatpush2.msra.mxu0 0.0
    %6931 = vmatprep.subr.mxu0 0.0
    %6932 = vmatpush2.msra.mxu0 0.0
    %6933 = vmatprep.subr.mxu0 0.0
    %6934 = vmatpush2.msra.mxu0 0.0
    %6935 = vmatprep.subr.mxu0 0.0
    %6936 = vmatpush2.msra.mxu0 0.0
    %6937 = vmatprep.subr.mxu0 0.0
    %6938 = vmatpush2.msra.mxu0 0.0
    %6939 = vmatprep.subr.mxu0 0.0
    %6940 = vmatpush2.msra.mxu0 0.0
    %6941 = vmatprep.subr.mxu0 0.0
    %6942 = vmatpush2.msra.mxu0 0.0
    %6943 = vmatprep.subr.mxu0 0.0
    %6944 = vmatpush2.msra.mxu0 0.0
    %6945 = vmatprep.subr.mxu0 0.0
    %6946 = vmatpush2.msra.mxu0 0.0
    %6947 = vmatprep.mubr.f32.mxu0 0.0
    %6948 = vmatmul.mubr.f32.gmra.mxu0 %v6872
    %v6949 = vpop.f32.mrf.mxu0
    %v6950 = vadd.f32 0.0, %v6949
    %v6951 = vpop.f32.mrf.mxu0
    %6952 = vmatprep.mubr.f32.mxu0 0.0
    %6953 = vmatmul.mubr.f32.gmra.mxu0 %v6875
    %v6954 = vpop.f32.mrf.mxu0
    %v6955 = vadd.f32 0.0, %v6954
    %v6956 = vpop.f32.mrf.mxu0
    %6957 = vmatprep.mubr.f32.mxu0 0.0
    %6958 = vmatmul.mubr.f32.gmra.mxu0 %v6878
    %v6959 = vpop.f32.mrf.mxu0
    %v6960 = vadd.f32 0.0, %v6959
    %v6961 = vpop.f32.mrf.mxu0
    %6962 = vmatprep.mubr.f32.mxu0 0.0
    %6963 = vmatmul.mubr.f32.gmra.mxu0 %v6881
    %v6964 = vpop.f32.mrf.mxu0
    %v6965 = vadd.f32 0.0, %v6964
    %v6966 = vpop.f32.mrf.mxu0
    %6967 = vdwg.mxu0
    %v6968 = vsel %vm499, %v6950, 0.0
    %v6969 = vsel %vm499, %v6955, 0.0
    %v6970 = vadd.f32 %v6968, %v6969
    %v6971 = vsel %vm499, %v6960, 0.0
    %v6972 = vadd.f32 %v6970, %v6971
    %v6973 = vsel %vm499, %v6965, 0.0
    %v6974 = vadd.f32 %v6972, %v6973
    %v6975 = vrot.slane %v6974, 4
    %v6976 = vadd.f32 %v6974, %v6975
    %v6977 = vrot.slane %v6976, 2
    %v6978 = vadd.f32 %v6976, %v6977
    %v6979 = vrot.slane %v6978, 1
    %v6980 = vadd.f32 %v6978, %v6979
    %v6981 = vmul.f32 %v6950, %v6950
    %v6982 = vmul.f32 %v6955, %v6955
    %v6983 = vmul.f32 %v6960, %v6960
    %v6984 = vmul.f32 %v6965, %v6965
    %v6985 = vsel %vm499, %v6981, 0.0
    %v6986 = vsel %vm499, %v6982, 0.0
    %v6987 = vadd.f32 %v6985, %v6986
    %v6988 = vsel %vm499, %v6983, 0.0
    %v6989 = vadd.f32 %v6987, %v6988
    %v6990 = vsel %vm499, %v6984, 0.0
    %v6991 = vadd.f32 %v6989, %v6990
    %v6992 = vrot.slane %v6991, 4
    %v6993 = vadd.f32 %v6991, %v6992
    %v6994 = vrot.slane %v6993, 2
    %v6995 = vadd.f32 %v6993, %v6994
    %v6996 = vrot.slane %v6995, 1
    %v6997 = vadd.f32 %v6995, %v6996
    %v6999 = vsel %vm499, %v6980, 0
    %7001 = vmatprep.subr.mxu0 0.0
    %7002 = vmatpush1.msra.mxu0 0.0
    %7003 = vmatprep.subr.mxu0 0.0
    %7004 = vmatpush1.msra.mxu0 0.0
    %7005 = vmatprep.subr.mxu0 0.0
    %7006 = vmatpush1.msra.mxu0 0.0
    %7007 = vmatprep.subr.mxu0 0.0
    %7008 = vmatpush1.msra.mxu0 0.0
    %7009 = vmatprep.subr.mxu0 0.0
    %7010 = vmatpush1.msra.mxu0 0.0
    %7011 = vmatprep.subr.mxu0 0.0
    %7012 = vmatpush1.msra.mxu0 0.0
    %7013 = vmatprep.subr.mxu0 0.0
    %7014 = vmatpush1.msra.mxu0 0.0
    %7015 = vmatprep.subr.mxu0 0.0
    %7016 = vmatpush1.msra.mxu0 0.0
    %7017 = vmatprep.subr.mxu0 0.0
    %7018 = vmatpush1.msra.mxu0 %v5033
    %7019 = vmatprep.subr.mxu0 0.0
    %7020 = vmatpush1.msra.mxu0 %v5032
    %7021 = vmatprep.subr.mxu0 0.0
    %7022 = vmatpush1.msra.mxu0 %v5031
    %7023 = vmatprep.subr.mxu0 0.0
    %7024 = vmatpush1.msra.mxu0 %v5030
    %7025 = vmatprep.subr.mxu0 0.0
    %7026 = vmatpush1.msra.mxu0 %v5029
    %7027 = vmatprep.subr.mxu0 0.0
    %7028 = vmatpush1.msra.mxu0 %v5028
    %7029 = vmatprep.subr.mxu0 0.0
    %7030 = vmatpush1.msra.mxu0 %v5027
    %7031 = vmatprep.subr.mxu0 0.0
    %7032 = vmatpush1.msra.mxu0 %v5026
    %7033 = vmatprep.subr.mxu0 0.0
    %7034 = vmatpush2.msra.mxu0 0.0
    %7035 = vmatprep.subr.mxu0 0.0
    %7036 = vmatpush2.msra.mxu0 0.0
    %7037 = vmatprep.subr.mxu0 0.0
    %7038 = vmatpush2.msra.mxu0 0.0
    %7039 = vmatprep.subr.mxu0 0.0
    %7040 = vmatpush2.msra.mxu0 0.0
    %7041 = vmatprep.subr.mxu0 0.0
    %7042 = vmatpush2.msra.mxu0 0.0
    %7043 = vmatprep.subr.mxu0 0.0
    %7044 = vmatpush2.msra.mxu0 0.0
    %7045 = vmatprep.subr.mxu0 0.0
    %7046 = vmatpush2.msra.mxu0 0.0
    %7047 = vmatprep.subr.mxu0 0.0
    %7048 = vmatpush2.msra.mxu0 0.0
    %7049 = vmatprep.subr.mxu0 0.0
    %7050 = vmatpush2.msra.mxu0 0.0
    %7051 = vmatprep.subr.mxu0 0.0
    %7052 = vmatpush2.msra.mxu0 0.0
    %7053 = vmatprep.subr.mxu0 0.0
    %7054 = vmatpush2.msra.mxu0 0.0
    %7055 = vmatprep.subr.mxu0 0.0
    %7056 = vmatpush2.msra.mxu0 0.0
    %7057 = vmatprep.subr.mxu0 0.0
    %7058 = vmatpush2.msra.mxu0 0.0
    %7059 = vmatprep.subr.mxu0 0.0
    %7060 = vmatpush2.msra.mxu0 0.0
    %7061 = vmatprep.subr.mxu0 0.0
    %7062 = vmatpush2.msra.mxu0 0.0
    %7063 = vmatprep.subr.mxu0 0.0
    %7064 = vmatpush2.msra.mxu0 0.0
    %7065 = vmatprep.mubr.f32.mxu0 0.0
    %7066 = vmatmul.mubr.f32.gmra.mxu0 %v6999
    %v7067 = vpop.f32.mrf.mxu0
    %v7068 = vadd.f32 0.0, %v7067
    %v7069 = vpop.f32.mrf.mxu0
    %7070 = vdwg.mxu0
    %v7072 = vsel %vm499, %v6997, 0
    %7074 = vmatprep.subr.mxu0 0.0
    %7075 = vmatpush1.msra.mxu0 0.0
    %7076 = vmatprep.subr.mxu0 0.0
    %7077 = vmatpush1.msra.mxu0 0.0
    %7078 = vmatprep.subr.mxu0 0.0
    %7079 = vmatpush1.msra.mxu0 0.0
    %7080 = vmatprep.subr.mxu0 0.0
    %7081 = vmatpush1.msra.mxu0 0.0
    %7082 = vmatprep.subr.mxu0 0.0
    %7083 = vmatpush1.msra.mxu0 0.0
    %7084 = vmatprep.subr.mxu0 0.0
    %7085 = vmatpush1.msra.mxu0 0.0
    %7086 = vmatprep.subr.mxu0 0.0
    %7087 = vmatpush1.msra.mxu0 0.0
    %7088 = vmatprep.subr.mxu0 0.0
    %7089 = vmatpush1.msra.mxu0 0.0
    %7090 = vmatprep.subr.mxu0 0.0
    %7091 = vmatpush1.msra.mxu0 %v5033
    %7092 = vmatprep.subr.mxu0 0.0
    %7093 = vmatpush1.msra.mxu0 %v5032
    %7094 = vmatprep.subr.mxu0 0.0
    %7095 = vmatpush1.msra.mxu0 %v5031
    %7096 = vmatprep.subr.mxu0 0.0
    %7097 = vmatpush1.msra.mxu0 %v5030
    %7098 = vmatprep.subr.mxu0 0.0
    %7099 = vmatpush1.msra.mxu0 %v5029
    %7100 = vmatprep.subr.mxu0 0.0
    %7101 = vmatpush1.msra.mxu0 %v5028
    %7102 = vmatprep.subr.mxu0 0.0
    %7103 = vmatpush1.msra.mxu0 %v5027
    %7104 = vmatprep.subr.mxu0 0.0
    %7105 = vmatpush1.msra.mxu0 %v5026
    %7106 = vmatprep.subr.mxu0 0.0
    %7107 = vmatpush2.msra.mxu0 0.0
    %7108 = vmatprep.subr.mxu0 0.0
    %7109 = vmatpush2.msra.mxu0 0.0
    %7110 = vmatprep.subr.mxu0 0.0
    %7111 = vmatpush2.msra.mxu0 0.0
    %7112 = vmatprep.subr.mxu0 0.0
    %7113 = vmatpush2.msra.mxu0 0.0
    %7114 = vmatprep.subr.mxu0 0.0
    %7115 = vmatpush2.msra.mxu0 0.0
    %7116 = vmatprep.subr.mxu0 0.0
    %7117 = vmatpush2.msra.mxu0 0.0
    %7118 = vmatprep.subr.mxu0 0.0
    %7119 = vmatpush2.msra.mxu0 0.0
    %7120 = vmatprep.subr.mxu0 0.0
    %7121 = vmatpush2.msra.mxu0 0.0
    %7122 = vmatprep.subr.mxu0 0.0
    %7123 = vmatpush2.msra.mxu0 0.0
    %7124 = vmatprep.subr.mxu0 0.0
    %7125 = vmatpush2.msra.mxu0 0.0
    %7126 = vmatprep.subr.mxu0 0.0
    %7127 = vmatpush2.msra.mxu0 0.0
    %7128 = vmatprep.subr.mxu0 0.0
    %7129 = vmatpush2.msra.mxu0 0.0
    %7130 = vmatprep.subr.mxu0 0.0
    %7131 = vmatpush2.msra.mxu0 0.0
    %7132 = vmatprep.subr.mxu0 0.0
    %7133 = vmatpush2.msra.mxu0 0.0
    %7134 = vmatprep.subr.mxu0 0.0
    %7135 = vmatpush2.msra.mxu0 0.0
    %7136 = vmatprep.subr.mxu0 0.0
    %7137 = vmatpush2.msra.mxu0 0.0
    %7138 = vmatprep.mubr.f32.mxu0 0.0
    %7139 = vmatmul.mubr.f32.gmra.mxu0 %v7072
    %v7140 = vpop.f32.mrf.mxu0
    %v7141 = vadd.f32 0.0, %v7140
    %v7142 = vpop.f32.mrf.mxu0
    %7143 = vdwg.mxu0
    %v7144 = vmul.f32 %v7068, 0.001953125
    %v7145 = vmul.f32 %v7141, 0.001953125
    %v7146 = vmul.f32 %v7144, %v7144
    %v7147 = vsub.f32 %v7145, %v7146
    %v7148 = vadd.f32 %v7147, 1e-05
    %v7149 = vrsqrt.pop %v7148
    %v7150 = vsub.f32 0.0, %v7144
    %v7151 = vmul.f32 %v7150, %v7149
    %v7153 = vsel %vm656, %v7149, 0
    %7155 = vmatprep.subr.mxu0 0.0
    %7156 = vmatpush1.msra.mxu0 0.0
    %7157 = vmatprep.subr.mxu0 0.0
    %7158 = vmatpush1.msra.mxu0 0.0
    %7159 = vmatprep.subr.mxu0 0.0
    %7160 = vmatpush1.msra.mxu0 0.0
    %7161 = vmatprep.subr.mxu0 0.0
    %7162 = vmatpush1.msra.mxu0 0.0
    %7163 = vmatprep.subr.mxu0 0.0
    %7164 = vmatpush1.msra.mxu0 0.0
    %7165 = vmatprep.subr.mxu0 0.0
    %7166 = vmatpush1.msra.mxu0 0.0
    %7167 = vmatprep.subr.mxu0 0.0
    %7168 = vmatpush1.msra.mxu0 0.0
    %7169 = vmatprep.subr.mxu0 0.0
    %7170 = vmatpush1.msra.mxu0 0.0
    %7171 = vmatprep.subr.mxu0 0.0
    %7172 = vmatpush1.msra.mxu0 0.0
    %7173 = vmatprep.subr.mxu0 0.0
    %7174 = vmatpush1.msra.mxu0 0.0
    %7175 = vmatprep.subr.mxu0 0.0
    %7176 = vmatpush1.msra.mxu0 0.0
    %7177 = vmatprep.subr.mxu0 0.0
    %7178 = vmatpush1.msra.mxu0 0.0
    %7179 = vmatprep.subr.mxu0 0.0
    %7180 = vmatpush1.msra.mxu0 0.0
    %7181 = vmatprep.subr.mxu0 0.0
    %7182 = vmatpush1.msra.mxu0 0.0
    %7183 = vmatprep.subr.mxu0 0.0
    %7184 = vmatpush1.msra.mxu0 0.0
    %7185 = vmatprep.subr.mxu0 0.0
    %7186 = vmatpush1.msra.mxu0 %v5193
    %7187 = vmatprep.subr.mxu0 0.0
    %7188 = vmatpush2.msra.mxu0 0.0
    %7189 = vmatprep.subr.mxu0 0.0
    %7190 = vmatpush2.msra.mxu0 0.0
    %7191 = vmatprep.subr.mxu0 0.0
    %7192 = vmatpush2.msra.mxu0 0.0
    %7193 = vmatprep.subr.mxu0 0.0
    %7194 = vmatpush2.msra.mxu0 0.0
    %7195 = vmatprep.subr.mxu0 0.0
    %7196 = vmatpush2.msra.mxu0 0.0
    %7197 = vmatprep.subr.mxu0 0.0
    %7198 = vmatpush2.msra.mxu0 0.0
    %7199 = vmatprep.subr.mxu0 0.0
    %7200 = vmatpush2.msra.mxu0 0.0
    %7201 = vmatprep.subr.mxu0 0.0
    %7202 = vmatpush2.msra.mxu0 0.0
    %7203 = vmatprep.subr.mxu0 0.0
    %7204 = vmatpush2.msra.mxu0 0.0
    %7205 = vmatprep.subr.mxu0 0.0
    %7206 = vmatpush2.msra.mxu0 0.0
    %7207 = vmatprep.subr.mxu0 0.0
    %7208 = vmatpush2.msra.mxu0 0.0
    %7209 = vmatprep.subr.mxu0 0.0
    %7210 = vmatpush2.msra.mxu0 0.0
    %7211 = vmatprep.subr.mxu0 0.0
    %7212 = vmatpush2.msra.mxu0 0.0
    %7213 = vmatprep.subr.mxu0 0.0
    %7214 = vmatpush2.msra.mxu0 0.0
    %7215 = vmatprep.subr.mxu0 0.0
    %7216 = vmatpush2.msra.mxu0 0.0
    %7217 = vmatprep.subr.mxu0 0.0
    %7218 = vmatpush2.msra.mxu0 0.0
    %7219 = vmatprep.mubr.f32.mxu0 0.0
    %7220 = vmatmul.mubr.f32.gmra.mxu0 %v7153
    %v7221 = vpop.f32.mrf.mxu0
    %v7222 = vadd.f32 0.0, %v7221
    %v7223 = vpop.f32.mrf.mxu0
    %7224 = vdwg.mxu0
    %v7226 = vsel %vm656, %v7151, 0
    %7228 = vmatprep.subr.mxu0 0.0
    %7229 = vmatpush1.msra.mxu0 0.0
    %7230 = vmatprep.subr.mxu0 0.0
    %7231 = vmatpush1.msra.mxu0 0.0
    %7232 = vmatprep.subr.mxu0 0.0
    %7233 = vmatpush1.msra.mxu0 0.0
    %7234 = vmatprep.subr.mxu0 0.0
    %7235 = vmatpush1.msra.mxu0 0.0
    %7236 = vmatprep.subr.mxu0 0.0
    %7237 = vmatpush1.msra.mxu0 0.0
    %7238 = vmatprep.subr.mxu0 0.0
    %7239 = vmatpush1.msra.mxu0 0.0
    %7240 = vmatprep.subr.mxu0 0.0
    %7241 = vmatpush1.msra.mxu0 0.0
    %7242 = vmatprep.subr.mxu0 0.0
    %7243 = vmatpush1.msra.mxu0 0.0
    %7244 = vmatprep.subr.mxu0 0.0
    %7245 = vmatpush1.msra.mxu0 0.0
    %7246 = vmatprep.subr.mxu0 0.0
    %7247 = vmatpush1.msra.mxu0 0.0
    %7248 = vmatprep.subr.mxu0 0.0
    %7249 = vmatpush1.msra.mxu0 0.0
    %7250 = vmatprep.subr.mxu0 0.0
    %7251 = vmatpush1.msra.mxu0 0.0
    %7252 = vmatprep.subr.mxu0 0.0
    %7253 = vmatpush1.msra.mxu0 0.0
    %7254 = vmatprep.subr.mxu0 0.0
    %7255 = vmatpush1.msra.mxu0 0.0
    %7256 = vmatprep.subr.mxu0 0.0
    %7257 = vmatpush1.msra.mxu0 0.0
    %7258 = vmatprep.subr.mxu0 0.0
    %7259 = vmatpush1.msra.mxu0 %v5193
    %7260 = vmatprep.subr.mxu0 0.0
    %7261 = vmatpush2.msra.mxu0 0.0
    %7262 = vmatprep.subr.mxu0 0.0
    %7263 = vmatpush2.msra.mxu0 0.0
    %7264 = vmatprep.subr.mxu0 0.0
    %7265 = vmatpush2.msra.mxu0 0.0
    %7266 = vmatprep.subr.mxu0 0.0
    %7267 = vmatpush2.msra.mxu0 0.0
    %7268 = vmatprep.subr.mxu0 0.0
    %7269 = vmatpush2.msra.mxu0 0.0
    %7270 = vmatprep.subr.mxu0 0.0
    %7271 = vmatpush2.msra.mxu0 0.0
    %7272 = vmatprep.subr.mxu0 0.0
    %7273 = vmatpush2.msra.mxu0 0.0
    %7274 = vmatprep.subr.mxu0 0.0
    %7275 = vmatpush2.msra.mxu0 0.0
    %7276 = vmatprep.subr.mxu0 0.0
    %7277 = vmatpush2.msra.mxu0 0.0
    %7278 = vmatprep.subr.mxu0 0.0
    %7279 = vmatpush2.msra.mxu0 0.0
    %7280 = vmatprep.subr.mxu0 0.0
    %7281 = vmatpush2.msra.mxu0 0.0
    %7282 = vmatprep.subr.mxu0 0.0
    %7283 = vmatpush2.msra.mxu0 0.0
    %7284 = vmatprep.subr.mxu0 0.0
    %7285 = vmatpush2.msra.mxu0 0.0
    %7286 = vmatprep.subr.mxu0 0.0
    %7287 = vmatpush2.msra.mxu0 0.0
    %7288 = vmatprep.subr.mxu0 0.0
    %7289 = vmatpush2.msra.mxu0 0.0
    %7290 = vmatprep.subr.mxu0 0.0
    %7291 = vmatpush2.msra.mxu0 0.0
    %7292 = vmatprep.mubr.f32.mxu0 0.0
    %7293 = vmatmul.mubr.f32.gmra.mxu0 %v7226
    %v7294 = vpop.f32.mrf.mxu0
    %v7295 = vadd.f32 0.0, %v7294
    %v7296 = vpop.f32.mrf.mxu0
    %7297 = vdwg.mxu0
    %v7298 = vlaneseq
    %v7299 = vshrl.u32 %v7298, 7
    %v7300 = vsub.s32 0, %v7299
    %v7301 = vrot.slane %v7222, %v7300
    %v7302 = vmul.f32 %v6950, %v7301
    %v7303 = vmul.f32 %v6955, %v7301
    %v7304 = vmul.f32 %v6960, %v7301
    %v7305 = vmul.f32 %v6965, %v7301
    %v7306 = vlaneseq
    %v7307 = vshrl.u32 %v7306, 7
    %v7308 = vsub.s32 0, %v7307
    %v7309 = vrot.slane %v7295, %v7308
    %v7310 = vadd.f32 %v7302, %v7309
    %v7311 = vadd.f32 %v7303, %v7309
    %v7312 = vadd.f32 %v7304, %v7309
    %v7313 = vadd.f32 %v7305, %v7309
    %v7314 = vstv %s6127
    %v7315 = vmul.f32 %v7314, %v7310
    %v7316 = vmul.f32 %v7314, %v7311
    %v7317 = vmul.f32 %v7314, %v7312
    %v7318 = vmul.f32 %v7314, %v7313
    %7323 = vrot.lane.b32.xlu0 %v7315, 16
    %v7324 = vpop.permute.xlu0 %7323
    %7325 = vrot.lane.b32.xlu0 %v7316, 16
    %v7326 = vpop.permute.xlu0 %7325
    %7327 = vrot.lane.b32.xlu0 %v7317, 16
    %v7328 = vpop.permute.xlu0 %7327
    %7329 = vrot.lane.b32.xlu0 %v7318, 16
    %v7330 = vpop.permute.xlu0 %7329
    %v7335 = vadd.f32 %v6123, %v7324
    %v7336 = vadd.f32 %v6124, %v7326
    %v7337 = vadd.f32 %v6125, %v7328
    %v7338 = vadd.f32 %v6126, %v7330
    %7343 = vrot.lane.b32.xlu0 %v7335, 112
    %v7344 = vpop.permute.xlu0 %7343
    %7345 = vrot.lane.b32.xlu0 %v7336, 112
    %v7346 = vpop.permute.xlu0 %7345
    %7347 = vrot.lane.b32.xlu0 %v7337, 112
    %v7348 = vpop.permute.xlu0 %7347
    %7349 = vrot.lane.b32.xlu0 %v7338, 112
    %v7350 = vpop.permute.xlu0 %7349
    %7355 = vst.msk [vmem:[#allocation27] sm:$0xff] %vm499, %v7344
    %7356 = vst.msk [vmem:[#allocation27 + $0x8] sm:$0xff] %vm499, %v7346
    %7357 = vst.msk [vmem:[#allocation27 + $0x10] sm:$0xff] %vm499, %v7348
    %7358 = vst.msk [vmem:[#allocation27 + $0x18] sm:$0xff] %vm499, %v7350
    // Predicated region
    $region130: #{tpu_custom_call.1} parent=1 // pred_check
      _
    $region131: #{tpu_custom_call.1} parent=1 // pred_check_branch
      %7360 = sbr.rel (0) target = $region133
    $region132: #{tpu_custom_call.1} parent=1 // pred_region
      %s7362 = ssub.s32 512, 512
      %7363 = vsyncadd [#allocation6], %s7362
      %s7364 = sshll.u32 [#allocation27], 4
      %s7365 = int_to_ptr.vmem [resolvable:$true] %s7364
      %7370 = dma.vmem_to_hbm [thread:$0]  %s7365, 512, %s18, [#allocation6], 128, 128, 8
    $region133: #{tpu_custom_call.1} parent=1 // pred_fallthru
      _
    // Predicated region
    $region134: #{tpu_custom_call.1} parent=1 // pred_check
      _
    $region135: #{tpu_custom_call.1} parent=1 // pred_check_branch
      %7372 = sbr.rel (0) target = $region137
    $region136: #{tpu_custom_call.1} parent=1 // pred_region
      %7373 = dma.done [#allocation6], 512
    $region137: #{tpu_custom_call.1} parent=1 // pred_fallthru
      _
    %7374 = vsyncpa [#allocation5], 1
    %7375 = vsyncpa [#allocation10], 1
    %7376 = vsyncpa [#allocation13], 1
    %7377 = vsyncpa [#allocation16], 1
    %7378 = vsyncpa [#allocation19], 1
    %7379 = vsyncpa [#allocation22], 1
    %7380 = vsyncpa [#allocation25], 1
    %7381 = vsyncpa [#allocation6], 1
    %7382 = vsyncpa [#allocation7], 1

</llo_original>
